<compile_context>
chip_gen: v5e
topology: v5e:2x2
jax: 0.10.0
libtpu: 0.0.40
codegen_flags: <defaults>
</compile_context>

<pallas_src>
import functools

import jax
import jax.numpy as jnp
from jax import lax
from jax.experimental import pallas as pl
from jax.experimental.pallas import tpu as pltpu


# ----------------------------------------------------------------------------
# In-kernel building blocks (operate on VMEM-resident values, one batch element)
# ----------------------------------------------------------------------------

def _gather_rows(hb, t_out, shift, stride):
    """rows[t] = hb[stride*t + shift], zeros for out-of-range indices (= zero padding).

    Implemented as a tiny 0/1 selection matmul on the MXU: avoids strided slicing /
    concatenation / reshapes inside the kernel and folds padding + stride in one op.
    """
    t_in = hb.shape[0]
    r = lax.broadcasted_iota(jnp.int32, (t_out, t_in), 0)
    c = lax.broadcasted_iota(jnp.int32, (t_out, t_in), 1)
    sel = (c == stride * r + shift).astype(jnp.bfloat16)
    return jnp.dot(sel, hb, preferred_element_type=jnp.float32).astype(jnp.bfloat16)


def _conv1d(h, conv, *, K, dil=1, pad=0, stride=1):
    """Conv1d on a (T, Cin) activation. conv['w']: (K, Cin, Cout) bf16, conv['b']: (1, Cout) f32."""
    w_ref, b_ref = conv["w"], conv["b"]
    T = h.shape[0]
    Cout = w_ref.shape[-1]
    T_out = (T + 2 * pad - dil * (K - 1) - 1) // stride + 1
    hb = h.astype(jnp.bfloat16)
    acc = jnp.zeros((T_out, Cout), jnp.float32)
    for k in range(K):
        shift = k * dil - pad
        if stride == 1 and shift == 0 and T_out == T:
            hk = hb                                      # identity tap: skip the gather
        else:
            hk = _gather_rows(hb, T_out, shift, stride)
        acc = acc + jnp.dot(hk, w_ref[k], preferred_element_type=jnp.float32)
    return acc + b_ref[...]


def _upsample2(h):
    """nn.Upsample(scale_factor=2, mode='nearest') along time, via a 0/1 matmul (stays in VMEM)."""
    T = h.shape[0]
    r = lax.broadcasted_iota(jnp.int32, (2 * T, T), 0)
    c = lax.broadcasted_iota(jnp.int32, (2 * T, T), 1)
    d = r - 2 * c
    up = ((d == 0) | (d == 1)).astype(jnp.bfloat16)
    return jnp.dot(up, h.astype(jnp.bfloat16), preferred_element_type=jnp.float32)


def _res_block(h, rb, dil):
    # ResConv1DBlock: x + conv2(relu(conv1(relu(x))))
    y = jnp.maximum(h, 0.0)
    y = _conv1d(y, rb["c1"], K=3, dil=dil, pad=dil)
    y = jnp.maximum(y, 0.0)
    y = _conv1d(y, rb["c2"], K=1)
    return h + y


def _encoder(x, enc, cfg):
    h = _conv1d(x, enc["in"], K=3, pad=1)                       # Conv1d(in_dim, W, 3, 1, 1)
    h = jnp.maximum(h, 0.0)                                     # nn.ReLU()
    for blk in enc["down"]:
        h = _conv1d(h, blk["conv"], K=cfg["filter_t"],
                    stride=cfg["stride_t"], pad=cfg["pad_t"])   # strided down-conv
        for rb, dil in zip(blk["res"], cfg["dils"]):
            h = _res_block(h, rb, dil)
    return _conv1d(h, enc["out"], K=3, pad=1)                   # Conv1d(W, code_dim, 3, 1, 1)


def _decoder(xq, dec, cfg):
    h = _conv1d(xq, dec["in"], K=3, pad=1)
    h = jnp.maximum(h, 0.0)                                     # nn.ReLU()
    for blk in dec["up"]:
        for rb, dil in zip(blk["res"], cfg["dils"]):
            h = _res_block(h, rb, dil)
        h = _upsample2(h)                                       # Upsample(2, 'nearest')
        h = _conv1d(h, blk["conv"], K=3, pad=1)
    h = _conv1d(h, dec["out1"], K=3, pad=1)
    h = jnp.maximum(h, 0.0)                                     # nn.ReLU()
    return _conv1d(h, dec["out2"], K=3, pad=1)                  # Conv1d(W, in_dim, 3, 1, 1)


def _quantize(x_enc, q, nb_code):
    """QuantizeEMAReset eval path: nearest code (first-argmin tie-break), dequantize,
    per-batch code counts and squared-error partial sum (loss/ppl finished outside)."""
    xb = x_enc.astype(jnp.bfloat16)
    # ||x||^2 is row-constant -> cannot change the argmin (dropped); ||c||^2 precomputed.
    d = q["c2"][...] - 2.0 * jnp.dot(xb, q["cbt"][...], preferred_element_type=jnp.float32)
    iota = lax.broadcasted_iota(jnp.int32, d.shape, 1).astype(jnp.float32)
    dmin = jnp.min(d, axis=-1, keepdims=True)
    idx = jnp.min(jnp.where(d <= dmin, iota, float(nb_code)), axis=-1, keepdims=True)
    onehot = (iota == idx).astype(jnp.float32)                  # (Tq, Kc)
    x_d = jnp.dot(onehot.astype(jnp.bfloat16), q["cb"][...],
                  preferred_element_type=jnp.float32)           # dequantize (Tq, D)
    counts = jnp.sum(onehot, axis=0, keepdims=True)             # (1, Kc)
    diff = x_enc - x_d                                          # true x vs x_d for the loss
    sq = jnp.sum(diff * diff, keepdims=True)                    # (1, 1)
    return x_d, counts, sq


def _fused_kernel(*refs, treedef, n_leaves, cfg):
    x_ref = refs[0]
    params = jax.tree_util.tree_unflatten(treedef, refs[1:1 + n_leaves])
    y_ref, counts_ref, sq_ref = refs[1 + n_leaves:]

    x = x_ref[...]                                   # (T, Cin) f32, one batch element
    h = _encoder(x, params["enc"], cfg)              # (Tq, code_dim)
    x_d, counts, sq = _quantize(h, params["quant"], cfg["nb_code"])
    y = _decoder(x_d, params["dec"], cfg)            # straight-through forward value -> decoder

    y_ref[...] = y
    counts_ref[...] = counts
    sq_ref[...] = sq


# ----------------------------------------------------------------------------
# pallas_call wrapper
# ----------------------------------------------------------------------------

def _const_spec(shape):
    zeros = (0,) * len(shape)
    return pl.BlockSpec(tuple(shape), lambda n, _z=zeros: _z)   # resident weight block


def tsvqvae_forward(prepared, x, cfg):
    """TSVQVAE.forward: one fused Pallas kernel (grid over batch, 'parallel') plus a few
    scalar XLA reductions for commit loss / perplexity."""
    N, T, Cin = x.shape
    xf = x.astype(jnp.float32)                                  # preprocess(): .float()
    leaves, treedef = jax.tree_util.tree_flatten(prepared)
    Kc = cfg["nb_code"]

    kern = functools.partial(_fused_kernel, treedef=treedef,
                             n_leaves=len(leaves), cfg=cfg)

    in_specs = [pl.BlockSpec((None, T, Cin), lambda n: (n, 0, 0))]
    in_specs += [_const_spec(leaf.shape) for leaf in leaves]
    out_specs = [
        pl.BlockSpec((None, T, Cin), lambda n: (n, 0, 0)),
        pl.BlockSpec((None, 1, Kc), lambda n: (n, 0, 0)),
        pl.BlockSpec((None, 1, 1), lambda n: (n, 0, 0)),
    ]
    out_shape = (
        jax.ShapeDtypeStruct((N, T, Cin), jnp.float32),
        jax.ShapeDtypeStruct((N, 1, Kc), jnp.float32),
        jax.ShapeDtypeStruct((N, 1, 1), jnp.float32),
    )

    y, counts, sq = pl.pallas_call(
        kern,
        out_shape=out_shape,
        grid=(N,),
        in_specs=in_specs,
        out_specs=out_specs,
        compiler_params=pltpu.CompilerParams(dimension_semantics=("parallel",)),
    )(xf, *leaves)

    # Tiny scalar epilogue: global code histogram -> commit loss & perplexity.
    code_count = jnp.sum(counts, axis=(0, 1))                   # (Kc,)
    m = jnp.sum(code_count)                                     # = N * Tq
    loss = jnp.sum(sq) / (m * cfg["code_dim"])                  # F.mse_loss(x, x_d)
    prob = code_count / m
    ppl = jnp.exp(-jnp.sum(prob * jnp.log(prob + 1e-7)))
    return y, loss, ppl                                         # postprocess(): already (N, T, C)


# ----------------------------------------------------------------------------
# Deterministic parameter init + one-time weight preparation
# ----------------------------------------------------------------------------

def init_params(key, cfg):
    keys = iter(jax.random.split(key, 512))

    def conv(k, cin, cout):
        kw, kb = jax.random.split(next(keys))
        w = jax.random.normal(kw, (k, cin, cout), jnp.float32) / jnp.sqrt(float(k * cin))
        b = 0.01 * jax.random.normal(kb, (cout,), jnp.float32)
        return {"w": w, "b": b}

    def resnet():
        return [{"c1": conv(3, cfg["width"], cfg["width"]),
                 "c2": conv(1, cfg["width"], cfg["width"])} for _ in cfg["dils"]]

    enc = {
        "in": conv(3, cfg["in_dim"], cfg["width"]),
        "down": [{"conv": conv(cfg["filter_t"], cfg["width"], cfg["width"]),
                  "res": resnet()} for _ in range(cfg["down_t"])],
        "out": conv(3, cfg["width"], cfg["code_dim"]),
    }
    dec = {
        "in": conv(3, cfg["code_dim"], cfg["width"]),
        "up": [{"res": resnet(), "conv": conv(3, cfg["width"], cfg["width"])}
               for _ in range(cfg["down_t"])],
        "out1": conv(3, cfg["width"], cfg["width"]),
        "out2": conv(3, cfg["width"], cfg["in_dim"]),
    }
    codebook = jax.random.normal(next(keys), (cfg["nb_code"], cfg["code_dim"]), jnp.float32)
    return {"enc": enc, "dec": dec, "codebook": codebook}


def prepare_params(params, cfg):
    """One-time prep: bf16 (K, Cin, Cout) conv weights, f32 (1, Cout) biases, bf16 codebook in
    both orientations (avoids an in-kernel transpose), precomputed ||c||^2 row."""
    del cfg  # shapes come from the arrays themselves

    def prep_conv(c):
        cout = c["w"].shape[-1]
        return {"w": c["w"].astype(jnp.bfloat16),
                "b": c["b"].reshape(1, cout).astype(jnp.float32)}

    def prep_res(res):
        return [{"c1": prep_conv(r["c1"]), "c2": prep_conv(r["c2"])} for r in res]

    enc, dec = params["enc"], params["dec"]
    cb = params["codebook"].astype(jnp.float32)
    return {
        "enc": {
            "in": prep_conv(enc["in"]),
            "down": [{"conv": prep_conv(b["conv"]), "res": prep_res(b["res"])}
                     for b in enc["down"]],
            "out": prep_conv(enc["out"]),
        },
        "dec": {
            "in": prep_conv(dec["in"]),
            "up": [{"res": prep_res(b["res"]), "conv": prep_conv(b["conv"])}
                   for b in dec["up"]],
            "out1": prep_conv(dec["out1"]),
            "out2": prep_conv(dec["out2"]),
        },
        "quant": {
            "cb": cb.astype(jnp.bfloat16),                      # (Kc, D) for dequantize
            "cbt": cb.T.astype(jnp.bfloat16),                   # (D, Kc) for distances
            "c2": jnp.sum(cb * cb, axis=1)[None, :],            # (1, Kc) ||c||^2
        },
    }


# ----------------------------------------------------------------------------

if __name__ == "__main__":
    stride_t = 2
    depth = 2
    rate = 3
    cfg = dict(
        in_dim=6,             # dataname='stock' -> input_emb_width = 6
        code_dim=32,
        nb_code=64,
        down_t=2,
        stride_t=stride_t,
        filter_t=stride_t * 2,
        pad_t=stride_t // 2,
        width=32,
        depth=depth,
        # Resnet1D(reverse_dilation=True): dilations rate**d, reversed -> static config
        dils=tuple(rate ** d for d in range(depth))[::-1],
    )

    key = jax.random.PRNGKey(0)
    pkey, xkey = jax.random.split(key)
    params = init_params(pkey, cfg)
    prepared = prepare_params(params, cfg)                       # one-time weight prep
    x = jax.random.normal(xkey, (2, 16, cfg["in_dim"]), jnp.float32)   # (N, T, C_in)

    fwd = jax.jit(functools.partial(tsvqvae_forward, cfg=cfg))
    y, loss, ppl = jax.block_until_ready(fwd(prepared, x))

    assert y.shape == x.shape, (y.shape, x.shape)
    assert bool(jnp.all(jnp.isfinite(y))) and bool(jnp.isfinite(loss)) and bool(jnp.isfinite(ppl))
    print("KERNEL_OK")
</pallas_src>

<mosaic_0001>
module attributes {stable_mosaic.version = 11 : i64} {
  func.func @_fused_kernel(%arg0: i32, %arg1: memref<1x16x6xf32, #tpu.memory_space<vmem>>, %arg2: memref<1x32xf32, #tpu.memory_space<vmem>>, %arg3: memref<3x32x32xbf16, #tpu.memory_space<vmem>>, %arg4: memref<1x32xf32, #tpu.memory_space<vmem>>, %arg5: memref<3x32x32xbf16, #tpu.memory_space<vmem>>, %arg6: memref<1x6xf32, #tpu.memory_space<vmem>>, %arg7: memref<3x32x6xbf16, #tpu.memory_space<vmem>>, %arg8: memref<1x32xf32, #tpu.memory_space<vmem>>, %arg9: memref<3x32x32xbf16, #tpu.memory_space<vmem>>, %arg10: memref<1x32xf32, #tpu.memory_space<vmem>>, %arg11: memref<3x32x32xbf16, #tpu.memory_space<vmem>>, %arg12: memref<1x32xf32, #tpu.memory_space<vmem>>, %arg13: memref<1x32x32xbf16, #tpu.memory_space<vmem>>, %arg14: memref<1x32xf32, #tpu.memory_space<vmem>>, %arg15: memref<3x32x32xbf16, #tpu.memory_space<vmem>>, %arg16: memref<1x32xf32, #tpu.memory_space<vmem>>, %arg17: memref<1x32x32xbf16, #tpu.memory_space<vmem>>, %arg18: memref<1x32xf32, #tpu.memory_space<vmem>>, %arg19: memref<3x32x32xbf16, #tpu.memory_space<vmem>>, %arg20: memref<1x32xf32, #tpu.memory_space<vmem>>, %arg21: memref<3x32x32xbf16, #tpu.memory_space<vmem>>, %arg22: memref<1x32xf32, #tpu.memory_space<vmem>>, %arg23: memref<1x32x32xbf16, #tpu.memory_space<vmem>>, %arg24: memref<1x32xf32, #tpu.memory_space<vmem>>, %arg25: memref<3x32x32xbf16, #tpu.memory_space<vmem>>, %arg26: memref<1x32xf32, #tpu.memory_space<vmem>>, %arg27: memref<1x32x32xbf16, #tpu.memory_space<vmem>>, %arg28: memref<1x32xf32, #tpu.memory_space<vmem>>, %arg29: memref<4x32x32xbf16, #tpu.memory_space<vmem>>, %arg30: memref<1x32xf32, #tpu.memory_space<vmem>>, %arg31: memref<3x32x32xbf16, #tpu.memory_space<vmem>>, %arg32: memref<1x32xf32, #tpu.memory_space<vmem>>, %arg33: memref<1x32x32xbf16, #tpu.memory_space<vmem>>, %arg34: memref<1x32xf32, #tpu.memory_space<vmem>>, %arg35: memref<3x32x32xbf16, #tpu.memory_space<vmem>>, %arg36: memref<1x32xf32, #tpu.memory_space<vmem>>, %arg37: memref<1x32x32xbf16, #tpu.memory_space<vmem>>, %arg38: memref<1x32xf32, #tpu.memory_space<vmem>>, %arg39: memref<4x32x32xbf16, #tpu.memory_space<vmem>>, %arg40: memref<1x32xf32, #tpu.memory_space<vmem>>, %arg41: memref<3x32x32xbf16, #tpu.memory_space<vmem>>, %arg42: memref<1x32xf32, #tpu.memory_space<vmem>>, %arg43: memref<1x32x32xbf16, #tpu.memory_space<vmem>>, %arg44: memref<1x32xf32, #tpu.memory_space<vmem>>, %arg45: memref<3x32x32xbf16, #tpu.memory_space<vmem>>, %arg46: memref<1x32xf32, #tpu.memory_space<vmem>>, %arg47: memref<1x32x32xbf16, #tpu.memory_space<vmem>>, %arg48: memref<1x32xf32, #tpu.memory_space<vmem>>, %arg49: memref<3x6x32xbf16, #tpu.memory_space<vmem>>, %arg50: memref<1x32xf32, #tpu.memory_space<vmem>>, %arg51: memref<3x32x32xbf16, #tpu.memory_space<vmem>>, %arg52: memref<1x64xf32, #tpu.memory_space<vmem>>, %arg53: memref<64x32xbf16, #tpu.memory_space<vmem>>, %arg54: memref<32x64xbf16, #tpu.memory_space<vmem>>, %arg55: memref<1x16x6xf32, #tpu.memory_space<vmem>>, %arg56: memref<1x1x64xf32, #tpu.memory_space<vmem>>, %arg57: memref<1x1x1xf32, #tpu.memory_space<vmem>>) attributes {dimension_semantics = [#tpu.dimension_semantics<parallel>], iteration_bounds = array<i64: 2>, scalar_prefetch = 0 : i64, scratch_operands = 0 : i64, tpu.core_type = #tpu.core_type<tc>, window_params = [{transform_indices = @transform_0, window_bounds = array<i64: 1, 16, 6>}, {pipeline_mode = #tpu.pipeline_mode<synchronous>, transform_indices = @transform_1, window_bounds = array<i64: 1, 32>}, {pipeline_mode = #tpu.pipeline_mode<synchronous>, transform_indices = @transform_2, window_bounds = array<i64: 3, 32, 32>}, {pipeline_mode = #tpu.pipeline_mode<synchronous>, transform_indices = @transform_3, window_bounds = array<i64: 1, 32>}, {pipeline_mode = #tpu.pipeline_mode<synchronous>, transform_indices = @transform_4, window_bounds = array<i64: 3, 32, 32>}, {pipeline_mode = #tpu.pipeline_mode<synchronous>, transform_indices = @transform_5, window_bounds = array<i64: 1, 6>}, {pipeline_mode = #tpu.pipeline_mode<synchronous>, transform_indices = @transform_6, window_bounds = array<i64: 3, 32, 6>}, {pipeline_mode = #tpu.pipeline_mode<synchronous>, transform_indices = @transform_7, window_bounds = array<i64: 1, 32>}, {pipeline_mode = #tpu.pipeline_mode<synchronous>, transform_indices = @transform_8, window_bounds = array<i64: 3, 32, 32>}, {pipeline_mode = #tpu.pipeline_mode<synchronous>, transform_indices = @transform_9, window_bounds = array<i64: 1, 32>}, {pipeline_mode = #tpu.pipeline_mode<synchronous>, transform_indices = @transform_10, window_bounds = array<i64: 3, 32, 32>}, {pipeline_mode = #tpu.pipeline_mode<synchronous>, transform_indices = @transform_11, window_bounds = array<i64: 1, 32>}, {pipeline_mode = #tpu.pipeline_mode<synchronous>, transform_indices = @transform_12, window_bounds = array<i64: 1, 32, 32>}, {pipeline_mode = #tpu.pipeline_mode<synchronous>, transform_indices = @transform_13, window_bounds = array<i64: 1, 32>}, {pipeline_mode = #tpu.pipeline_mode<synchronous>, transform_indices = @transform_14, window_bounds = array<i64: 3, 32, 32>}, {pipeline_mode = #tpu.pipeline_mode<synchronous>, transform_indices = @transform_15, window_bounds = array<i64: 1, 32>}, {pipeline_mode = #tpu.pipeline_mode<synchronous>, transform_indices = @transform_16, window_bounds = array<i64: 1, 32, 32>}, {pipeline_mode = #tpu.pipeline_mode<synchronous>, transform_indices = @transform_17, window_bounds = array<i64: 1, 32>}, {pipeline_mode = #tpu.pipeline_mode<synchronous>, transform_indices = @transform_18, window_bounds = array<i64: 3, 32, 32>}, {pipeline_mode = #tpu.pipeline_mode<synchronous>, transform_indices = @transform_19, window_bounds = array<i64: 1, 32>}, {pipeline_mode = #tpu.pipeline_mode<synchronous>, transform_indices = @transform_20, window_bounds = array<i64: 3, 32, 32>}, {pipeline_mode = #tpu.pipeline_mode<synchronous>, transform_indices = @transform_21, window_bounds = array<i64: 1, 32>}, {pipeline_mode = #tpu.pipeline_mode<synchronous>, transform_indices = @transform_22, window_bounds = array<i64: 1, 32, 32>}, {pipeline_mode = #tpu.pipeline_mode<synchronous>, transform_indices = @transform_23, window_bounds = array<i64: 1, 32>}, {pipeline_mode = #tpu.pipeline_mode<synchronous>, transform_indices = @transform_24, window_bounds = array<i64: 3, 32, 32>}, {pipeline_mode = #tpu.pipeline_mode<synchronous>, transform_indices = @transform_25, window_bounds = array<i64: 1, 32>}, {pipeline_mode = #tpu.pipeline_mode<synchronous>, transform_indices = @transform_26, window_bounds = array<i64: 1, 32, 32>}, {pipeline_mode = #tpu.pipeline_mode<synchronous>, transform_indices = @transform_27, window_bounds = array<i64: 1, 32>}, {pipeline_mode = #tpu.pipeline_mode<synchronous>, transform_indices = @transform_28, window_bounds = array<i64: 4, 32, 32>}, {pipeline_mode = #tpu.pipeline_mode<synchronous>, transform_indices = @transform_29, window_bounds = array<i64: 1, 32>}, {pipeline_mode = #tpu.pipeline_mode<synchronous>, transform_indices = @transform_30, window_bounds = array<i64: 3, 32, 32>}, {pipeline_mode = #tpu.pipeline_mode<synchronous>, transform_indices = @transform_31, window_bounds = array<i64: 1, 32>}, {pipeline_mode = #tpu.pipeline_mode<synchronous>, transform_indices = @transform_32, window_bounds = array<i64: 1, 32, 32>}, {pipeline_mode = #tpu.pipeline_mode<synchronous>, transform_indices = @transform_33, window_bounds = array<i64: 1, 32>}, {pipeline_mode = #tpu.pipeline_mode<synchronous>, transform_indices = @transform_34, window_bounds = array<i64: 3, 32, 32>}, {pipeline_mode = #tpu.pipeline_mode<synchronous>, transform_indices = @transform_35, window_bounds = array<i64: 1, 32>}, {pipeline_mode = #tpu.pipeline_mode<synchronous>, transform_indices = @transform_36, window_bounds = array<i64: 1, 32, 32>}, {pipeline_mode = #tpu.pipeline_mode<synchronous>, transform_indices = @transform_37, window_bounds = array<i64: 1, 32>}, {pipeline_mode = #tpu.pipeline_mode<synchronous>, transform_indices = @transform_38, window_bounds = array<i64: 4, 32, 32>}, {pipeline_mode = #tpu.pipeline_mode<synchronous>, transform_indices = @transform_39, window_bounds = array<i64: 1, 32>}, {pipeline_mode = #tpu.pipeline_mode<synchronous>, transform_indices = @transform_40, window_bounds = array<i64: 3, 32, 32>}, {pipeline_mode = #tpu.pipeline_mode<synchronous>, transform_indices = @transform_41, window_bounds = array<i64: 1, 32>}, {pipeline_mode = #tpu.pipeline_mode<synchronous>, transform_indices = @transform_42, window_bounds = array<i64: 1, 32, 32>}, {pipeline_mode = #tpu.pipeline_mode<synchronous>, transform_indices = @transform_43, window_bounds = array<i64: 1, 32>}, {pipeline_mode = #tpu.pipeline_mode<synchronous>, transform_indices = @transform_44, window_bounds = array<i64: 3, 32, 32>}, {pipeline_mode = #tpu.pipeline_mode<synchronous>, transform_indices = @transform_45, window_bounds = array<i64: 1, 32>}, {pipeline_mode = #tpu.pipeline_mode<synchronous>, transform_indices = @transform_46, window_bounds = array<i64: 1, 32, 32>}, {pipeline_mode = #tpu.pipeline_mode<synchronous>, transform_indices = @transform_47, window_bounds = array<i64: 1, 32>}, {pipeline_mode = #tpu.pipeline_mode<synchronous>, transform_indices = @transform_48, window_bounds = array<i64: 3, 6, 32>}, {pipeline_mode = #tpu.pipeline_mode<synchronous>, transform_indices = @transform_49, window_bounds = array<i64: 1, 32>}, {pipeline_mode = #tpu.pipeline_mode<synchronous>, transform_indices = @transform_50, window_bounds = array<i64: 3, 32, 32>}, {pipeline_mode = #tpu.pipeline_mode<synchronous>, transform_indices = @transform_51, window_bounds = array<i64: 1, 64>}, {pipeline_mode = #tpu.pipeline_mode<synchronous>, transform_indices = @transform_52, window_bounds = array<i64: 64, 32>}, {pipeline_mode = #tpu.pipeline_mode<synchronous>, transform_indices = @transform_53, window_bounds = array<i64: 32, 64>}, {transform_indices = @transform_54, window_bounds = array<i64: 1, 16, 6>}, {transform_indices = @transform_55, window_bounds = array<i64: 1, 1, 64>}, {transform_indices = @transform_56, window_bounds = array<i64: 1, 1, 1>}]} {
    %c0 = arith.constant 0 : index
    %c0_0 = arith.constant 0 : index
    %c0_1 = arith.constant 0 : index
    %0 = vector.load %arg1[%c0, %c0_0, %c0_1] : memref<1x16x6xf32, #tpu.memory_space<vmem>>, vector<1x16x6xf32>
    %1 = vector.shape_cast %0 : vector<1x16x6xf32> to vector<16x6xf32>
    %2 = arith.truncf %1 : vector<16x6xf32> to vector<16x6xbf16>
    %cst = arith.constant 0.000000e+00 : f32
    %3 = vector.broadcast %cst : f32 to vector<16x32xf32>
    %4 = tpu.iota {dimensions = array<i32: 0>} : vector<16x16xi32>
    %5 = tpu.iota {dimensions = array<i32: 1>} : vector<16x16xi32>
    %c1_i32 = arith.constant 1 : i32
    %6 = vector.broadcast %c1_i32 : i32 to vector<16x16xi32>
    %7 = arith.muli %6, %4 : vector<16x16xi32>
    %c-1_i32 = arith.constant -1 : i32
    %8 = vector.broadcast %c-1_i32 : i32 to vector<16x16xi32>
    %9 = arith.addi %7, %8 : vector<16x16xi32>
    %10 = arith.cmpi eq, %5, %9 : vector<16x16xi32>
    %11 = arith.extui %10 : vector<16x16xi1> to vector<16x16xi32>
    %12 = arith.sitofp %11 : vector<16x16xi32> to vector<16x16xf32>
    %13 = arith.truncf %12 : vector<16x16xf32> to vector<16x16xbf16>
    %cst_2 = arith.constant dense<0.000000e+00> : vector<16x6xf32>
    %14 = tpu.matmul %13, %2, %cst_2 {dimension_numbers = #tpu.dot_dimension_numbers<[1], [0], [0], [1], [0, 0, 1, 1], [], []>} : vector<16x16xbf16>, vector<16x6xbf16>, vector<16x6xf32> -> vector<16x6xf32>
    %15 = arith.truncf %14 : vector<16x6xf32> to vector<16x6xbf16>
    %c0_3 = arith.constant 0 : index
    %c0_4 = arith.constant 0 : index
    %c0_5 = arith.constant 0 : index
    %16 = vector.load %arg49[%c0_3, %c0_4, %c0_5] : memref<3x6x32xbf16, #tpu.memory_space<vmem>>, vector<1x6x32xbf16>
    %17 = vector.shape_cast %16 : vector<1x6x32xbf16> to vector<6x32xbf16>
    %cst_6 = arith.constant dense<0.000000e+00> : vector<16x32xf32>
    %18 = tpu.matmul %15, %17, %cst_6 {dimension_numbers = #tpu.dot_dimension_numbers<[1], [0], [0], [1], [0, 0, 1, 1], [], []>} : vector<16x6xbf16>, vector<6x32xbf16>, vector<16x32xf32> -> vector<16x32xf32>
    %19 = arith.addf %3, %18 : vector<16x32xf32>
    %c1 = arith.constant 1 : index
    %c0_7 = arith.constant 0 : index
    %c0_8 = arith.constant 0 : index
    %20 = vector.load %arg49[%c1, %c0_7, %c0_8] : memref<3x6x32xbf16, #tpu.memory_space<vmem>>, vector<1x6x32xbf16>
    %21 = vector.shape_cast %20 : vector<1x6x32xbf16> to vector<6x32xbf16>
    %cst_9 = arith.constant dense<0.000000e+00> : vector<16x32xf32>
    %22 = tpu.matmul %2, %21, %cst_9 {dimension_numbers = #tpu.dot_dimension_numbers<[1], [0], [0], [1], [0, 0, 1, 1], [], []>} : vector<16x6xbf16>, vector<6x32xbf16>, vector<16x32xf32> -> vector<16x32xf32>
    %23 = arith.addf %19, %22 : vector<16x32xf32>
    %24 = tpu.iota {dimensions = array<i32: 0>} : vector<16x16xi32>
    %25 = tpu.iota {dimensions = array<i32: 1>} : vector<16x16xi32>
    %c1_i32_10 = arith.constant 1 : i32
    %26 = vector.broadcast %c1_i32_10 : i32 to vector<16x16xi32>
    %27 = arith.muli %26, %24 : vector<16x16xi32>
    %c1_i32_11 = arith.constant 1 : i32
    %28 = vector.broadcast %c1_i32_11 : i32 to vector<16x16xi32>
    %29 = arith.addi %27, %28 : vector<16x16xi32>
    %30 = arith.cmpi eq, %25, %29 : vector<16x16xi32>
    %31 = arith.extui %30 : vector<16x16xi1> to vector<16x16xi32>
    %32 = arith.sitofp %31 : vector<16x16xi32> to vector<16x16xf32>
    %33 = arith.truncf %32 : vector<16x16xf32> to vector<16x16xbf16>
    %cst_12 = arith.constant dense<0.000000e+00> : vector<16x6xf32>
    %34 = tpu.matmul %33, %2, %cst_12 {dimension_numbers = #tpu.dot_dimension_numbers<[1], [0], [0], [1], [0, 0, 1, 1], [], []>} : vector<16x16xbf16>, vector<16x6xbf16>, vector<16x6xf32> -> vector<16x6xf32>
    %35 = arith.truncf %34 : vector<16x6xf32> to vector<16x6xbf16>
    %c2 = arith.constant 2 : index
    %c0_13 = arith.constant 0 : index
    %c0_14 = arith.constant 0 : index
    %36 = vector.load %arg49[%c2, %c0_13, %c0_14] : memref<3x6x32xbf16, #tpu.memory_space<vmem>>, vector<1x6x32xbf16>
    %37 = vector.shape_cast %36 : vector<1x6x32xbf16> to vector<6x32xbf16>
    %cst_15 = arith.constant dense<0.000000e+00> : vector<16x32xf32>
    %38 = tpu.matmul %35, %37, %cst_15 {dimension_numbers = #tpu.dot_dimension_numbers<[1], [0], [0], [1], [0, 0, 1, 1], [], []>} : vector<16x6xbf16>, vector<6x32xbf16>, vector<16x32xf32> -> vector<16x32xf32>
    %39 = arith.addf %23, %38 : vector<16x32xf32>
    %c0_16 = arith.constant 0 : index
    %c0_17 = arith.constant 0 : index
    %40 = vector.load %arg48[%c0_16, %c0_17] : memref<1x32xf32, #tpu.memory_space<vmem>>, vector<1x32xf32>
    %41 = vector.broadcast %40 : vector<1x32xf32> to vector<16x32xf32>
    %42 = arith.addf %39, %41 : vector<16x32xf32>
    %cst_18 = arith.constant 0.000000e+00 : f32
    %43 = vector.broadcast %cst_18 : f32 to vector<16x32xf32>
    %44 = arith.maximumf %42, %43 : vector<16x32xf32>
    %45 = arith.truncf %44 : vector<16x32xf32> to vector<16x32xbf16>
    %cst_19 = arith.constant 0.000000e+00 : f32
    %46 = vector.broadcast %cst_19 : f32 to vector<8x32xf32>
    %47 = tpu.iota {dimensions = array<i32: 0>} : vector<8x16xi32>
    %48 = tpu.iota {dimensions = array<i32: 1>} : vector<8x16xi32>
    %c2_i32 = arith.constant 2 : i32
    %49 = vector.broadcast %c2_i32 : i32 to vector<8x16xi32>
    %50 = arith.muli %49, %47 : vector<8x16xi32>
    %c-1_i32_20 = arith.constant -1 : i32
    %51 = vector.broadcast %c-1_i32_20 : i32 to vector<8x16xi32>
    %52 = arith.addi %50, %51 : vector<8x16xi32>
    %53 = arith.cmpi eq, %48, %52 : vector<8x16xi32>
    %54 = arith.extui %53 : vector<8x16xi1> to vector<8x16xi32>
    %55 = arith.sitofp %54 : vector<8x16xi32> to vector<8x16xf32>
    %56 = arith.truncf %55 : vector<8x16xf32> to vector<8x16xbf16>
    %cst_21 = arith.constant dense<0.000000e+00> : vector<8x32xf32>
    %57 = tpu.matmul %56, %45, %cst_21 {dimension_numbers = #tpu.dot_dimension_numbers<[1], [0], [0], [1], [0, 0, 1, 1], [], []>} : vector<8x16xbf16>, vector<16x32xbf16>, vector<8x32xf32> -> vector<8x32xf32>
    %58 = arith.truncf %57 : vector<8x32xf32> to vector<8x32xbf16>
    %c0_22 = arith.constant 0 : index
    %c0_23 = arith.constant 0 : index
    %c0_24 = arith.constant 0 : index
    %59 = vector.load %arg29[%c0_22, %c0_23, %c0_24] : memref<4x32x32xbf16, #tpu.memory_space<vmem>>, vector<1x32x32xbf16>
    %60 = vector.shape_cast %59 : vector<1x32x32xbf16> to vector<32x32xbf16>
    %cst_25 = arith.constant dense<0.000000e+00> : vector<8x32xf32>
    %61 = tpu.matmul %58, %60, %cst_25 {dimension_numbers = #tpu.dot_dimension_numbers<[1], [0], [0], [1], [0, 0, 1, 1], [], []>} : vector<8x32xbf16>, vector<32x32xbf16>, vector<8x32xf32> -> vector<8x32xf32>
    %62 = arith.addf %46, %61 : vector<8x32xf32>
    %63 = tpu.iota {dimensions = array<i32: 0>} : vector<8x16xi32>
    %64 = tpu.iota {dimensions = array<i32: 1>} : vector<8x16xi32>
    %c2_i32_26 = arith.constant 2 : i32
    %65 = vector.broadcast %c2_i32_26 : i32 to vector<8x16xi32>
    %66 = arith.muli %65, %63 : vector<8x16xi32>
    %c0_i32 = arith.constant 0 : i32
    %67 = vector.broadcast %c0_i32 : i32 to vector<8x16xi32>
    %68 = arith.addi %66, %67 : vector<8x16xi32>
    %69 = arith.cmpi eq, %64, %68 : vector<8x16xi32>
    %70 = arith.extui %69 : vector<8x16xi1> to vector<8x16xi32>
    %71 = arith.sitofp %70 : vector<8x16xi32> to vector<8x16xf32>
    %72 = arith.truncf %71 : vector<8x16xf32> to vector<8x16xbf16>
    %cst_27 = arith.constant dense<0.000000e+00> : vector<8x32xf32>
    %73 = tpu.matmul %72, %45, %cst_27 {dimension_numbers = #tpu.dot_dimension_numbers<[1], [0], [0], [1], [0, 0, 1, 1], [], []>} : vector<8x16xbf16>, vector<16x32xbf16>, vector<8x32xf32> -> vector<8x32xf32>
    %74 = arith.truncf %73 : vector<8x32xf32> to vector<8x32xbf16>
    %c1_28 = arith.constant 1 : index
    %c0_29 = arith.constant 0 : index
    %c0_30 = arith.constant 0 : index
    %75 = vector.load %arg29[%c1_28, %c0_29, %c0_30] : memref<4x32x32xbf16, #tpu.memory_space<vmem>>, vector<1x32x32xbf16>
    %76 = vector.shape_cast %75 : vector<1x32x32xbf16> to vector<32x32xbf16>
    %cst_31 = arith.constant dense<0.000000e+00> : vector<8x32xf32>
    %77 = tpu.matmul %74, %76, %cst_31 {dimension_numbers = #tpu.dot_dimension_numbers<[1], [0], [0], [1], [0, 0, 1, 1], [], []>} : vector<8x32xbf16>, vector<32x32xbf16>, vector<8x32xf32> -> vector<8x32xf32>
    %78 = arith.addf %62, %77 : vector<8x32xf32>
    %79 = tpu.iota {dimensions = array<i32: 0>} : vector<8x16xi32>
    %80 = tpu.iota {dimensions = array<i32: 1>} : vector<8x16xi32>
    %c2_i32_32 = arith.constant 2 : i32
    %81 = vector.broadcast %c2_i32_32 : i32 to vector<8x16xi32>
    %82 = arith.muli %81, %79 : vector<8x16xi32>
    %c1_i32_33 = arith.constant 1 : i32
    %83 = vector.broadcast %c1_i32_33 : i32 to vector<8x16xi32>
    %84 = arith.addi %82, %83 : vector<8x16xi32>
    %85 = arith.cmpi eq, %80, %84 : vector<8x16xi32>
    %86 = arith.extui %85 : vector<8x16xi1> to vector<8x16xi32>
    %87 = arith.sitofp %86 : vector<8x16xi32> to vector<8x16xf32>
    %88 = arith.truncf %87 : vector<8x16xf32> to vector<8x16xbf16>
    %cst_34 = arith.constant dense<0.000000e+00> : vector<8x32xf32>
    %89 = tpu.matmul %88, %45, %cst_34 {dimension_numbers = #tpu.dot_dimension_numbers<[1], [0], [0], [1], [0, 0, 1, 1], [], []>} : vector<8x16xbf16>, vector<16x32xbf16>, vector<8x32xf32> -> vector<8x32xf32>
    %90 = arith.truncf %89 : vector<8x32xf32> to vector<8x32xbf16>
    %c2_35 = arith.constant 2 : index
    %c0_36 = arith.constant 0 : index
    %c0_37 = arith.constant 0 : index
    %91 = vector.load %arg29[%c2_35, %c0_36, %c0_37] : memref<4x32x32xbf16, #tpu.memory_space<vmem>>, vector<1x32x32xbf16>
    %92 = vector.shape_cast %91 : vector<1x32x32xbf16> to vector<32x32xbf16>
    %cst_38 = arith.constant dense<0.000000e+00> : vector<8x32xf32>
    %93 = tpu.matmul %90, %92, %cst_38 {dimension_numbers = #tpu.dot_dimension_numbers<[1], [0], [0], [1], [0, 0, 1, 1], [], []>} : vector<8x32xbf16>, vector<32x32xbf16>, vector<8x32xf32> -> vector<8x32xf32>
    %94 = arith.addf %78, %93 : vector<8x32xf32>
    %95 = tpu.iota {dimensions = array<i32: 0>} : vector<8x16xi32>
    %96 = tpu.iota {dimensions = array<i32: 1>} : vector<8x16xi32>
    %c2_i32_39 = arith.constant 2 : i32
    %97 = vector.broadcast %c2_i32_39 : i32 to vector<8x16xi32>
    %98 = arith.muli %97, %95 : vector<8x16xi32>
    %c2_i32_40 = arith.constant 2 : i32
    %99 = vector.broadcast %c2_i32_40 : i32 to vector<8x16xi32>
    %100 = arith.addi %98, %99 : vector<8x16xi32>
    %101 = arith.cmpi eq, %96, %100 : vector<8x16xi32>
    %102 = arith.extui %101 : vector<8x16xi1> to vector<8x16xi32>
    %103 = arith.sitofp %102 : vector<8x16xi32> to vector<8x16xf32>
    %104 = arith.truncf %103 : vector<8x16xf32> to vector<8x16xbf16>
    %cst_41 = arith.constant dense<0.000000e+00> : vector<8x32xf32>
    %105 = tpu.matmul %104, %45, %cst_41 {dimension_numbers = #tpu.dot_dimension_numbers<[1], [0], [0], [1], [0, 0, 1, 1], [], []>} : vector<8x16xbf16>, vector<16x32xbf16>, vector<8x32xf32> -> vector<8x32xf32>
    %106 = arith.truncf %105 : vector<8x32xf32> to vector<8x32xbf16>
    %c3 = arith.constant 3 : index
    %c0_42 = arith.constant 0 : index
    %c0_43 = arith.constant 0 : index
    %107 = vector.load %arg29[%c3, %c0_42, %c0_43] : memref<4x32x32xbf16, #tpu.memory_space<vmem>>, vector<1x32x32xbf16>
    %108 = vector.shape_cast %107 : vector<1x32x32xbf16> to vector<32x32xbf16>
    %cst_44 = arith.constant dense<0.000000e+00> : vector<8x32xf32>
    %109 = tpu.matmul %106, %108, %cst_44 {dimension_numbers = #tpu.dot_dimension_numbers<[1], [0], [0], [1], [0, 0, 1, 1], [], []>} : vector<8x32xbf16>, vector<32x32xbf16>, vector<8x32xf32> -> vector<8x32xf32>
    %110 = arith.addf %94, %109 : vector<8x32xf32>
    %c0_45 = arith.constant 0 : index
    %c0_46 = arith.constant 0 : index
    %111 = vector.load %arg28[%c0_45, %c0_46] : memref<1x32xf32, #tpu.memory_space<vmem>>, vector<1x32xf32>
    %112 = vector.broadcast %111 : vector<1x32xf32> to vector<8x32xf32>
    %113 = arith.addf %110, %112 : vector<8x32xf32>
    %cst_47 = arith.constant 0.000000e+00 : f32
    %114 = vector.broadcast %cst_47 : f32 to vector<8x32xf32>
    %115 = arith.maximumf %113, %114 : vector<8x32xf32>
    %116 = arith.truncf %115 : vector<8x32xf32> to vector<8x32xbf16>
    %cst_48 = arith.constant 0.000000e+00 : f32
    %117 = vector.broadcast %cst_48 : f32 to vector<8x32xf32>
    %118 = tpu.iota {dimensions = array<i32: 0>} : vector<8x8xi32>
    %119 = tpu.iota {dimensions = array<i32: 1>} : vector<8x8xi32>
    %c1_i32_49 = arith.constant 1 : i32
    %120 = vector.broadcast %c1_i32_49 : i32 to vector<8x8xi32>
    %121 = arith.muli %120, %118 : vector<8x8xi32>
    %c-3_i32 = arith.constant -3 : i32
    %122 = vector.broadcast %c-3_i32 : i32 to vector<8x8xi32>
    %123 = arith.addi %121, %122 : vector<8x8xi32>
    %124 = arith.cmpi eq, %119, %123 : vector<8x8xi32>
    %125 = arith.extui %124 : vector<8x8xi1> to vector<8x8xi32>
    %126 = arith.sitofp %125 : vector<8x8xi32> to vector<8x8xf32>
    %127 = arith.truncf %126 : vector<8x8xf32> to vector<8x8xbf16>
    %cst_50 = arith.constant dense<0.000000e+00> : vector<8x32xf32>
    %128 = tpu.matmul %127, %116, %cst_50 {dimension_numbers = #tpu.dot_dimension_numbers<[1], [0], [0], [1], [0, 0, 1, 1], [], []>} : vector<8x8xbf16>, vector<8x32xbf16>, vector<8x32xf32> -> vector<8x32xf32>
    %129 = arith.truncf %128 : vector<8x32xf32> to vector<8x32xbf16>
    %c0_51 = arith.constant 0 : index
    %c0_52 = arith.constant 0 : index
    %c0_53 = arith.constant 0 : index
    %130 = vector.load %arg31[%c0_51, %c0_52, %c0_53] : memref<3x32x32xbf16, #tpu.memory_space<vmem>>, vector<1x32x32xbf16>
    %131 = vector.shape_cast %130 : vector<1x32x32xbf16> to vector<32x32xbf16>
    %cst_54 = arith.constant dense<0.000000e+00> : vector<8x32xf32>
    %132 = tpu.matmul %129, %131, %cst_54 {dimension_numbers = #tpu.dot_dimension_numbers<[1], [0], [0], [1], [0, 0, 1, 1], [], []>} : vector<8x32xbf16>, vector<32x32xbf16>, vector<8x32xf32> -> vector<8x32xf32>
    %133 = arith.addf %117, %132 : vector<8x32xf32>
    %c1_55 = arith.constant 1 : index
    %c0_56 = arith.constant 0 : index
    %c0_57 = arith.constant 0 : index
    %134 = vector.load %arg31[%c1_55, %c0_56, %c0_57] : memref<3x32x32xbf16, #tpu.memory_space<vmem>>, vector<1x32x32xbf16>
    %135 = vector.shape_cast %134 : vector<1x32x32xbf16> to vector<32x32xbf16>
    %cst_58 = arith.constant dense<0.000000e+00> : vector<8x32xf32>
    %136 = tpu.matmul %116, %135, %cst_58 {dimension_numbers = #tpu.dot_dimension_numbers<[1], [0], [0], [1], [0, 0, 1, 1], [], []>} : vector<8x32xbf16>, vector<32x32xbf16>, vector<8x32xf32> -> vector<8x32xf32>
    %137 = arith.addf %133, %136 : vector<8x32xf32>
    %138 = tpu.iota {dimensions = array<i32: 0>} : vector<8x8xi32>
    %139 = tpu.iota {dimensions = array<i32: 1>} : vector<8x8xi32>
    %c1_i32_59 = arith.constant 1 : i32
    %140 = vector.broadcast %c1_i32_59 : i32 to vector<8x8xi32>
    %141 = arith.muli %140, %138 : vector<8x8xi32>
    %c3_i32 = arith.constant 3 : i32
    %142 = vector.broadcast %c3_i32 : i32 to vector<8x8xi32>
    %143 = arith.addi %141, %142 : vector<8x8xi32>
    %144 = arith.cmpi eq, %139, %143 : vector<8x8xi32>
    %145 = arith.extui %144 : vector<8x8xi1> to vector<8x8xi32>
    %146 = arith.sitofp %145 : vector<8x8xi32> to vector<8x8xf32>
    %147 = arith.truncf %146 : vector<8x8xf32> to vector<8x8xbf16>
    %cst_60 = arith.constant dense<0.000000e+00> : vector<8x32xf32>
    %148 = tpu.matmul %147, %116, %cst_60 {dimension_numbers = #tpu.dot_dimension_numbers<[1], [0], [0], [1], [0, 0, 1, 1], [], []>} : vector<8x8xbf16>, vector<8x32xbf16>, vector<8x32xf32> -> vector<8x32xf32>
    %149 = arith.truncf %148 : vector<8x32xf32> to vector<8x32xbf16>
    %c2_61 = arith.constant 2 : index
    %c0_62 = arith.constant 0 : index
    %c0_63 = arith.constant 0 : index
    %150 = vector.load %arg31[%c2_61, %c0_62, %c0_63] : memref<3x32x32xbf16, #tpu.memory_space<vmem>>, vector<1x32x32xbf16>
    %151 = vector.shape_cast %150 : vector<1x32x32xbf16> to vector<32x32xbf16>
    %cst_64 = arith.constant dense<0.000000e+00> : vector<8x32xf32>
    %152 = tpu.matmul %149, %151, %cst_64 {dimension_numbers = #tpu.dot_dimension_numbers<[1], [0], [0], [1], [0, 0, 1, 1], [], []>} : vector<8x32xbf16>, vector<32x32xbf16>, vector<8x32xf32> -> vector<8x32xf32>
    %153 = arith.addf %137, %152 : vector<8x32xf32>
    %c0_65 = arith.constant 0 : index
    %c0_66 = arith.constant 0 : index
    %154 = vector.load %arg30[%c0_65, %c0_66] : memref<1x32xf32, #tpu.memory_space<vmem>>, vector<1x32xf32>
    %155 = vector.broadcast %154 : vector<1x32xf32> to vector<8x32xf32>
    %156 = arith.addf %153, %155 : vector<8x32xf32>
    %cst_67 = arith.constant 0.000000e+00 : f32
    %157 = vector.broadcast %cst_67 : f32 to vector<8x32xf32>
    %158 = arith.maximumf %156, %157 : vector<8x32xf32>
    %159 = arith.truncf %158 : vector<8x32xf32> to vector<8x32xbf16>
    %cst_68 = arith.constant 0.000000e+00 : f32
    %160 = vector.broadcast %cst_68 : f32 to vector<8x32xf32>
    %c0_69 = arith.constant 0 : index
    %c0_70 = arith.constant 0 : index
    %c0_71 = arith.constant 0 : index
    %161 = vector.load %arg33[%c0_69, %c0_70, %c0_71] : memref<1x32x32xbf16, #tpu.memory_space<vmem>>, vector<1x32x32xbf16>
    %162 = vector.shape_cast %161 : vector<1x32x32xbf16> to vector<32x32xbf16>
    %cst_72 = arith.constant dense<0.000000e+00> : vector<8x32xf32>
    %163 = tpu.matmul %159, %162, %cst_72 {dimension_numbers = #tpu.dot_dimension_numbers<[1], [0], [0], [1], [0, 0, 1, 1], [], []>} : vector<8x32xbf16>, vector<32x32xbf16>, vector<8x32xf32> -> vector<8x32xf32>
    %164 = arith.addf %160, %163 : vector<8x32xf32>
    %c0_73 = arith.constant 0 : index
    %c0_74 = arith.constant 0 : index
    %165 = vector.load %arg32[%c0_73, %c0_74] : memref<1x32xf32, #tpu.memory_space<vmem>>, vector<1x32xf32>
    %166 = vector.broadcast %165 : vector<1x32xf32> to vector<8x32xf32>
    %167 = arith.addf %164, %166 : vector<8x32xf32>
    %168 = arith.addf %113, %167 : vector<8x32xf32>
    %cst_75 = arith.constant 0.000000e+00 : f32
    %169 = vector.broadcast %cst_75 : f32 to vector<8x32xf32>
    %170 = arith.maximumf %168, %169 : vector<8x32xf32>
    %171 = arith.truncf %170 : vector<8x32xf32> to vector<8x32xbf16>
    %cst_76 = arith.constant 0.000000e+00 : f32
    %172 = vector.broadcast %cst_76 : f32 to vector<8x32xf32>
    %173 = tpu.iota {dimensions = array<i32: 0>} : vector<8x8xi32>
    %174 = tpu.iota {dimensions = array<i32: 1>} : vector<8x8xi32>
    %c1_i32_77 = arith.constant 1 : i32
    %175 = vector.broadcast %c1_i32_77 : i32 to vector<8x8xi32>
    %176 = arith.muli %175, %173 : vector<8x8xi32>
    %c-1_i32_78 = arith.constant -1 : i32
    %177 = vector.broadcast %c-1_i32_78 : i32 to vector<8x8xi32>
    %178 = arith.addi %176, %177 : vector<8x8xi32>
    %179 = arith.cmpi eq, %174, %178 : vector<8x8xi32>
    %180 = arith.extui %179 : vector<8x8xi1> to vector<8x8xi32>
    %181 = arith.sitofp %180 : vector<8x8xi32> to vector<8x8xf32>
    %182 = arith.truncf %181 : vector<8x8xf32> to vector<8x8xbf16>
    %cst_79 = arith.constant dense<0.000000e+00> : vector<8x32xf32>
    %183 = tpu.matmul %182, %171, %cst_79 {dimension_numbers = #tpu.dot_dimension_numbers<[1], [0], [0], [1], [0, 0, 1, 1], [], []>} : vector<8x8xbf16>, vector<8x32xbf16>, vector<8x32xf32> -> vector<8x32xf32>
    %184 = arith.truncf %183 : vector<8x32xf32> to vector<8x32xbf16>
    %c0_80 = arith.constant 0 : index
    %c0_81 = arith.constant 0 : index
    %c0_82 = arith.constant 0 : index
    %185 = vector.load %arg35[%c0_80, %c0_81, %c0_82] : memref<3x32x32xbf16, #tpu.memory_space<vmem>>, vector<1x32x32xbf16>
    %186 = vector.shape_cast %185 : vector<1x32x32xbf16> to vector<32x32xbf16>
    %cst_83 = arith.constant dense<0.000000e+00> : vector<8x32xf32>
    %187 = tpu.matmul %184, %186, %cst_83 {dimension_numbers = #tpu.dot_dimension_numbers<[1], [0], [0], [1], [0, 0, 1, 1], [], []>} : vector<8x32xbf16>, vector<32x32xbf16>, vector<8x32xf32> -> vector<8x32xf32>
    %188 = arith.addf %172, %187 : vector<8x32xf32>
    %c1_84 = arith.constant 1 : index
    %c0_85 = arith.constant 0 : index
    %c0_86 = arith.constant 0 : index
    %189 = vector.load %arg35[%c1_84, %c0_85, %c0_86] : memref<3x32x32xbf16, #tpu.memory_space<vmem>>, vector<1x32x32xbf16>
    %190 = vector.shape_cast %189 : vector<1x32x32xbf16> to vector<32x32xbf16>
    %cst_87 = arith.constant dense<0.000000e+00> : vector<8x32xf32>
    %191 = tpu.matmul %171, %190, %cst_87 {dimension_numbers = #tpu.dot_dimension_numbers<[1], [0], [0], [1], [0, 0, 1, 1], [], []>} : vector<8x32xbf16>, vector<32x32xbf16>, vector<8x32xf32> -> vector<8x32xf32>
    %192 = arith.addf %188, %191 : vector<8x32xf32>
    %193 = tpu.iota {dimensions = array<i32: 0>} : vector<8x8xi32>
    %194 = tpu.iota {dimensions = array<i32: 1>} : vector<8x8xi32>
    %c1_i32_88 = arith.constant 1 : i32
    %195 = vector.broadcast %c1_i32_88 : i32 to vector<8x8xi32>
    %196 = arith.muli %195, %193 : vector<8x8xi32>
    %c1_i32_89 = arith.constant 1 : i32
    %197 = vector.broadcast %c1_i32_89 : i32 to vector<8x8xi32>
    %198 = arith.addi %196, %197 : vector<8x8xi32>
    %199 = arith.cmpi eq, %194, %198 : vector<8x8xi32>
    %200 = arith.extui %199 : vector<8x8xi1> to vector<8x8xi32>
    %201 = arith.sitofp %200 : vector<8x8xi32> to vector<8x8xf32>
    %202 = arith.truncf %201 : vector<8x8xf32> to vector<8x8xbf16>
    %cst_90 = arith.constant dense<0.000000e+00> : vector<8x32xf32>
    %203 = tpu.matmul %202, %171, %cst_90 {dimension_numbers = #tpu.dot_dimension_numbers<[1], [0], [0], [1], [0, 0, 1, 1], [], []>} : vector<8x8xbf16>, vector<8x32xbf16>, vector<8x32xf32> -> vector<8x32xf32>
    %204 = arith.truncf %203 : vector<8x32xf32> to vector<8x32xbf16>
    %c2_91 = arith.constant 2 : index
    %c0_92 = arith.constant 0 : index
    %c0_93 = arith.constant 0 : index
    %205 = vector.load %arg35[%c2_91, %c0_92, %c0_93] : memref<3x32x32xbf16, #tpu.memory_space<vmem>>, vector<1x32x32xbf16>
    %206 = vector.shape_cast %205 : vector<1x32x32xbf16> to vector<32x32xbf16>
    %cst_94 = arith.constant dense<0.000000e+00> : vector<8x32xf32>
    %207 = tpu.matmul %204, %206, %cst_94 {dimension_numbers = #tpu.dot_dimension_numbers<[1], [0], [0], [1], [0, 0, 1, 1], [], []>} : vector<8x32xbf16>, vector<32x32xbf16>, vector<8x32xf32> -> vector<8x32xf32>
    %208 = arith.addf %192, %207 : vector<8x32xf32>
    %c0_95 = arith.constant 0 : index
    %c0_96 = arith.constant 0 : index
    %209 = vector.load %arg34[%c0_95, %c0_96] : memref<1x32xf32, #tpu.memory_space<vmem>>, vector<1x32xf32>
    %210 = vector.broadcast %209 : vector<1x32xf32> to vector<8x32xf32>
    %211 = arith.addf %208, %210 : vector<8x32xf32>
    %cst_97 = arith.constant 0.000000e+00 : f32
    %212 = vector.broadcast %cst_97 : f32 to vector<8x32xf32>
    %213 = arith.maximumf %211, %212 : vector<8x32xf32>
    %214 = arith.truncf %213 : vector<8x32xf32> to vector<8x32xbf16>
    %cst_98 = arith.constant 0.000000e+00 : f32
    %215 = vector.broadcast %cst_98 : f32 to vector<8x32xf32>
    %c0_99 = arith.constant 0 : index
    %c0_100 = arith.constant 0 : index
    %c0_101 = arith.constant 0 : index
    %216 = vector.load %arg37[%c0_99, %c0_100, %c0_101] : memref<1x32x32xbf16, #tpu.memory_space<vmem>>, vector<1x32x32xbf16>
    %217 = vector.shape_cast %216 : vector<1x32x32xbf16> to vector<32x32xbf16>
    %cst_102 = arith.constant dense<0.000000e+00> : vector<8x32xf32>
    %218 = tpu.matmul %214, %217, %cst_102 {dimension_numbers = #tpu.dot_dimension_numbers<[1], [0], [0], [1], [0, 0, 1, 1], [], []>} : vector<8x32xbf16>, vector<32x32xbf16>, vector<8x32xf32> -> vector<8x32xf32>
    %219 = arith.addf %215, %218 : vector<8x32xf32>
    %c0_103 = arith.constant 0 : index
    %c0_104 = arith.constant 0 : index
    %220 = vector.load %arg36[%c0_103, %c0_104] : memref<1x32xf32, #tpu.memory_space<vmem>>, vector<1x32xf32>
    %221 = vector.broadcast %220 : vector<1x32xf32> to vector<8x32xf32>
    %222 = arith.addf %219, %221 : vector<8x32xf32>
    %223 = arith.addf %168, %222 : vector<8x32xf32>
    %224 = arith.truncf %223 : vector<8x32xf32> to vector<8x32xbf16>
    %cst_105 = arith.constant 0.000000e+00 : f32
    %225 = vector.broadcast %cst_105 : f32 to vector<4x32xf32>
    %226 = tpu.iota {dimensions = array<i32: 0>} : vector<4x8xi32>
    %227 = tpu.iota {dimensions = array<i32: 1>} : vector<4x8xi32>
    %c2_i32_106 = arith.constant 2 : i32
    %228 = vector.broadcast %c2_i32_106 : i32 to vector<4x8xi32>
    %229 = arith.muli %228, %226 : vector<4x8xi32>
    %c-1_i32_107 = arith.constant -1 : i32
    %230 = vector.broadcast %c-1_i32_107 : i32 to vector<4x8xi32>
    %231 = arith.addi %229, %230 : vector<4x8xi32>
    %232 = arith.cmpi eq, %227, %231 : vector<4x8xi32>
    %233 = arith.extui %232 : vector<4x8xi1> to vector<4x8xi32>
    %234 = arith.sitofp %233 : vector<4x8xi32> to vector<4x8xf32>
    %235 = arith.truncf %234 : vector<4x8xf32> to vector<4x8xbf16>
    %cst_108 = arith.constant dense<0.000000e+00> : vector<4x32xf32>
    %236 = tpu.matmul %235, %224, %cst_108 {dimension_numbers = #tpu.dot_dimension_numbers<[1], [0], [0], [1], [0, 0, 1, 1], [], []>} : vector<4x8xbf16>, vector<8x32xbf16>, vector<4x32xf32> -> vector<4x32xf32>
    %237 = arith.truncf %236 : vector<4x32xf32> to vector<4x32xbf16>
    %c0_109 = arith.constant 0 : index
    %c0_110 = arith.constant 0 : index
    %c0_111 = arith.constant 0 : index
    %238 = vector.load %arg39[%c0_109, %c0_110, %c0_111] : memref<4x32x32xbf16, #tpu.memory_space<vmem>>, vector<1x32x32xbf16>
    %239 = vector.shape_cast %238 : vector<1x32x32xbf16> to vector<32x32xbf16>
    %cst_112 = arith.constant dense<0.000000e+00> : vector<4x32xf32>
    %240 = tpu.matmul %237, %239, %cst_112 {dimension_numbers = #tpu.dot_dimension_numbers<[1], [0], [0], [1], [0, 0, 1, 1], [], []>} : vector<4x32xbf16>, vector<32x32xbf16>, vector<4x32xf32> -> vector<4x32xf32>
    %241 = arith.addf %225, %240 : vector<4x32xf32>
    %242 = tpu.iota {dimensions = array<i32: 0>} : vector<4x8xi32>
    %243 = tpu.iota {dimensions = array<i32: 1>} : vector<4x8xi32>
    %c2_i32_113 = arith.constant 2 : i32
    %244 = vector.broadcast %c2_i32_113 : i32 to vector<4x8xi32>
    %245 = arith.muli %244, %242 : vector<4x8xi32>
    %c0_i32_114 = arith.constant 0 : i32
    %246 = vector.broadcast %c0_i32_114 : i32 to vector<4x8xi32>
    %247 = arith.addi %245, %246 : vector<4x8xi32>
    %248 = arith.cmpi eq, %243, %247 : vector<4x8xi32>
    %249 = arith.extui %248 : vector<4x8xi1> to vector<4x8xi32>
    %250 = arith.sitofp %249 : vector<4x8xi32> to vector<4x8xf32>
    %251 = arith.truncf %250 : vector<4x8xf32> to vector<4x8xbf16>
    %cst_115 = arith.constant dense<0.000000e+00> : vector<4x32xf32>
    %252 = tpu.matmul %251, %224, %cst_115 {dimension_numbers = #tpu.dot_dimension_numbers<[1], [0], [0], [1], [0, 0, 1, 1], [], []>} : vector<4x8xbf16>, vector<8x32xbf16>, vector<4x32xf32> -> vector<4x32xf32>
    %253 = arith.truncf %252 : vector<4x32xf32> to vector<4x32xbf16>
    %c1_116 = arith.constant 1 : index
    %c0_117 = arith.constant 0 : index
    %c0_118 = arith.constant 0 : index
    %254 = vector.load %arg39[%c1_116, %c0_117, %c0_118] : memref<4x32x32xbf16, #tpu.memory_space<vmem>>, vector<1x32x32xbf16>
    %255 = vector.shape_cast %254 : vector<1x32x32xbf16> to vector<32x32xbf16>
    %cst_119 = arith.constant dense<0.000000e+00> : vector<4x32xf32>
    %256 = tpu.matmul %253, %255, %cst_119 {dimension_numbers = #tpu.dot_dimension_numbers<[1], [0], [0], [1], [0, 0, 1, 1], [], []>} : vector<4x32xbf16>, vector<32x32xbf16>, vector<4x32xf32> -> vector<4x32xf32>
    %257 = arith.addf %241, %256 : vector<4x32xf32>
    %258 = tpu.iota {dimensions = array<i32: 0>} : vector<4x8xi32>
    %259 = tpu.iota {dimensions = array<i32: 1>} : vector<4x8xi32>
    %c2_i32_120 = arith.constant 2 : i32
    %260 = vector.broadcast %c2_i32_120 : i32 to vector<4x8xi32>
    %261 = arith.muli %260, %258 : vector<4x8xi32>
    %c1_i32_121 = arith.constant 1 : i32
    %262 = vector.broadcast %c1_i32_121 : i32 to vector<4x8xi32>
    %263 = arith.addi %261, %262 : vector<4x8xi32>
    %264 = arith.cmpi eq, %259, %263 : vector<4x8xi32>
    %265 = arith.extui %264 : vector<4x8xi1> to vector<4x8xi32>
    %266 = arith.sitofp %265 : vector<4x8xi32> to vector<4x8xf32>
    %267 = arith.truncf %266 : vector<4x8xf32> to vector<4x8xbf16>
    %cst_122 = arith.constant dense<0.000000e+00> : vector<4x32xf32>
    %268 = tpu.matmul %267, %224, %cst_122 {dimension_numbers = #tpu.dot_dimension_numbers<[1], [0], [0], [1], [0, 0, 1, 1], [], []>} : vector<4x8xbf16>, vector<8x32xbf16>, vector<4x32xf32> -> vector<4x32xf32>
    %269 = arith.truncf %268 : vector<4x32xf32> to vector<4x32xbf16>
    %c2_123 = arith.constant 2 : index
    %c0_124 = arith.constant 0 : index
    %c0_125 = arith.constant 0 : index
    %270 = vector.load %arg39[%c2_123, %c0_124, %c0_125] : memref<4x32x32xbf16, #tpu.memory_space<vmem>>, vector<1x32x32xbf16>
    %271 = vector.shape_cast %270 : vector<1x32x32xbf16> to vector<32x32xbf16>
    %cst_126 = arith.constant dense<0.000000e+00> : vector<4x32xf32>
    %272 = tpu.matmul %269, %271, %cst_126 {dimension_numbers = #tpu.dot_dimension_numbers<[1], [0], [0], [1], [0, 0, 1, 1], [], []>} : vector<4x32xbf16>, vector<32x32xbf16>, vector<4x32xf32> -> vector<4x32xf32>
    %273 = arith.addf %257, %272 : vector<4x32xf32>
    %274 = tpu.iota {dimensions = array<i32: 0>} : vector<4x8xi32>
    %275 = tpu.iota {dimensions = array<i32: 1>} : vector<4x8xi32>
    %c2_i32_127 = arith.constant 2 : i32
    %276 = vector.broadcast %c2_i32_127 : i32 to vector<4x8xi32>
    %277 = arith.muli %276, %274 : vector<4x8xi32>
    %c2_i32_128 = arith.constant 2 : i32
    %278 = vector.broadcast %c2_i32_128 : i32 to vector<4x8xi32>
    %279 = arith.addi %277, %278 : vector<4x8xi32>
    %280 = arith.cmpi eq, %275, %279 : vector<4x8xi32>
    %281 = arith.extui %280 : vector<4x8xi1> to vector<4x8xi32>
    %282 = arith.sitofp %281 : vector<4x8xi32> to vector<4x8xf32>
    %283 = arith.truncf %282 : vector<4x8xf32> to vector<4x8xbf16>
    %cst_129 = arith.constant dense<0.000000e+00> : vector<4x32xf32>
    %284 = tpu.matmul %283, %224, %cst_129 {dimension_numbers = #tpu.dot_dimension_numbers<[1], [0], [0], [1], [0, 0, 1, 1], [], []>} : vector<4x8xbf16>, vector<8x32xbf16>, vector<4x32xf32> -> vector<4x32xf32>
    %285 = arith.truncf %284 : vector<4x32xf32> to vector<4x32xbf16>
    %c3_130 = arith.constant 3 : index
    %c0_131 = arith.constant 0 : index
    %c0_132 = arith.constant 0 : index
    %286 = vector.load %arg39[%c3_130, %c0_131, %c0_132] : memref<4x32x32xbf16, #tpu.memory_space<vmem>>, vector<1x32x32xbf16>
    %287 = vector.shape_cast %286 : vector<1x32x32xbf16> to vector<32x32xbf16>
    %cst_133 = arith.constant dense<0.000000e+00> : vector<4x32xf32>
    %288 = tpu.matmul %285, %287, %cst_133 {dimension_numbers = #tpu.dot_dimension_numbers<[1], [0], [0], [1], [0, 0, 1, 1], [], []>} : vector<4x32xbf16>, vector<32x32xbf16>, vector<4x32xf32> -> vector<4x32xf32>
    %289 = arith.addf %273, %288 : vector<4x32xf32>
    %c0_134 = arith.constant 0 : index
    %c0_135 = arith.constant 0 : index
    %290 = vector.load %arg38[%c0_134, %c0_135] : memref<1x32xf32, #tpu.memory_space<vmem>>, vector<1x32xf32>
    %291 = vector.broadcast %290 : vector<1x32xf32> to vector<4x32xf32>
    %292 = arith.addf %289, %291 : vector<4x32xf32>
    %cst_136 = arith.constant 0.000000e+00 : f32
    %293 = vector.broadcast %cst_136 : f32 to vector<4x32xf32>
    %294 = arith.maximumf %292, %293 : vector<4x32xf32>
    %295 = arith.truncf %294 : vector<4x32xf32> to vector<4x32xbf16>
    %cst_137 = arith.constant 0.000000e+00 : f32
    %296 = vector.broadcast %cst_137 : f32 to vector<4x32xf32>
    %297 = tpu.iota {dimensions = array<i32: 0>} : vector<4x4xi32>
    %298 = tpu.iota {dimensions = array<i32: 1>} : vector<4x4xi32>
    %c1_i32_138 = arith.constant 1 : i32
    %299 = vector.broadcast %c1_i32_138 : i32 to vector<4x4xi32>
    %300 = arith.muli %299, %297 : vector<4x4xi32>
    %c-3_i32_139 = arith.constant -3 : i32
    %301 = vector.broadcast %c-3_i32_139 : i32 to vector<4x4xi32>
    %302 = arith.addi %300, %301 : vector<4x4xi32>
    %303 = arith.cmpi eq, %298, %302 : vector<4x4xi32>
    %304 = arith.extui %303 : vector<4x4xi1> to vector<4x4xi32>
    %305 = arith.sitofp %304 : vector<4x4xi32> to vector<4x4xf32>
    %306 = arith.truncf %305 : vector<4x4xf32> to vector<4x4xbf16>
    %cst_140 = arith.constant dense<0.000000e+00> : vector<4x32xf32>
    %307 = tpu.matmul %306, %295, %cst_140 {dimension_numbers = #tpu.dot_dimension_numbers<[1], [0], [0], [1], [0, 0, 1, 1], [], []>} : vector<4x4xbf16>, vector<4x32xbf16>, vector<4x32xf32> -> vector<4x32xf32>
    %308 = arith.truncf %307 : vector<4x32xf32> to vector<4x32xbf16>
    %c0_141 = arith.constant 0 : index
    %c0_142 = arith.constant 0 : index
    %c0_143 = arith.constant 0 : index
    %309 = vector.load %arg41[%c0_141, %c0_142, %c0_143] : memref<3x32x32xbf16, #tpu.memory_space<vmem>>, vector<1x32x32xbf16>
    %310 = vector.shape_cast %309 : vector<1x32x32xbf16> to vector<32x32xbf16>
    %cst_144 = arith.constant dense<0.000000e+00> : vector<4x32xf32>
    %311 = tpu.matmul %308, %310, %cst_144 {dimension_numbers = #tpu.dot_dimension_numbers<[1], [0], [0], [1], [0, 0, 1, 1], [], []>} : vector<4x32xbf16>, vector<32x32xbf16>, vector<4x32xf32> -> vector<4x32xf32>
    %312 = arith.addf %296, %311 : vector<4x32xf32>
    %c1_145 = arith.constant 1 : index
    %c0_146 = arith.constant 0 : index
    %c0_147 = arith.constant 0 : index
    %313 = vector.load %arg41[%c1_145, %c0_146, %c0_147] : memref<3x32x32xbf16, #tpu.memory_space<vmem>>, vector<1x32x32xbf16>
    %314 = vector.shape_cast %313 : vector<1x32x32xbf16> to vector<32x32xbf16>
    %cst_148 = arith.constant dense<0.000000e+00> : vector<4x32xf32>
    %315 = tpu.matmul %295, %314, %cst_148 {dimension_numbers = #tpu.dot_dimension_numbers<[1], [0], [0], [1], [0, 0, 1, 1], [], []>} : vector<4x32xbf16>, vector<32x32xbf16>, vector<4x32xf32> -> vector<4x32xf32>
    %316 = arith.addf %312, %315 : vector<4x32xf32>
    %317 = tpu.iota {dimensions = array<i32: 0>} : vector<4x4xi32>
    %318 = tpu.iota {dimensions = array<i32: 1>} : vector<4x4xi32>
    %c1_i32_149 = arith.constant 1 : i32
    %319 = vector.broadcast %c1_i32_149 : i32 to vector<4x4xi32>
    %320 = arith.muli %319, %317 : vector<4x4xi32>
    %c3_i32_150 = arith.constant 3 : i32
    %321 = vector.broadcast %c3_i32_150 : i32 to vector<4x4xi32>
    %322 = arith.addi %320, %321 : vector<4x4xi32>
    %323 = arith.cmpi eq, %318, %322 : vector<4x4xi32>
    %324 = arith.extui %323 : vector<4x4xi1> to vector<4x4xi32>
    %325 = arith.sitofp %324 : vector<4x4xi32> to vector<4x4xf32>
    %326 = arith.truncf %325 : vector<4x4xf32> to vector<4x4xbf16>
    %cst_151 = arith.constant dense<0.000000e+00> : vector<4x32xf32>
    %327 = tpu.matmul %326, %295, %cst_151 {dimension_numbers = #tpu.dot_dimension_numbers<[1], [0], [0], [1], [0, 0, 1, 1], [], []>} : vector<4x4xbf16>, vector<4x32xbf16>, vector<4x32xf32> -> vector<4x32xf32>
    %328 = arith.truncf %327 : vector<4x32xf32> to vector<4x32xbf16>
    %c2_152 = arith.constant 2 : index
    %c0_153 = arith.constant 0 : index
    %c0_154 = arith.constant 0 : index
    %329 = vector.load %arg41[%c2_152, %c0_153, %c0_154] : memref<3x32x32xbf16, #tpu.memory_space<vmem>>, vector<1x32x32xbf16>
    %330 = vector.shape_cast %329 : vector<1x32x32xbf16> to vector<32x32xbf16>
    %cst_155 = arith.constant dense<0.000000e+00> : vector<4x32xf32>
    %331 = tpu.matmul %328, %330, %cst_155 {dimension_numbers = #tpu.dot_dimension_numbers<[1], [0], [0], [1], [0, 0, 1, 1], [], []>} : vector<4x32xbf16>, vector<32x32xbf16>, vector<4x32xf32> -> vector<4x32xf32>
    %332 = arith.addf %316, %331 : vector<4x32xf32>
    %c0_156 = arith.constant 0 : index
    %c0_157 = arith.constant 0 : index
    %333 = vector.load %arg40[%c0_156, %c0_157] : memref<1x32xf32, #tpu.memory_space<vmem>>, vector<1x32xf32>
    %334 = vector.broadcast %333 : vector<1x32xf32> to vector<4x32xf32>
    %335 = arith.addf %332, %334 : vector<4x32xf32>
    %cst_158 = arith.constant 0.000000e+00 : f32
    %336 = vector.broadcast %cst_158 : f32 to vector<4x32xf32>
    %337 = arith.maximumf %335, %336 : vector<4x32xf32>
    %338 = arith.truncf %337 : vector<4x32xf32> to vector<4x32xbf16>
    %cst_159 = arith.constant 0.000000e+00 : f32
    %339 = vector.broadcast %cst_159 : f32 to vector<4x32xf32>
    %c0_160 = arith.constant 0 : index
    %c0_161 = arith.constant 0 : index
    %c0_162 = arith.constant 0 : index
    %340 = vector.load %arg43[%c0_160, %c0_161, %c0_162] : memref<1x32x32xbf16, #tpu.memory_space<vmem>>, vector<1x32x32xbf16>
    %341 = vector.shape_cast %340 : vector<1x32x32xbf16> to vector<32x32xbf16>
    %cst_163 = arith.constant dense<0.000000e+00> : vector<4x32xf32>
    %342 = tpu.matmul %338, %341, %cst_163 {dimension_numbers = #tpu.dot_dimension_numbers<[1], [0], [0], [1], [0, 0, 1, 1], [], []>} : vector<4x32xbf16>, vector<32x32xbf16>, vector<4x32xf32> -> vector<4x32xf32>
    %343 = arith.addf %339, %342 : vector<4x32xf32>
    %c0_164 = arith.constant 0 : index
    %c0_165 = arith.constant 0 : index
    %344 = vector.load %arg42[%c0_164, %c0_165] : memref<1x32xf32, #tpu.memory_space<vmem>>, vector<1x32xf32>
    %345 = vector.broadcast %344 : vector<1x32xf32> to vector<4x32xf32>
    %346 = arith.addf %343, %345 : vector<4x32xf32>
    %347 = arith.addf %292, %346 : vector<4x32xf32>
    %cst_166 = arith.constant 0.000000e+00 : f32
    %348 = vector.broadcast %cst_166 : f32 to vector<4x32xf32>
    %349 = arith.maximumf %347, %348 : vector<4x32xf32>
    %350 = arith.truncf %349 : vector<4x32xf32> to vector<4x32xbf16>
    %cst_167 = arith.constant 0.000000e+00 : f32
    %351 = vector.broadcast %cst_167 : f32 to vector<4x32xf32>
    %352 = tpu.iota {dimensions = array<i32: 0>} : vector<4x4xi32>
    %353 = tpu.iota {dimensions = array<i32: 1>} : vector<4x4xi32>
    %c1_i32_168 = arith.constant 1 : i32
    %354 = vector.broadcast %c1_i32_168 : i32 to vector<4x4xi32>
    %355 = arith.muli %354, %352 : vector<4x4xi32>
    %c-1_i32_169 = arith.constant -1 : i32
    %356 = vector.broadcast %c-1_i32_169 : i32 to vector<4x4xi32>
    %357 = arith.addi %355, %356 : vector<4x4xi32>
    %358 = arith.cmpi eq, %353, %357 : vector<4x4xi32>
    %359 = arith.extui %358 : vector<4x4xi1> to vector<4x4xi32>
    %360 = arith.sitofp %359 : vector<4x4xi32> to vector<4x4xf32>
    %361 = arith.truncf %360 : vector<4x4xf32> to vector<4x4xbf16>
    %cst_170 = arith.constant dense<0.000000e+00> : vector<4x32xf32>
    %362 = tpu.matmul %361, %350, %cst_170 {dimension_numbers = #tpu.dot_dimension_numbers<[1], [0], [0], [1], [0, 0, 1, 1], [], []>} : vector<4x4xbf16>, vector<4x32xbf16>, vector<4x32xf32> -> vector<4x32xf32>
    %363 = arith.truncf %362 : vector<4x32xf32> to vector<4x32xbf16>
    %c0_171 = arith.constant 0 : index
    %c0_172 = arith.constant 0 : index
    %c0_173 = arith.constant 0 : index
    %364 = vector.load %arg45[%c0_171, %c0_172, %c0_173] : memref<3x32x32xbf16, #tpu.memory_space<vmem>>, vector<1x32x32xbf16>
    %365 = vector.shape_cast %364 : vector<1x32x32xbf16> to vector<32x32xbf16>
    %cst_174 = arith.constant dense<0.000000e+00> : vector<4x32xf32>
    %366 = tpu.matmul %363, %365, %cst_174 {dimension_numbers = #tpu.dot_dimension_numbers<[1], [0], [0], [1], [0, 0, 1, 1], [], []>} : vector<4x32xbf16>, vector<32x32xbf16>, vector<4x32xf32> -> vector<4x32xf32>
    %367 = arith.addf %351, %366 : vector<4x32xf32>
    %c1_175 = arith.constant 1 : index
    %c0_176 = arith.constant 0 : index
    %c0_177 = arith.constant 0 : index
    %368 = vector.load %arg45[%c1_175, %c0_176, %c0_177] : memref<3x32x32xbf16, #tpu.memory_space<vmem>>, vector<1x32x32xbf16>
    %369 = vector.shape_cast %368 : vector<1x32x32xbf16> to vector<32x32xbf16>
    %cst_178 = arith.constant dense<0.000000e+00> : vector<4x32xf32>
    %370 = tpu.matmul %350, %369, %cst_178 {dimension_numbers = #tpu.dot_dimension_numbers<[1], [0], [0], [1], [0, 0, 1, 1], [], []>} : vector<4x32xbf16>, vector<32x32xbf16>, vector<4x32xf32> -> vector<4x32xf32>
    %371 = arith.addf %367, %370 : vector<4x32xf32>
    %372 = tpu.iota {dimensions = array<i32: 0>} : vector<4x4xi32>
    %373 = tpu.iota {dimensions = array<i32: 1>} : vector<4x4xi32>
    %c1_i32_179 = arith.constant 1 : i32
    %374 = vector.broadcast %c1_i32_179 : i32 to vector<4x4xi32>
    %375 = arith.muli %374, %372 : vector<4x4xi32>
    %c1_i32_180 = arith.constant 1 : i32
    %376 = vector.broadcast %c1_i32_180 : i32 to vector<4x4xi32>
    %377 = arith.addi %375, %376 : vector<4x4xi32>
    %378 = arith.cmpi eq, %373, %377 : vector<4x4xi32>
    %379 = arith.extui %378 : vector<4x4xi1> to vector<4x4xi32>
    %380 = arith.sitofp %379 : vector<4x4xi32> to vector<4x4xf32>
    %381 = arith.truncf %380 : vector<4x4xf32> to vector<4x4xbf16>
    %cst_181 = arith.constant dense<0.000000e+00> : vector<4x32xf32>
    %382 = tpu.matmul %381, %350, %cst_181 {dimension_numbers = #tpu.dot_dimension_numbers<[1], [0], [0], [1], [0, 0, 1, 1], [], []>} : vector<4x4xbf16>, vector<4x32xbf16>, vector<4x32xf32> -> vector<4x32xf32>
    %383 = arith.truncf %382 : vector<4x32xf32> to vector<4x32xbf16>
    %c2_182 = arith.constant 2 : index
    %c0_183 = arith.constant 0 : index
    %c0_184 = arith.constant 0 : index
    %384 = vector.load %arg45[%c2_182, %c0_183, %c0_184] : memref<3x32x32xbf16, #tpu.memory_space<vmem>>, vector<1x32x32xbf16>
    %385 = vector.shape_cast %384 : vector<1x32x32xbf16> to vector<32x32xbf16>
    %cst_185 = arith.constant dense<0.000000e+00> : vector<4x32xf32>
    %386 = tpu.matmul %383, %385, %cst_185 {dimension_numbers = #tpu.dot_dimension_numbers<[1], [0], [0], [1], [0, 0, 1, 1], [], []>} : vector<4x32xbf16>, vector<32x32xbf16>, vector<4x32xf32> -> vector<4x32xf32>
    %387 = arith.addf %371, %386 : vector<4x32xf32>
    %c0_186 = arith.constant 0 : index
    %c0_187 = arith.constant 0 : index
    %388 = vector.load %arg44[%c0_186, %c0_187] : memref<1x32xf32, #tpu.memory_space<vmem>>, vector<1x32xf32>
    %389 = vector.broadcast %388 : vector<1x32xf32> to vector<4x32xf32>
    %390 = arith.addf %387, %389 : vector<4x32xf32>
    %cst_188 = arith.constant 0.000000e+00 : f32
    %391 = vector.broadcast %cst_188 : f32 to vector<4x32xf32>
    %392 = arith.maximumf %390, %391 : vector<4x32xf32>
    %393 = arith.truncf %392 : vector<4x32xf32> to vector<4x32xbf16>
    %cst_189 = arith.constant 0.000000e+00 : f32
    %394 = vector.broadcast %cst_189 : f32 to vector<4x32xf32>
    %c0_190 = arith.constant 0 : index
    %c0_191 = arith.constant 0 : index
    %c0_192 = arith.constant 0 : index
    %395 = vector.load %arg47[%c0_190, %c0_191, %c0_192] : memref<1x32x32xbf16, #tpu.memory_space<vmem>>, vector<1x32x32xbf16>
    %396 = vector.shape_cast %395 : vector<1x32x32xbf16> to vector<32x32xbf16>
    %cst_193 = arith.constant dense<0.000000e+00> : vector<4x32xf32>
    %397 = tpu.matmul %393, %396, %cst_193 {dimension_numbers = #tpu.dot_dimension_numbers<[1], [0], [0], [1], [0, 0, 1, 1], [], []>} : vector<4x32xbf16>, vector<32x32xbf16>, vector<4x32xf32> -> vector<4x32xf32>
    %398 = arith.addf %394, %397 : vector<4x32xf32>
    %c0_194 = arith.constant 0 : index
    %c0_195 = arith.constant 0 : index
    %399 = vector.load %arg46[%c0_194, %c0_195] : memref<1x32xf32, #tpu.memory_space<vmem>>, vector<1x32xf32>
    %400 = vector.broadcast %399 : vector<1x32xf32> to vector<4x32xf32>
    %401 = arith.addf %398, %400 : vector<4x32xf32>
    %402 = arith.addf %347, %401 : vector<4x32xf32>
    %403 = arith.truncf %402 : vector<4x32xf32> to vector<4x32xbf16>
    %cst_196 = arith.constant 0.000000e+00 : f32
    %404 = vector.broadcast %cst_196 : f32 to vector<4x32xf32>
    %405 = tpu.iota {dimensions = array<i32: 0>} : vector<4x4xi32>
    %406 = tpu.iota {dimensions = array<i32: 1>} : vector<4x4xi32>
    %c1_i32_197 = arith.constant 1 : i32
    %407 = vector.broadcast %c1_i32_197 : i32 to vector<4x4xi32>
    %408 = arith.muli %407, %405 : vector<4x4xi32>
    %c-1_i32_198 = arith.constant -1 : i32
    %409 = vector.broadcast %c-1_i32_198 : i32 to vector<4x4xi32>
    %410 = arith.addi %408, %409 : vector<4x4xi32>
    %411 = arith.cmpi eq, %406, %410 : vector<4x4xi32>
    %412 = arith.extui %411 : vector<4x4xi1> to vector<4x4xi32>
    %413 = arith.sitofp %412 : vector<4x4xi32> to vector<4x4xf32>
    %414 = arith.truncf %413 : vector<4x4xf32> to vector<4x4xbf16>
    %cst_199 = arith.constant dense<0.000000e+00> : vector<4x32xf32>
    %415 = tpu.matmul %414, %403, %cst_199 {dimension_numbers = #tpu.dot_dimension_numbers<[1], [0], [0], [1], [0, 0, 1, 1], [], []>} : vector<4x4xbf16>, vector<4x32xbf16>, vector<4x32xf32> -> vector<4x32xf32>
    %416 = arith.truncf %415 : vector<4x32xf32> to vector<4x32xbf16>
    %c0_200 = arith.constant 0 : index
    %c0_201 = arith.constant 0 : index
    %c0_202 = arith.constant 0 : index
    %417 = vector.load %arg51[%c0_200, %c0_201, %c0_202] : memref<3x32x32xbf16, #tpu.memory_space<vmem>>, vector<1x32x32xbf16>
    %418 = vector.shape_cast %417 : vector<1x32x32xbf16> to vector<32x32xbf16>
    %cst_203 = arith.constant dense<0.000000e+00> : vector<4x32xf32>
    %419 = tpu.matmul %416, %418, %cst_203 {dimension_numbers = #tpu.dot_dimension_numbers<[1], [0], [0], [1], [0, 0, 1, 1], [], []>} : vector<4x32xbf16>, vector<32x32xbf16>, vector<4x32xf32> -> vector<4x32xf32>
    %420 = arith.addf %404, %419 : vector<4x32xf32>
    %c1_204 = arith.constant 1 : index
    %c0_205 = arith.constant 0 : index
    %c0_206 = arith.constant 0 : index
    %421 = vector.load %arg51[%c1_204, %c0_205, %c0_206] : memref<3x32x32xbf16, #tpu.memory_space<vmem>>, vector<1x32x32xbf16>
    %422 = vector.shape_cast %421 : vector<1x32x32xbf16> to vector<32x32xbf16>
    %cst_207 = arith.constant dense<0.000000e+00> : vector<4x32xf32>
    %423 = tpu.matmul %403, %422, %cst_207 {dimension_numbers = #tpu.dot_dimension_numbers<[1], [0], [0], [1], [0, 0, 1, 1], [], []>} : vector<4x32xbf16>, vector<32x32xbf16>, vector<4x32xf32> -> vector<4x32xf32>
    %424 = arith.addf %420, %423 : vector<4x32xf32>
    %425 = tpu.iota {dimensions = array<i32: 0>} : vector<4x4xi32>
    %426 = tpu.iota {dimensions = array<i32: 1>} : vector<4x4xi32>
    %c1_i32_208 = arith.constant 1 : i32
    %427 = vector.broadcast %c1_i32_208 : i32 to vector<4x4xi32>
    %428 = arith.muli %427, %425 : vector<4x4xi32>
    %c1_i32_209 = arith.constant 1 : i32
    %429 = vector.broadcast %c1_i32_209 : i32 to vector<4x4xi32>
    %430 = arith.addi %428, %429 : vector<4x4xi32>
    %431 = arith.cmpi eq, %426, %430 : vector<4x4xi32>
    %432 = arith.extui %431 : vector<4x4xi1> to vector<4x4xi32>
    %433 = arith.sitofp %432 : vector<4x4xi32> to vector<4x4xf32>
    %434 = arith.truncf %433 : vector<4x4xf32> to vector<4x4xbf16>
    %cst_210 = arith.constant dense<0.000000e+00> : vector<4x32xf32>
    %435 = tpu.matmul %434, %403, %cst_210 {dimension_numbers = #tpu.dot_dimension_numbers<[1], [0], [0], [1], [0, 0, 1, 1], [], []>} : vector<4x4xbf16>, vector<4x32xbf16>, vector<4x32xf32> -> vector<4x32xf32>
    %436 = arith.truncf %435 : vector<4x32xf32> to vector<4x32xbf16>
    %c2_211 = arith.constant 2 : index
    %c0_212 = arith.constant 0 : index
    %c0_213 = arith.constant 0 : index
    %437 = vector.load %arg51[%c2_211, %c0_212, %c0_213] : memref<3x32x32xbf16, #tpu.memory_space<vmem>>, vector<1x32x32xbf16>
    %438 = vector.shape_cast %437 : vector<1x32x32xbf16> to vector<32x32xbf16>
    %cst_214 = arith.constant dense<0.000000e+00> : vector<4x32xf32>
    %439 = tpu.matmul %436, %438, %cst_214 {dimension_numbers = #tpu.dot_dimension_numbers<[1], [0], [0], [1], [0, 0, 1, 1], [], []>} : vector<4x32xbf16>, vector<32x32xbf16>, vector<4x32xf32> -> vector<4x32xf32>
    %440 = arith.addf %424, %439 : vector<4x32xf32>
    %c0_215 = arith.constant 0 : index
    %c0_216 = arith.constant 0 : index
    %441 = vector.load %arg50[%c0_215, %c0_216] : memref<1x32xf32, #tpu.memory_space<vmem>>, vector<1x32xf32>
    %442 = vector.broadcast %441 : vector<1x32xf32> to vector<4x32xf32>
    %443 = arith.addf %440, %442 : vector<4x32xf32>
    %444 = arith.truncf %443 : vector<4x32xf32> to vector<4x32xbf16>
    %c0_217 = arith.constant 0 : index
    %c0_218 = arith.constant 0 : index
    %445 = vector.load %arg52[%c0_217, %c0_218] : memref<1x64xf32, #tpu.memory_space<vmem>>, vector<1x64xf32>
    %c0_219 = arith.constant 0 : index
    %c0_220 = arith.constant 0 : index
    %446 = vector.load %arg54[%c0_219, %c0_220] : memref<32x64xbf16, #tpu.memory_space<vmem>>, vector<32x64xbf16>
    %cst_221 = arith.constant dense<0.000000e+00> : vector<4x64xf32>
    %447 = tpu.matmul %444, %446, %cst_221 {dimension_numbers = #tpu.dot_dimension_numbers<[1], [0], [0], [1], [0, 0, 1, 1], [], []>} : vector<4x32xbf16>, vector<32x64xbf16>, vector<4x64xf32> -> vector<4x64xf32>
    %cst_222 = arith.constant 2.000000e+00 : f32
    %448 = vector.broadcast %cst_222 : f32 to vector<4x64xf32>
    %449 = arith.mulf %448, %447 : vector<4x64xf32>
    %450 = vector.broadcast %445 : vector<1x64xf32> to vector<4x64xf32>
    %451 = arith.subf %450, %449 : vector<4x64xf32>
    %452 = tpu.iota {dimensions = array<i32: 1>} : vector<4x64xi32>
    %453 = arith.sitofp %452 : vector<4x64xi32> to vector<4x64xf32>
    %cst_223 = arith.constant dense<0x7F800000> : vector<4xf32>
    %454 = vector.multi_reduction <minimumf>, %451, %cst_223 [1] : vector<4x64xf32> to vector<4xf32>
    %455 = vector.shape_cast %454 : vector<4xf32> to vector<4x1xf32>
    %456 = vector.broadcast %455 : vector<4x1xf32> to vector<4x64xf32>
    %457 = arith.cmpf ole, %451, %456 : vector<4x64xf32>
    %cst_224 = arith.constant 6.400000e+01 : f32
    %458 = vector.broadcast %cst_224 : f32 to vector<4x64xf32>
    %459 = arith.select %457, %453, %458 : vector<4x64xi1>, vector<4x64xf32>
    %cst_225 = arith.constant dense<0x7F800000> : vector<4xf32>
    %460 = vector.multi_reduction <minimumf>, %459, %cst_225 [1] : vector<4x64xf32> to vector<4xf32>
    %461 = vector.shape_cast %460 : vector<4xf32> to vector<4x1xf32>
    %462 = vector.broadcast %461 : vector<4x1xf32> to vector<4x64xf32>
    %463 = arith.cmpf oeq, %453, %462 : vector<4x64xf32>
    %464 = arith.extui %463 : vector<4x64xi1> to vector<4x64xi32>
    %465 = arith.sitofp %464 : vector<4x64xi32> to vector<4x64xf32>
    %466 = arith.truncf %465 : vector<4x64xf32> to vector<4x64xbf16>
    %c0_226 = arith.constant 0 : index
    %c0_227 = arith.constant 0 : index
    %467 = vector.load %arg53[%c0_226, %c0_227] : memref<64x32xbf16, #tpu.memory_space<vmem>>, vector<64x32xbf16>
    %cst_228 = arith.constant dense<0.000000e+00> : vector<4x32xf32>
    %468 = tpu.matmul %466, %467, %cst_228 {dimension_numbers = #tpu.dot_dimension_numbers<[1], [0], [0], [1], [0, 0, 1, 1], [], []>} : vector<4x64xbf16>, vector<64x32xbf16>, vector<4x32xf32> -> vector<4x32xf32>
    %cst_229 = arith.constant dense<0.000000e+00> : vector<64xf32>
    %469 = vector.multi_reduction <add>, %465, %cst_229 [0] : vector<4x64xf32> to vector<64xf32>
    %470 = vector.shape_cast %469 : vector<64xf32> to vector<1x64xf32>
    %471 = arith.subf %443, %468 : vector<4x32xf32>
    %472 = arith.mulf %471, %471 : vector<4x32xf32>
    %473 = vector.shape_cast %472 : vector<4x32xf32> to vector<1x4x32xf32>
    %cst_230 = arith.constant dense<0.000000e+00> : vector<1xf32>
    %474 = vector.multi_reduction <add>, %473, %cst_230 [1, 2] : vector<1x4x32xf32> to vector<1xf32>
    %475 = vector.shape_cast %474 : vector<1xf32> to vector<1x1x1xf32>
    %476 = vector.extract %475[0, 0, 0] : f32 from vector<1x1x1xf32>
    %477 = vector.broadcast %476 : f32 to vector<1x1xf32>
    %478 = arith.truncf %468 : vector<4x32xf32> to vector<4x32xbf16>
    %cst_231 = arith.constant 0.000000e+00 : f32
    %479 = vector.broadcast %cst_231 : f32 to vector<4x32xf32>
    %480 = tpu.iota {dimensions = array<i32: 0>} : vector<4x4xi32>
    %481 = tpu.iota {dimensions = array<i32: 1>} : vector<4x4xi32>
    %c1_i32_232 = arith.constant 1 : i32
    %482 = vector.broadcast %c1_i32_232 : i32 to vector<4x4xi32>
    %483 = arith.muli %482, %480 : vector<4x4xi32>
    %c-1_i32_233 = arith.constant -1 : i32
    %484 = vector.broadcast %c-1_i32_233 : i32 to vector<4x4xi32>
    %485 = arith.addi %483, %484 : vector<4x4xi32>
    %486 = arith.cmpi eq, %481, %485 : vector<4x4xi32>
    %487 = arith.extui %486 : vector<4x4xi1> to vector<4x4xi32>
    %488 = arith.sitofp %487 : vector<4x4xi32> to vector<4x4xf32>
    %489 = arith.truncf %488 : vector<4x4xf32> to vector<4x4xbf16>
    %cst_234 = arith.constant dense<0.000000e+00> : vector<4x32xf32>
    %490 = tpu.matmul %489, %478, %cst_234 {dimension_numbers = #tpu.dot_dimension_numbers<[1], [0], [0], [1], [0, 0, 1, 1], [], []>} : vector<4x4xbf16>, vector<4x32xbf16>, vector<4x32xf32> -> vector<4x32xf32>
    %491 = arith.truncf %490 : vector<4x32xf32> to vector<4x32xbf16>
    %c0_235 = arith.constant 0 : index
    %c0_236 = arith.constant 0 : index
    %c0_237 = arith.constant 0 : index
    %492 = vector.load %arg3[%c0_235, %c0_236, %c0_237] : memref<3x32x32xbf16, #tpu.memory_space<vmem>>, vector<1x32x32xbf16>
    %493 = vector.shape_cast %492 : vector<1x32x32xbf16> to vector<32x32xbf16>
    %cst_238 = arith.constant dense<0.000000e+00> : vector<4x32xf32>
    %494 = tpu.matmul %491, %493, %cst_238 {dimension_numbers = #tpu.dot_dimension_numbers<[1], [0], [0], [1], [0, 0, 1, 1], [], []>} : vector<4x32xbf16>, vector<32x32xbf16>, vector<4x32xf32> -> vector<4x32xf32>
    %495 = arith.addf %479, %494 : vector<4x32xf32>
    %c1_239 = arith.constant 1 : index
    %c0_240 = arith.constant 0 : index
    %c0_241 = arith.constant 0 : index
    %496 = vector.load %arg3[%c1_239, %c0_240, %c0_241] : memref<3x32x32xbf16, #tpu.memory_space<vmem>>, vector<1x32x32xbf16>
    %497 = vector.shape_cast %496 : vector<1x32x32xbf16> to vector<32x32xbf16>
    %cst_242 = arith.constant dense<0.000000e+00> : vector<4x32xf32>
    %498 = tpu.matmul %478, %497, %cst_242 {dimension_numbers = #tpu.dot_dimension_numbers<[1], [0], [0], [1], [0, 0, 1, 1], [], []>} : vector<4x32xbf16>, vector<32x32xbf16>, vector<4x32xf32> -> vector<4x32xf32>
    %499 = arith.addf %495, %498 : vector<4x32xf32>
    %500 = tpu.iota {dimensions = array<i32: 0>} : vector<4x4xi32>
    %501 = tpu.iota {dimensions = array<i32: 1>} : vector<4x4xi32>
    %c1_i32_243 = arith.constant 1 : i32
    %502 = vector.broadcast %c1_i32_243 : i32 to vector<4x4xi32>
    %503 = arith.muli %502, %500 : vector<4x4xi32>
    %c1_i32_244 = arith.constant 1 : i32
    %504 = vector.broadcast %c1_i32_244 : i32 to vector<4x4xi32>
    %505 = arith.addi %503, %504 : vector<4x4xi32>
    %506 = arith.cmpi eq, %501, %505 : vector<4x4xi32>
    %507 = arith.extui %506 : vector<4x4xi1> to vector<4x4xi32>
    %508 = arith.sitofp %507 : vector<4x4xi32> to vector<4x4xf32>
    %509 = arith.truncf %508 : vector<4x4xf32> to vector<4x4xbf16>
    %cst_245 = arith.constant dense<0.000000e+00> : vector<4x32xf32>
    %510 = tpu.matmul %509, %478, %cst_245 {dimension_numbers = #tpu.dot_dimension_numbers<[1], [0], [0], [1], [0, 0, 1, 1], [], []>} : vector<4x4xbf16>, vector<4x32xbf16>, vector<4x32xf32> -> vector<4x32xf32>
    %511 = arith.truncf %510 : vector<4x32xf32> to vector<4x32xbf16>
    %c2_246 = arith.constant 2 : index
    %c0_247 = arith.constant 0 : index
    %c0_248 = arith.constant 0 : index
    %512 = vector.load %arg3[%c2_246, %c0_247, %c0_248] : memref<3x32x32xbf16, #tpu.memory_space<vmem>>, vector<1x32x32xbf16>
    %513 = vector.shape_cast %512 : vector<1x32x32xbf16> to vector<32x32xbf16>
    %cst_249 = arith.constant dense<0.000000e+00> : vector<4x32xf32>
    %514 = tpu.matmul %511, %513, %cst_249 {dimension_numbers = #tpu.dot_dimension_numbers<[1], [0], [0], [1], [0, 0, 1, 1], [], []>} : vector<4x32xbf16>, vector<32x32xbf16>, vector<4x32xf32> -> vector<4x32xf32>
    %515 = arith.addf %499, %514 : vector<4x32xf32>
    %c0_250 = arith.constant 0 : index
    %c0_251 = arith.constant 0 : index
    %516 = vector.load %arg2[%c0_250, %c0_251] : memref<1x32xf32, #tpu.memory_space<vmem>>, vector<1x32xf32>
    %517 = vector.broadcast %516 : vector<1x32xf32> to vector<4x32xf32>
    %518 = arith.addf %515, %517 : vector<4x32xf32>
    %cst_252 = arith.constant 0.000000e+00 : f32
    %519 = vector.broadcast %cst_252 : f32 to vector<4x32xf32>
    %520 = arith.maximumf %518, %519 : vector<4x32xf32>
    %cst_253 = arith.constant 0.000000e+00 : f32
    %521 = vector.broadcast %cst_253 : f32 to vector<4x32xf32>
    %522 = arith.maximumf %520, %521 : vector<4x32xf32>
    %523 = arith.truncf %522 : vector<4x32xf32> to vector<4x32xbf16>
    %cst_254 = arith.constant 0.000000e+00 : f32
    %524 = vector.broadcast %cst_254 : f32 to vector<4x32xf32>
    %525 = tpu.iota {dimensions = array<i32: 0>} : vector<4x4xi32>
    %526 = tpu.iota {dimensions = array<i32: 1>} : vector<4x4xi32>
    %c1_i32_255 = arith.constant 1 : i32
    %527 = vector.broadcast %c1_i32_255 : i32 to vector<4x4xi32>
    %528 = arith.muli %527, %525 : vector<4x4xi32>
    %c-3_i32_256 = arith.constant -3 : i32
    %529 = vector.broadcast %c-3_i32_256 : i32 to vector<4x4xi32>
    %530 = arith.addi %528, %529 : vector<4x4xi32>
    %531 = arith.cmpi eq, %526, %530 : vector<4x4xi32>
    %532 = arith.extui %531 : vector<4x4xi1> to vector<4x4xi32>
    %533 = arith.sitofp %532 : vector<4x4xi32> to vector<4x4xf32>
    %534 = arith.truncf %533 : vector<4x4xf32> to vector<4x4xbf16>
    %cst_257 = arith.constant dense<0.000000e+00> : vector<4x32xf32>
    %535 = tpu.matmul %534, %523, %cst_257 {dimension_numbers = #tpu.dot_dimension_numbers<[1], [0], [0], [1], [0, 0, 1, 1], [], []>} : vector<4x4xbf16>, vector<4x32xbf16>, vector<4x32xf32> -> vector<4x32xf32>
    %536 = arith.truncf %535 : vector<4x32xf32> to vector<4x32xbf16>
    %c0_258 = arith.constant 0 : index
    %c0_259 = arith.constant 0 : index
    %c0_260 = arith.constant 0 : index
    %537 = vector.load %arg11[%c0_258, %c0_259, %c0_260] : memref<3x32x32xbf16, #tpu.memory_space<vmem>>, vector<1x32x32xbf16>
    %538 = vector.shape_cast %537 : vector<1x32x32xbf16> to vector<32x32xbf16>
    %cst_261 = arith.constant dense<0.000000e+00> : vector<4x32xf32>
    %539 = tpu.matmul %536, %538, %cst_261 {dimension_numbers = #tpu.dot_dimension_numbers<[1], [0], [0], [1], [0, 0, 1, 1], [], []>} : vector<4x32xbf16>, vector<32x32xbf16>, vector<4x32xf32> -> vector<4x32xf32>
    %540 = arith.addf %524, %539 : vector<4x32xf32>
    %c1_262 = arith.constant 1 : index
    %c0_263 = arith.constant 0 : index
    %c0_264 = arith.constant 0 : index
    %541 = vector.load %arg11[%c1_262, %c0_263, %c0_264] : memref<3x32x32xbf16, #tpu.memory_space<vmem>>, vector<1x32x32xbf16>
    %542 = vector.shape_cast %541 : vector<1x32x32xbf16> to vector<32x32xbf16>
    %cst_265 = arith.constant dense<0.000000e+00> : vector<4x32xf32>
    %543 = tpu.matmul %523, %542, %cst_265 {dimension_numbers = #tpu.dot_dimension_numbers<[1], [0], [0], [1], [0, 0, 1, 1], [], []>} : vector<4x32xbf16>, vector<32x32xbf16>, vector<4x32xf32> -> vector<4x32xf32>
    %544 = arith.addf %540, %543 : vector<4x32xf32>
    %545 = tpu.iota {dimensions = array<i32: 0>} : vector<4x4xi32>
    %546 = tpu.iota {dimensions = array<i32: 1>} : vector<4x4xi32>
    %c1_i32_266 = arith.constant 1 : i32
    %547 = vector.broadcast %c1_i32_266 : i32 to vector<4x4xi32>
    %548 = arith.muli %547, %545 : vector<4x4xi32>
    %c3_i32_267 = arith.constant 3 : i32
    %549 = vector.broadcast %c3_i32_267 : i32 to vector<4x4xi32>
    %550 = arith.addi %548, %549 : vector<4x4xi32>
    %551 = arith.cmpi eq, %546, %550 : vector<4x4xi32>
    %552 = arith.extui %551 : vector<4x4xi1> to vector<4x4xi32>
    %553 = arith.sitofp %552 : vector<4x4xi32> to vector<4x4xf32>
    %554 = arith.truncf %553 : vector<4x4xf32> to vector<4x4xbf16>
    %cst_268 = arith.constant dense<0.000000e+00> : vector<4x32xf32>
    %555 = tpu.matmul %554, %523, %cst_268 {dimension_numbers = #tpu.dot_dimension_numbers<[1], [0], [0], [1], [0, 0, 1, 1], [], []>} : vector<4x4xbf16>, vector<4x32xbf16>, vector<4x32xf32> -> vector<4x32xf32>
    %556 = arith.truncf %555 : vector<4x32xf32> to vector<4x32xbf16>
    %c2_269 = arith.constant 2 : index
    %c0_270 = arith.constant 0 : index
    %c0_271 = arith.constant 0 : index
    %557 = vector.load %arg11[%c2_269, %c0_270, %c0_271] : memref<3x32x32xbf16, #tpu.memory_space<vmem>>, vector<1x32x32xbf16>
    %558 = vector.shape_cast %557 : vector<1x32x32xbf16> to vector<32x32xbf16>
    %cst_272 = arith.constant dense<0.000000e+00> : vector<4x32xf32>
    %559 = tpu.matmul %556, %558, %cst_272 {dimension_numbers = #tpu.dot_dimension_numbers<[1], [0], [0], [1], [0, 0, 1, 1], [], []>} : vector<4x32xbf16>, vector<32x32xbf16>, vector<4x32xf32> -> vector<4x32xf32>
    %560 = arith.addf %544, %559 : vector<4x32xf32>
    %c0_273 = arith.constant 0 : index
    %c0_274 = arith.constant 0 : index
    %561 = vector.load %arg10[%c0_273, %c0_274] : memref<1x32xf32, #tpu.memory_space<vmem>>, vector<1x32xf32>
    %562 = vector.broadcast %561 : vector<1x32xf32> to vector<4x32xf32>
    %563 = arith.addf %560, %562 : vector<4x32xf32>
    %cst_275 = arith.constant 0.000000e+00 : f32
    %564 = vector.broadcast %cst_275 : f32 to vector<4x32xf32>
    %565 = arith.maximumf %563, %564 : vector<4x32xf32>
    %566 = arith.truncf %565 : vector<4x32xf32> to vector<4x32xbf16>
    %cst_276 = arith.constant 0.000000e+00 : f32
    %567 = vector.broadcast %cst_276 : f32 to vector<4x32xf32>
    %c0_277 = arith.constant 0 : index
    %c0_278 = arith.constant 0 : index
    %c0_279 = arith.constant 0 : index
    %568 = vector.load %arg13[%c0_277, %c0_278, %c0_279] : memref<1x32x32xbf16, #tpu.memory_space<vmem>>, vector<1x32x32xbf16>
    %569 = vector.shape_cast %568 : vector<1x32x32xbf16> to vector<32x32xbf16>
    %cst_280 = arith.constant dense<0.000000e+00> : vector<4x32xf32>
    %570 = tpu.matmul %566, %569, %cst_280 {dimension_numbers = #tpu.dot_dimension_numbers<[1], [0], [0], [1], [0, 0, 1, 1], [], []>} : vector<4x32xbf16>, vector<32x32xbf16>, vector<4x32xf32> -> vector<4x32xf32>
    %571 = arith.addf %567, %570 : vector<4x32xf32>
    %c0_281 = arith.constant 0 : index
    %c0_282 = arith.constant 0 : index
    %572 = vector.load %arg12[%c0_281, %c0_282] : memref<1x32xf32, #tpu.memory_space<vmem>>, vector<1x32xf32>
    %573 = vector.broadcast %572 : vector<1x32xf32> to vector<4x32xf32>
    %574 = arith.addf %571, %573 : vector<4x32xf32>
    %575 = arith.addf %520, %574 : vector<4x32xf32>
    %cst_283 = arith.constant 0.000000e+00 : f32
    %576 = vector.broadcast %cst_283 : f32 to vector<4x32xf32>
    %577 = arith.maximumf %575, %576 : vector<4x32xf32>
    %578 = arith.truncf %577 : vector<4x32xf32> to vector<4x32xbf16>
    %cst_284 = arith.constant 0.000000e+00 : f32
    %579 = vector.broadcast %cst_284 : f32 to vector<4x32xf32>
    %580 = tpu.iota {dimensions = array<i32: 0>} : vector<4x4xi32>
    %581 = tpu.iota {dimensions = array<i32: 1>} : vector<4x4xi32>
    %c1_i32_285 = arith.constant 1 : i32
    %582 = vector.broadcast %c1_i32_285 : i32 to vector<4x4xi32>
    %583 = arith.muli %582, %580 : vector<4x4xi32>
    %c-1_i32_286 = arith.constant -1 : i32
    %584 = vector.broadcast %c-1_i32_286 : i32 to vector<4x4xi32>
    %585 = arith.addi %583, %584 : vector<4x4xi32>
    %586 = arith.cmpi eq, %581, %585 : vector<4x4xi32>
    %587 = arith.extui %586 : vector<4x4xi1> to vector<4x4xi32>
    %588 = arith.sitofp %587 : vector<4x4xi32> to vector<4x4xf32>
    %589 = arith.truncf %588 : vector<4x4xf32> to vector<4x4xbf16>
    %cst_287 = arith.constant dense<0.000000e+00> : vector<4x32xf32>
    %590 = tpu.matmul %589, %578, %cst_287 {dimension_numbers = #tpu.dot_dimension_numbers<[1], [0], [0], [1], [0, 0, 1, 1], [], []>} : vector<4x4xbf16>, vector<4x32xbf16>, vector<4x32xf32> -> vector<4x32xf32>
    %591 = arith.truncf %590 : vector<4x32xf32> to vector<4x32xbf16>
    %c0_288 = arith.constant 0 : index
    %c0_289 = arith.constant 0 : index
    %c0_290 = arith.constant 0 : index
    %592 = vector.load %arg15[%c0_288, %c0_289, %c0_290] : memref<3x32x32xbf16, #tpu.memory_space<vmem>>, vector<1x32x32xbf16>
    %593 = vector.shape_cast %592 : vector<1x32x32xbf16> to vector<32x32xbf16>
    %cst_291 = arith.constant dense<0.000000e+00> : vector<4x32xf32>
    %594 = tpu.matmul %591, %593, %cst_291 {dimension_numbers = #tpu.dot_dimension_numbers<[1], [0], [0], [1], [0, 0, 1, 1], [], []>} : vector<4x32xbf16>, vector<32x32xbf16>, vector<4x32xf32> -> vector<4x32xf32>
    %595 = arith.addf %579, %594 : vector<4x32xf32>
    %c1_292 = arith.constant 1 : index
    %c0_293 = arith.constant 0 : index
    %c0_294 = arith.constant 0 : index
    %596 = vector.load %arg15[%c1_292, %c0_293, %c0_294] : memref<3x32x32xbf16, #tpu.memory_space<vmem>>, vector<1x32x32xbf16>
    %597 = vector.shape_cast %596 : vector<1x32x32xbf16> to vector<32x32xbf16>
    %cst_295 = arith.constant dense<0.000000e+00> : vector<4x32xf32>
    %598 = tpu.matmul %578, %597, %cst_295 {dimension_numbers = #tpu.dot_dimension_numbers<[1], [0], [0], [1], [0, 0, 1, 1], [], []>} : vector<4x32xbf16>, vector<32x32xbf16>, vector<4x32xf32> -> vector<4x32xf32>
    %599 = arith.addf %595, %598 : vector<4x32xf32>
    %600 = tpu.iota {dimensions = array<i32: 0>} : vector<4x4xi32>
    %601 = tpu.iota {dimensions = array<i32: 1>} : vector<4x4xi32>
    %c1_i32_296 = arith.constant 1 : i32
    %602 = vector.broadcast %c1_i32_296 : i32 to vector<4x4xi32>
    %603 = arith.muli %602, %600 : vector<4x4xi32>
    %c1_i32_297 = arith.constant 1 : i32
    %604 = vector.broadcast %c1_i32_297 : i32 to vector<4x4xi32>
    %605 = arith.addi %603, %604 : vector<4x4xi32>
    %606 = arith.cmpi eq, %601, %605 : vector<4x4xi32>
    %607 = arith.extui %606 : vector<4x4xi1> to vector<4x4xi32>
    %608 = arith.sitofp %607 : vector<4x4xi32> to vector<4x4xf32>
    %609 = arith.truncf %608 : vector<4x4xf32> to vector<4x4xbf16>
    %cst_298 = arith.constant dense<0.000000e+00> : vector<4x32xf32>
    %610 = tpu.matmul %609, %578, %cst_298 {dimension_numbers = #tpu.dot_dimension_numbers<[1], [0], [0], [1], [0, 0, 1, 1], [], []>} : vector<4x4xbf16>, vector<4x32xbf16>, vector<4x32xf32> -> vector<4x32xf32>
    %611 = arith.truncf %610 : vector<4x32xf32> to vector<4x32xbf16>
    %c2_299 = arith.constant 2 : index
    %c0_300 = arith.constant 0 : index
    %c0_301 = arith.constant 0 : index
    %612 = vector.load %arg15[%c2_299, %c0_300, %c0_301] : memref<3x32x32xbf16, #tpu.memory_space<vmem>>, vector<1x32x32xbf16>
    %613 = vector.shape_cast %612 : vector<1x32x32xbf16> to vector<32x32xbf16>
    %cst_302 = arith.constant dense<0.000000e+00> : vector<4x32xf32>
    %614 = tpu.matmul %611, %613, %cst_302 {dimension_numbers = #tpu.dot_dimension_numbers<[1], [0], [0], [1], [0, 0, 1, 1], [], []>} : vector<4x32xbf16>, vector<32x32xbf16>, vector<4x32xf32> -> vector<4x32xf32>
    %615 = arith.addf %599, %614 : vector<4x32xf32>
    %c0_303 = arith.constant 0 : index
    %c0_304 = arith.constant 0 : index
    %616 = vector.load %arg14[%c0_303, %c0_304] : memref<1x32xf32, #tpu.memory_space<vmem>>, vector<1x32xf32>
    %617 = vector.broadcast %616 : vector<1x32xf32> to vector<4x32xf32>
    %618 = arith.addf %615, %617 : vector<4x32xf32>
    %cst_305 = arith.constant 0.000000e+00 : f32
    %619 = vector.broadcast %cst_305 : f32 to vector<4x32xf32>
    %620 = arith.maximumf %618, %619 : vector<4x32xf32>
    %621 = arith.truncf %620 : vector<4x32xf32> to vector<4x32xbf16>
    %cst_306 = arith.constant 0.000000e+00 : f32
    %622 = vector.broadcast %cst_306 : f32 to vector<4x32xf32>
    %c0_307 = arith.constant 0 : index
    %c0_308 = arith.constant 0 : index
    %c0_309 = arith.constant 0 : index
    %623 = vector.load %arg17[%c0_307, %c0_308, %c0_309] : memref<1x32x32xbf16, #tpu.memory_space<vmem>>, vector<1x32x32xbf16>
    %624 = vector.shape_cast %623 : vector<1x32x32xbf16> to vector<32x32xbf16>
    %cst_310 = arith.constant dense<0.000000e+00> : vector<4x32xf32>
    %625 = tpu.matmul %621, %624, %cst_310 {dimension_numbers = #tpu.dot_dimension_numbers<[1], [0], [0], [1], [0, 0, 1, 1], [], []>} : vector<4x32xbf16>, vector<32x32xbf16>, vector<4x32xf32> -> vector<4x32xf32>
    %626 = arith.addf %622, %625 : vector<4x32xf32>
    %c0_311 = arith.constant 0 : index
    %c0_312 = arith.constant 0 : index
    %627 = vector.load %arg16[%c0_311, %c0_312] : memref<1x32xf32, #tpu.memory_space<vmem>>, vector<1x32xf32>
    %628 = vector.broadcast %627 : vector<1x32xf32> to vector<4x32xf32>
    %629 = arith.addf %626, %628 : vector<4x32xf32>
    %630 = arith.addf %575, %629 : vector<4x32xf32>
    %631 = tpu.iota {dimensions = array<i32: 0>} : vector<8x4xi32>
    %632 = tpu.iota {dimensions = array<i32: 1>} : vector<8x4xi32>
    %c2_i32_313 = arith.constant 2 : i32
    %633 = vector.broadcast %c2_i32_313 : i32 to vector<8x4xi32>
    %634 = arith.muli %633, %632 : vector<8x4xi32>
    %635 = arith.subi %631, %634 : vector<8x4xi32>
    %c0_i32_314 = arith.constant 0 : i32
    %636 = vector.broadcast %c0_i32_314 : i32 to vector<8x4xi32>
    %637 = arith.cmpi eq, %635, %636 : vector<8x4xi32>
    %c1_i32_315 = arith.constant 1 : i32
    %638 = vector.broadcast %c1_i32_315 : i32 to vector<8x4xi32>
    %639 = arith.cmpi eq, %635, %638 : vector<8x4xi32>
    %640 = arith.ori %637, %639 : vector<8x4xi1>
    %641 = arith.extui %640 : vector<8x4xi1> to vector<8x4xi32>
    %642 = arith.sitofp %641 : vector<8x4xi32> to vector<8x4xf32>
    %643 = arith.truncf %642 : vector<8x4xf32> to vector<8x4xbf16>
    %644 = arith.truncf %630 : vector<4x32xf32> to vector<4x32xbf16>
    %cst_316 = arith.constant dense<0.000000e+00> : vector<8x32xf32>
    %645 = tpu.matmul %643, %644, %cst_316 {dimension_numbers = #tpu.dot_dimension_numbers<[1], [0], [0], [1], [0, 0, 1, 1], [], []>} : vector<8x4xbf16>, vector<4x32xbf16>, vector<8x32xf32> -> vector<8x32xf32>
    %646 = arith.truncf %645 : vector<8x32xf32> to vector<8x32xbf16>
    %cst_317 = arith.constant 0.000000e+00 : f32
    %647 = vector.broadcast %cst_317 : f32 to vector<8x32xf32>
    %648 = tpu.iota {dimensions = array<i32: 0>} : vector<8x8xi32>
    %649 = tpu.iota {dimensions = array<i32: 1>} : vector<8x8xi32>
    %c1_i32_318 = arith.constant 1 : i32
    %650 = vector.broadcast %c1_i32_318 : i32 to vector<8x8xi32>
    %651 = arith.muli %650, %648 : vector<8x8xi32>
    %c-1_i32_319 = arith.constant -1 : i32
    %652 = vector.broadcast %c-1_i32_319 : i32 to vector<8x8xi32>
    %653 = arith.addi %651, %652 : vector<8x8xi32>
    %654 = arith.cmpi eq, %649, %653 : vector<8x8xi32>
    %655 = arith.extui %654 : vector<8x8xi1> to vector<8x8xi32>
    %656 = arith.sitofp %655 : vector<8x8xi32> to vector<8x8xf32>
    %657 = arith.truncf %656 : vector<8x8xf32> to vector<8x8xbf16>
    %cst_320 = arith.constant dense<0.000000e+00> : vector<8x32xf32>
    %658 = tpu.matmul %657, %646, %cst_320 {dimension_numbers = #tpu.dot_dimension_numbers<[1], [0], [0], [1], [0, 0, 1, 1], [], []>} : vector<8x8xbf16>, vector<8x32xbf16>, vector<8x32xf32> -> vector<8x32xf32>
    %659 = arith.truncf %658 : vector<8x32xf32> to vector<8x32xbf16>
    %c0_321 = arith.constant 0 : index
    %c0_322 = arith.constant 0 : index
    %c0_323 = arith.constant 0 : index
    %660 = vector.load %arg9[%c0_321, %c0_322, %c0_323] : memref<3x32x32xbf16, #tpu.memory_space<vmem>>, vector<1x32x32xbf16>
    %661 = vector.shape_cast %660 : vector<1x32x32xbf16> to vector<32x32xbf16>
    %cst_324 = arith.constant dense<0.000000e+00> : vector<8x32xf32>
    %662 = tpu.matmul %659, %661, %cst_324 {dimension_numbers = #tpu.dot_dimension_numbers<[1], [0], [0], [1], [0, 0, 1, 1], [], []>} : vector<8x32xbf16>, vector<32x32xbf16>, vector<8x32xf32> -> vector<8x32xf32>
    %663 = arith.addf %647, %662 : vector<8x32xf32>
    %c1_325 = arith.constant 1 : index
    %c0_326 = arith.constant 0 : index
    %c0_327 = arith.constant 0 : index
    %664 = vector.load %arg9[%c1_325, %c0_326, %c0_327] : memref<3x32x32xbf16, #tpu.memory_space<vmem>>, vector<1x32x32xbf16>
    %665 = vector.shape_cast %664 : vector<1x32x32xbf16> to vector<32x32xbf16>
    %cst_328 = arith.constant dense<0.000000e+00> : vector<8x32xf32>
    %666 = tpu.matmul %646, %665, %cst_328 {dimension_numbers = #tpu.dot_dimension_numbers<[1], [0], [0], [1], [0, 0, 1, 1], [], []>} : vector<8x32xbf16>, vector<32x32xbf16>, vector<8x32xf32> -> vector<8x32xf32>
    %667 = arith.addf %663, %666 : vector<8x32xf32>
    %668 = tpu.iota {dimensions = array<i32: 0>} : vector<8x8xi32>
    %669 = tpu.iota {dimensions = array<i32: 1>} : vector<8x8xi32>
    %c1_i32_329 = arith.constant 1 : i32
    %670 = vector.broadcast %c1_i32_329 : i32 to vector<8x8xi32>
    %671 = arith.muli %670, %668 : vector<8x8xi32>
    %c1_i32_330 = arith.constant 1 : i32
    %672 = vector.broadcast %c1_i32_330 : i32 to vector<8x8xi32>
    %673 = arith.addi %671, %672 : vector<8x8xi32>
    %674 = arith.cmpi eq, %669, %673 : vector<8x8xi32>
    %675 = arith.extui %674 : vector<8x8xi1> to vector<8x8xi32>
    %676 = arith.sitofp %675 : vector<8x8xi32> to vector<8x8xf32>
    %677 = arith.truncf %676 : vector<8x8xf32> to vector<8x8xbf16>
    %cst_331 = arith.constant dense<0.000000e+00> : vector<8x32xf32>
    %678 = tpu.matmul %677, %646, %cst_331 {dimension_numbers = #tpu.dot_dimension_numbers<[1], [0], [0], [1], [0, 0, 1, 1], [], []>} : vector<8x8xbf16>, vector<8x32xbf16>, vector<8x32xf32> -> vector<8x32xf32>
    %679 = arith.truncf %678 : vector<8x32xf32> to vector<8x32xbf16>
    %c2_332 = arith.constant 2 : index
    %c0_333 = arith.constant 0 : index
    %c0_334 = arith.constant 0 : index
    %680 = vector.load %arg9[%c2_332, %c0_333, %c0_334] : memref<3x32x32xbf16, #tpu.memory_space<vmem>>, vector<1x32x32xbf16>
    %681 = vector.shape_cast %680 : vector<1x32x32xbf16> to vector<32x32xbf16>
    %cst_335 = arith.constant dense<0.000000e+00> : vector<8x32xf32>
    %682 = tpu.matmul %679, %681, %cst_335 {dimension_numbers = #tpu.dot_dimension_numbers<[1], [0], [0], [1], [0, 0, 1, 1], [], []>} : vector<8x32xbf16>, vector<32x32xbf16>, vector<8x32xf32> -> vector<8x32xf32>
    %683 = arith.addf %667, %682 : vector<8x32xf32>
    %c0_336 = arith.constant 0 : index
    %c0_337 = arith.constant 0 : index
    %684 = vector.load %arg8[%c0_336, %c0_337] : memref<1x32xf32, #tpu.memory_space<vmem>>, vector<1x32xf32>
    %685 = vector.broadcast %684 : vector<1x32xf32> to vector<8x32xf32>
    %686 = arith.addf %683, %685 : vector<8x32xf32>
    %cst_338 = arith.constant 0.000000e+00 : f32
    %687 = vector.broadcast %cst_338 : f32 to vector<8x32xf32>
    %688 = arith.maximumf %686, %687 : vector<8x32xf32>
    %689 = arith.truncf %688 : vector<8x32xf32> to vector<8x32xbf16>
    %cst_339 = arith.constant 0.000000e+00 : f32
    %690 = vector.broadcast %cst_339 : f32 to vector<8x32xf32>
    %691 = tpu.iota {dimensions = array<i32: 0>} : vector<8x8xi32>
    %692 = tpu.iota {dimensions = array<i32: 1>} : vector<8x8xi32>
    %c1_i32_340 = arith.constant 1 : i32
    %693 = vector.broadcast %c1_i32_340 : i32 to vector<8x8xi32>
    %694 = arith.muli %693, %691 : vector<8x8xi32>
    %c-3_i32_341 = arith.constant -3 : i32
    %695 = vector.broadcast %c-3_i32_341 : i32 to vector<8x8xi32>
    %696 = arith.addi %694, %695 : vector<8x8xi32>
    %697 = arith.cmpi eq, %692, %696 : vector<8x8xi32>
    %698 = arith.extui %697 : vector<8x8xi1> to vector<8x8xi32>
    %699 = arith.sitofp %698 : vector<8x8xi32> to vector<8x8xf32>
    %700 = arith.truncf %699 : vector<8x8xf32> to vector<8x8xbf16>
    %cst_342 = arith.constant dense<0.000000e+00> : vector<8x32xf32>
    %701 = tpu.matmul %700, %689, %cst_342 {dimension_numbers = #tpu.dot_dimension_numbers<[1], [0], [0], [1], [0, 0, 1, 1], [], []>} : vector<8x8xbf16>, vector<8x32xbf16>, vector<8x32xf32> -> vector<8x32xf32>
    %702 = arith.truncf %701 : vector<8x32xf32> to vector<8x32xbf16>
    %c0_343 = arith.constant 0 : index
    %c0_344 = arith.constant 0 : index
    %c0_345 = arith.constant 0 : index
    %703 = vector.load %arg21[%c0_343, %c0_344, %c0_345] : memref<3x32x32xbf16, #tpu.memory_space<vmem>>, vector<1x32x32xbf16>
    %704 = vector.shape_cast %703 : vector<1x32x32xbf16> to vector<32x32xbf16>
    %cst_346 = arith.constant dense<0.000000e+00> : vector<8x32xf32>
    %705 = tpu.matmul %702, %704, %cst_346 {dimension_numbers = #tpu.dot_dimension_numbers<[1], [0], [0], [1], [0, 0, 1, 1], [], []>} : vector<8x32xbf16>, vector<32x32xbf16>, vector<8x32xf32> -> vector<8x32xf32>
    %706 = arith.addf %690, %705 : vector<8x32xf32>
    %c1_347 = arith.constant 1 : index
    %c0_348 = arith.constant 0 : index
    %c0_349 = arith.constant 0 : index
    %707 = vector.load %arg21[%c1_347, %c0_348, %c0_349] : memref<3x32x32xbf16, #tpu.memory_space<vmem>>, vector<1x32x32xbf16>
    %708 = vector.shape_cast %707 : vector<1x32x32xbf16> to vector<32x32xbf16>
    %cst_350 = arith.constant dense<0.000000e+00> : vector<8x32xf32>
    %709 = tpu.matmul %689, %708, %cst_350 {dimension_numbers = #tpu.dot_dimension_numbers<[1], [0], [0], [1], [0, 0, 1, 1], [], []>} : vector<8x32xbf16>, vector<32x32xbf16>, vector<8x32xf32> -> vector<8x32xf32>
    %710 = arith.addf %706, %709 : vector<8x32xf32>
    %711 = tpu.iota {dimensions = array<i32: 0>} : vector<8x8xi32>
    %712 = tpu.iota {dimensions = array<i32: 1>} : vector<8x8xi32>
    %c1_i32_351 = arith.constant 1 : i32
    %713 = vector.broadcast %c1_i32_351 : i32 to vector<8x8xi32>
    %714 = arith.muli %713, %711 : vector<8x8xi32>
    %c3_i32_352 = arith.constant 3 : i32
    %715 = vector.broadcast %c3_i32_352 : i32 to vector<8x8xi32>
    %716 = arith.addi %714, %715 : vector<8x8xi32>
    %717 = arith.cmpi eq, %712, %716 : vector<8x8xi32>
    %718 = arith.extui %717 : vector<8x8xi1> to vector<8x8xi32>
    %719 = arith.sitofp %718 : vector<8x8xi32> to vector<8x8xf32>
    %720 = arith.truncf %719 : vector<8x8xf32> to vector<8x8xbf16>
    %cst_353 = arith.constant dense<0.000000e+00> : vector<8x32xf32>
    %721 = tpu.matmul %720, %689, %cst_353 {dimension_numbers = #tpu.dot_dimension_numbers<[1], [0], [0], [1], [0, 0, 1, 1], [], []>} : vector<8x8xbf16>, vector<8x32xbf16>, vector<8x32xf32> -> vector<8x32xf32>
    %722 = arith.truncf %721 : vector<8x32xf32> to vector<8x32xbf16>
    %c2_354 = arith.constant 2 : index
    %c0_355 = arith.constant 0 : index
    %c0_356 = arith.constant 0 : index
    %723 = vector.load %arg21[%c2_354, %c0_355, %c0_356] : memref<3x32x32xbf16, #tpu.memory_space<vmem>>, vector<1x32x32xbf16>
    %724 = vector.shape_cast %723 : vector<1x32x32xbf16> to vector<32x32xbf16>
    %cst_357 = arith.constant dense<0.000000e+00> : vector<8x32xf32>
    %725 = tpu.matmul %722, %724, %cst_357 {dimension_numbers = #tpu.dot_dimension_numbers<[1], [0], [0], [1], [0, 0, 1, 1], [], []>} : vector<8x32xbf16>, vector<32x32xbf16>, vector<8x32xf32> -> vector<8x32xf32>
    %726 = arith.addf %710, %725 : vector<8x32xf32>
    %c0_358 = arith.constant 0 : index
    %c0_359 = arith.constant 0 : index
    %727 = vector.load %arg20[%c0_358, %c0_359] : memref<1x32xf32, #tpu.memory_space<vmem>>, vector<1x32xf32>
    %728 = vector.broadcast %727 : vector<1x32xf32> to vector<8x32xf32>
    %729 = arith.addf %726, %728 : vector<8x32xf32>
    %cst_360 = arith.constant 0.000000e+00 : f32
    %730 = vector.broadcast %cst_360 : f32 to vector<8x32xf32>
    %731 = arith.maximumf %729, %730 : vector<8x32xf32>
    %732 = arith.truncf %731 : vector<8x32xf32> to vector<8x32xbf16>
    %cst_361 = arith.constant 0.000000e+00 : f32
    %733 = vector.broadcast %cst_361 : f32 to vector<8x32xf32>
    %c0_362 = arith.constant 0 : index
    %c0_363 = arith.constant 0 : index
    %c0_364 = arith.constant 0 : index
    %734 = vector.load %arg23[%c0_362, %c0_363, %c0_364] : memref<1x32x32xbf16, #tpu.memory_space<vmem>>, vector<1x32x32xbf16>
    %735 = vector.shape_cast %734 : vector<1x32x32xbf16> to vector<32x32xbf16>
    %cst_365 = arith.constant dense<0.000000e+00> : vector<8x32xf32>
    %736 = tpu.matmul %732, %735, %cst_365 {dimension_numbers = #tpu.dot_dimension_numbers<[1], [0], [0], [1], [0, 0, 1, 1], [], []>} : vector<8x32xbf16>, vector<32x32xbf16>, vector<8x32xf32> -> vector<8x32xf32>
    %737 = arith.addf %733, %736 : vector<8x32xf32>
    %c0_366 = arith.constant 0 : index
    %c0_367 = arith.constant 0 : index
    %738 = vector.load %arg22[%c0_366, %c0_367] : memref<1x32xf32, #tpu.memory_space<vmem>>, vector<1x32xf32>
    %739 = vector.broadcast %738 : vector<1x32xf32> to vector<8x32xf32>
    %740 = arith.addf %737, %739 : vector<8x32xf32>
    %741 = arith.addf %686, %740 : vector<8x32xf32>
    %cst_368 = arith.constant 0.000000e+00 : f32
    %742 = vector.broadcast %cst_368 : f32 to vector<8x32xf32>
    %743 = arith.maximumf %741, %742 : vector<8x32xf32>
    %744 = arith.truncf %743 : vector<8x32xf32> to vector<8x32xbf16>
    %cst_369 = arith.constant 0.000000e+00 : f32
    %745 = vector.broadcast %cst_369 : f32 to vector<8x32xf32>
    %746 = tpu.iota {dimensions = array<i32: 0>} : vector<8x8xi32>
    %747 = tpu.iota {dimensions = array<i32: 1>} : vector<8x8xi32>
    %c1_i32_370 = arith.constant 1 : i32
    %748 = vector.broadcast %c1_i32_370 : i32 to vector<8x8xi32>
    %749 = arith.muli %748, %746 : vector<8x8xi32>
    %c-1_i32_371 = arith.constant -1 : i32
    %750 = vector.broadcast %c-1_i32_371 : i32 to vector<8x8xi32>
    %751 = arith.addi %749, %750 : vector<8x8xi32>
    %752 = arith.cmpi eq, %747, %751 : vector<8x8xi32>
    %753 = arith.extui %752 : vector<8x8xi1> to vector<8x8xi32>
    %754 = arith.sitofp %753 : vector<8x8xi32> to vector<8x8xf32>
    %755 = arith.truncf %754 : vector<8x8xf32> to vector<8x8xbf16>
    %cst_372 = arith.constant dense<0.000000e+00> : vector<8x32xf32>
    %756 = tpu.matmul %755, %744, %cst_372 {dimension_numbers = #tpu.dot_dimension_numbers<[1], [0], [0], [1], [0, 0, 1, 1], [], []>} : vector<8x8xbf16>, vector<8x32xbf16>, vector<8x32xf32> -> vector<8x32xf32>
    %757 = arith.truncf %756 : vector<8x32xf32> to vector<8x32xbf16>
    %c0_373 = arith.constant 0 : index
    %c0_374 = arith.constant 0 : index
    %c0_375 = arith.constant 0 : index
    %758 = vector.load %arg25[%c0_373, %c0_374, %c0_375] : memref<3x32x32xbf16, #tpu.memory_space<vmem>>, vector<1x32x32xbf16>
    %759 = vector.shape_cast %758 : vector<1x32x32xbf16> to vector<32x32xbf16>
    %cst_376 = arith.constant dense<0.000000e+00> : vector<8x32xf32>
    %760 = tpu.matmul %757, %759, %cst_376 {dimension_numbers = #tpu.dot_dimension_numbers<[1], [0], [0], [1], [0, 0, 1, 1], [], []>} : vector<8x32xbf16>, vector<32x32xbf16>, vector<8x32xf32> -> vector<8x32xf32>
    %761 = arith.addf %745, %760 : vector<8x32xf32>
    %c1_377 = arith.constant 1 : index
    %c0_378 = arith.constant 0 : index
    %c0_379 = arith.constant 0 : index
    %762 = vector.load %arg25[%c1_377, %c0_378, %c0_379] : memref<3x32x32xbf16, #tpu.memory_space<vmem>>, vector<1x32x32xbf16>
    %763 = vector.shape_cast %762 : vector<1x32x32xbf16> to vector<32x32xbf16>
    %cst_380 = arith.constant dense<0.000000e+00> : vector<8x32xf32>
    %764 = tpu.matmul %744, %763, %cst_380 {dimension_numbers = #tpu.dot_dimension_numbers<[1], [0], [0], [1], [0, 0, 1, 1], [], []>} : vector<8x32xbf16>, vector<32x32xbf16>, vector<8x32xf32> -> vector<8x32xf32>
    %765 = arith.addf %761, %764 : vector<8x32xf32>
    %766 = tpu.iota {dimensions = array<i32: 0>} : vector<8x8xi32>
    %767 = tpu.iota {dimensions = array<i32: 1>} : vector<8x8xi32>
    %c1_i32_381 = arith.constant 1 : i32
    %768 = vector.broadcast %c1_i32_381 : i32 to vector<8x8xi32>
    %769 = arith.muli %768, %766 : vector<8x8xi32>
    %c1_i32_382 = arith.constant 1 : i32
    %770 = vector.broadcast %c1_i32_382 : i32 to vector<8x8xi32>
    %771 = arith.addi %769, %770 : vector<8x8xi32>
    %772 = arith.cmpi eq, %767, %771 : vector<8x8xi32>
    %773 = arith.extui %772 : vector<8x8xi1> to vector<8x8xi32>
    %774 = arith.sitofp %773 : vector<8x8xi32> to vector<8x8xf32>
    %775 = arith.truncf %774 : vector<8x8xf32> to vector<8x8xbf16>
    %cst_383 = arith.constant dense<0.000000e+00> : vector<8x32xf32>
    %776 = tpu.matmul %775, %744, %cst_383 {dimension_numbers = #tpu.dot_dimension_numbers<[1], [0], [0], [1], [0, 0, 1, 1], [], []>} : vector<8x8xbf16>, vector<8x32xbf16>, vector<8x32xf32> -> vector<8x32xf32>
    %777 = arith.truncf %776 : vector<8x32xf32> to vector<8x32xbf16>
    %c2_384 = arith.constant 2 : index
    %c0_385 = arith.constant 0 : index
    %c0_386 = arith.constant 0 : index
    %778 = vector.load %arg25[%c2_384, %c0_385, %c0_386] : memref<3x32x32xbf16, #tpu.memory_space<vmem>>, vector<1x32x32xbf16>
    %779 = vector.shape_cast %778 : vector<1x32x32xbf16> to vector<32x32xbf16>
    %cst_387 = arith.constant dense<0.000000e+00> : vector<8x32xf32>
    %780 = tpu.matmul %777, %779, %cst_387 {dimension_numbers = #tpu.dot_dimension_numbers<[1], [0], [0], [1], [0, 0, 1, 1], [], []>} : vector<8x32xbf16>, vector<32x32xbf16>, vector<8x32xf32> -> vector<8x32xf32>
    %781 = arith.addf %765, %780 : vector<8x32xf32>
    %c0_388 = arith.constant 0 : index
    %c0_389 = arith.constant 0 : index
    %782 = vector.load %arg24[%c0_388, %c0_389] : memref<1x32xf32, #tpu.memory_space<vmem>>, vector<1x32xf32>
    %783 = vector.broadcast %782 : vector<1x32xf32> to vector<8x32xf32>
    %784 = arith.addf %781, %783 : vector<8x32xf32>
    %cst_390 = arith.constant 0.000000e+00 : f32
    %785 = vector.broadcast %cst_390 : f32 to vector<8x32xf32>
    %786 = arith.maximumf %784, %785 : vector<8x32xf32>
    %787 = arith.truncf %786 : vector<8x32xf32> to vector<8x32xbf16>
    %cst_391 = arith.constant 0.000000e+00 : f32
    %788 = vector.broadcast %cst_391 : f32 to vector<8x32xf32>
    %c0_392 = arith.constant 0 : index
    %c0_393 = arith.constant 0 : index
    %c0_394 = arith.constant 0 : index
    %789 = vector.load %arg27[%c0_392, %c0_393, %c0_394] : memref<1x32x32xbf16, #tpu.memory_space<vmem>>, vector<1x32x32xbf16>
    %790 = vector.shape_cast %789 : vector<1x32x32xbf16> to vector<32x32xbf16>
    %cst_395 = arith.constant dense<0.000000e+00> : vector<8x32xf32>
    %791 = tpu.matmul %787, %790, %cst_395 {dimension_numbers = #tpu.dot_dimension_numbers<[1], [0], [0], [1], [0, 0, 1, 1], [], []>} : vector<8x32xbf16>, vector<32x32xbf16>, vector<8x32xf32> -> vector<8x32xf32>
    %792 = arith.addf %788, %791 : vector<8x32xf32>
    %c0_396 = arith.constant 0 : index
    %c0_397 = arith.constant 0 : index
    %793 = vector.load %arg26[%c0_396, %c0_397] : memref<1x32xf32, #tpu.memory_space<vmem>>, vector<1x32xf32>
    %794 = vector.broadcast %793 : vector<1x32xf32> to vector<8x32xf32>
    %795 = arith.addf %792, %794 : vector<8x32xf32>
    %796 = arith.addf %741, %795 : vector<8x32xf32>
    %797 = tpu.iota {dimensions = array<i32: 0>} : vector<16x8xi32>
    %798 = tpu.iota {dimensions = array<i32: 1>} : vector<16x8xi32>
    %c2_i32_398 = arith.constant 2 : i32
    %799 = vector.broadcast %c2_i32_398 : i32 to vector<16x8xi32>
    %800 = arith.muli %799, %798 : vector<16x8xi32>
    %801 = arith.subi %797, %800 : vector<16x8xi32>
    %c0_i32_399 = arith.constant 0 : i32
    %802 = vector.broadcast %c0_i32_399 : i32 to vector<16x8xi32>
    %803 = arith.cmpi eq, %801, %802 : vector<16x8xi32>
    %c1_i32_400 = arith.constant 1 : i32
    %804 = vector.broadcast %c1_i32_400 : i32 to vector<16x8xi32>
    %805 = arith.cmpi eq, %801, %804 : vector<16x8xi32>
    %806 = arith.ori %803, %805 : vector<16x8xi1>
    %807 = arith.extui %806 : vector<16x8xi1> to vector<16x8xi32>
    %808 = arith.sitofp %807 : vector<16x8xi32> to vector<16x8xf32>
    %809 = arith.truncf %808 : vector<16x8xf32> to vector<16x8xbf16>
    %810 = arith.truncf %796 : vector<8x32xf32> to vector<8x32xbf16>
    %cst_401 = arith.constant dense<0.000000e+00> : vector<16x32xf32>
    %811 = tpu.matmul %809, %810, %cst_401 {dimension_numbers = #tpu.dot_dimension_numbers<[1], [0], [0], [1], [0, 0, 1, 1], [], []>} : vector<16x8xbf16>, vector<8x32xbf16>, vector<16x32xf32> -> vector<16x32xf32>
    %812 = arith.truncf %811 : vector<16x32xf32> to vector<16x32xbf16>
    %cst_402 = arith.constant 0.000000e+00 : f32
    %813 = vector.broadcast %cst_402 : f32 to vector<16x32xf32>
    %814 = tpu.iota {dimensions = array<i32: 0>} : vector<16x16xi32>
    %815 = tpu.iota {dimensions = array<i32: 1>} : vector<16x16xi32>
    %c1_i32_403 = arith.constant 1 : i32
    %816 = vector.broadcast %c1_i32_403 : i32 to vector<16x16xi32>
    %817 = arith.muli %816, %814 : vector<16x16xi32>
    %c-1_i32_404 = arith.constant -1 : i32
    %818 = vector.broadcast %c-1_i32_404 : i32 to vector<16x16xi32>
    %819 = arith.addi %817, %818 : vector<16x16xi32>
    %820 = arith.cmpi eq, %815, %819 : vector<16x16xi32>
    %821 = arith.extui %820 : vector<16x16xi1> to vector<16x16xi32>
    %822 = arith.sitofp %821 : vector<16x16xi32> to vector<16x16xf32>
    %823 = arith.truncf %822 : vector<16x16xf32> to vector<16x16xbf16>
    %cst_405 = arith.constant dense<0.000000e+00> : vector<16x32xf32>
    %824 = tpu.matmul %823, %812, %cst_405 {dimension_numbers = #tpu.dot_dimension_numbers<[1], [0], [0], [1], [0, 0, 1, 1], [], []>} : vector<16x16xbf16>, vector<16x32xbf16>, vector<16x32xf32> -> vector<16x32xf32>
    %825 = arith.truncf %824 : vector<16x32xf32> to vector<16x32xbf16>
    %c0_406 = arith.constant 0 : index
    %c0_407 = arith.constant 0 : index
    %c0_408 = arith.constant 0 : index
    %826 = vector.load %arg19[%c0_406, %c0_407, %c0_408] : memref<3x32x32xbf16, #tpu.memory_space<vmem>>, vector<1x32x32xbf16>
    %827 = vector.shape_cast %826 : vector<1x32x32xbf16> to vector<32x32xbf16>
    %cst_409 = arith.constant dense<0.000000e+00> : vector<16x32xf32>
    %828 = tpu.matmul %825, %827, %cst_409 {dimension_numbers = #tpu.dot_dimension_numbers<[1], [0], [0], [1], [0, 0, 1, 1], [], []>} : vector<16x32xbf16>, vector<32x32xbf16>, vector<16x32xf32> -> vector<16x32xf32>
    %829 = arith.addf %813, %828 : vector<16x32xf32>
    %c1_410 = arith.constant 1 : index
    %c0_411 = arith.constant 0 : index
    %c0_412 = arith.constant 0 : index
    %830 = vector.load %arg19[%c1_410, %c0_411, %c0_412] : memref<3x32x32xbf16, #tpu.memory_space<vmem>>, vector<1x32x32xbf16>
    %831 = vector.shape_cast %830 : vector<1x32x32xbf16> to vector<32x32xbf16>
    %cst_413 = arith.constant dense<0.000000e+00> : vector<16x32xf32>
    %832 = tpu.matmul %812, %831, %cst_413 {dimension_numbers = #tpu.dot_dimension_numbers<[1], [0], [0], [1], [0, 0, 1, 1], [], []>} : vector<16x32xbf16>, vector<32x32xbf16>, vector<16x32xf32> -> vector<16x32xf32>
    %833 = arith.addf %829, %832 : vector<16x32xf32>
    %834 = tpu.iota {dimensions = array<i32: 0>} : vector<16x16xi32>
    %835 = tpu.iota {dimensions = array<i32: 1>} : vector<16x16xi32>
    %c1_i32_414 = arith.constant 1 : i32
    %836 = vector.broadcast %c1_i32_414 : i32 to vector<16x16xi32>
    %837 = arith.muli %836, %834 : vector<16x16xi32>
    %c1_i32_415 = arith.constant 1 : i32
    %838 = vector.broadcast %c1_i32_415 : i32 to vector<16x16xi32>
    %839 = arith.addi %837, %838 : vector<16x16xi32>
    %840 = arith.cmpi eq, %835, %839 : vector<16x16xi32>
    %841 = arith.extui %840 : vector<16x16xi1> to vector<16x16xi32>
    %842 = arith.sitofp %841 : vector<16x16xi32> to vector<16x16xf32>
    %843 = arith.truncf %842 : vector<16x16xf32> to vector<16x16xbf16>
    %cst_416 = arith.constant dense<0.000000e+00> : vector<16x32xf32>
    %844 = tpu.matmul %843, %812, %cst_416 {dimension_numbers = #tpu.dot_dimension_numbers<[1], [0], [0], [1], [0, 0, 1, 1], [], []>} : vector<16x16xbf16>, vector<16x32xbf16>, vector<16x32xf32> -> vector<16x32xf32>
    %845 = arith.truncf %844 : vector<16x32xf32> to vector<16x32xbf16>
    %c2_417 = arith.constant 2 : index
    %c0_418 = arith.constant 0 : index
    %c0_419 = arith.constant 0 : index
    %846 = vector.load %arg19[%c2_417, %c0_418, %c0_419] : memref<3x32x32xbf16, #tpu.memory_space<vmem>>, vector<1x32x32xbf16>
    %847 = vector.shape_cast %846 : vector<1x32x32xbf16> to vector<32x32xbf16>
    %cst_420 = arith.constant dense<0.000000e+00> : vector<16x32xf32>
    %848 = tpu.matmul %845, %847, %cst_420 {dimension_numbers = #tpu.dot_dimension_numbers<[1], [0], [0], [1], [0, 0, 1, 1], [], []>} : vector<16x32xbf16>, vector<32x32xbf16>, vector<16x32xf32> -> vector<16x32xf32>
    %849 = arith.addf %833, %848 : vector<16x32xf32>
    %c0_421 = arith.constant 0 : index
    %c0_422 = arith.constant 0 : index
    %850 = vector.load %arg18[%c0_421, %c0_422] : memref<1x32xf32, #tpu.memory_space<vmem>>, vector<1x32xf32>
    %851 = vector.broadcast %850 : vector<1x32xf32> to vector<16x32xf32>
    %852 = arith.addf %849, %851 : vector<16x32xf32>
    %853 = arith.truncf %852 : vector<16x32xf32> to vector<16x32xbf16>
    %cst_423 = arith.constant 0.000000e+00 : f32
    %854 = vector.broadcast %cst_423 : f32 to vector<16x32xf32>
    %855 = tpu.iota {dimensions = array<i32: 0>} : vector<16x16xi32>
    %856 = tpu.iota {dimensions = array<i32: 1>} : vector<16x16xi32>
    %c1_i32_424 = arith.constant 1 : i32
    %857 = vector.broadcast %c1_i32_424 : i32 to vector<16x16xi32>
    %858 = arith.muli %857, %855 : vector<16x16xi32>
    %c-1_i32_425 = arith.constant -1 : i32
    %859 = vector.broadcast %c-1_i32_425 : i32 to vector<16x16xi32>
    %860 = arith.addi %858, %859 : vector<16x16xi32>
    %861 = arith.cmpi eq, %856, %860 : vector<16x16xi32>
    %862 = arith.extui %861 : vector<16x16xi1> to vector<16x16xi32>
    %863 = arith.sitofp %862 : vector<16x16xi32> to vector<16x16xf32>
    %864 = arith.truncf %863 : vector<16x16xf32> to vector<16x16xbf16>
    %cst_426 = arith.constant dense<0.000000e+00> : vector<16x32xf32>
    %865 = tpu.matmul %864, %853, %cst_426 {dimension_numbers = #tpu.dot_dimension_numbers<[1], [0], [0], [1], [0, 0, 1, 1], [], []>} : vector<16x16xbf16>, vector<16x32xbf16>, vector<16x32xf32> -> vector<16x32xf32>
    %866 = arith.truncf %865 : vector<16x32xf32> to vector<16x32xbf16>
    %c0_427 = arith.constant 0 : index
    %c0_428 = arith.constant 0 : index
    %c0_429 = arith.constant 0 : index
    %867 = vector.load %arg5[%c0_427, %c0_428, %c0_429] : memref<3x32x32xbf16, #tpu.memory_space<vmem>>, vector<1x32x32xbf16>
    %868 = vector.shape_cast %867 : vector<1x32x32xbf16> to vector<32x32xbf16>
    %cst_430 = arith.constant dense<0.000000e+00> : vector<16x32xf32>
    %869 = tpu.matmul %866, %868, %cst_430 {dimension_numbers = #tpu.dot_dimension_numbers<[1], [0], [0], [1], [0, 0, 1, 1], [], []>} : vector<16x32xbf16>, vector<32x32xbf16>, vector<16x32xf32> -> vector<16x32xf32>
    %870 = arith.addf %854, %869 : vector<16x32xf32>
    %c1_431 = arith.constant 1 : index
    %c0_432 = arith.constant 0 : index
    %c0_433 = arith.constant 0 : index
    %871 = vector.load %arg5[%c1_431, %c0_432, %c0_433] : memref<3x32x32xbf16, #tpu.memory_space<vmem>>, vector<1x32x32xbf16>
    %872 = vector.shape_cast %871 : vector<1x32x32xbf16> to vector<32x32xbf16>
    %cst_434 = arith.constant dense<0.000000e+00> : vector<16x32xf32>
    %873 = tpu.matmul %853, %872, %cst_434 {dimension_numbers = #tpu.dot_dimension_numbers<[1], [0], [0], [1], [0, 0, 1, 1], [], []>} : vector<16x32xbf16>, vector<32x32xbf16>, vector<16x32xf32> -> vector<16x32xf32>
    %874 = arith.addf %870, %873 : vector<16x32xf32>
    %875 = tpu.iota {dimensions = array<i32: 0>} : vector<16x16xi32>
    %876 = tpu.iota {dimensions = array<i32: 1>} : vector<16x16xi32>
    %c1_i32_435 = arith.constant 1 : i32
    %877 = vector.broadcast %c1_i32_435 : i32 to vector<16x16xi32>
    %878 = arith.muli %877, %875 : vector<16x16xi32>
    %c1_i32_436 = arith.constant 1 : i32
    %879 = vector.broadcast %c1_i32_436 : i32 to vector<16x16xi32>
    %880 = arith.addi %878, %879 : vector<16x16xi32>
    %881 = arith.cmpi eq, %876, %880 : vector<16x16xi32>
    %882 = arith.extui %881 : vector<16x16xi1> to vector<16x16xi32>
    %883 = arith.sitofp %882 : vector<16x16xi32> to vector<16x16xf32>
    %884 = arith.truncf %883 : vector<16x16xf32> to vector<16x16xbf16>
    %cst_437 = arith.constant dense<0.000000e+00> : vector<16x32xf32>
    %885 = tpu.matmul %884, %853, %cst_437 {dimension_numbers = #tpu.dot_dimension_numbers<[1], [0], [0], [1], [0, 0, 1, 1], [], []>} : vector<16x16xbf16>, vector<16x32xbf16>, vector<16x32xf32> -> vector<16x32xf32>
    %886 = arith.truncf %885 : vector<16x32xf32> to vector<16x32xbf16>
    %c2_438 = arith.constant 2 : index
    %c0_439 = arith.constant 0 : index
    %c0_440 = arith.constant 0 : index
    %887 = vector.load %arg5[%c2_438, %c0_439, %c0_440] : memref<3x32x32xbf16, #tpu.memory_space<vmem>>, vector<1x32x32xbf16>
    %888 = vector.shape_cast %887 : vector<1x32x32xbf16> to vector<32x32xbf16>
    %cst_441 = arith.constant dense<0.000000e+00> : vector<16x32xf32>
    %889 = tpu.matmul %886, %888, %cst_441 {dimension_numbers = #tpu.dot_dimension_numbers<[1], [0], [0], [1], [0, 0, 1, 1], [], []>} : vector<16x32xbf16>, vector<32x32xbf16>, vector<16x32xf32> -> vector<16x32xf32>
    %890 = arith.addf %874, %889 : vector<16x32xf32>
    %c0_442 = arith.constant 0 : index
    %c0_443 = arith.constant 0 : index
    %891 = vector.load %arg4[%c0_442, %c0_443] : memref<1x32xf32, #tpu.memory_space<vmem>>, vector<1x32xf32>
    %892 = vector.broadcast %891 : vector<1x32xf32> to vector<16x32xf32>
    %893 = arith.addf %890, %892 : vector<16x32xf32>
    %cst_444 = arith.constant 0.000000e+00 : f32
    %894 = vector.broadcast %cst_444 : f32 to vector<16x32xf32>
    %895 = arith.maximumf %893, %894 : vector<16x32xf32>
    %896 = arith.truncf %895 : vector<16x32xf32> to vector<16x32xbf16>
    %cst_445 = arith.constant 0.000000e+00 : f32
    %897 = vector.broadcast %cst_445 : f32 to vector<16x6xf32>
    %898 = tpu.iota {dimensions = array<i32: 0>} : vector<16x16xi32>
    %899 = tpu.iota {dimensions = array<i32: 1>} : vector<16x16xi32>
    %c1_i32_446 = arith.constant 1 : i32
    %900 = vector.broadcast %c1_i32_446 : i32 to vector<16x16xi32>
    %901 = arith.muli %900, %898 : vector<16x16xi32>
    %c-1_i32_447 = arith.constant -1 : i32
    %902 = vector.broadcast %c-1_i32_447 : i32 to vector<16x16xi32>
    %903 = arith.addi %901, %902 : vector<16x16xi32>
    %904 = arith.cmpi eq, %899, %903 : vector<16x16xi32>
    %905 = arith.extui %904 : vector<16x16xi1> to vector<16x16xi32>
    %906 = arith.sitofp %905 : vector<16x16xi32> to vector<16x16xf32>
    %907 = arith.truncf %906 : vector<16x16xf32> to vector<16x16xbf16>
    %cst_448 = arith.constant dense<0.000000e+00> : vector<16x32xf32>
    %908 = tpu.matmul %907, %896, %cst_448 {dimension_numbers = #tpu.dot_dimension_numbers<[1], [0], [0], [1], [0, 0, 1, 1], [], []>} : vector<16x16xbf16>, vector<16x32xbf16>, vector<16x32xf32> -> vector<16x32xf32>
    %909 = arith.truncf %908 : vector<16x32xf32> to vector<16x32xbf16>
    %c0_449 = arith.constant 0 : index
    %c0_450 = arith.constant 0 : index
    %c0_451 = arith.constant 0 : index
    %910 = vector.load %arg7[%c0_449, %c0_450, %c0_451] : memref<3x32x6xbf16, #tpu.memory_space<vmem>>, vector<1x32x6xbf16>
    %911 = vector.shape_cast %910 : vector<1x32x6xbf16> to vector<32x6xbf16>
    %cst_452 = arith.constant dense<0.000000e+00> : vector<16x6xf32>
    %912 = tpu.matmul %909, %911, %cst_452 {dimension_numbers = #tpu.dot_dimension_numbers<[1], [0], [0], [1], [0, 0, 1, 1], [], []>} : vector<16x32xbf16>, vector<32x6xbf16>, vector<16x6xf32> -> vector<16x6xf32>
    %913 = arith.addf %897, %912 : vector<16x6xf32>
    %c1_453 = arith.constant 1 : index
    %c0_454 = arith.constant 0 : index
    %c0_455 = arith.constant 0 : index
    %914 = vector.load %arg7[%c1_453, %c0_454, %c0_455] : memref<3x32x6xbf16, #tpu.memory_space<vmem>>, vector<1x32x6xbf16>
    %915 = vector.shape_cast %914 : vector<1x32x6xbf16> to vector<32x6xbf16>
    %cst_456 = arith.constant dense<0.000000e+00> : vector<16x6xf32>
    %916 = tpu.matmul %896, %915, %cst_456 {dimension_numbers = #tpu.dot_dimension_numbers<[1], [0], [0], [1], [0, 0, 1, 1], [], []>} : vector<16x32xbf16>, vector<32x6xbf16>, vector<16x6xf32> -> vector<16x6xf32>
    %917 = arith.addf %913, %916 : vector<16x6xf32>
    %918 = tpu.iota {dimensions = array<i32: 0>} : vector<16x16xi32>
    %919 = tpu.iota {dimensions = array<i32: 1>} : vector<16x16xi32>
    %c1_i32_457 = arith.constant 1 : i32
    %920 = vector.broadcast %c1_i32_457 : i32 to vector<16x16xi32>
    %921 = arith.muli %920, %918 : vector<16x16xi32>
    %c1_i32_458 = arith.constant 1 : i32
    %922 = vector.broadcast %c1_i32_458 : i32 to vector<16x16xi32>
    %923 = arith.addi %921, %922 : vector<16x16xi32>
    %924 = arith.cmpi eq, %919, %923 : vector<16x16xi32>
    %925 = arith.extui %924 : vector<16x16xi1> to vector<16x16xi32>
    %926 = arith.sitofp %925 : vector<16x16xi32> to vector<16x16xf32>
    %927 = arith.truncf %926 : vector<16x16xf32> to vector<16x16xbf16>
    %cst_459 = arith.constant dense<0.000000e+00> : vector<16x32xf32>
    %928 = tpu.matmul %927, %896, %cst_459 {dimension_numbers = #tpu.dot_dimension_numbers<[1], [0], [0], [1], [0, 0, 1, 1], [], []>} : vector<16x16xbf16>, vector<16x32xbf16>, vector<16x32xf32> -> vector<16x32xf32>
    %929 = arith.truncf %928 : vector<16x32xf32> to vector<16x32xbf16>
    %c2_460 = arith.constant 2 : index
    %c0_461 = arith.constant 0 : index
    %c0_462 = arith.constant 0 : index
    %930 = vector.load %arg7[%c2_460, %c0_461, %c0_462] : memref<3x32x6xbf16, #tpu.memory_space<vmem>>, vector<1x32x6xbf16>
    %931 = vector.shape_cast %930 : vector<1x32x6xbf16> to vector<32x6xbf16>
    %cst_463 = arith.constant dense<0.000000e+00> : vector<16x6xf32>
    %932 = tpu.matmul %929, %931, %cst_463 {dimension_numbers = #tpu.dot_dimension_numbers<[1], [0], [0], [1], [0, 0, 1, 1], [], []>} : vector<16x32xbf16>, vector<32x6xbf16>, vector<16x6xf32> -> vector<16x6xf32>
    %933 = arith.addf %917, %932 : vector<16x6xf32>
    %c0_464 = arith.constant 0 : index
    %c0_465 = arith.constant 0 : index
    %934 = vector.load %arg6[%c0_464, %c0_465] : memref<1x6xf32, #tpu.memory_space<vmem>>, vector<1x6xf32>
    %935 = vector.broadcast %934 : vector<1x6xf32> to vector<16x6xf32>
    %936 = arith.addf %933, %935 : vector<16x6xf32>
    %c0_466 = arith.constant 0 : index
    %c0_467 = arith.constant 0 : index
    %c0_468 = arith.constant 0 : index
    %937 = vector.load %arg55[%c0_466, %c0_467, %c0_468] : memref<1x16x6xf32, #tpu.memory_space<vmem>>, vector<1x16x6xf32>
    %938 = vector.shape_cast %937 : vector<1x16x6xf32> to vector<16x6xf32>
    %939 = vector.shape_cast %936 : vector<16x6xf32> to vector<1x16x6xf32>
    tpu.vector_store %arg55[%c0_466, %c0_467, %c0_468], %939 {strides = array<i32>} : memref<1x16x6xf32, #tpu.memory_space<vmem>>, vector<1x16x6xf32>,
    %c0_469 = arith.constant 0 : index
    %c0_470 = arith.constant 0 : index
    %c0_471 = arith.constant 0 : index
    %940 = vector.load %arg56[%c0_469, %c0_470, %c0_471] : memref<1x1x64xf32, #tpu.memory_space<vmem>>, vector<1x1x64xf32>
    %941 = vector.shape_cast %940 : vector<1x1x64xf32> to vector<1x64xf32>
    %942 = vector.shape_cast %470 : vector<1x64xf32> to vector<1x1x64xf32>
    tpu.vector_store %arg56[%c0_469, %c0_470, %c0_471], %942 {strides = array<i32>} : memref<1x1x64xf32, #tpu.memory_space<vmem>>, vector<1x1x64xf32>,
    %c0_472 = arith.constant 0 : index
    %c0_473 = arith.constant 0 : index
    %c0_474 = arith.constant 0 : index
    %943 = vector.load %arg57[%c0_472, %c0_473, %c0_474] : memref<1x1x1xf32, #tpu.memory_space<vmem>>, vector<1x1x1xf32>
    %944 = vector.shape_cast %943 : vector<1x1x1xf32> to vector<1x1xf32>
    %945 = vector.shape_cast %477 : vector<1x1xf32> to vector<1x1x1xf32>
    tpu.vector_store %arg57[%c0_472, %c0_473, %c0_474], %945 {strides = array<i32>} : memref<1x1x1xf32, #tpu.memory_space<vmem>>, vector<1x1x1xf32>,
    return
  }
  func.func @transform_0(%arg0: i32) -> (i32, i32, i32) {
    %c0_i32 = arith.constant 0 : i32
    %c0_i32_0 = arith.constant 0 : i32
    %c0_i32_1 = arith.constant 0 : i32
    return %arg0, %c0_i32, %c0_i32_0 : i32, i32, i32
  }
  func.func @transform_1(%arg0: i32) -> (i32, i32) {
    %c0_i32 = arith.constant 0 : i32
    %c0_i32_0 = arith.constant 0 : i32
    %c0_i32_1 = arith.constant 0 : i32
    return %c0_i32, %c0_i32_0 : i32, i32
  }
  func.func @transform_2(%arg0: i32) -> (i32, i32, i32) {
    %c0_i32 = arith.constant 0 : i32
    %c0_i32_0 = arith.constant 0 : i32
    %c0_i32_1 = arith.constant 0 : i32
    %c0_i32_2 = arith.constant 0 : i32
    return %c0_i32, %c0_i32_0, %c0_i32_1 : i32, i32, i32
  }
  func.func @transform_3(%arg0: i32) -> (i32, i32) {
    %c0_i32 = arith.constant 0 : i32
    %c0_i32_0 = arith.constant 0 : i32
    %c0_i32_1 = arith.constant 0 : i32
    return %c0_i32, %c0_i32_0 : i32, i32
  }
  func.func @transform_4(%arg0: i32) -> (i32, i32, i32) {
    %c0_i32 = arith.constant 0 : i32
    %c0_i32_0 = arith.constant 0 : i32
    %c0_i32_1 = arith.constant 0 : i32
    %c0_i32_2 = arith.constant 0 : i32
    return %c0_i32, %c0_i32_0, %c0_i32_1 : i32, i32, i32
  }
  func.func @transform_5(%arg0: i32) -> (i32, i32) {
    %c0_i32 = arith.constant 0 : i32
    %c0_i32_0 = arith.constant 0 : i32
    %c0_i32_1 = arith.constant 0 : i32
    return %c0_i32, %c0_i32_0 : i32, i32
  }
  func.func @transform_6(%arg0: i32) -> (i32, i32, i32) {
    %c0_i32 = arith.constant 0 : i32
    %c0_i32_0 = arith.constant 0 : i32
    %c0_i32_1 = arith.constant 0 : i32
    %c0_i32_2 = arith.constant 0 : i32
    return %c0_i32, %c0_i32_0, %c0_i32_1 : i32, i32, i32
  }
  func.func @transform_7(%arg0: i32) -> (i32, i32) {
    %c0_i32 = arith.constant 0 : i32
    %c0_i32_0 = arith.constant 0 : i32
    %c0_i32_1 = arith.constant 0 : i32
    return %c0_i32, %c0_i32_0 : i32, i32
  }
  func.func @transform_8(%arg0: i32) -> (i32, i32, i32) {
    %c0_i32 = arith.constant 0 : i32
    %c0_i32_0 = arith.constant 0 : i32
    %c0_i32_1 = arith.constant 0 : i32
    %c0_i32_2 = arith.constant 0 : i32
    return %c0_i32, %c0_i32_0, %c0_i32_1 : i32, i32, i32
  }
  func.func @transform_9(%arg0: i32) -> (i32, i32) {
    %c0_i32 = arith.constant 0 : i32
    %c0_i32_0 = arith.constant 0 : i32
    %c0_i32_1 = arith.constant 0 : i32
    return %c0_i32, %c0_i32_0 : i32, i32
  }
  func.func @transform_10(%arg0: i32) -> (i32, i32, i32) {
    %c0_i32 = arith.constant 0 : i32
    %c0_i32_0 = arith.constant 0 : i32
    %c0_i32_1 = arith.constant 0 : i32
    %c0_i32_2 = arith.constant 0 : i32
    return %c0_i32, %c0_i32_0, %c0_i32_1 : i32, i32, i32
  }
  func.func @transform_11(%arg0: i32) -> (i32, i32) {
    %c0_i32 = arith.constant 0 : i32
    %c0_i32_0 = arith.constant 0 : i32
    %c0_i32_1 = arith.constant 0 : i32
    return %c0_i32, %c0_i32_0 : i32, i32
  }
  func.func @transform_12(%arg0: i32) -> (i32, i32, i32) {
    %c0_i32 = arith.constant 0 : i32
    %c0_i32_0 = arith.constant 0 : i32
    %c0_i32_1 = arith.constant 0 : i32
    %c0_i32_2 = arith.constant 0 : i32
    return %c0_i32, %c0_i32_0, %c0_i32_1 : i32, i32, i32
  }
  func.func @transform_13(%arg0: i32) -> (i32, i32) {
    %c0_i32 = arith.constant 0 : i32
    %c0_i32_0 = arith.constant 0 : i32
    %c0_i32_1 = arith.constant 0 : i32
    return %c0_i32, %c0_i32_0 : i32, i32
  }
  func.func @transform_14(%arg0: i32) -> (i32, i32, i32) {
    %c0_i32 = arith.constant 0 : i32
    %c0_i32_0 = arith.constant 0 : i32
    %c0_i32_1 = arith.constant 0 : i32
    %c0_i32_2 = arith.constant 0 : i32
    return %c0_i32, %c0_i32_0, %c0_i32_1 : i32, i32, i32
  }
  func.func @transform_15(%arg0: i32) -> (i32, i32) {
    %c0_i32 = arith.constant 0 : i32
    %c0_i32_0 = arith.constant 0 : i32
    %c0_i32_1 = arith.constant 0 : i32
    return %c0_i32, %c0_i32_0 : i32, i32
  }
  func.func @transform_16(%arg0: i32) -> (i32, i32, i32) {
    %c0_i32 = arith.constant 0 : i32
    %c0_i32_0 = arith.constant 0 : i32
    %c0_i32_1 = arith.constant 0 : i32
    %c0_i32_2 = arith.constant 0 : i32
    return %c0_i32, %c0_i32_0, %c0_i32_1 : i32, i32, i32
  }
  func.func @transform_17(%arg0: i32) -> (i32, i32) {
    %c0_i32 = arith.constant 0 : i32
    %c0_i32_0 = arith.constant 0 : i32
    %c0_i32_1 = arith.constant 0 : i32
    return %c0_i32, %c0_i32_0 : i32, i32
  }
  func.func @transform_18(%arg0: i32) -> (i32, i32, i32) {
    %c0_i32 = arith.constant 0 : i32
    %c0_i32_0 = arith.constant 0 : i32
    %c0_i32_1 = arith.constant 0 : i32
    %c0_i32_2 = arith.constant 0 : i32
    return %c0_i32, %c0_i32_0, %c0_i32_1 : i32, i32, i32
  }
  func.func @transform_19(%arg0: i32) -> (i32, i32) {
    %c0_i32 = arith.constant 0 : i32
    %c0_i32_0 = arith.constant 0 : i32
    %c0_i32_1 = arith.constant 0 : i32
    return %c0_i32, %c0_i32_0 : i32, i32
  }
  func.func @transform_20(%arg0: i32) -> (i32, i32, i32) {
    %c0_i32 = arith.constant 0 : i32
    %c0_i32_0 = arith.constant 0 : i32
    %c0_i32_1 = arith.constant 0 : i32
    %c0_i32_2 = arith.constant 0 : i32
    return %c0_i32, %c0_i32_0, %c0_i32_1 : i32, i32, i32
  }
  func.func @transform_21(%arg0: i32) -> (i32, i32) {
    %c0_i32 = arith.constant 0 : i32
    %c0_i32_0 = arith.constant 0 : i32
    %c0_i32_1 = arith.constant 0 : i32
    return %c0_i32, %c0_i32_0 : i32, i32
  }
  func.func @transform_22(%arg0: i32) -> (i32, i32, i32) {
    %c0_i32 = arith.constant 0 : i32
    %c0_i32_0 = arith.constant 0 : i32
    %c0_i32_1 = arith.constant 0 : i32
    %c0_i32_2 = arith.constant 0 : i32
    return %c0_i32, %c0_i32_0, %c0_i32_1 : i32, i32, i32
  }
  func.func @transform_23(%arg0: i32) -> (i32, i32) {
    %c0_i32 = arith.constant 0 : i32
    %c0_i32_0 = arith.constant 0 : i32
    %c0_i32_1 = arith.constant 0 : i32
    return %c0_i32, %c0_i32_0 : i32, i32
  }
  func.func @transform_24(%arg0: i32) -> (i32, i32, i32) {
    %c0_i32 = arith.constant 0 : i32
    %c0_i32_0 = arith.constant 0 : i32
    %c0_i32_1 = arith.constant 0 : i32
    %c0_i32_2 = arith.constant 0 : i32
    return %c0_i32, %c0_i32_0, %c0_i32_1 : i32, i32, i32
  }
  func.func @transform_25(%arg0: i32) -> (i32, i32) {
    %c0_i32 = arith.constant 0 : i32
    %c0_i32_0 = arith.constant 0 : i32
    %c0_i32_1 = arith.constant 0 : i32
    return %c0_i32, %c0_i32_0 : i32, i32
  }
  func.func @transform_26(%arg0: i32) -> (i32, i32, i32) {
    %c0_i32 = arith.constant 0 : i32
    %c0_i32_0 = arith.constant 0 : i32
    %c0_i32_1 = arith.constant 0 : i32
    %c0_i32_2 = arith.constant 0 : i32
    return %c0_i32, %c0_i32_0, %c0_i32_1 : i32, i32, i32
  }
  func.func @transform_27(%arg0: i32) -> (i32, i32) {
    %c0_i32 = arith.constant 0 : i32
    %c0_i32_0 = arith.constant 0 : i32
    %c0_i32_1 = arith.constant 0 : i32
    return %c0_i32, %c0_i32_0 : i32, i32
  }
  func.func @transform_28(%arg0: i32) -> (i32, i32, i32) {
    %c0_i32 = arith.constant 0 : i32
    %c0_i32_0 = arith.constant 0 : i32
    %c0_i32_1 = arith.constant 0 : i32
    %c0_i32_2 = arith.constant 0 : i32
    return %c0_i32, %c0_i32_0, %c0_i32_1 : i32, i32, i32
  }
  func.func @transform_29(%arg0: i32) -> (i32, i32) {
    %c0_i32 = arith.constant 0 : i32
    %c0_i32_0 = arith.constant 0 : i32
    %c0_i32_1 = arith.constant 0 : i32
    return %c0_i32, %c0_i32_0 : i32, i32
  }
  func.func @transform_30(%arg0: i32) -> (i32, i32, i32) {
    %c0_i32 = arith.constant 0 : i32
    %c0_i32_0 = arith.constant 0 : i32
    %c0_i32_1 = arith.constant 0 : i32
    %c0_i32_2 = arith.constant 0 : i32
    return %c0_i32, %c0_i32_0, %c0_i32_1 : i32, i32, i32
  }
  func.func @transform_31(%arg0: i32) -> (i32, i32) {
    %c0_i32 = arith.constant 0 : i32
    %c0_i32_0 = arith.constant 0 : i32
    %c0_i32_1 = arith.constant 0 : i32
    return %c0_i32, %c0_i32_0 : i32, i32
  }
  func.func @transform_32(%arg0: i32) -> (i32, i32, i32) {
    %c0_i32 = arith.constant 0 : i32
    %c0_i32_0 = arith.constant 0 : i32
    %c0_i32_1 = arith.constant 0 : i32
    %c0_i32_2 = arith.constant 0 : i32
    return %c0_i32, %c0_i32_0, %c0_i32_1 : i32, i32, i32
  }
  func.func @transform_33(%arg0: i32) -> (i32, i32) {
    %c0_i32 = arith.constant 0 : i32
    %c0_i32_0 = arith.constant 0 : i32
    %c0_i32_1 = arith.constant 0 : i32
    return %c0_i32, %c0_i32_0 : i32, i32
  }
  func.func @transform_34(%arg0: i32) -> (i32, i32, i32) {
    %c0_i32 = arith.constant 0 : i32
    %c0_i32_0 = arith.constant 0 : i32
    %c0_i32_1 = arith.constant 0 : i32
    %c0_i32_2 = arith.constant 0 : i32
    return %c0_i32, %c0_i32_0, %c0_i32_1 : i32, i32, i32
  }
  func.func @transform_35(%arg0: i32) -> (i32, i32) {
    %c0_i32 = arith.constant 0 : i32
    %c0_i32_0 = arith.constant 0 : i32
    %c0_i32_1 = arith.constant 0 : i32
    return %c0_i32, %c0_i32_0 : i32, i32
  }
  func.func @transform_36(%arg0: i32) -> (i32, i32, i32) {
    %c0_i32 = arith.constant 0 : i32
    %c0_i32_0 = arith.constant 0 : i32
    %c0_i32_1 = arith.constant 0 : i32
    %c0_i32_2 = arith.constant 0 : i32
    return %c0_i32, %c0_i32_0, %c0_i32_1 : i32, i32, i32
  }
  func.func @transform_37(%arg0: i32) -> (i32, i32) {
    %c0_i32 = arith.constant 0 : i32
    %c0_i32_0 = arith.constant 0 : i32
    %c0_i32_1 = arith.constant 0 : i32
    return %c0_i32, %c0_i32_0 : i32, i32
  }
  func.func @transform_38(%arg0: i32) -> (i32, i32, i32) {
    %c0_i32 = arith.constant 0 : i32
    %c0_i32_0 = arith.constant 0 : i32
    %c0_i32_1 = arith.constant 0 : i32
    %c0_i32_2 = arith.constant 0 : i32
    return %c0_i32, %c0_i32_0, %c0_i32_1 : i32, i32, i32
  }
  func.func @transform_39(%arg0: i32) -> (i32, i32) {
    %c0_i32 = arith.constant 0 : i32
    %c0_i32_0 = arith.constant 0 : i32
    %c0_i32_1 = arith.constant 0 : i32
    return %c0_i32, %c0_i32_0 : i32, i32
  }
  func.func @transform_40(%arg0: i32) -> (i32, i32, i32) {
    %c0_i32 = arith.constant 0 : i32
    %c0_i32_0 = arith.constant 0 : i32
    %c0_i32_1 = arith.constant 0 : i32
    %c0_i32_2 = arith.constant 0 : i32
    return %c0_i32, %c0_i32_0, %c0_i32_1 : i32, i32, i32
  }
  func.func @transform_41(%arg0: i32) -> (i32, i32) {
    %c0_i32 = arith.constant 0 : i32
    %c0_i32_0 = arith.constant 0 : i32
    %c0_i32_1 = arith.constant 0 : i32
    return %c0_i32, %c0_i32_0 : i32, i32
  }
  func.func @transform_42(%arg0: i32) -> (i32, i32, i32) {
    %c0_i32 = arith.constant 0 : i32
    %c0_i32_0 = arith.constant 0 : i32
    %c0_i32_1 = arith.constant 0 : i32
    %c0_i32_2 = arith.constant 0 : i32
    return %c0_i32, %c0_i32_0, %c0_i32_1 : i32, i32, i32
  }
  func.func @transform_43(%arg0: i32) -> (i32, i32) {
    %c0_i32 = arith.constant 0 : i32
    %c0_i32_0 = arith.constant 0 : i32
    %c0_i32_1 = arith.constant 0 : i32
    return %c0_i32, %c0_i32_0 : i32, i32
  }
  func.func @transform_44(%arg0: i32) -> (i32, i32, i32) {
    %c0_i32 = arith.constant 0 : i32
    %c0_i32_0 = arith.constant 0 : i32
    %c0_i32_1 = arith.constant 0 : i32
    %c0_i32_2 = arith.constant 0 : i32
    return %c0_i32, %c0_i32_0, %c0_i32_1 : i32, i32, i32
  }
  func.func @transform_45(%arg0: i32) -> (i32, i32) {
    %c0_i32 = arith.constant 0 : i32
    %c0_i32_0 = arith.constant 0 : i32
    %c0_i32_1 = arith.constant 0 : i32
    return %c0_i32, %c0_i32_0 : i32, i32
  }
  func.func @transform_46(%arg0: i32) -> (i32, i32, i32) {
    %c0_i32 = arith.constant 0 : i32
    %c0_i32_0 = arith.constant 0 : i32
    %c0_i32_1 = arith.constant 0 : i32
    %c0_i32_2 = arith.constant 0 : i32
    return %c0_i32, %c0_i32_0, %c0_i32_1 : i32, i32, i32
  }
  func.func @transform_47(%arg0: i32) -> (i32, i32) {
    %c0_i32 = arith.constant 0 : i32
    %c0_i32_0 = arith.constant 0 : i32
    %c0_i32_1 = arith.constant 0 : i32
    return %c0_i32, %c0_i32_0 : i32, i32
  }
  func.func @transform_48(%arg0: i32) -> (i32, i32, i32) {
    %c0_i32 = arith.constant 0 : i32
    %c0_i32_0 = arith.constant 0 : i32
    %c0_i32_1 = arith.constant 0 : i32
    %c0_i32_2 = arith.constant 0 : i32
    return %c0_i32, %c0_i32_0, %c0_i32_1 : i32, i32, i32
  }
  func.func @transform_49(%arg0: i32) -> (i32, i32) {
    %c0_i32 = arith.constant 0 : i32
    %c0_i32_0 = arith.constant 0 : i32
    %c0_i32_1 = arith.constant 0 : i32
    return %c0_i32, %c0_i32_0 : i32, i32
  }
  func.func @transform_50(%arg0: i32) -> (i32, i32, i32) {
    %c0_i32 = arith.constant 0 : i32
    %c0_i32_0 = arith.constant 0 : i32
    %c0_i32_1 = arith.constant 0 : i32
    %c0_i32_2 = arith.constant 0 : i32
    return %c0_i32, %c0_i32_0, %c0_i32_1 : i32, i32, i32
  }
  func.func @transform_51(%arg0: i32) -> (i32, i32) {
    %c0_i32 = arith.constant 0 : i32
    %c0_i32_0 = arith.constant 0 : i32
    %c0_i32_1 = arith.constant 0 : i32
    return %c0_i32, %c0_i32_0 : i32, i32
  }
  func.func @transform_52(%arg0: i32) -> (i32, i32) {
    %c0_i32 = arith.constant 0 : i32
    %c0_i32_0 = arith.constant 0 : i32
    %c0_i32_1 = arith.constant 0 : i32
    return %c0_i32, %c0_i32_0 : i32, i32
  }
  func.func @transform_53(%arg0: i32) -> (i32, i32) {
    %c0_i32 = arith.constant 0 : i32
    %c0_i32_0 = arith.constant 0 : i32
    %c0_i32_1 = arith.constant 0 : i32
    return %c0_i32, %c0_i32_0 : i32, i32
  }
  func.func @transform_54(%arg0: i32) -> (i32, i32, i32) {
    %c0_i32 = arith.constant 0 : i32
    %c0_i32_0 = arith.constant 0 : i32
    %c0_i32_1 = arith.constant 0 : i32
    return %arg0, %c0_i32, %c0_i32_0 : i32, i32, i32
  }
  func.func @transform_55(%arg0: i32) -> (i32, i32, i32) {
    %c0_i32 = arith.constant 0 : i32
    %c0_i32_0 = arith.constant 0 : i32
    %c0_i32_1 = arith.constant 0 : i32
    return %arg0, %c0_i32, %c0_i32_0 : i32, i32, i32
  }
  func.func @transform_56(%arg0: i32) -> (i32, i32, i32) {
    %c0_i32 = arith.constant 0 : i32
    %c0_i32_0 = arith.constant 0 : i32
    %c0_i32_1 = arith.constant 0 : i32
    return %arg0, %c0_i32, %c0_i32_0 : i32, i32, i32
  }
}

</mosaic_0001>

<llo_original>
// kernel: tsvqvae_forward.1
$region0: #{tsvqvae_forward.1}
  #allocation0 [shape = 'u32[]', space=smem, size = 0x4, offset = 0x4, fixed_abs, tag = 'smem constant byte address 0x4 - core index']
  #allocation1 [shape = 'u32[72,128]{1,0:T(1,128)}', space=vmem, size = 0x9000, scoped, tag = 'internal scratch']
  %s0 = inlined_call_operand.smem [shape: u32[57], index: -1, kind: input, shape index: {}]
  %s1 = sld [smem:[%s0]]
  %s2 = scalar_lea.smem %s0, 1
  %s3 = sld [smem:[%s2]]
  %s4 = scalar_lea.smem %s0, 2
  %s5 = sld [smem:[%s4]]
  %s6 = scalar_lea.smem %s0, 3
  %s7 = sld [smem:[%s6]]
  %s8 = scalar_lea.smem %s0, 4
  %s9 = sld [smem:[%s8]]
  %s10 = scalar_lea.smem %s0, 5
  %s11 = sld [smem:[%s10]]
  %s12 = scalar_lea.smem %s0, 6
  %s13 = sld [smem:[%s12]]
  %s14 = scalar_lea.smem %s0, 7
  %s15 = sld [smem:[%s14]]
  %s16 = scalar_lea.smem %s0, 8
  %s17 = sld [smem:[%s16]]
  %s18 = scalar_lea.smem %s0, 9
  %s19 = sld [smem:[%s18]]
  %s20 = scalar_lea.smem %s0, 10
  %s21 = sld [smem:[%s20]]
  %s22 = scalar_lea.smem %s0, 11
  %s23 = sld [smem:[%s22]]
  %s24 = scalar_lea.smem %s0, 12
  %s25 = sld [smem:[%s24]]
  %s26 = scalar_lea.smem %s0, 13
  %s27 = sld [smem:[%s26]]
  %s28 = scalar_lea.smem %s0, 14
  %s29 = sld [smem:[%s28]]
  %s30 = scalar_lea.smem %s0, 15
  %s31 = sld [smem:[%s30]]
  %s32 = scalar_lea.smem %s0, 16
  %s33 = sld [smem:[%s32]]
  %s34 = scalar_lea.smem %s0, 17
  %s35 = sld [smem:[%s34]]
  %s36 = scalar_lea.smem %s0, 18
  %s37 = sld [smem:[%s36]]
  %s38 = scalar_lea.smem %s0, 19
  %s39 = sld [smem:[%s38]]
  %s40 = scalar_lea.smem %s0, 20
  %s41 = sld [smem:[%s40]]
  %s42 = scalar_lea.smem %s0, 21
  %s43 = sld [smem:[%s42]]
  %s44 = scalar_lea.smem %s0, 22
  %s45 = sld [smem:[%s44]]
  %s46 = scalar_lea.smem %s0, 23
  %s47 = sld [smem:[%s46]]
  %s48 = scalar_lea.smem %s0, 24
  %s49 = sld [smem:[%s48]]
  %s50 = scalar_lea.smem %s0, 25
  %s51 = sld [smem:[%s50]]
  %s52 = scalar_lea.smem %s0, 26
  %s53 = sld [smem:[%s52]]
  %s54 = scalar_lea.smem %s0, 27
  %s55 = sld [smem:[%s54]]
  %s56 = scalar_lea.smem %s0, 28
  %s57 = sld [smem:[%s56]]
  %s58 = scalar_lea.smem %s0, 29
  %s59 = sld [smem:[%s58]]
  %s60 = scalar_lea.smem %s0, 30
  %s61 = sld [smem:[%s60]]
  %s62 = scalar_lea.smem %s0, 31
  %s63 = sld [smem:[%s62]]
  %s64 = scalar_lea.smem %s0, 32
  %s65 = sld [smem:[%s64]]
  %s66 = scalar_lea.smem %s0, 33
  %s67 = sld [smem:[%s66]]
  %s68 = scalar_lea.smem %s0, 34
  %s69 = sld [smem:[%s68]]
  %s70 = scalar_lea.smem %s0, 35
  %s71 = sld [smem:[%s70]]
  %s72 = scalar_lea.smem %s0, 36
  %s73 = sld [smem:[%s72]]
  %s74 = scalar_lea.smem %s0, 37
  %s75 = sld [smem:[%s74]]
  %s76 = scalar_lea.smem %s0, 38
  %s77 = sld [smem:[%s76]]
  %s78 = scalar_lea.smem %s0, 39
  %s79 = sld [smem:[%s78]]
  %s80 = scalar_lea.smem %s0, 40
  %s81 = sld [smem:[%s80]]
  %s82 = scalar_lea.smem %s0, 41
  %s83 = sld [smem:[%s82]]
  %s84 = scalar_lea.smem %s0, 42
  %s85 = sld [smem:[%s84]]
  %s86 = scalar_lea.smem %s0, 43
  %s87 = sld [smem:[%s86]]
  %s88 = scalar_lea.smem %s0, 44
  %s89 = sld [smem:[%s88]]
  %s90 = scalar_lea.smem %s0, 45
  %s91 = sld [smem:[%s90]]
  %s92 = scalar_lea.smem %s0, 46
  %s93 = sld [smem:[%s92]]
  %s94 = scalar_lea.smem %s0, 47
  %s95 = sld [smem:[%s94]]
  %s96 = scalar_lea.smem %s0, 48
  %s97 = sld [smem:[%s96]]
  %s98 = scalar_lea.smem %s0, 49
  %s99 = sld [smem:[%s98]]
  %s100 = scalar_lea.smem %s0, 50
  %s101 = sld [smem:[%s100]]
  %s102 = scalar_lea.smem %s0, 51
  %s103 = sld [smem:[%s102]]
  %s104 = scalar_lea.smem %s0, 52
  %s105 = sld [smem:[%s104]]
  %s106 = scalar_lea.smem %s0, 53
  %s107 = sld [smem:[%s106]]
  %s108 = scalar_lea.smem %s0, 54
  %s109 = sld [smem:[%s108]]
  %s110 = scalar_lea.smem %s0, 55
  %s111 = sld [smem:[%s110]]
  %s112 = scalar_lea.smem %s0, 56
  %s113 = sld [smem:[%s112]]
  %114 = xla_tuple %s109, %s111, %s113
  %s115 = sld [smem:[#allocation0]]
  $region453: #{tsvqvae_forward.1} parent=0
    _
  %s117 = ssub.s32 1, %s115
  %s118 = scalar_select 0, %s117, %s115
  $region1: #{tsvqvae_forward.1} parent=0
    #allocation2 [shape = 'u8[512]{0}', space=vmem, size = 0x400, scoped, tag = 'input window, operand 1, single buffered']
    #allocation3 [shape = 's32[2]{0}', space=sflag, size = 0x8, scoped, tag = 'scoped memory for tsvqvae_forward.1']
    #allocation4 [shape = 'u8[24576]{0}', space=vmem, size = 0x6000, scoped, tag = 'input window, operand 2, single buffered']
    #allocation5 [shape = 's32[1]{0}', space=sflag, size = 0x4, scoped, tag = 'scoped memory for tsvqvae_forward.1']
    #allocation6 [shape = 'u8[512]{0}', space=vmem, size = 0x400, scoped, tag = 'input window, operand 3, single buffered']
    #allocation7 [shape = 'u8[24576]{0}', space=vmem, size = 0x6000, scoped, tag = 'input window, operand 4, single buffered']
    #allocation8 [shape = 's32[1]{0}', space=sflag, size = 0x4, scoped, tag = 'scoped memory for tsvqvae_forward.1']
    #allocation9 [shape = 'u8[512]{0}', space=vmem, size = 0x400, scoped, tag = 'input window, operand 5, single buffered']
    #allocation10 [shape = 'u8[512]{0}', space=vmem, size = 0x400, scoped, tag = 'input window, operand 7, single buffered']
    #allocation11 [shape = 's32[1]{0}', space=sflag, size = 0x4, scoped, tag = 'scoped memory for tsvqvae_forward.1']
    #allocation12 [shape = 'u8[24576]{0}', space=vmem, size = 0x6000, scoped, tag = 'input window, operand 8, single buffered']
    #allocation13 [shape = 'u8[512]{0}', space=vmem, size = 0x400, scoped, tag = 'input window, operand 9, single buffered']
    #allocation14 [shape = 's32[1]{0}', space=sflag, size = 0x4, scoped, tag = 'scoped memory for tsvqvae_forward.1']
    #allocation15 [shape = 'u8[24576]{0}', space=vmem, size = 0x6000, scoped, tag = 'input window, operand 10, single buffered']
    #allocation16 [shape = 'u8[512]{0}', space=vmem, size = 0x400, scoped, tag = 'input window, operand 11, single buffered']
    #allocation17 [shape = 's32[1]{0}', space=sflag, size = 0x4, scoped, tag = 'scoped memory for tsvqvae_forward.1']
    #allocation18 [shape = 'u8[8192]{0}', space=vmem, size = 0x2000, scoped, tag = 'input window, operand 12, single buffered']
    #allocation19 [shape = 'u8[512]{0}', space=vmem, size = 0x400, scoped, tag = 'input window, operand 13, single buffered']
    #allocation20 [shape = 's32[1]{0}', space=sflag, size = 0x4, scoped, tag = 'scoped memory for tsvqvae_forward.1']
    #allocation21 [shape = 'u8[24576]{0}', space=vmem, size = 0x6000, scoped, tag = 'input window, operand 14, single buffered']
    #allocation22 [shape = 'u8[512]{0}', space=vmem, size = 0x400, scoped, tag = 'input window, operand 15, single buffered']
    #allocation23 [shape = 's32[1]{0}', space=sflag, size = 0x4, scoped, tag = 'scoped memory for tsvqvae_forward.1']
    #allocation24 [shape = 'u8[8192]{0}', space=vmem, size = 0x2000, scoped, tag = 'input window, operand 16, single buffered']
    #allocation25 [shape = 'u8[512]{0}', space=vmem, size = 0x400, scoped, tag = 'input window, operand 17, single buffered']
    #allocation26 [shape = 's32[1]{0}', space=sflag, size = 0x4, scoped, tag = 'scoped memory for tsvqvae_forward.1']
    #allocation27 [shape = 'u8[24576]{0}', space=vmem, size = 0x6000, scoped, tag = 'input window, operand 18, single buffered']
    #allocation28 [shape = 'u8[512]{0}', space=vmem, size = 0x400, scoped, tag = 'input window, operand 19, single buffered']
    #allocation29 [shape = 's32[1]{0}', space=sflag, size = 0x4, scoped, tag = 'scoped memory for tsvqvae_forward.1']
    #allocation30 [shape = 'u8[24576]{0}', space=vmem, size = 0x6000, scoped, tag = 'input window, operand 20, single buffered']
    #allocation31 [shape = 'u8[512]{0}', space=vmem, size = 0x400, scoped, tag = 'input window, operand 21, single buffered']
    #allocation32 [shape = 's32[1]{0}', space=sflag, size = 0x4, scoped, tag = 'scoped memory for tsvqvae_forward.1']
    #allocation33 [shape = 'u8[8192]{0}', space=vmem, size = 0x2000, scoped, tag = 'input window, operand 22, single buffered']
    #allocation34 [shape = 'u8[512]{0}', space=vmem, size = 0x400, scoped, tag = 'input window, operand 23, single buffered']
    #allocation35 [shape = 's32[1]{0}', space=sflag, size = 0x4, scoped, tag = 'scoped memory for tsvqvae_forward.1']
    #allocation36 [shape = 'u8[24576]{0}', space=vmem, size = 0x6000, scoped, tag = 'input window, operand 24, single buffered']
    #allocation37 [shape = 'u8[512]{0}', space=vmem, size = 0x400, scoped, tag = 'input window, operand 25, single buffered']
    #allocation38 [shape = 's32[1]{0}', space=sflag, size = 0x4, scoped, tag = 'scoped memory for tsvqvae_forward.1']
    #allocation39 [shape = 'u8[8192]{0}', space=vmem, size = 0x2000, scoped, tag = 'input window, operand 26, single buffered']
    #allocation40 [shape = 'u8[512]{0}', space=vmem, size = 0x400, scoped, tag = 'input window, operand 27, single buffered']
    #allocation41 [shape = 's32[1]{0}', space=sflag, size = 0x4, scoped, tag = 'scoped memory for tsvqvae_forward.1']
    #allocation42 [shape = 'u8[512]{0}', space=vmem, size = 0x400, scoped, tag = 'input window, operand 29, single buffered']
    #allocation43 [shape = 'u8[24576]{0}', space=vmem, size = 0x6000, scoped, tag = 'input window, operand 30, single buffered']
    #allocation44 [shape = 's32[1]{0}', space=sflag, size = 0x4, scoped, tag = 'scoped memory for tsvqvae_forward.1']
    #allocation45 [shape = 'u8[512]{0}', space=vmem, size = 0x400, scoped, tag = 'input window, operand 31, single buffered']
    #allocation46 [shape = 'u8[8192]{0}', space=vmem, size = 0x2000, scoped, tag = 'input window, operand 32, single buffered']
    #allocation47 [shape = 's32[1]{0}', space=sflag, size = 0x4, scoped, tag = 'scoped memory for tsvqvae_forward.1']
    #allocation48 [shape = 'u8[512]{0}', space=vmem, size = 0x400, scoped, tag = 'input window, operand 33, single buffered']
    #allocation49 [shape = 'u8[24576]{0}', space=vmem, size = 0x6000, scoped, tag = 'input window, operand 34, single buffered']
    #allocation50 [shape = 's32[1]{0}', space=sflag, size = 0x4, scoped, tag = 'scoped memory for tsvqvae_forward.1']
    #allocation51 [shape = 'u8[512]{0}', space=vmem, size = 0x400, scoped, tag = 'input window, operand 35, single buffered']
    #allocation52 [shape = 'u8[512]{0}', space=vmem, size = 0x400, scoped, tag = 'input window, operand 37, single buffered']
    #allocation53 [shape = 's32[1]{0}', space=sflag, size = 0x4, scoped, tag = 'scoped memory for tsvqvae_forward.1']
    #allocation54 [shape = 'u8[512]{0}', space=vmem, size = 0x400, scoped, tag = 'input window, operand 39, single buffered']
    #allocation55 [shape = 'u8[24576]{0}', space=vmem, size = 0x6000, scoped, tag = 'input window, operand 40, single buffered']
    #allocation56 [shape = 's32[1]{0}', space=sflag, size = 0x4, scoped, tag = 'scoped memory for tsvqvae_forward.1']
    #allocation57 [shape = 'u8[512]{0}', space=vmem, size = 0x400, scoped, tag = 'input window, operand 41, single buffered']
    #allocation58 [shape = 'u8[8192]{0}', space=vmem, size = 0x2000, scoped, tag = 'input window, operand 42, single buffered']
    #allocation59 [shape = 's32[1]{0}', space=sflag, size = 0x4, scoped, tag = 'scoped memory for tsvqvae_forward.1']
    #allocation60 [shape = 'u8[512]{0}', space=vmem, size = 0x400, scoped, tag = 'input window, operand 43, single buffered']
    #allocation61 [shape = 'u8[24576]{0}', space=vmem, size = 0x6000, scoped, tag = 'input window, operand 44, single buffered']
    #allocation62 [shape = 's32[1]{0}', space=sflag, size = 0x4, scoped, tag = 'scoped memory for tsvqvae_forward.1']
    #allocation63 [shape = 'u8[512]{0}', space=vmem, size = 0x400, scoped, tag = 'input window, operand 45, single buffered']
    #allocation64 [shape = 'u8[8192]{0}', space=vmem, size = 0x2000, scoped, tag = 'input window, operand 46, single buffered']
    #allocation65 [shape = 's32[1]{0}', space=sflag, size = 0x4, scoped, tag = 'scoped memory for tsvqvae_forward.1']
    #allocation66 [shape = 'u8[512]{0}', space=vmem, size = 0x400, scoped, tag = 'input window, operand 47, single buffered']
    #allocation67 [shape = 'u8[6144]{0}', space=vmem, size = 0x1800, scoped, tag = 'input window, operand 48, single buffered']
    #allocation68 [shape = 's32[1]{0}', space=sflag, size = 0x4, scoped, tag = 'scoped memory for tsvqvae_forward.1']
    #allocation69 [shape = 'u8[512]{0}', space=vmem, size = 0x400, scoped, tag = 'input window, operand 49, single buffered']
    #allocation70 [shape = 'u8[24576]{0}', space=vmem, size = 0x6000, scoped, tag = 'input window, operand 50, single buffered']
    #allocation71 [shape = 's32[1]{0}', space=sflag, size = 0x4, scoped, tag = 'scoped memory for tsvqvae_forward.1']
    #allocation72 [shape = 'u8[512]{0}', space=vmem, size = 0x400, scoped, tag = 'input window, operand 51, single buffered']
    %119 = vsyncpa [#allocation3], 0
    %120 = vsyncpa [#allocation5], 0
    %121 = vsyncpa [#allocation8], 0
    %122 = vsyncpa [#allocation11], 0
    %123 = vsyncpa [#allocation14], 0
    %124 = vsyncpa [#allocation17], 0
    %125 = vsyncpa [#allocation20], 0
    %126 = vsyncpa [#allocation23], 0
    %127 = vsyncpa [#allocation26], 0
    %128 = vsyncpa [#allocation29], 0
    %129 = vsyncpa [#allocation32], 0
    %130 = vsyncpa [#allocation35], 0
    %131 = vsyncpa [#allocation38], 0
    %132 = vsyncpa [#allocation41], 0
    %133 = vsyncpa [#allocation44], 0
    %134 = vsyncpa [#allocation47], 0
    %135 = vsyncpa [#allocation50], 0
    %136 = vsyncpa [#allocation53], 0
    %137 = vsyncpa [#allocation56], 0
    %138 = vsyncpa [#allocation59], 0
    %139 = vsyncpa [#allocation62], 0
    %140 = vsyncpa [#allocation65], 0
    %141 = vsyncpa [#allocation68], 0
    %142 = vsyncpa [#allocation71], 0
    loop: start=0, step=1, limit=4
    $region2: #{tsvqvae_forward.1} parent=1 // loop_pre_header
      _
    $region3: #{tsvqvae_forward.1} parent=1 // loop_header
      %s144 = sphi 0, %s148
      %p145 = scmp.ge.s32.totalorder %s144, 4
      %s154 = sphi 0, %s156
      %s157 = sphi 0, %s154
      %s158 = sphi 0, %s157
      %s174 = sphi 0, %s158
      %s178 = sphi 0, %s178
      %s180 = sphi 0, %s178
      %s181 = sphi 0, %s180
      %s195 = sphi 0, %s181
      %s199 = sphi 0, %s199
      %s201 = sphi 0, %s199
      %s202 = sphi 0, %s201
      %s216 = sphi 0, %s202
      %s220 = sphi 0, %s220
      %s222 = sphi 0, %s220
      %s223 = sphi 0, %s222
      %s237 = sphi 0, %s223
      %s241 = sphi 0, %s241
      %s243 = sphi 0, %s241
      %s244 = sphi 0, %s243
      %s258 = sphi 0, %s244
      %s262 = sphi 0, %s262
      %s264 = sphi 0, %s262
      %s265 = sphi 0, %s264
      %s279 = sphi 0, %s265
      %s283 = sphi 0, %s283
      %s285 = sphi 0, %s283
      %s286 = sphi 0, %s285
      %s300 = sphi 0, %s286
      %s304 = sphi 0, %s304
      %s306 = sphi 0, %s304
      %s307 = sphi 0, %s306
      %s321 = sphi 0, %s307
      %s325 = sphi 0, %s325
      %s327 = sphi 0, %s325
      %s328 = sphi 0, %s327
      %s342 = sphi 0, %s328
      %s346 = sphi 0, %s346
      %s348 = sphi 0, %s346
      %s349 = sphi 0, %s348
      %s363 = sphi 0, %s349
      %s367 = sphi 0, %s367
      %s369 = sphi 0, %s367
      %s370 = sphi 0, %s369
      %s384 = sphi 0, %s370
      %s388 = sphi 0, %s388
      %s390 = sphi 0, %s388
      %s391 = sphi 0, %s390
      %s405 = sphi 0, %s391
      %s409 = sphi 0, %s409
      %s411 = sphi 0, %s409
      %s412 = sphi 0, %s411
      %s426 = sphi 0, %s412
      %s430 = sphi 0, %s430
      %s432 = sphi 0, %s430
      %s433 = sphi 0, %s432
      %s447 = sphi 0, %s433
      %s451 = sphi 0, %s451
      %s453 = sphi 0, %s451
      %s454 = sphi 0, %s453
      %s468 = sphi 0, %s454
      %s472 = sphi 0, %s472
      %s474 = sphi 0, %s472
      %s475 = sphi 0, %s474
      %s489 = sphi 0, %s475
      %s493 = sphi 0, %s493
      %s495 = sphi 0, %s493
      %s496 = sphi 0, %s495
      %s510 = sphi 0, %s496
      %s514 = sphi 0, %s514
      %s516 = sphi 0, %s514
      %s517 = sphi 0, %s516
      %s531 = sphi 0, %s517
      %s535 = sphi 0, %s535
      %s537 = sphi 0, %s535
      %s538 = sphi 0, %s537
      %s552 = sphi 0, %s538
      %s556 = sphi 0, %s556
      %s558 = sphi 0, %s556
      %s559 = sphi 0, %s558
      %s573 = sphi 0, %s559
      %s577 = sphi 0, %s577
      %s579 = sphi 0, %s577
      %s580 = sphi 0, %s579
      %s594 = sphi 0, %s580
      %s598 = sphi 0, %s598
      %s600 = sphi 0, %s598
      %s601 = sphi 0, %s600
      %s615 = sphi 0, %s601
      %s619 = sphi 0, %s619
      %s621 = sphi 0, %s619
      %s622 = sphi 0, %s621
      %s636 = sphi 0, %s622
      %s640 = sphi 0, %s640
      %s642 = sphi 0, %s640
      %s643 = sphi 0, %s642
      %s657 = sphi 0, %s643
      %s661 = sphi 0, %s661
      %s663 = sphi 0, %s661
      %s664 = sphi 0, %s663
      %s678 = sphi 0, %s664
      %s682 = sphi 0, %s682
      %s684 = sphi 0, %s682
      %s685 = sphi 0, %s684
      %s699 = sphi 0, %s685
      %s703 = sphi 0, %s703
      %s705 = sphi 0, %s703
      %s706 = sphi 0, %s705
      %s720 = sphi 0, %s706
      %s724 = sphi 0, %s724
      %s726 = sphi 0, %s724
      %s727 = sphi 0, %s726
      %s741 = sphi 0, %s727
      %s745 = sphi 0, %s745
      %s747 = sphi 0, %s745
      %s748 = sphi 0, %s747
      %s762 = sphi 0, %s748
      %s766 = sphi 0, %s766
      %s768 = sphi 0, %s766
      %s769 = sphi 0, %s768
      %s783 = sphi 0, %s769
      %s787 = sphi 0, %s787
      %s789 = sphi 0, %s787
      %s790 = sphi 0, %s789
      %s804 = sphi 0, %s790
      %s808 = sphi 0, %s808
      %s810 = sphi 0, %s808
      %s811 = sphi 0, %s810
      %s825 = sphi 0, %s811
      %s829 = sphi 0, %s829
      %s831 = sphi 0, %s829
      %s832 = sphi 0, %s831
      %s846 = sphi 0, %s832
      %s850 = sphi 0, %s850
      %s852 = sphi 0, %s850
      %s853 = sphi 0, %s852
      %s867 = sphi 0, %s853
      %s871 = sphi 0, %s871
      %s873 = sphi 0, %s871
      %s874 = sphi 0, %s873
      %s888 = sphi 0, %s874
      %s892 = sphi 0, %s892
      %s894 = sphi 0, %s892
      %s895 = sphi 0, %s894
      %s909 = sphi 0, %s895
      %s913 = sphi 0, %s913
      %s915 = sphi 0, %s913
      %s916 = sphi 0, %s915
      %s930 = sphi 0, %s916
      %s934 = sphi 0, %s934
      %s936 = sphi 0, %s934
      %s937 = sphi 0, %s936
      %s951 = sphi 0, %s937
      %s955 = sphi 0, %s955
      %s957 = sphi 0, %s955
      %s958 = sphi 0, %s957
      %s972 = sphi 0, %s958
      %s976 = sphi 0, %s976
      %s978 = sphi 0, %s976
      %s979 = sphi 0, %s978
      %s993 = sphi 0, %s979
      %s997 = sphi 0, %s997
      %s999 = sphi 0, %s997
      %s1000 = sphi 0, %s999
      %s1014 = sphi 0, %s1000
      %s1018 = sphi 0, %s1018
      %s1020 = sphi 0, %s1018
      %s1021 = sphi 0, %s1020
      %s1035 = sphi 0, %s1021
      %s1039 = sphi 0, %s1039
      %s1041 = sphi 0, %s1039
      %s1042 = sphi 0, %s1041
      %s1056 = sphi 0, %s1042
      %s1060 = sphi 0, %s1060
      %s1062 = sphi 0, %s1060
      %s1063 = sphi 0, %s1062
      %s1077 = sphi 0, %s1063
      %s1081 = sphi 0, %s1081
      %s1083 = sphi 0, %s1081
      %s1084 = sphi 0, %s1083
      %s1098 = sphi 0, %s1084
      %s1102 = sphi 0, %s1102
      %s1104 = sphi 0, %s1102
      %s1105 = sphi 0, %s1104
      %s1119 = sphi 0, %s1105
      %s1123 = sphi 0, %s1123
      %s1125 = sphi 0, %s1123
      %s1126 = sphi 0, %s1125
      %s1140 = sphi 0, %s1126
      %s1144 = sphi 0, %s1144
      %s1146 = sphi 0, %s1144
      %s1147 = sphi 0, %s1146
      %s1161 = sphi 0, %s1147
      %s1165 = sphi 0, %s1165
      %s1167 = sphi 0, %s1165
      %s1168 = sphi 0, %s1167
      %s1182 = sphi 0, %s1168
      %s1186 = sphi 0, %s1186
      %s1188 = sphi 0, %s1186
      %s1189 = sphi 0, %s1188
      %s1203 = sphi 0, %s1189
      %s1207 = sphi 0, %s1207
      %s1209 = sphi 0, %s1207
      %s1210 = sphi 0, %s1209
      %s1224 = sphi 0, %s1210
      %s1228 = sphi 0, %s1228
      %s1230 = sphi 0, %s1228
      %s1231 = sphi 0, %s1230
      %s1245 = sphi 0, %s1231
      %s1249 = sphi 0, %s1249
      %s1251 = sphi 0, %s1249
      %s1252 = sphi 0, %s1251
      %s1266 = sphi 0, %s1252
      %s1270 = sphi 0, %s1270
      %s1272 = sphi 0, %s1270
      %s1273 = sphi 0, %s1272
      %s1287 = sphi 0, %s1273
      %s1293 = sphi 0, %s1295
      %s1296 = sphi 0, %s1293
      %s1297 = sphi 0, %s1296
      %s1313 = sphi 0, %s1297
      %s1319 = sphi 0, %s1321
      %s1322 = sphi 0, %s1319
      %s1323 = sphi 0, %s1322
      %s1339 = sphi 0, %s1323
      %s1345 = sphi 0, %s1347
      %s1348 = sphi 0, %s1345
      %s1349 = sphi 0, %s1348
      %s1365 = sphi 0, %s1349
    $region4: #{tsvqvae_forward.1} parent=1 // loop_header_branch
      %147 = sbr.rel (%p145) target = $region8
    $region5: #{tsvqvae_forward.1} parent=1 // loop_body
      %s149 = ssub.s32 %s144, 1
      %s150 = ssub.s32 %s144, 2
      %s151 = sadd.s32 %s144, 1
      %s152 = ssub.s32 %s144, %s151
      %p153 = scmp.eq.s32.totalorder %s152, 0
      %s155 = sadd.s32 %s154, 1
      %s156 = scalar_select %p153, %s154, %s155
      %p159 = pneg %p153
      %p160 = scmp.eq.s32.totalorder %s144, 1
      %p161 = por %p159, %p160
      %p162 = scmp.ne.s32.totalorder %s154, %s157
      %p163 = scmp.eq.s32.totalorder %s144, 0
      %p164 = por %p162, %p163
      %p165 = scmp.ne.s32.totalorder %s154, %s157
      %p166 = scmp.eq.s32.totalorder %s149, 1
      %p167 = por %p165, %p166
      %p168 = scmp.ne.s32.totalorder %s157, %s158
      %p169 = scmp.eq.s32.totalorder %s149, 0
      %p170 = por %p168, %p169
      %p171 = scmp.ne.s32.totalorder %s157, %s158
      %p172 = scmp.eq.s32.totalorder %s150, 1
      %p173 = por %p171, %p172
      %p175 = scmp.ne.s32.totalorder %s158, %s174
      %p176 = scmp.eq.s32.totalorder %s150, 0
      %p177 = por %p175, %p176
      %s179 = sadd.s32 %s178, 1
      %p182 = scmp.eq.s32.totalorder %s144, 1
      %p183 = scmp.ne.s32.totalorder %s178, %s180
      %p184 = scmp.eq.s32.totalorder %s144, 0
      %p185 = por %p183, %p184
      %p186 = scmp.ne.s32.totalorder %s178, %s180
      %p187 = scmp.eq.s32.totalorder %s149, 1
      %p188 = por %p186, %p187
      %p189 = scmp.ne.s32.totalorder %s180, %s181
      %p190 = scmp.eq.s32.totalorder %s149, 0
      %p191 = por %p189, %p190
      %p192 = scmp.ne.s32.totalorder %s180, %s181
      %p193 = scmp.eq.s32.totalorder %s150, 1
      %p194 = por %p192, %p193
      %p196 = scmp.ne.s32.totalorder %s181, %s195
      %p197 = scmp.eq.s32.totalorder %s150, 0
      %p198 = por %p196, %p197
      %s200 = sadd.s32 %s199, 1
      %p203 = scmp.eq.s32.totalorder %s144, 1
      %p204 = scmp.ne.s32.totalorder %s199, %s201
      %p205 = scmp.eq.s32.totalorder %s144, 0
      %p206 = por %p204, %p205
      %p207 = scmp.ne.s32.totalorder %s199, %s201
      %p208 = scmp.eq.s32.totalorder %s149, 1
      %p209 = por %p207, %p208
      %p210 = scmp.ne.s32.totalorder %s201, %s202
      %p211 = scmp.eq.s32.totalorder %s149, 0
      %p212 = por %p210, %p211
      %p213 = scmp.ne.s32.totalorder %s201, %s202
      %p214 = scmp.eq.s32.totalorder %s150, 1
      %p215 = por %p213, %p214
      %p217 = scmp.ne.s32.totalorder %s202, %s216
      %p218 = scmp.eq.s32.totalorder %s150, 0
      %p219 = por %p217, %p218
      %s221 = sadd.s32 %s220, 1
      %p224 = scmp.eq.s32.totalorder %s144, 1
      %p225 = scmp.ne.s32.totalorder %s220, %s222
      %p226 = scmp.eq.s32.totalorder %s144, 0
      %p227 = por %p225, %p226
      %p228 = scmp.ne.s32.totalorder %s220, %s222
      %p229 = scmp.eq.s32.totalorder %s149, 1
      %p230 = por %p228, %p229
      %p231 = scmp.ne.s32.totalorder %s222, %s223
      %p232 = scmp.eq.s32.totalorder %s149, 0
      %p233 = por %p231, %p232
      %p234 = scmp.ne.s32.totalorder %s222, %s223
      %p235 = scmp.eq.s32.totalorder %s150, 1
      %p236 = por %p234, %p235
      %p238 = scmp.ne.s32.totalorder %s223, %s237
      %p239 = scmp.eq.s32.totalorder %s150, 0
      %p240 = por %p238, %p239
      %s242 = sadd.s32 %s241, 1
      %p245 = scmp.eq.s32.totalorder %s144, 1
      %p246 = scmp.ne.s32.totalorder %s241, %s243
      %p247 = scmp.eq.s32.totalorder %s144, 0
      %p248 = por %p246, %p247
      %p249 = scmp.ne.s32.totalorder %s241, %s243
      %p250 = scmp.eq.s32.totalorder %s149, 1
      %p251 = por %p249, %p250
      %p252 = scmp.ne.s32.totalorder %s243, %s244
      %p253 = scmp.eq.s32.totalorder %s149, 0
      %p254 = por %p252, %p253
      %p255 = scmp.ne.s32.totalorder %s243, %s244
      %p256 = scmp.eq.s32.totalorder %s150, 1
      %p257 = por %p255, %p256
      %p259 = scmp.ne.s32.totalorder %s244, %s258
      %p260 = scmp.eq.s32.totalorder %s150, 0
      %p261 = por %p259, %p260
      %s263 = sadd.s32 %s262, 1
      %p266 = scmp.eq.s32.totalorder %s144, 1
      %p267 = scmp.ne.s32.totalorder %s262, %s264
      %p268 = scmp.eq.s32.totalorder %s144, 0
      %p269 = por %p267, %p268
      %p270 = scmp.ne.s32.totalorder %s262, %s264
      %p271 = scmp.eq.s32.totalorder %s149, 1
      %p272 = por %p270, %p271
      %p273 = scmp.ne.s32.totalorder %s264, %s265
      %p274 = scmp.eq.s32.totalorder %s149, 0
      %p275 = por %p273, %p274
      %p276 = scmp.ne.s32.totalorder %s264, %s265
      %p277 = scmp.eq.s32.totalorder %s150, 1
      %p278 = por %p276, %p277
      %p280 = scmp.ne.s32.totalorder %s265, %s279
      %p281 = scmp.eq.s32.totalorder %s150, 0
      %p282 = por %p280, %p281
      %s284 = sadd.s32 %s283, 1
      %p287 = scmp.eq.s32.totalorder %s144, 1
      %p288 = scmp.ne.s32.totalorder %s283, %s285
      %p289 = scmp.eq.s32.totalorder %s144, 0
      %p290 = por %p288, %p289
      %p291 = scmp.ne.s32.totalorder %s283, %s285
      %p292 = scmp.eq.s32.totalorder %s149, 1
      %p293 = por %p291, %p292
      %p294 = scmp.ne.s32.totalorder %s285, %s286
      %p295 = scmp.eq.s32.totalorder %s149, 0
      %p296 = por %p294, %p295
      %p297 = scmp.ne.s32.totalorder %s285, %s286
      %p298 = scmp.eq.s32.totalorder %s150, 1
      %p299 = por %p297, %p298
      %p301 = scmp.ne.s32.totalorder %s286, %s300
      %p302 = scmp.eq.s32.totalorder %s150, 0
      %p303 = por %p301, %p302
      %s305 = sadd.s32 %s304, 1
      %p308 = scmp.eq.s32.totalorder %s144, 1
      %p309 = scmp.ne.s32.totalorder %s304, %s306
      %p310 = scmp.eq.s32.totalorder %s144, 0
      %p311 = por %p309, %p310
      %p312 = scmp.ne.s32.totalorder %s304, %s306
      %p313 = scmp.eq.s32.totalorder %s149, 1
      %p314 = por %p312, %p313
      %p315 = scmp.ne.s32.totalorder %s306, %s307
      %p316 = scmp.eq.s32.totalorder %s149, 0
      %p317 = por %p315, %p316
      %p318 = scmp.ne.s32.totalorder %s306, %s307
      %p319 = scmp.eq.s32.totalorder %s150, 1
      %p320 = por %p318, %p319
      %p322 = scmp.ne.s32.totalorder %s307, %s321
      %p323 = scmp.eq.s32.totalorder %s150, 0
      %p324 = por %p322, %p323
      %s326 = sadd.s32 %s325, 1
      %p329 = scmp.eq.s32.totalorder %s144, 1
      %p330 = scmp.ne.s32.totalorder %s325, %s327
      %p331 = scmp.eq.s32.totalorder %s144, 0
      %p332 = por %p330, %p331
      %p333 = scmp.ne.s32.totalorder %s325, %s327
      %p334 = scmp.eq.s32.totalorder %s149, 1
      %p335 = por %p333, %p334
      %p336 = scmp.ne.s32.totalorder %s327, %s328
      %p337 = scmp.eq.s32.totalorder %s149, 0
      %p338 = por %p336, %p337
      %p339 = scmp.ne.s32.totalorder %s327, %s328
      %p340 = scmp.eq.s32.totalorder %s150, 1
      %p341 = por %p339, %p340
      %p343 = scmp.ne.s32.totalorder %s328, %s342
      %p344 = scmp.eq.s32.totalorder %s150, 0
      %p345 = por %p343, %p344
      %s347 = sadd.s32 %s346, 1
      %p350 = scmp.eq.s32.totalorder %s144, 1
      %p351 = scmp.ne.s32.totalorder %s346, %s348
      %p352 = scmp.eq.s32.totalorder %s144, 0
      %p353 = por %p351, %p352
      %p354 = scmp.ne.s32.totalorder %s346, %s348
      %p355 = scmp.eq.s32.totalorder %s149, 1
      %p356 = por %p354, %p355
      %p357 = scmp.ne.s32.totalorder %s348, %s349
      %p358 = scmp.eq.s32.totalorder %s149, 0
      %p359 = por %p357, %p358
      %p360 = scmp.ne.s32.totalorder %s348, %s349
      %p361 = scmp.eq.s32.totalorder %s150, 1
      %p362 = por %p360, %p361
      %p364 = scmp.ne.s32.totalorder %s349, %s363
      %p365 = scmp.eq.s32.totalorder %s150, 0
      %p366 = por %p364, %p365
      %s368 = sadd.s32 %s367, 1
      %p371 = scmp.eq.s32.totalorder %s144, 1
      %p372 = scmp.ne.s32.totalorder %s367, %s369
      %p373 = scmp.eq.s32.totalorder %s144, 0
      %p374 = por %p372, %p373
      %p375 = scmp.ne.s32.totalorder %s367, %s369
      %p376 = scmp.eq.s32.totalorder %s149, 1
      %p377 = por %p375, %p376
      %p378 = scmp.ne.s32.totalorder %s369, %s370
      %p379 = scmp.eq.s32.totalorder %s149, 0
      %p380 = por %p378, %p379
      %p381 = scmp.ne.s32.totalorder %s369, %s370
      %p382 = scmp.eq.s32.totalorder %s150, 1
      %p383 = por %p381, %p382
      %p385 = scmp.ne.s32.totalorder %s370, %s384
      %p386 = scmp.eq.s32.totalorder %s150, 0
      %p387 = por %p385, %p386
      %s389 = sadd.s32 %s388, 1
      %p392 = scmp.eq.s32.totalorder %s144, 1
      %p393 = scmp.ne.s32.totalorder %s388, %s390
      %p394 = scmp.eq.s32.totalorder %s144, 0
      %p395 = por %p393, %p394
      %p396 = scmp.ne.s32.totalorder %s388, %s390
      %p397 = scmp.eq.s32.totalorder %s149, 1
      %p398 = por %p396, %p397
      %p399 = scmp.ne.s32.totalorder %s390, %s391
      %p400 = scmp.eq.s32.totalorder %s149, 0
      %p401 = por %p399, %p400
      %p402 = scmp.ne.s32.totalorder %s390, %s391
      %p403 = scmp.eq.s32.totalorder %s150, 1
      %p404 = por %p402, %p403
      %p406 = scmp.ne.s32.totalorder %s391, %s405
      %p407 = scmp.eq.s32.totalorder %s150, 0
      %p408 = por %p406, %p407
      %s410 = sadd.s32 %s409, 1
      %p413 = scmp.eq.s32.totalorder %s144, 1
      %p414 = scmp.ne.s32.totalorder %s409, %s411
      %p415 = scmp.eq.s32.totalorder %s144, 0
      %p416 = por %p414, %p415
      %p417 = scmp.ne.s32.totalorder %s409, %s411
      %p418 = scmp.eq.s32.totalorder %s149, 1
      %p419 = por %p417, %p418
      %p420 = scmp.ne.s32.totalorder %s411, %s412
      %p421 = scmp.eq.s32.totalorder %s149, 0
      %p422 = por %p420, %p421
      %p423 = scmp.ne.s32.totalorder %s411, %s412
      %p424 = scmp.eq.s32.totalorder %s150, 1
      %p425 = por %p423, %p424
      %p427 = scmp.ne.s32.totalorder %s412, %s426
      %p428 = scmp.eq.s32.totalorder %s150, 0
      %p429 = por %p427, %p428
      %s431 = sadd.s32 %s430, 1
      %p434 = scmp.eq.s32.totalorder %s144, 1
      %p435 = scmp.ne.s32.totalorder %s430, %s432
      %p436 = scmp.eq.s32.totalorder %s144, 0
      %p437 = por %p435, %p436
      %p438 = scmp.ne.s32.totalorder %s430, %s432
      %p439 = scmp.eq.s32.totalorder %s149, 1
      %p440 = por %p438, %p439
      %p441 = scmp.ne.s32.totalorder %s432, %s433
      %p442 = scmp.eq.s32.totalorder %s149, 0
      %p443 = por %p441, %p442
      %p444 = scmp.ne.s32.totalorder %s432, %s433
      %p445 = scmp.eq.s32.totalorder %s150, 1
      %p446 = por %p444, %p445
      %p448 = scmp.ne.s32.totalorder %s433, %s447
      %p449 = scmp.eq.s32.totalorder %s150, 0
      %p450 = por %p448, %p449
      %s452 = sadd.s32 %s451, 1
      %p455 = scmp.eq.s32.totalorder %s144, 1
      %p456 = scmp.ne.s32.totalorder %s451, %s453
      %p457 = scmp.eq.s32.totalorder %s144, 0
      %p458 = por %p456, %p457
      %p459 = scmp.ne.s32.totalorder %s451, %s453
      %p460 = scmp.eq.s32.totalorder %s149, 1
      %p461 = por %p459, %p460
      %p462 = scmp.ne.s32.totalorder %s453, %s454
      %p463 = scmp.eq.s32.totalorder %s149, 0
      %p464 = por %p462, %p463
      %p465 = scmp.ne.s32.totalorder %s453, %s454
      %p466 = scmp.eq.s32.totalorder %s150, 1
      %p467 = por %p465, %p466
      %p469 = scmp.ne.s32.totalorder %s454, %s468
      %p470 = scmp.eq.s32.totalorder %s150, 0
      %p471 = por %p469, %p470
      %s473 = sadd.s32 %s472, 1
      %p476 = scmp.eq.s32.totalorder %s144, 1
      %p477 = scmp.ne.s32.totalorder %s472, %s474
      %p478 = scmp.eq.s32.totalorder %s144, 0
      %p479 = por %p477, %p478
      %p480 = scmp.ne.s32.totalorder %s472, %s474
      %p481 = scmp.eq.s32.totalorder %s149, 1
      %p482 = por %p480, %p481
      %p483 = scmp.ne.s32.totalorder %s474, %s475
      %p484 = scmp.eq.s32.totalorder %s149, 0
      %p485 = por %p483, %p484
      %p486 = scmp.ne.s32.totalorder %s474, %s475
      %p487 = scmp.eq.s32.totalorder %s150, 1
      %p488 = por %p486, %p487
      %p490 = scmp.ne.s32.totalorder %s475, %s489
      %p491 = scmp.eq.s32.totalorder %s150, 0
      %p492 = por %p490, %p491
      %s494 = sadd.s32 %s493, 1
      %p497 = scmp.eq.s32.totalorder %s144, 1
      %p498 = scmp.ne.s32.totalorder %s493, %s495
      %p499 = scmp.eq.s32.totalorder %s144, 0
      %p500 = por %p498, %p499
      %p501 = scmp.ne.s32.totalorder %s493, %s495
      %p502 = scmp.eq.s32.totalorder %s149, 1
      %p503 = por %p501, %p502
      %p504 = scmp.ne.s32.totalorder %s495, %s496
      %p505 = scmp.eq.s32.totalorder %s149, 0
      %p506 = por %p504, %p505
      %p507 = scmp.ne.s32.totalorder %s495, %s496
      %p508 = scmp.eq.s32.totalorder %s150, 1
      %p509 = por %p507, %p508
      %p511 = scmp.ne.s32.totalorder %s496, %s510
      %p512 = scmp.eq.s32.totalorder %s150, 0
      %p513 = por %p511, %p512
      %s515 = sadd.s32 %s514, 1
      %p518 = scmp.eq.s32.totalorder %s144, 1
      %p519 = scmp.ne.s32.totalorder %s514, %s516
      %p520 = scmp.eq.s32.totalorder %s144, 0
      %p521 = por %p519, %p520
      %p522 = scmp.ne.s32.totalorder %s514, %s516
      %p523 = scmp.eq.s32.totalorder %s149, 1
      %p524 = por %p522, %p523
      %p525 = scmp.ne.s32.totalorder %s516, %s517
      %p526 = scmp.eq.s32.totalorder %s149, 0
      %p527 = por %p525, %p526
      %p528 = scmp.ne.s32.totalorder %s516, %s517
      %p529 = scmp.eq.s32.totalorder %s150, 1
      %p530 = por %p528, %p529
      %p532 = scmp.ne.s32.totalorder %s517, %s531
      %p533 = scmp.eq.s32.totalorder %s150, 0
      %p534 = por %p532, %p533
      %s536 = sadd.s32 %s535, 1
      %p539 = scmp.eq.s32.totalorder %s144, 1
      %p540 = scmp.ne.s32.totalorder %s535, %s537
      %p541 = scmp.eq.s32.totalorder %s144, 0
      %p542 = por %p540, %p541
      %p543 = scmp.ne.s32.totalorder %s535, %s537
      %p544 = scmp.eq.s32.totalorder %s149, 1
      %p545 = por %p543, %p544
      %p546 = scmp.ne.s32.totalorder %s537, %s538
      %p547 = scmp.eq.s32.totalorder %s149, 0
      %p548 = por %p546, %p547
      %p549 = scmp.ne.s32.totalorder %s537, %s538
      %p550 = scmp.eq.s32.totalorder %s150, 1
      %p551 = por %p549, %p550
      %p553 = scmp.ne.s32.totalorder %s538, %s552
      %p554 = scmp.eq.s32.totalorder %s150, 0
      %p555 = por %p553, %p554
      %s557 = sadd.s32 %s556, 1
      %p560 = scmp.eq.s32.totalorder %s144, 1
      %p561 = scmp.ne.s32.totalorder %s556, %s558
      %p562 = scmp.eq.s32.totalorder %s144, 0
      %p563 = por %p561, %p562
      %p564 = scmp.ne.s32.totalorder %s556, %s558
      %p565 = scmp.eq.s32.totalorder %s149, 1
      %p566 = por %p564, %p565
      %p567 = scmp.ne.s32.totalorder %s558, %s559
      %p568 = scmp.eq.s32.totalorder %s149, 0
      %p569 = por %p567, %p568
      %p570 = scmp.ne.s32.totalorder %s558, %s559
      %p571 = scmp.eq.s32.totalorder %s150, 1
      %p572 = por %p570, %p571
      %p574 = scmp.ne.s32.totalorder %s559, %s573
      %p575 = scmp.eq.s32.totalorder %s150, 0
      %p576 = por %p574, %p575
      %s578 = sadd.s32 %s577, 1
      %p581 = scmp.eq.s32.totalorder %s144, 1
      %p582 = scmp.ne.s32.totalorder %s577, %s579
      %p583 = scmp.eq.s32.totalorder %s144, 0
      %p584 = por %p582, %p583
      %p585 = scmp.ne.s32.totalorder %s577, %s579
      %p586 = scmp.eq.s32.totalorder %s149, 1
      %p587 = por %p585, %p586
      %p588 = scmp.ne.s32.totalorder %s579, %s580
      %p589 = scmp.eq.s32.totalorder %s149, 0
      %p590 = por %p588, %p589
      %p591 = scmp.ne.s32.totalorder %s579, %s580
      %p592 = scmp.eq.s32.totalorder %s150, 1
      %p593 = por %p591, %p592
      %p595 = scmp.ne.s32.totalorder %s580, %s594
      %p596 = scmp.eq.s32.totalorder %s150, 0
      %p597 = por %p595, %p596
      %s599 = sadd.s32 %s598, 1
      %p602 = scmp.eq.s32.totalorder %s144, 1
      %p603 = scmp.ne.s32.totalorder %s598, %s600
      %p604 = scmp.eq.s32.totalorder %s144, 0
      %p605 = por %p603, %p604
      %p606 = scmp.ne.s32.totalorder %s598, %s600
      %p607 = scmp.eq.s32.totalorder %s149, 1
      %p608 = por %p606, %p607
      %p609 = scmp.ne.s32.totalorder %s600, %s601
      %p610 = scmp.eq.s32.totalorder %s149, 0
      %p611 = por %p609, %p610
      %p612 = scmp.ne.s32.totalorder %s600, %s601
      %p613 = scmp.eq.s32.totalorder %s150, 1
      %p614 = por %p612, %p613
      %p616 = scmp.ne.s32.totalorder %s601, %s615
      %p617 = scmp.eq.s32.totalorder %s150, 0
      %p618 = por %p616, %p617
      %s620 = sadd.s32 %s619, 1
      %p623 = scmp.eq.s32.totalorder %s144, 1
      %p624 = scmp.ne.s32.totalorder %s619, %s621
      %p625 = scmp.eq.s32.totalorder %s144, 0
      %p626 = por %p624, %p625
      %p627 = scmp.ne.s32.totalorder %s619, %s621
      %p628 = scmp.eq.s32.totalorder %s149, 1
      %p629 = por %p627, %p628
      %p630 = scmp.ne.s32.totalorder %s621, %s622
      %p631 = scmp.eq.s32.totalorder %s149, 0
      %p632 = por %p630, %p631
      %p633 = scmp.ne.s32.totalorder %s621, %s622
      %p634 = scmp.eq.s32.totalorder %s150, 1
      %p635 = por %p633, %p634
      %p637 = scmp.ne.s32.totalorder %s622, %s636
      %p638 = scmp.eq.s32.totalorder %s150, 0
      %p639 = por %p637, %p638
      %s641 = sadd.s32 %s640, 1
      %p644 = scmp.eq.s32.totalorder %s144, 1
      %p645 = scmp.ne.s32.totalorder %s640, %s642
      %p646 = scmp.eq.s32.totalorder %s144, 0
      %p647 = por %p645, %p646
      %p648 = scmp.ne.s32.totalorder %s640, %s642
      %p649 = scmp.eq.s32.totalorder %s149, 1
      %p650 = por %p648, %p649
      %p651 = scmp.ne.s32.totalorder %s642, %s643
      %p652 = scmp.eq.s32.totalorder %s149, 0
      %p653 = por %p651, %p652
      %p654 = scmp.ne.s32.totalorder %s642, %s643
      %p655 = scmp.eq.s32.totalorder %s150, 1
      %p656 = por %p654, %p655
      %p658 = scmp.ne.s32.totalorder %s643, %s657
      %p659 = scmp.eq.s32.totalorder %s150, 0
      %p660 = por %p658, %p659
      %s662 = sadd.s32 %s661, 1
      %p665 = scmp.eq.s32.totalorder %s144, 1
      %p666 = scmp.ne.s32.totalorder %s661, %s663
      %p667 = scmp.eq.s32.totalorder %s144, 0
      %p668 = por %p666, %p667
      %p669 = scmp.ne.s32.totalorder %s661, %s663
      %p670 = scmp.eq.s32.totalorder %s149, 1
      %p671 = por %p669, %p670
      %p672 = scmp.ne.s32.totalorder %s663, %s664
      %p673 = scmp.eq.s32.totalorder %s149, 0
      %p674 = por %p672, %p673
      %p675 = scmp.ne.s32.totalorder %s663, %s664
      %p676 = scmp.eq.s32.totalorder %s150, 1
      %p677 = por %p675, %p676
      %p679 = scmp.ne.s32.totalorder %s664, %s678
      %p680 = scmp.eq.s32.totalorder %s150, 0
      %p681 = por %p679, %p680
      %s683 = sadd.s32 %s682, 1
      %p686 = scmp.eq.s32.totalorder %s144, 1
      %p687 = scmp.ne.s32.totalorder %s682, %s684
      %p688 = scmp.eq.s32.totalorder %s144, 0
      %p689 = por %p687, %p688
      %p690 = scmp.ne.s32.totalorder %s682, %s684
      %p691 = scmp.eq.s32.totalorder %s149, 1
      %p692 = por %p690, %p691
      %p693 = scmp.ne.s32.totalorder %s684, %s685
      %p694 = scmp.eq.s32.totalorder %s149, 0
      %p695 = por %p693, %p694
      %p696 = scmp.ne.s32.totalorder %s684, %s685
      %p697 = scmp.eq.s32.totalorder %s150, 1
      %p698 = por %p696, %p697
      %p700 = scmp.ne.s32.totalorder %s685, %s699
      %p701 = scmp.eq.s32.totalorder %s150, 0
      %p702 = por %p700, %p701
      %s704 = sadd.s32 %s703, 1
      %p707 = scmp.eq.s32.totalorder %s144, 1
      %p708 = scmp.ne.s32.totalorder %s703, %s705
      %p709 = scmp.eq.s32.totalorder %s144, 0
      %p710 = por %p708, %p709
      %p711 = scmp.ne.s32.totalorder %s703, %s705
      %p712 = scmp.eq.s32.totalorder %s149, 1
      %p713 = por %p711, %p712
      %p714 = scmp.ne.s32.totalorder %s705, %s706
      %p715 = scmp.eq.s32.totalorder %s149, 0
      %p716 = por %p714, %p715
      %p717 = scmp.ne.s32.totalorder %s705, %s706
      %p718 = scmp.eq.s32.totalorder %s150, 1
      %p719 = por %p717, %p718
      %p721 = scmp.ne.s32.totalorder %s706, %s720
      %p722 = scmp.eq.s32.totalorder %s150, 0
      %p723 = por %p721, %p722
      %s725 = sadd.s32 %s724, 1
      %p728 = scmp.eq.s32.totalorder %s144, 1
      %p729 = scmp.ne.s32.totalorder %s724, %s726
      %p730 = scmp.eq.s32.totalorder %s144, 0
      %p731 = por %p729, %p730
      %p732 = scmp.ne.s32.totalorder %s724, %s726
      %p733 = scmp.eq.s32.totalorder %s149, 1
      %p734 = por %p732, %p733
      %p735 = scmp.ne.s32.totalorder %s726, %s727
      %p736 = scmp.eq.s32.totalorder %s149, 0
      %p737 = por %p735, %p736
      %p738 = scmp.ne.s32.totalorder %s726, %s727
      %p739 = scmp.eq.s32.totalorder %s150, 1
      %p740 = por %p738, %p739
      %p742 = scmp.ne.s32.totalorder %s727, %s741
      %p743 = scmp.eq.s32.totalorder %s150, 0
      %p744 = por %p742, %p743
      %s746 = sadd.s32 %s745, 1
      %p749 = scmp.eq.s32.totalorder %s144, 1
      %p750 = scmp.ne.s32.totalorder %s745, %s747
      %p751 = scmp.eq.s32.totalorder %s144, 0
      %p752 = por %p750, %p751
      %p753 = scmp.ne.s32.totalorder %s745, %s747
      %p754 = scmp.eq.s32.totalorder %s149, 1
      %p755 = por %p753, %p754
      %p756 = scmp.ne.s32.totalorder %s747, %s748
      %p757 = scmp.eq.s32.totalorder %s149, 0
      %p758 = por %p756, %p757
      %p759 = scmp.ne.s32.totalorder %s747, %s748
      %p760 = scmp.eq.s32.totalorder %s150, 1
      %p761 = por %p759, %p760
      %p763 = scmp.ne.s32.totalorder %s748, %s762
      %p764 = scmp.eq.s32.totalorder %s150, 0
      %p765 = por %p763, %p764
      %s767 = sadd.s32 %s766, 1
      %p770 = scmp.eq.s32.totalorder %s144, 1
      %p771 = scmp.ne.s32.totalorder %s766, %s768
      %p772 = scmp.eq.s32.totalorder %s144, 0
      %p773 = por %p771, %p772
      %p774 = scmp.ne.s32.totalorder %s766, %s768
      %p775 = scmp.eq.s32.totalorder %s149, 1
      %p776 = por %p774, %p775
      %p777 = scmp.ne.s32.totalorder %s768, %s769
      %p778 = scmp.eq.s32.totalorder %s149, 0
      %p779 = por %p777, %p778
      %p780 = scmp.ne.s32.totalorder %s768, %s769
      %p781 = scmp.eq.s32.totalorder %s150, 1
      %p782 = por %p780, %p781
      %p784 = scmp.ne.s32.totalorder %s769, %s783
      %p785 = scmp.eq.s32.totalorder %s150, 0
      %p786 = por %p784, %p785
      %s788 = sadd.s32 %s787, 1
      %p791 = scmp.eq.s32.totalorder %s144, 1
      %p792 = scmp.ne.s32.totalorder %s787, %s789
      %p793 = scmp.eq.s32.totalorder %s144, 0
      %p794 = por %p792, %p793
      %p795 = scmp.ne.s32.totalorder %s787, %s789
      %p796 = scmp.eq.s32.totalorder %s149, 1
      %p797 = por %p795, %p796
      %p798 = scmp.ne.s32.totalorder %s789, %s790
      %p799 = scmp.eq.s32.totalorder %s149, 0
      %p800 = por %p798, %p799
      %p801 = scmp.ne.s32.totalorder %s789, %s790
      %p802 = scmp.eq.s32.totalorder %s150, 1
      %p803 = por %p801, %p802
      %p805 = scmp.ne.s32.totalorder %s790, %s804
      %p806 = scmp.eq.s32.totalorder %s150, 0
      %p807 = por %p805, %p806
      %s809 = sadd.s32 %s808, 1
      %p812 = scmp.eq.s32.totalorder %s144, 1
      %p813 = scmp.ne.s32.totalorder %s808, %s810
      %p814 = scmp.eq.s32.totalorder %s144, 0
      %p815 = por %p813, %p814
      %p816 = scmp.ne.s32.totalorder %s808, %s810
      %p817 = scmp.eq.s32.totalorder %s149, 1
      %p818 = por %p816, %p817
      %p819 = scmp.ne.s32.totalorder %s810, %s811
      %p820 = scmp.eq.s32.totalorder %s149, 0
      %p821 = por %p819, %p820
      %p822 = scmp.ne.s32.totalorder %s810, %s811
      %p823 = scmp.eq.s32.totalorder %s150, 1
      %p824 = por %p822, %p823
      %p826 = scmp.ne.s32.totalorder %s811, %s825
      %p827 = scmp.eq.s32.totalorder %s150, 0
      %p828 = por %p826, %p827
      %s830 = sadd.s32 %s829, 1
      %p833 = scmp.eq.s32.totalorder %s144, 1
      %p834 = scmp.ne.s32.totalorder %s829, %s831
      %p835 = scmp.eq.s32.totalorder %s144, 0
      %p836 = por %p834, %p835
      %p837 = scmp.ne.s32.totalorder %s829, %s831
      %p838 = scmp.eq.s32.totalorder %s149, 1
      %p839 = por %p837, %p838
      %p840 = scmp.ne.s32.totalorder %s831, %s832
      %p841 = scmp.eq.s32.totalorder %s149, 0
      %p842 = por %p840, %p841
      %p843 = scmp.ne.s32.totalorder %s831, %s832
      %p844 = scmp.eq.s32.totalorder %s150, 1
      %p845 = por %p843, %p844
      %p847 = scmp.ne.s32.totalorder %s832, %s846
      %p848 = scmp.eq.s32.totalorder %s150, 0
      %p849 = por %p847, %p848
      %s851 = sadd.s32 %s850, 1
      %p854 = scmp.eq.s32.totalorder %s144, 1
      %p855 = scmp.ne.s32.totalorder %s850, %s852
      %p856 = scmp.eq.s32.totalorder %s144, 0
      %p857 = por %p855, %p856
      %p858 = scmp.ne.s32.totalorder %s850, %s852
      %p859 = scmp.eq.s32.totalorder %s149, 1
      %p860 = por %p858, %p859
      %p861 = scmp.ne.s32.totalorder %s852, %s853
      %p862 = scmp.eq.s32.totalorder %s149, 0
      %p863 = por %p861, %p862
      %p864 = scmp.ne.s32.totalorder %s852, %s853
      %p865 = scmp.eq.s32.totalorder %s150, 1
      %p866 = por %p864, %p865
      %p868 = scmp.ne.s32.totalorder %s853, %s867
      %p869 = scmp.eq.s32.totalorder %s150, 0
      %p870 = por %p868, %p869
      %s872 = sadd.s32 %s871, 1
      %p875 = scmp.eq.s32.totalorder %s144, 1
      %p876 = scmp.ne.s32.totalorder %s871, %s873
      %p877 = scmp.eq.s32.totalorder %s144, 0
      %p878 = por %p876, %p877
      %p879 = scmp.ne.s32.totalorder %s871, %s873
      %p880 = scmp.eq.s32.totalorder %s149, 1
      %p881 = por %p879, %p880
      %p882 = scmp.ne.s32.totalorder %s873, %s874
      %p883 = scmp.eq.s32.totalorder %s149, 0
      %p884 = por %p882, %p883
      %p885 = scmp.ne.s32.totalorder %s873, %s874
      %p886 = scmp.eq.s32.totalorder %s150, 1
      %p887 = por %p885, %p886
      %p889 = scmp.ne.s32.totalorder %s874, %s888
      %p890 = scmp.eq.s32.totalorder %s150, 0
      %p891 = por %p889, %p890
      %s893 = sadd.s32 %s892, 1
      %p896 = scmp.eq.s32.totalorder %s144, 1
      %p897 = scmp.ne.s32.totalorder %s892, %s894
      %p898 = scmp.eq.s32.totalorder %s144, 0
      %p899 = por %p897, %p898
      %p900 = scmp.ne.s32.totalorder %s892, %s894
      %p901 = scmp.eq.s32.totalorder %s149, 1
      %p902 = por %p900, %p901
      %p903 = scmp.ne.s32.totalorder %s894, %s895
      %p904 = scmp.eq.s32.totalorder %s149, 0
      %p905 = por %p903, %p904
      %p906 = scmp.ne.s32.totalorder %s894, %s895
      %p907 = scmp.eq.s32.totalorder %s150, 1
      %p908 = por %p906, %p907
      %p910 = scmp.ne.s32.totalorder %s895, %s909
      %p911 = scmp.eq.s32.totalorder %s150, 0
      %p912 = por %p910, %p911
      %s914 = sadd.s32 %s913, 1
      %p917 = scmp.eq.s32.totalorder %s144, 1
      %p918 = scmp.ne.s32.totalorder %s913, %s915
      %p919 = scmp.eq.s32.totalorder %s144, 0
      %p920 = por %p918, %p919
      %p921 = scmp.ne.s32.totalorder %s913, %s915
      %p922 = scmp.eq.s32.totalorder %s149, 1
      %p923 = por %p921, %p922
      %p924 = scmp.ne.s32.totalorder %s915, %s916
      %p925 = scmp.eq.s32.totalorder %s149, 0
      %p926 = por %p924, %p925
      %p927 = scmp.ne.s32.totalorder %s915, %s916
      %p928 = scmp.eq.s32.totalorder %s150, 1
      %p929 = por %p927, %p928
      %p931 = scmp.ne.s32.totalorder %s916, %s930
      %p932 = scmp.eq.s32.totalorder %s150, 0
      %p933 = por %p931, %p932
      %s935 = sadd.s32 %s934, 1
      %p938 = scmp.eq.s32.totalorder %s144, 1
      %p939 = scmp.ne.s32.totalorder %s934, %s936
      %p940 = scmp.eq.s32.totalorder %s144, 0
      %p941 = por %p939, %p940
      %p942 = scmp.ne.s32.totalorder %s934, %s936
      %p943 = scmp.eq.s32.totalorder %s149, 1
      %p944 = por %p942, %p943
      %p945 = scmp.ne.s32.totalorder %s936, %s937
      %p946 = scmp.eq.s32.totalorder %s149, 0
      %p947 = por %p945, %p946
      %p948 = scmp.ne.s32.totalorder %s936, %s937
      %p949 = scmp.eq.s32.totalorder %s150, 1
      %p950 = por %p948, %p949
      %p952 = scmp.ne.s32.totalorder %s937, %s951
      %p953 = scmp.eq.s32.totalorder %s150, 0
      %p954 = por %p952, %p953
      %s956 = sadd.s32 %s955, 1
      %p959 = scmp.eq.s32.totalorder %s144, 1
      %p960 = scmp.ne.s32.totalorder %s955, %s957
      %p961 = scmp.eq.s32.totalorder %s144, 0
      %p962 = por %p960, %p961
      %p963 = scmp.ne.s32.totalorder %s955, %s957
      %p964 = scmp.eq.s32.totalorder %s149, 1
      %p965 = por %p963, %p964
      %p966 = scmp.ne.s32.totalorder %s957, %s958
      %p967 = scmp.eq.s32.totalorder %s149, 0
      %p968 = por %p966, %p967
      %p969 = scmp.ne.s32.totalorder %s957, %s958
      %p970 = scmp.eq.s32.totalorder %s150, 1
      %p971 = por %p969, %p970
      %p973 = scmp.ne.s32.totalorder %s958, %s972
      %p974 = scmp.eq.s32.totalorder %s150, 0
      %p975 = por %p973, %p974
      %s977 = sadd.s32 %s976, 1
      %p980 = scmp.eq.s32.totalorder %s144, 1
      %p981 = scmp.ne.s32.totalorder %s976, %s978
      %p982 = scmp.eq.s32.totalorder %s144, 0
      %p983 = por %p981, %p982
      %p984 = scmp.ne.s32.totalorder %s976, %s978
      %p985 = scmp.eq.s32.totalorder %s149, 1
      %p986 = por %p984, %p985
      %p987 = scmp.ne.s32.totalorder %s978, %s979
      %p988 = scmp.eq.s32.totalorder %s149, 0
      %p989 = por %p987, %p988
      %p990 = scmp.ne.s32.totalorder %s978, %s979
      %p991 = scmp.eq.s32.totalorder %s150, 1
      %p992 = por %p990, %p991
      %p994 = scmp.ne.s32.totalorder %s979, %s993
      %p995 = scmp.eq.s32.totalorder %s150, 0
      %p996 = por %p994, %p995
      %s998 = sadd.s32 %s997, 1
      %p1001 = scmp.eq.s32.totalorder %s144, 1
      %p1002 = scmp.ne.s32.totalorder %s997, %s999
      %p1003 = scmp.eq.s32.totalorder %s144, 0
      %p1004 = por %p1002, %p1003
      %p1005 = scmp.ne.s32.totalorder %s997, %s999
      %p1006 = scmp.eq.s32.totalorder %s149, 1
      %p1007 = por %p1005, %p1006
      %p1008 = scmp.ne.s32.totalorder %s999, %s1000
      %p1009 = scmp.eq.s32.totalorder %s149, 0
      %p1010 = por %p1008, %p1009
      %p1011 = scmp.ne.s32.totalorder %s999, %s1000
      %p1012 = scmp.eq.s32.totalorder %s150, 1
      %p1013 = por %p1011, %p1012
      %p1015 = scmp.ne.s32.totalorder %s1000, %s1014
      %p1016 = scmp.eq.s32.totalorder %s150, 0
      %p1017 = por %p1015, %p1016
      %s1019 = sadd.s32 %s1018, 1
      %p1022 = scmp.eq.s32.totalorder %s144, 1
      %p1023 = scmp.ne.s32.totalorder %s1018, %s1020
      %p1024 = scmp.eq.s32.totalorder %s144, 0
      %p1025 = por %p1023, %p1024
      %p1026 = scmp.ne.s32.totalorder %s1018, %s1020
      %p1027 = scmp.eq.s32.totalorder %s149, 1
      %p1028 = por %p1026, %p1027
      %p1029 = scmp.ne.s32.totalorder %s1020, %s1021
      %p1030 = scmp.eq.s32.totalorder %s149, 0
      %p1031 = por %p1029, %p1030
      %p1032 = scmp.ne.s32.totalorder %s1020, %s1021
      %p1033 = scmp.eq.s32.totalorder %s150, 1
      %p1034 = por %p1032, %p1033
      %p1036 = scmp.ne.s32.totalorder %s1021, %s1035
      %p1037 = scmp.eq.s32.totalorder %s150, 0
      %p1038 = por %p1036, %p1037
      %s1040 = sadd.s32 %s1039, 1
      %p1043 = scmp.eq.s32.totalorder %s144, 1
      %p1044 = scmp.ne.s32.totalorder %s1039, %s1041
      %p1045 = scmp.eq.s32.totalorder %s144, 0
      %p1046 = por %p1044, %p1045
      %p1047 = scmp.ne.s32.totalorder %s1039, %s1041
      %p1048 = scmp.eq.s32.totalorder %s149, 1
      %p1049 = por %p1047, %p1048
      %p1050 = scmp.ne.s32.totalorder %s1041, %s1042
      %p1051 = scmp.eq.s32.totalorder %s149, 0
      %p1052 = por %p1050, %p1051
      %p1053 = scmp.ne.s32.totalorder %s1041, %s1042
      %p1054 = scmp.eq.s32.totalorder %s150, 1
      %p1055 = por %p1053, %p1054
      %p1057 = scmp.ne.s32.totalorder %s1042, %s1056
      %p1058 = scmp.eq.s32.totalorder %s150, 0
      %p1059 = por %p1057, %p1058
      %s1061 = sadd.s32 %s1060, 1
      %p1064 = scmp.eq.s32.totalorder %s144, 1
      %p1065 = scmp.ne.s32.totalorder %s1060, %s1062
      %p1066 = scmp.eq.s32.totalorder %s144, 0
      %p1067 = por %p1065, %p1066
      %p1068 = scmp.ne.s32.totalorder %s1060, %s1062
      %p1069 = scmp.eq.s32.totalorder %s149, 1
      %p1070 = por %p1068, %p1069
      %p1071 = scmp.ne.s32.totalorder %s1062, %s1063
      %p1072 = scmp.eq.s32.totalorder %s149, 0
      %p1073 = por %p1071, %p1072
      %p1074 = scmp.ne.s32.totalorder %s1062, %s1063
      %p1075 = scmp.eq.s32.totalorder %s150, 1
      %p1076 = por %p1074, %p1075
      %p1078 = scmp.ne.s32.totalorder %s1063, %s1077
      %p1079 = scmp.eq.s32.totalorder %s150, 0
      %p1080 = por %p1078, %p1079
      %s1082 = sadd.s32 %s1081, 1
      %p1085 = scmp.eq.s32.totalorder %s144, 1
      %p1086 = scmp.ne.s32.totalorder %s1081, %s1083
      %p1087 = scmp.eq.s32.totalorder %s144, 0
      %p1088 = por %p1086, %p1087
      %p1089 = scmp.ne.s32.totalorder %s1081, %s1083
      %p1090 = scmp.eq.s32.totalorder %s149, 1
      %p1091 = por %p1089, %p1090
      %p1092 = scmp.ne.s32.totalorder %s1083, %s1084
      %p1093 = scmp.eq.s32.totalorder %s149, 0
      %p1094 = por %p1092, %p1093
      %p1095 = scmp.ne.s32.totalorder %s1083, %s1084
      %p1096 = scmp.eq.s32.totalorder %s150, 1
      %p1097 = por %p1095, %p1096
      %p1099 = scmp.ne.s32.totalorder %s1084, %s1098
      %p1100 = scmp.eq.s32.totalorder %s150, 0
      %p1101 = por %p1099, %p1100
      %s1103 = sadd.s32 %s1102, 1
      %p1106 = scmp.eq.s32.totalorder %s144, 1
      %p1107 = scmp.ne.s32.totalorder %s1102, %s1104
      %p1108 = scmp.eq.s32.totalorder %s144, 0
      %p1109 = por %p1107, %p1108
      %p1110 = scmp.ne.s32.totalorder %s1102, %s1104
      %p1111 = scmp.eq.s32.totalorder %s149, 1
      %p1112 = por %p1110, %p1111
      %p1113 = scmp.ne.s32.totalorder %s1104, %s1105
      %p1114 = scmp.eq.s32.totalorder %s149, 0
      %p1115 = por %p1113, %p1114
      %p1116 = scmp.ne.s32.totalorder %s1104, %s1105
      %p1117 = scmp.eq.s32.totalorder %s150, 1
      %p1118 = por %p1116, %p1117
      %p1120 = scmp.ne.s32.totalorder %s1105, %s1119
      %p1121 = scmp.eq.s32.totalorder %s150, 0
      %p1122 = por %p1120, %p1121
      %s1124 = sadd.s32 %s1123, 1
      %p1127 = scmp.eq.s32.totalorder %s144, 1
      %p1128 = scmp.ne.s32.totalorder %s1123, %s1125
      %p1129 = scmp.eq.s32.totalorder %s144, 0
      %p1130 = por %p1128, %p1129
      %p1131 = scmp.ne.s32.totalorder %s1123, %s1125
      %p1132 = scmp.eq.s32.totalorder %s149, 1
      %p1133 = por %p1131, %p1132
      %p1134 = scmp.ne.s32.totalorder %s1125, %s1126
      %p1135 = scmp.eq.s32.totalorder %s149, 0
      %p1136 = por %p1134, %p1135
      %p1137 = scmp.ne.s32.totalorder %s1125, %s1126
      %p1138 = scmp.eq.s32.totalorder %s150, 1
      %p1139 = por %p1137, %p1138
      %p1141 = scmp.ne.s32.totalorder %s1126, %s1140
      %p1142 = scmp.eq.s32.totalorder %s150, 0
      %p1143 = por %p1141, %p1142
      %s1145 = sadd.s32 %s1144, 1
      %p1148 = scmp.eq.s32.totalorder %s144, 1
      %p1149 = scmp.ne.s32.totalorder %s1144, %s1146
      %p1150 = scmp.eq.s32.totalorder %s144, 0
      %p1151 = por %p1149, %p1150
      %p1152 = scmp.ne.s32.totalorder %s1144, %s1146
      %p1153 = scmp.eq.s32.totalorder %s149, 1
      %p1154 = por %p1152, %p1153
      %p1155 = scmp.ne.s32.totalorder %s1146, %s1147
      %p1156 = scmp.eq.s32.totalorder %s149, 0
      %p1157 = por %p1155, %p1156
      %p1158 = scmp.ne.s32.totalorder %s1146, %s1147
      %p1159 = scmp.eq.s32.totalorder %s150, 1
      %p1160 = por %p1158, %p1159
      %p1162 = scmp.ne.s32.totalorder %s1147, %s1161
      %p1163 = scmp.eq.s32.totalorder %s150, 0
      %p1164 = por %p1162, %p1163
      %s1166 = sadd.s32 %s1165, 1
      %p1169 = scmp.eq.s32.totalorder %s144, 1
      %p1170 = scmp.ne.s32.totalorder %s1165, %s1167
      %p1171 = scmp.eq.s32.totalorder %s144, 0
      %p1172 = por %p1170, %p1171
      %p1173 = scmp.ne.s32.totalorder %s1165, %s1167
      %p1174 = scmp.eq.s32.totalorder %s149, 1
      %p1175 = por %p1173, %p1174
      %p1176 = scmp.ne.s32.totalorder %s1167, %s1168
      %p1177 = scmp.eq.s32.totalorder %s149, 0
      %p1178 = por %p1176, %p1177
      %p1179 = scmp.ne.s32.totalorder %s1167, %s1168
      %p1180 = scmp.eq.s32.totalorder %s150, 1
      %p1181 = por %p1179, %p1180
      %p1183 = scmp.ne.s32.totalorder %s1168, %s1182
      %p1184 = scmp.eq.s32.totalorder %s150, 0
      %p1185 = por %p1183, %p1184
      %s1187 = sadd.s32 %s1186, 1
      %p1190 = scmp.eq.s32.totalorder %s144, 1
      %p1191 = scmp.ne.s32.totalorder %s1186, %s1188
      %p1192 = scmp.eq.s32.totalorder %s144, 0
      %p1193 = por %p1191, %p1192
      %p1194 = scmp.ne.s32.totalorder %s1186, %s1188
      %p1195 = scmp.eq.s32.totalorder %s149, 1
      %p1196 = por %p1194, %p1195
      %p1197 = scmp.ne.s32.totalorder %s1188, %s1189
      %p1198 = scmp.eq.s32.totalorder %s149, 0
      %p1199 = por %p1197, %p1198
      %p1200 = scmp.ne.s32.totalorder %s1188, %s1189
      %p1201 = scmp.eq.s32.totalorder %s150, 1
      %p1202 = por %p1200, %p1201
      %p1204 = scmp.ne.s32.totalorder %s1189, %s1203
      %p1205 = scmp.eq.s32.totalorder %s150, 0
      %p1206 = por %p1204, %p1205
      %s1208 = sadd.s32 %s1207, 1
      %p1211 = scmp.eq.s32.totalorder %s144, 1
      %p1212 = scmp.ne.s32.totalorder %s1207, %s1209
      %p1213 = scmp.eq.s32.totalorder %s144, 0
      %p1214 = por %p1212, %p1213
      %p1215 = scmp.ne.s32.totalorder %s1207, %s1209
      %p1216 = scmp.eq.s32.totalorder %s149, 1
      %p1217 = por %p1215, %p1216
      %p1218 = scmp.ne.s32.totalorder %s1209, %s1210
      %p1219 = scmp.eq.s32.totalorder %s149, 0
      %p1220 = por %p1218, %p1219
      %p1221 = scmp.ne.s32.totalorder %s1209, %s1210
      %p1222 = scmp.eq.s32.totalorder %s150, 1
      %p1223 = por %p1221, %p1222
      %p1225 = scmp.ne.s32.totalorder %s1210, %s1224
      %p1226 = scmp.eq.s32.totalorder %s150, 0
      %p1227 = por %p1225, %p1226
      %s1229 = sadd.s32 %s1228, 1
      %p1232 = scmp.eq.s32.totalorder %s144, 1
      %p1233 = scmp.ne.s32.totalorder %s1228, %s1230
      %p1234 = scmp.eq.s32.totalorder %s144, 0
      %p1235 = por %p1233, %p1234
      %p1236 = scmp.ne.s32.totalorder %s1228, %s1230
      %p1237 = scmp.eq.s32.totalorder %s149, 1
      %p1238 = por %p1236, %p1237
      %p1239 = scmp.ne.s32.totalorder %s1230, %s1231
      %p1240 = scmp.eq.s32.totalorder %s149, 0
      %p1241 = por %p1239, %p1240
      %p1242 = scmp.ne.s32.totalorder %s1230, %s1231
      %p1243 = scmp.eq.s32.totalorder %s150, 1
      %p1244 = por %p1242, %p1243
      %p1246 = scmp.ne.s32.totalorder %s1231, %s1245
      %p1247 = scmp.eq.s32.totalorder %s150, 0
      %p1248 = por %p1246, %p1247
      %s1250 = sadd.s32 %s1249, 1
      %p1253 = scmp.eq.s32.totalorder %s144, 1
      %p1254 = scmp.ne.s32.totalorder %s1249, %s1251
      %p1255 = scmp.eq.s32.totalorder %s144, 0
      %p1256 = por %p1254, %p1255
      %p1257 = scmp.ne.s32.totalorder %s1249, %s1251
      %p1258 = scmp.eq.s32.totalorder %s149, 1
      %p1259 = por %p1257, %p1258
      %p1260 = scmp.ne.s32.totalorder %s1251, %s1252
      %p1261 = scmp.eq.s32.totalorder %s149, 0
      %p1262 = por %p1260, %p1261
      %p1263 = scmp.ne.s32.totalorder %s1251, %s1252
      %p1264 = scmp.eq.s32.totalorder %s150, 1
      %p1265 = por %p1263, %p1264
      %p1267 = scmp.ne.s32.totalorder %s1252, %s1266
      %p1268 = scmp.eq.s32.totalorder %s150, 0
      %p1269 = por %p1267, %p1268
      %s1271 = sadd.s32 %s1270, 1
      %p1274 = scmp.eq.s32.totalorder %s144, 1
      %p1275 = scmp.ne.s32.totalorder %s1270, %s1272
      %p1276 = scmp.eq.s32.totalorder %s144, 0
      %p1277 = por %p1275, %p1276
      %p1278 = scmp.ne.s32.totalorder %s1270, %s1272
      %p1279 = scmp.eq.s32.totalorder %s149, 1
      %p1280 = por %p1278, %p1279
      %p1281 = scmp.ne.s32.totalorder %s1272, %s1273
      %p1282 = scmp.eq.s32.totalorder %s149, 0
      %p1283 = por %p1281, %p1282
      %p1284 = scmp.ne.s32.totalorder %s1272, %s1273
      %p1285 = scmp.eq.s32.totalorder %s150, 1
      %p1286 = por %p1284, %p1285
      %p1288 = scmp.ne.s32.totalorder %s1273, %s1287
      %p1289 = scmp.eq.s32.totalorder %s150, 0
      %p1290 = por %p1288, %p1289
      %s1291 = ssub.s32 %s144, %s151
      %p1292 = scmp.eq.s32.totalorder %s1291, 0
      %s1294 = sadd.s32 %s1293, 1
      %s1295 = scalar_select %p1292, %s1293, %s1294
      %p1298 = pneg %p1292
      %p1299 = scmp.eq.s32.totalorder %s144, 1
      %p1300 = por %p1298, %p1299
      %p1301 = scmp.ne.s32.totalorder %s1293, %s1296
      %p1302 = scmp.eq.s32.totalorder %s144, 0
      %p1303 = por %p1301, %p1302
      %p1304 = scmp.ne.s32.totalorder %s1293, %s1296
      %p1305 = scmp.eq.s32.totalorder %s149, 1
      %p1306 = por %p1304, %p1305
      %p1307 = scmp.ne.s32.totalorder %s1296, %s1297
      %p1308 = scmp.eq.s32.totalorder %s149, 0
      %p1309 = por %p1307, %p1308
      %p1310 = scmp.ne.s32.totalorder %s1296, %s1297
      %p1311 = scmp.eq.s32.totalorder %s150, 1
      %p1312 = por %p1310, %p1311
      %p1314 = scmp.ne.s32.totalorder %s1297, %s1313
      %p1315 = scmp.eq.s32.totalorder %s150, 0
      %p1316 = por %p1314, %p1315
      %s1317 = ssub.s32 %s144, %s151
      %p1318 = scmp.eq.s32.totalorder %s1317, 0
      %s1320 = sadd.s32 %s1319, 1
      %s1321 = scalar_select %p1318, %s1319, %s1320
      %p1324 = pneg %p1318
      %p1325 = scmp.eq.s32.totalorder %s144, 1
      %p1326 = por %p1324, %p1325
      %p1327 = scmp.ne.s32.totalorder %s1319, %s1322
      %p1328 = scmp.eq.s32.totalorder %s144, 0
      %p1329 = por %p1327, %p1328
      %p1330 = scmp.ne.s32.totalorder %s1319, %s1322
      %p1331 = scmp.eq.s32.totalorder %s149, 1
      %p1332 = por %p1330, %p1331
      %p1333 = scmp.ne.s32.totalorder %s1322, %s1323
      %p1334 = scmp.eq.s32.totalorder %s149, 0
      %p1335 = por %p1333, %p1334
      %p1336 = scmp.ne.s32.totalorder %s1322, %s1323
      %p1337 = scmp.eq.s32.totalorder %s150, 1
      %p1338 = por %p1336, %p1337
      %p1340 = scmp.ne.s32.totalorder %s1323, %s1339
      %p1341 = scmp.eq.s32.totalorder %s150, 0
      %p1342 = por %p1340, %p1341
      %s1343 = ssub.s32 %s144, %s151
      %p1344 = scmp.eq.s32.totalorder %s1343, 0
      %s1346 = sadd.s32 %s1345, 1
      %s1347 = scalar_select %p1344, %s1345, %s1346
      %p1350 = pneg %p1344
      %p1351 = scmp.eq.s32.totalorder %s144, 1
      %p1352 = por %p1350, %p1351
      %p1353 = scmp.ne.s32.totalorder %s1345, %s1348
      %p1354 = scmp.eq.s32.totalorder %s144, 0
      %p1355 = por %p1353, %p1354
      %p1356 = scmp.ne.s32.totalorder %s1345, %s1348
      %p1357 = scmp.eq.s32.totalorder %s149, 1
      %p1358 = por %p1356, %p1357
      %p1359 = scmp.ne.s32.totalorder %s1348, %s1349
      %p1360 = scmp.eq.s32.totalorder %s149, 0
      %p1361 = por %p1359, %p1360
      %p1362 = scmp.ne.s32.totalorder %s1348, %s1349
      %p1363 = scmp.eq.s32.totalorder %s150, 1
      %p1364 = por %p1362, %p1363
      %p1366 = scmp.ne.s32.totalorder %s1349, %s1365
      %p1367 = scmp.eq.s32.totalorder %s150, 0
      %p1368 = por %p1366, %p1367
      %p1369 = scmp.le.s32.totalorder 1, %s144
      %p1370 = scmp.lt.s32.totalorder %s144, 3
      %p1371 = pnand %p1369, %p1370
      %p1372 = pneg %p1371
      // Predicated region
      $region9: #{tsvqvae_forward.1} parent=5 // pred_check
        _
      $region10: #{tsvqvae_forward.1} parent=5 // pred_check_branch
        %1374 = sbr.rel (%p1371) target = $region12
      $region11: #{tsvqvae_forward.1} parent=5 // pred_region
        %s1375 = ssub.s32 %s144, 1
        // Predicated region
        $region13: #{tsvqvae_forward.1} parent=11 // pred_check
          %p1376 = pneg %p191
        $region14: #{tsvqvae_forward.1} parent=11 // pred_check_branch
          %1378 = sbr.rel (%p1376) target = $region16
        $region15: #{tsvqvae_forward.1} parent=11 // pred_region
          %1380 = vsyncadd [#allocation3], 0
          %s1382 = sshll.u32 %s3, 4
          %s1383 = int_to_ptr.hbm [resolvable:$true] %s1382
          %s1384 = sshll.u32 [#allocation2], 4
          %s1385 = int_to_ptr.vmem [resolvable:$true] %s1384
          %1387 = dma.hbm_to_vmem [thread:$0]  %s1383, 16, %s1385, [#allocation3]
        $region16: #{tsvqvae_forward.1} parent=11 // pred_fallthru
          _
        // Predicated region
        $region17: #{tsvqvae_forward.1} parent=11 // pred_check
          %p1388 = pneg %p212
        $region18: #{tsvqvae_forward.1} parent=11 // pred_check_branch
          %1390 = sbr.rel (%p1388) target = $region20
        $region19: #{tsvqvae_forward.1} parent=11 // pred_region
          %1392 = vsyncadd [#allocation5], 0
          %s1393 = sshll.u32 %s5, 4
          %s1394 = int_to_ptr.hbm [resolvable:$true] %s1393
          %s1395 = sshll.u32 [#allocation4], 4
          %s1396 = int_to_ptr.vmem [resolvable:$true] %s1395
          %1401 = dma.hbm_to_vmem [thread:$0]  %s1394, 768, %s1396, [#allocation5], 64, 64, 4
        $region20: #{tsvqvae_forward.1} parent=11 // pred_fallthru
          _
        // Predicated region
        $region21: #{tsvqvae_forward.1} parent=11 // pred_check
          %p1402 = pneg %p233
        $region22: #{tsvqvae_forward.1} parent=11 // pred_check_branch
          %1404 = sbr.rel (%p1402) target = $region24
        $region23: #{tsvqvae_forward.1} parent=11 // pred_region
          %1406 = vsyncadd [#allocation5], 0
          %s1408 = sshll.u32 %s7, 4
          %s1409 = int_to_ptr.hbm [resolvable:$true] %s1408
          %s1410 = sshll.u32 [#allocation6], 4
          %s1411 = int_to_ptr.vmem [resolvable:$true] %s1410
          %1413 = dma.hbm_to_vmem [thread:$0]  %s1409, 16, %s1411, [#allocation5]
        $region24: #{tsvqvae_forward.1} parent=11 // pred_fallthru
          _
        // Predicated region
        $region25: #{tsvqvae_forward.1} parent=11 // pred_check
          %p1414 = pneg %p254
        $region26: #{tsvqvae_forward.1} parent=11 // pred_check_branch
          %1416 = sbr.rel (%p1414) target = $region28
        $region27: #{tsvqvae_forward.1} parent=11 // pred_region
          %1418 = vsyncadd [#allocation8], 0
          %s1419 = sshll.u32 %s9, 4
          %s1420 = int_to_ptr.hbm [resolvable:$true] %s1419
          %s1421 = sshll.u32 [#allocation7], 4
          %s1422 = int_to_ptr.vmem [resolvable:$true] %s1421
          %1427 = dma.hbm_to_vmem [thread:$0]  %s1420, 768, %s1422, [#allocation8], 64, 64, 4
        $region28: #{tsvqvae_forward.1} parent=11 // pred_fallthru
          _
        // Predicated region
        $region29: #{tsvqvae_forward.1} parent=11 // pred_check
          %p1428 = pneg %p275
        $region30: #{tsvqvae_forward.1} parent=11 // pred_check_branch
          %1430 = sbr.rel (%p1428) target = $region32
        $region31: #{tsvqvae_forward.1} parent=11 // pred_region
          %1432 = vsyncadd [#allocation8], 0
          %s1434 = sshll.u32 %s11, 4
          %s1435 = int_to_ptr.hbm [resolvable:$true] %s1434
          %s1436 = sshll.u32 [#allocation9], 4
          %s1437 = int_to_ptr.vmem [resolvable:$true] %s1436
          %1439 = dma.hbm_to_vmem [thread:$0]  %s1435, 16, %s1437, [#allocation8]
        $region32: #{tsvqvae_forward.1} parent=11 // pred_fallthru
          _
        // Predicated region
        $region33: #{tsvqvae_forward.1} parent=11 // pred_check
          %p1440 = pneg %p296
        $region34: #{tsvqvae_forward.1} parent=11 // pred_check_branch
          %1442 = sbr.rel (%p1440) target = $region36
        $region35: #{tsvqvae_forward.1} parent=11 // pred_region
          _
        $region36: #{tsvqvae_forward.1} parent=11 // pred_fallthru
          _
        // Predicated region
        $region37: #{tsvqvae_forward.1} parent=11 // pred_check
          %p1443 = pneg %p317
        $region38: #{tsvqvae_forward.1} parent=11 // pred_check_branch
          %1445 = sbr.rel (%p1443) target = $region40
        $region39: #{tsvqvae_forward.1} parent=11 // pred_region
          %1447 = vsyncadd [#allocation11], 0
          %s1449 = sshll.u32 %s15, 4
          %s1450 = int_to_ptr.hbm [resolvable:$true] %s1449
          %s1451 = sshll.u32 [#allocation10], 4
          %s1452 = int_to_ptr.vmem [resolvable:$true] %s1451
          %1454 = dma.hbm_to_vmem [thread:$0]  %s1450, 16, %s1452, [#allocation11]
        $region40: #{tsvqvae_forward.1} parent=11 // pred_fallthru
          _
        // Predicated region
        $region41: #{tsvqvae_forward.1} parent=11 // pred_check
          %p1455 = pneg %p338
        $region42: #{tsvqvae_forward.1} parent=11 // pred_check_branch
          %1457 = sbr.rel (%p1455) target = $region44
        $region43: #{tsvqvae_forward.1} parent=11 // pred_region
          %1459 = vsyncadd [#allocation11], 0
          %s1460 = sshll.u32 %s17, 4
          %s1461 = int_to_ptr.hbm [resolvable:$true] %s1460
          %s1462 = sshll.u32 [#allocation12], 4
          %s1463 = int_to_ptr.vmem [resolvable:$true] %s1462
          %1468 = dma.hbm_to_vmem [thread:$0]  %s1461, 768, %s1463, [#allocation11], 64, 64, 4
        $region44: #{tsvqvae_forward.1} parent=11 // pred_fallthru
          _
        // Predicated region
        $region45: #{tsvqvae_forward.1} parent=11 // pred_check
          %p1469 = pneg %p359
        $region46: #{tsvqvae_forward.1} parent=11 // pred_check_branch
          %1471 = sbr.rel (%p1469) target = $region48
        $region47: #{tsvqvae_forward.1} parent=11 // pred_region
          %1473 = vsyncadd [#allocation14], 0
          %s1475 = sshll.u32 %s19, 4
          %s1476 = int_to_ptr.hbm [resolvable:$true] %s1475
          %s1477 = sshll.u32 [#allocation13], 4
          %s1478 = int_to_ptr.vmem [resolvable:$true] %s1477
          %1480 = dma.hbm_to_vmem [thread:$0]  %s1476, 16, %s1478, [#allocation14]
        $region48: #{tsvqvae_forward.1} parent=11 // pred_fallthru
          _
        // Predicated region
        $region49: #{tsvqvae_forward.1} parent=11 // pred_check
          %p1481 = pneg %p380
        $region50: #{tsvqvae_forward.1} parent=11 // pred_check_branch
          %1483 = sbr.rel (%p1481) target = $region52
        $region51: #{tsvqvae_forward.1} parent=11 // pred_region
          %1485 = vsyncadd [#allocation14], 0
          %s1486 = sshll.u32 %s21, 4
          %s1487 = int_to_ptr.hbm [resolvable:$true] %s1486
          %s1488 = sshll.u32 [#allocation15], 4
          %s1489 = int_to_ptr.vmem [resolvable:$true] %s1488
          %1494 = dma.hbm_to_vmem [thread:$0]  %s1487, 768, %s1489, [#allocation14], 64, 64, 4
        $region52: #{tsvqvae_forward.1} parent=11 // pred_fallthru
          _
        // Predicated region
        $region53: #{tsvqvae_forward.1} parent=11 // pred_check
          %p1495 = pneg %p401
        $region54: #{tsvqvae_forward.1} parent=11 // pred_check_branch
          %1497 = sbr.rel (%p1495) target = $region56
        $region55: #{tsvqvae_forward.1} parent=11 // pred_region
          %1499 = vsyncadd [#allocation17], 0
          %s1501 = sshll.u32 %s23, 4
          %s1502 = int_to_ptr.hbm [resolvable:$true] %s1501
          %s1503 = sshll.u32 [#allocation16], 4
          %s1504 = int_to_ptr.vmem [resolvable:$true] %s1503
          %1506 = dma.hbm_to_vmem [thread:$0]  %s1502, 16, %s1504, [#allocation17]
        $region56: #{tsvqvae_forward.1} parent=11 // pred_fallthru
          _
        // Predicated region
        $region57: #{tsvqvae_forward.1} parent=11 // pred_check
          %p1507 = pneg %p422
        $region58: #{tsvqvae_forward.1} parent=11 // pred_check_branch
          %1509 = sbr.rel (%p1507) target = $region60
        $region59: #{tsvqvae_forward.1} parent=11 // pred_region
          %1511 = vsyncadd [#allocation17], 0
          %s1512 = sshll.u32 %s25, 4
          %s1513 = int_to_ptr.hbm [resolvable:$true] %s1512
          %s1514 = sshll.u32 [#allocation18], 4
          %s1515 = int_to_ptr.vmem [resolvable:$true] %s1514
          %1520 = dma.hbm_to_vmem [thread:$0]  %s1513, 256, %s1515, [#allocation17], 64, 64, 4
        $region60: #{tsvqvae_forward.1} parent=11 // pred_fallthru
          _
        // Predicated region
        $region61: #{tsvqvae_forward.1} parent=11 // pred_check
          %p1521 = pneg %p443
        $region62: #{tsvqvae_forward.1} parent=11 // pred_check_branch
          %1523 = sbr.rel (%p1521) target = $region64
        $region63: #{tsvqvae_forward.1} parent=11 // pred_region
          %1525 = vsyncadd [#allocation20], 0
          %s1527 = sshll.u32 %s27, 4
          %s1528 = int_to_ptr.hbm [resolvable:$true] %s1527
          %s1529 = sshll.u32 [#allocation19], 4
          %s1530 = int_to_ptr.vmem [resolvable:$true] %s1529
          %1532 = dma.hbm_to_vmem [thread:$0]  %s1528, 16, %s1530, [#allocation20]
        $region64: #{tsvqvae_forward.1} parent=11 // pred_fallthru
          _
        // Predicated region
        $region65: #{tsvqvae_forward.1} parent=11 // pred_check
          %p1533 = pneg %p464
        $region66: #{tsvqvae_forward.1} parent=11 // pred_check_branch
          %1535 = sbr.rel (%p1533) target = $region68
        $region67: #{tsvqvae_forward.1} parent=11 // pred_region
          %1537 = vsyncadd [#allocation20], 0
          %s1538 = sshll.u32 %s29, 4
          %s1539 = int_to_ptr.hbm [resolvable:$true] %s1538
          %s1540 = sshll.u32 [#allocation21], 4
          %s1541 = int_to_ptr.vmem [resolvable:$true] %s1540
          %1546 = dma.hbm_to_vmem [thread:$0]  %s1539, 768, %s1541, [#allocation20], 64, 64, 4
        $region68: #{tsvqvae_forward.1} parent=11 // pred_fallthru
          _
        // Predicated region
        $region69: #{tsvqvae_forward.1} parent=11 // pred_check
          %p1547 = pneg %p485
        $region70: #{tsvqvae_forward.1} parent=11 // pred_check_branch
          %1549 = sbr.rel (%p1547) target = $region72
        $region71: #{tsvqvae_forward.1} parent=11 // pred_region
          %1551 = vsyncadd [#allocation23], 0
          %s1553 = sshll.u32 %s31, 4
          %s1554 = int_to_ptr.hbm [resolvable:$true] %s1553
          %s1555 = sshll.u32 [#allocation22], 4
          %s1556 = int_to_ptr.vmem [resolvable:$true] %s1555
          %1558 = dma.hbm_to_vmem [thread:$0]  %s1554, 16, %s1556, [#allocation23]
        $region72: #{tsvqvae_forward.1} parent=11 // pred_fallthru
          _
        // Predicated region
        $region73: #{tsvqvae_forward.1} parent=11 // pred_check
          %p1559 = pneg %p506
        $region74: #{tsvqvae_forward.1} parent=11 // pred_check_branch
          %1561 = sbr.rel (%p1559) target = $region76
        $region75: #{tsvqvae_forward.1} parent=11 // pred_region
          %1563 = vsyncadd [#allocation23], 0
          %s1564 = sshll.u32 %s33, 4
          %s1565 = int_to_ptr.hbm [resolvable:$true] %s1564
          %s1566 = sshll.u32 [#allocation24], 4
          %s1567 = int_to_ptr.vmem [resolvable:$true] %s1566
          %1572 = dma.hbm_to_vmem [thread:$0]  %s1565, 256, %s1567, [#allocation23], 64, 64, 4
        $region76: #{tsvqvae_forward.1} parent=11 // pred_fallthru
          _
        // Predicated region
        $region77: #{tsvqvae_forward.1} parent=11 // pred_check
          %p1573 = pneg %p527
        $region78: #{tsvqvae_forward.1} parent=11 // pred_check_branch
          %1575 = sbr.rel (%p1573) target = $region80
        $region79: #{tsvqvae_forward.1} parent=11 // pred_region
          %1577 = vsyncadd [#allocation26], 0
          %s1579 = sshll.u32 %s35, 4
          %s1580 = int_to_ptr.hbm [resolvable:$true] %s1579
          %s1581 = sshll.u32 [#allocation25], 4
          %s1582 = int_to_ptr.vmem [resolvable:$true] %s1581
          %1584 = dma.hbm_to_vmem [thread:$0]  %s1580, 16, %s1582, [#allocation26]
        $region80: #{tsvqvae_forward.1} parent=11 // pred_fallthru
          _
        // Predicated region
        $region81: #{tsvqvae_forward.1} parent=11 // pred_check
          %p1585 = pneg %p548
        $region82: #{tsvqvae_forward.1} parent=11 // pred_check_branch
          %1587 = sbr.rel (%p1585) target = $region84
        $region83: #{tsvqvae_forward.1} parent=11 // pred_region
          %1589 = vsyncadd [#allocation26], 0
          %s1590 = sshll.u32 %s37, 4
          %s1591 = int_to_ptr.hbm [resolvable:$true] %s1590
          %s1592 = sshll.u32 [#allocation27], 4
          %s1593 = int_to_ptr.vmem [resolvable:$true] %s1592
          %1598 = dma.hbm_to_vmem [thread:$0]  %s1591, 768, %s1593, [#allocation26], 64, 64, 4
        $region84: #{tsvqvae_forward.1} parent=11 // pred_fallthru
          _
        // Predicated region
        $region85: #{tsvqvae_forward.1} parent=11 // pred_check
          %p1599 = pneg %p569
        $region86: #{tsvqvae_forward.1} parent=11 // pred_check_branch
          %1601 = sbr.rel (%p1599) target = $region88
        $region87: #{tsvqvae_forward.1} parent=11 // pred_region
          %1603 = vsyncadd [#allocation29], 0
          %s1605 = sshll.u32 %s39, 4
          %s1606 = int_to_ptr.hbm [resolvable:$true] %s1605
          %s1607 = sshll.u32 [#allocation28], 4
          %s1608 = int_to_ptr.vmem [resolvable:$true] %s1607
          %1610 = dma.hbm_to_vmem [thread:$0]  %s1606, 16, %s1608, [#allocation29]
        $region88: #{tsvqvae_forward.1} parent=11 // pred_fallthru
          _
        // Predicated region
        $region89: #{tsvqvae_forward.1} parent=11 // pred_check
          %p1611 = pneg %p590
        $region90: #{tsvqvae_forward.1} parent=11 // pred_check_branch
          %1613 = sbr.rel (%p1611) target = $region92
        $region91: #{tsvqvae_forward.1} parent=11 // pred_region
          %1615 = vsyncadd [#allocation29], 0
          %s1616 = sshll.u32 %s41, 4
          %s1617 = int_to_ptr.hbm [resolvable:$true] %s1616
          %s1618 = sshll.u32 [#allocation30], 4
          %s1619 = int_to_ptr.vmem [resolvable:$true] %s1618
          %1624 = dma.hbm_to_vmem [thread:$0]  %s1617, 768, %s1619, [#allocation29], 64, 64, 4
        $region92: #{tsvqvae_forward.1} parent=11 // pred_fallthru
          _
        // Predicated region
        $region93: #{tsvqvae_forward.1} parent=11 // pred_check
          %p1625 = pneg %p611
        $region94: #{tsvqvae_forward.1} parent=11 // pred_check_branch
          %1627 = sbr.rel (%p1625) target = $region96
        $region95: #{tsvqvae_forward.1} parent=11 // pred_region
          %1629 = vsyncadd [#allocation32], 0
          %s1631 = sshll.u32 %s43, 4
          %s1632 = int_to_ptr.hbm [resolvable:$true] %s1631
          %s1633 = sshll.u32 [#allocation31], 4
          %s1634 = int_to_ptr.vmem [resolvable:$true] %s1633
          %1636 = dma.hbm_to_vmem [thread:$0]  %s1632, 16, %s1634, [#allocation32]
        $region96: #{tsvqvae_forward.1} parent=11 // pred_fallthru
          _
        // Predicated region
        $region97: #{tsvqvae_forward.1} parent=11 // pred_check
          %p1637 = pneg %p632
        $region98: #{tsvqvae_forward.1} parent=11 // pred_check_branch
          %1639 = sbr.rel (%p1637) target = $region100
        $region99: #{tsvqvae_forward.1} parent=11 // pred_region
          %1641 = vsyncadd [#allocation32], 0
          %s1642 = sshll.u32 %s45, 4
          %s1643 = int_to_ptr.hbm [resolvable:$true] %s1642
          %s1644 = sshll.u32 [#allocation33], 4
          %s1645 = int_to_ptr.vmem [resolvable:$true] %s1644
          %1650 = dma.hbm_to_vmem [thread:$0]  %s1643, 256, %s1645, [#allocation32], 64, 64, 4
        $region100: #{tsvqvae_forward.1} parent=11 // pred_fallthru
          _
        // Predicated region
        $region101: #{tsvqvae_forward.1} parent=11 // pred_check
          %p1651 = pneg %p653
        $region102: #{tsvqvae_forward.1} parent=11 // pred_check_branch
          %1653 = sbr.rel (%p1651) target = $region104
        $region103: #{tsvqvae_forward.1} parent=11 // pred_region
          %1655 = vsyncadd [#allocation35], 0
          %s1657 = sshll.u32 %s47, 4
          %s1658 = int_to_ptr.hbm [resolvable:$true] %s1657
          %s1659 = sshll.u32 [#allocation34], 4
          %s1660 = int_to_ptr.vmem [resolvable:$true] %s1659
          %1662 = dma.hbm_to_vmem [thread:$0]  %s1658, 16, %s1660, [#allocation35]
        $region104: #{tsvqvae_forward.1} parent=11 // pred_fallthru
          _
        // Predicated region
        $region105: #{tsvqvae_forward.1} parent=11 // pred_check
          %p1663 = pneg %p674
        $region106: #{tsvqvae_forward.1} parent=11 // pred_check_branch
          %1665 = sbr.rel (%p1663) target = $region108
        $region107: #{tsvqvae_forward.1} parent=11 // pred_region
          %1667 = vsyncadd [#allocation35], 0
          %s1668 = sshll.u32 %s49, 4
          %s1669 = int_to_ptr.hbm [resolvable:$true] %s1668
          %s1670 = sshll.u32 [#allocation36], 4
          %s1671 = int_to_ptr.vmem [resolvable:$true] %s1670
          %1676 = dma.hbm_to_vmem [thread:$0]  %s1669, 768, %s1671, [#allocation35], 64, 64, 4
        $region108: #{tsvqvae_forward.1} parent=11 // pred_fallthru
          _
        // Predicated region
        $region109: #{tsvqvae_forward.1} parent=11 // pred_check
          %p1677 = pneg %p695
        $region110: #{tsvqvae_forward.1} parent=11 // pred_check_branch
          %1679 = sbr.rel (%p1677) target = $region112
        $region111: #{tsvqvae_forward.1} parent=11 // pred_region
          %1681 = vsyncadd [#allocation38], 0
          %s1683 = sshll.u32 %s51, 4
          %s1684 = int_to_ptr.hbm [resolvable:$true] %s1683
          %s1685 = sshll.u32 [#allocation37], 4
          %s1686 = int_to_ptr.vmem [resolvable:$true] %s1685
          %1688 = dma.hbm_to_vmem [thread:$0]  %s1684, 16, %s1686, [#allocation38]
        $region112: #{tsvqvae_forward.1} parent=11 // pred_fallthru
          _
        // Predicated region
        $region113: #{tsvqvae_forward.1} parent=11 // pred_check
          %p1689 = pneg %p716
        $region114: #{tsvqvae_forward.1} parent=11 // pred_check_branch
          %1691 = sbr.rel (%p1689) target = $region116
        $region115: #{tsvqvae_forward.1} parent=11 // pred_region
          %1693 = vsyncadd [#allocation38], 0
          %s1694 = sshll.u32 %s53, 4
          %s1695 = int_to_ptr.hbm [resolvable:$true] %s1694
          %s1696 = sshll.u32 [#allocation39], 4
          %s1697 = int_to_ptr.vmem [resolvable:$true] %s1696
          %1702 = dma.hbm_to_vmem [thread:$0]  %s1695, 256, %s1697, [#allocation38], 64, 64, 4
        $region116: #{tsvqvae_forward.1} parent=11 // pred_fallthru
          _
        // Predicated region
        $region117: #{tsvqvae_forward.1} parent=11 // pred_check
          %p1703 = pneg %p737
        $region118: #{tsvqvae_forward.1} parent=11 // pred_check_branch
          %1705 = sbr.rel (%p1703) target = $region120
        $region119: #{tsvqvae_forward.1} parent=11 // pred_region
          %1707 = vsyncadd [#allocation41], 0
          %s1709 = sshll.u32 %s55, 4
          %s1710 = int_to_ptr.hbm [resolvable:$true] %s1709
          %s1711 = sshll.u32 [#allocation40], 4
          %s1712 = int_to_ptr.vmem [resolvable:$true] %s1711
          %1714 = dma.hbm_to_vmem [thread:$0]  %s1710, 16, %s1712, [#allocation41]
        $region120: #{tsvqvae_forward.1} parent=11 // pred_fallthru
          _
        // Predicated region
        $region121: #{tsvqvae_forward.1} parent=11 // pred_check
          %p1715 = pneg %p758
        $region122: #{tsvqvae_forward.1} parent=11 // pred_check_branch
          %1717 = sbr.rel (%p1715) target = $region124
        $region123: #{tsvqvae_forward.1} parent=11 // pred_region
          _
        $region124: #{tsvqvae_forward.1} parent=11 // pred_fallthru
          _
        // Predicated region
        $region125: #{tsvqvae_forward.1} parent=11 // pred_check
          %p1718 = pneg %p779
        $region126: #{tsvqvae_forward.1} parent=11 // pred_check_branch
          %1720 = sbr.rel (%p1718) target = $region128
        $region127: #{tsvqvae_forward.1} parent=11 // pred_region
          %1722 = vsyncadd [#allocation41], 0
          %s1724 = sshll.u32 %s59, 4
          %s1725 = int_to_ptr.hbm [resolvable:$true] %s1724
          %s1726 = sshll.u32 [#allocation42], 4
          %s1727 = int_to_ptr.vmem [resolvable:$true] %s1726
          %1729 = dma.hbm_to_vmem [thread:$0]  %s1725, 16, %s1727, [#allocation41]
        $region128: #{tsvqvae_forward.1} parent=11 // pred_fallthru
          _
        // Predicated region
        $region129: #{tsvqvae_forward.1} parent=11 // pred_check
          %p1730 = pneg %p800
        $region130: #{tsvqvae_forward.1} parent=11 // pred_check_branch
          %1732 = sbr.rel (%p1730) target = $region132
        $region131: #{tsvqvae_forward.1} parent=11 // pred_region
          %1734 = vsyncadd [#allocation44], 0
          %s1735 = sshll.u32 %s61, 4
          %s1736 = int_to_ptr.hbm [resolvable:$true] %s1735
          %s1737 = sshll.u32 [#allocation43], 4
          %s1738 = int_to_ptr.vmem [resolvable:$true] %s1737
          %1743 = dma.hbm_to_vmem [thread:$0]  %s1736, 768, %s1738, [#allocation44], 64, 64, 4
        $region132: #{tsvqvae_forward.1} parent=11 // pred_fallthru
          _
        // Predicated region
        $region133: #{tsvqvae_forward.1} parent=11 // pred_check
          %p1744 = pneg %p821
        $region134: #{tsvqvae_forward.1} parent=11 // pred_check_branch
          %1746 = sbr.rel (%p1744) target = $region136
        $region135: #{tsvqvae_forward.1} parent=11 // pred_region
          %1748 = vsyncadd [#allocation44], 0
          %s1750 = sshll.u32 %s63, 4
          %s1751 = int_to_ptr.hbm [resolvable:$true] %s1750
          %s1752 = sshll.u32 [#allocation45], 4
          %s1753 = int_to_ptr.vmem [resolvable:$true] %s1752
          %1755 = dma.hbm_to_vmem [thread:$0]  %s1751, 16, %s1753, [#allocation44]
        $region136: #{tsvqvae_forward.1} parent=11 // pred_fallthru
          _
        // Predicated region
        $region137: #{tsvqvae_forward.1} parent=11 // pred_check
          %p1756 = pneg %p842
        $region138: #{tsvqvae_forward.1} parent=11 // pred_check_branch
          %1758 = sbr.rel (%p1756) target = $region140
        $region139: #{tsvqvae_forward.1} parent=11 // pred_region
          %1760 = vsyncadd [#allocation47], 0
          %s1761 = sshll.u32 %s65, 4
          %s1762 = int_to_ptr.hbm [resolvable:$true] %s1761
          %s1763 = sshll.u32 [#allocation46], 4
          %s1764 = int_to_ptr.vmem [resolvable:$true] %s1763
          %1769 = dma.hbm_to_vmem [thread:$0]  %s1762, 256, %s1764, [#allocation47], 64, 64, 4
        $region140: #{tsvqvae_forward.1} parent=11 // pred_fallthru
          _
        // Predicated region
        $region141: #{tsvqvae_forward.1} parent=11 // pred_check
          %p1770 = pneg %p863
        $region142: #{tsvqvae_forward.1} parent=11 // pred_check_branch
          %1772 = sbr.rel (%p1770) target = $region144
        $region143: #{tsvqvae_forward.1} parent=11 // pred_region
          %1774 = vsyncadd [#allocation47], 0
          %s1776 = sshll.u32 %s67, 4
          %s1777 = int_to_ptr.hbm [resolvable:$true] %s1776
          %s1778 = sshll.u32 [#allocation48], 4
          %s1779 = int_to_ptr.vmem [resolvable:$true] %s1778
          %1781 = dma.hbm_to_vmem [thread:$0]  %s1777, 16, %s1779, [#allocation47]
        $region144: #{tsvqvae_forward.1} parent=11 // pred_fallthru
          _
        // Predicated region
        $region145: #{tsvqvae_forward.1} parent=11 // pred_check
          %p1782 = pneg %p884
        $region146: #{tsvqvae_forward.1} parent=11 // pred_check_branch
          %1784 = sbr.rel (%p1782) target = $region148
        $region147: #{tsvqvae_forward.1} parent=11 // pred_region
          %1786 = vsyncadd [#allocation50], 0
          %s1787 = sshll.u32 %s69, 4
          %s1788 = int_to_ptr.hbm [resolvable:$true] %s1787
          %s1789 = sshll.u32 [#allocation49], 4
          %s1790 = int_to_ptr.vmem [resolvable:$true] %s1789
          %1795 = dma.hbm_to_vmem [thread:$0]  %s1788, 768, %s1790, [#allocation50], 64, 64, 4
        $region148: #{tsvqvae_forward.1} parent=11 // pred_fallthru
          _
        // Predicated region
        $region149: #{tsvqvae_forward.1} parent=11 // pred_check
          %p1796 = pneg %p905
        $region150: #{tsvqvae_forward.1} parent=11 // pred_check_branch
          %1798 = sbr.rel (%p1796) target = $region152
        $region151: #{tsvqvae_forward.1} parent=11 // pred_region
          %1800 = vsyncadd [#allocation50], 0
          %s1802 = sshll.u32 %s71, 4
          %s1803 = int_to_ptr.hbm [resolvable:$true] %s1802
          %s1804 = sshll.u32 [#allocation51], 4
          %s1805 = int_to_ptr.vmem [resolvable:$true] %s1804
          %1807 = dma.hbm_to_vmem [thread:$0]  %s1803, 16, %s1805, [#allocation50]
        $region152: #{tsvqvae_forward.1} parent=11 // pred_fallthru
          _
        // Predicated region
        $region153: #{tsvqvae_forward.1} parent=11 // pred_check
          %p1808 = pneg %p926
        $region154: #{tsvqvae_forward.1} parent=11 // pred_check_branch
          %1810 = sbr.rel (%p1808) target = $region156
        $region155: #{tsvqvae_forward.1} parent=11 // pred_region
          _
        $region156: #{tsvqvae_forward.1} parent=11 // pred_fallthru
          _
        // Predicated region
        $region157: #{tsvqvae_forward.1} parent=11 // pred_check
          %p1811 = pneg %p947
        $region158: #{tsvqvae_forward.1} parent=11 // pred_check_branch
          %1813 = sbr.rel (%p1811) target = $region160
        $region159: #{tsvqvae_forward.1} parent=11 // pred_region
          %1815 = vsyncadd [#allocation53], 0
          %s1817 = sshll.u32 %s75, 4
          %s1818 = int_to_ptr.hbm [resolvable:$true] %s1817
          %s1819 = sshll.u32 [#allocation52], 4
          %s1820 = int_to_ptr.vmem [resolvable:$true] %s1819
          %1822 = dma.hbm_to_vmem [thread:$0]  %s1818, 16, %s1820, [#allocation53]
        $region160: #{tsvqvae_forward.1} parent=11 // pred_fallthru
          _
        // Predicated region
        $region161: #{tsvqvae_forward.1} parent=11 // pred_check
          %p1823 = pneg %p968
        $region162: #{tsvqvae_forward.1} parent=11 // pred_check_branch
          %1825 = sbr.rel (%p1823) target = $region164
        $region163: #{tsvqvae_forward.1} parent=11 // pred_region
          _
        $region164: #{tsvqvae_forward.1} parent=11 // pred_fallthru
          _
        // Predicated region
        $region165: #{tsvqvae_forward.1} parent=11 // pred_check
          %p1826 = pneg %p989
        $region166: #{tsvqvae_forward.1} parent=11 // pred_check_branch
          %1828 = sbr.rel (%p1826) target = $region168
        $region167: #{tsvqvae_forward.1} parent=11 // pred_region
          %1830 = vsyncadd [#allocation53], 0
          %s1832 = sshll.u32 %s79, 4
          %s1833 = int_to_ptr.hbm [resolvable:$true] %s1832
          %s1834 = sshll.u32 [#allocation54], 4
          %s1835 = int_to_ptr.vmem [resolvable:$true] %s1834
          %1837 = dma.hbm_to_vmem [thread:$0]  %s1833, 16, %s1835, [#allocation53]
        $region168: #{tsvqvae_forward.1} parent=11 // pred_fallthru
          _
        // Predicated region
        $region169: #{tsvqvae_forward.1} parent=11 // pred_check
          %p1838 = pneg %p1010
        $region170: #{tsvqvae_forward.1} parent=11 // pred_check_branch
          %1840 = sbr.rel (%p1838) target = $region172
        $region171: #{tsvqvae_forward.1} parent=11 // pred_region
          %1842 = vsyncadd [#allocation56], 0
          %s1843 = sshll.u32 %s81, 4
          %s1844 = int_to_ptr.hbm [resolvable:$true] %s1843
          %s1845 = sshll.u32 [#allocation55], 4
          %s1846 = int_to_ptr.vmem [resolvable:$true] %s1845
          %1851 = dma.hbm_to_vmem [thread:$0]  %s1844, 768, %s1846, [#allocation56], 64, 64, 4
        $region172: #{tsvqvae_forward.1} parent=11 // pred_fallthru
          _
        // Predicated region
        $region173: #{tsvqvae_forward.1} parent=11 // pred_check
          %p1852 = pneg %p1031
        $region174: #{tsvqvae_forward.1} parent=11 // pred_check_branch
          %1854 = sbr.rel (%p1852) target = $region176
        $region175: #{tsvqvae_forward.1} parent=11 // pred_region
          %1856 = vsyncadd [#allocation56], 0
          %s1858 = sshll.u32 %s83, 4
          %s1859 = int_to_ptr.hbm [resolvable:$true] %s1858
          %s1860 = sshll.u32 [#allocation57], 4
          %s1861 = int_to_ptr.vmem [resolvable:$true] %s1860
          %1863 = dma.hbm_to_vmem [thread:$0]  %s1859, 16, %s1861, [#allocation56]
        $region176: #{tsvqvae_forward.1} parent=11 // pred_fallthru
          _
        // Predicated region
        $region177: #{tsvqvae_forward.1} parent=11 // pred_check
          %p1864 = pneg %p1052
        $region178: #{tsvqvae_forward.1} parent=11 // pred_check_branch
          %1866 = sbr.rel (%p1864) target = $region180
        $region179: #{tsvqvae_forward.1} parent=11 // pred_region
          %1868 = vsyncadd [#allocation59], 0
          %s1869 = sshll.u32 %s85, 4
          %s1870 = int_to_ptr.hbm [resolvable:$true] %s1869
          %s1871 = sshll.u32 [#allocation58], 4
          %s1872 = int_to_ptr.vmem [resolvable:$true] %s1871
          %1877 = dma.hbm_to_vmem [thread:$0]  %s1870, 256, %s1872, [#allocation59], 64, 64, 4
        $region180: #{tsvqvae_forward.1} parent=11 // pred_fallthru
          _
        // Predicated region
        $region181: #{tsvqvae_forward.1} parent=11 // pred_check
          %p1878 = pneg %p1073
        $region182: #{tsvqvae_forward.1} parent=11 // pred_check_branch
          %1880 = sbr.rel (%p1878) target = $region184
        $region183: #{tsvqvae_forward.1} parent=11 // pred_region
          %1882 = vsyncadd [#allocation59], 0
          %s1884 = sshll.u32 %s87, 4
          %s1885 = int_to_ptr.hbm [resolvable:$true] %s1884
          %s1886 = sshll.u32 [#allocation60], 4
          %s1887 = int_to_ptr.vmem [resolvable:$true] %s1886
          %1889 = dma.hbm_to_vmem [thread:$0]  %s1885, 16, %s1887, [#allocation59]
        $region184: #{tsvqvae_forward.1} parent=11 // pred_fallthru
          _
        // Predicated region
        $region185: #{tsvqvae_forward.1} parent=11 // pred_check
          %p1890 = pneg %p1094
        $region186: #{tsvqvae_forward.1} parent=11 // pred_check_branch
          %1892 = sbr.rel (%p1890) target = $region188
        $region187: #{tsvqvae_forward.1} parent=11 // pred_region
          %1894 = vsyncadd [#allocation62], 0
          %s1895 = sshll.u32 %s89, 4
          %s1896 = int_to_ptr.hbm [resolvable:$true] %s1895
          %s1897 = sshll.u32 [#allocation61], 4
          %s1898 = int_to_ptr.vmem [resolvable:$true] %s1897
          %1903 = dma.hbm_to_vmem [thread:$0]  %s1896, 768, %s1898, [#allocation62], 64, 64, 4
        $region188: #{tsvqvae_forward.1} parent=11 // pred_fallthru
          _
        // Predicated region
        $region189: #{tsvqvae_forward.1} parent=11 // pred_check
          %p1904 = pneg %p1115
        $region190: #{tsvqvae_forward.1} parent=11 // pred_check_branch
          %1906 = sbr.rel (%p1904) target = $region192
        $region191: #{tsvqvae_forward.1} parent=11 // pred_region
          %1908 = vsyncadd [#allocation62], 0
          %s1910 = sshll.u32 %s91, 4
          %s1911 = int_to_ptr.hbm [resolvable:$true] %s1910
          %s1912 = sshll.u32 [#allocation63], 4
          %s1913 = int_to_ptr.vmem [resolvable:$true] %s1912
          %1915 = dma.hbm_to_vmem [thread:$0]  %s1911, 16, %s1913, [#allocation62]
        $region192: #{tsvqvae_forward.1} parent=11 // pred_fallthru
          _
        // Predicated region
        $region193: #{tsvqvae_forward.1} parent=11 // pred_check
          %p1916 = pneg %p1136
        $region194: #{tsvqvae_forward.1} parent=11 // pred_check_branch
          %1918 = sbr.rel (%p1916) target = $region196
        $region195: #{tsvqvae_forward.1} parent=11 // pred_region
          %1920 = vsyncadd [#allocation65], 0
          %s1921 = sshll.u32 %s93, 4
          %s1922 = int_to_ptr.hbm [resolvable:$true] %s1921
          %s1923 = sshll.u32 [#allocation64], 4
          %s1924 = int_to_ptr.vmem [resolvable:$true] %s1923
          %1929 = dma.hbm_to_vmem [thread:$0]  %s1922, 256, %s1924, [#allocation65], 64, 64, 4
        $region196: #{tsvqvae_forward.1} parent=11 // pred_fallthru
          _
        // Predicated region
        $region197: #{tsvqvae_forward.1} parent=11 // pred_check
          %p1930 = pneg %p1157
        $region198: #{tsvqvae_forward.1} parent=11 // pred_check_branch
          %1932 = sbr.rel (%p1930) target = $region200
        $region199: #{tsvqvae_forward.1} parent=11 // pred_region
          %1934 = vsyncadd [#allocation65], 0
          %s1936 = sshll.u32 %s95, 4
          %s1937 = int_to_ptr.hbm [resolvable:$true] %s1936
          %s1938 = sshll.u32 [#allocation66], 4
          %s1939 = int_to_ptr.vmem [resolvable:$true] %s1938
          %1941 = dma.hbm_to_vmem [thread:$0]  %s1937, 16, %s1939, [#allocation65]
        $region200: #{tsvqvae_forward.1} parent=11 // pred_fallthru
          _
        // Predicated region
        $region201: #{tsvqvae_forward.1} parent=11 // pred_check
          %p1942 = pneg %p1178
        $region202: #{tsvqvae_forward.1} parent=11 // pred_check_branch
          %1944 = sbr.rel (%p1942) target = $region204
        $region203: #{tsvqvae_forward.1} parent=11 // pred_region
          %1946 = vsyncadd [#allocation68], 0
          %s1947 = sshll.u32 %s97, 4
          %s1948 = int_to_ptr.hbm [resolvable:$true] %s1947
          %s1949 = sshll.u32 [#allocation67], 4
          %s1950 = int_to_ptr.vmem [resolvable:$true] %s1949
          %1955 = dma.hbm_to_vmem [thread:$0]  %s1948, 192, %s1950, [#allocation68], 64, 64, 4
        $region204: #{tsvqvae_forward.1} parent=11 // pred_fallthru
          _
        // Predicated region
        $region205: #{tsvqvae_forward.1} parent=11 // pred_check
          %p1956 = pneg %p1199
        $region206: #{tsvqvae_forward.1} parent=11 // pred_check_branch
          %1958 = sbr.rel (%p1956) target = $region208
        $region207: #{tsvqvae_forward.1} parent=11 // pred_region
          %1960 = vsyncadd [#allocation68], 0
          %s1962 = sshll.u32 %s99, 4
          %s1963 = int_to_ptr.hbm [resolvable:$true] %s1962
          %s1964 = sshll.u32 [#allocation69], 4
          %s1965 = int_to_ptr.vmem [resolvable:$true] %s1964
          %1967 = dma.hbm_to_vmem [thread:$0]  %s1963, 16, %s1965, [#allocation68]
        $region208: #{tsvqvae_forward.1} parent=11 // pred_fallthru
          _
        // Predicated region
        $region209: #{tsvqvae_forward.1} parent=11 // pred_check
          %p1968 = pneg %p1220
        $region210: #{tsvqvae_forward.1} parent=11 // pred_check_branch
          %1970 = sbr.rel (%p1968) target = $region212
        $region211: #{tsvqvae_forward.1} parent=11 // pred_region
          %1972 = vsyncadd [#allocation71], 0
          %s1973 = sshll.u32 %s101, 4
          %s1974 = int_to_ptr.hbm [resolvable:$true] %s1973
          %s1975 = sshll.u32 [#allocation70], 4
          %s1976 = int_to_ptr.vmem [resolvable:$true] %s1975
          %1981 = dma.hbm_to_vmem [thread:$0]  %s1974, 768, %s1976, [#allocation71], 64, 64, 4
        $region212: #{tsvqvae_forward.1} parent=11 // pred_fallthru
          _
        // Predicated region
        $region213: #{tsvqvae_forward.1} parent=11 // pred_check
          %p1982 = pneg %p1241
        $region214: #{tsvqvae_forward.1} parent=11 // pred_check_branch
          %1984 = sbr.rel (%p1982) target = $region216
        $region215: #{tsvqvae_forward.1} parent=11 // pred_region
          %1986 = vsyncadd [#allocation71], 0
          %s1988 = sshll.u32 %s103, 4
          %s1989 = int_to_ptr.hbm [resolvable:$true] %s1988
          %s1990 = sshll.u32 [#allocation72], 4
          %s1991 = int_to_ptr.vmem [resolvable:$true] %s1990
          %1993 = dma.hbm_to_vmem [thread:$0]  %s1989, 16, %s1991, [#allocation71]
        $region216: #{tsvqvae_forward.1} parent=11 // pred_fallthru
          _
        // Predicated region
        $region217: #{tsvqvae_forward.1} parent=11 // pred_check
          %p1994 = pneg %p1262
        $region218: #{tsvqvae_forward.1} parent=11 // pred_check_branch
          %1996 = sbr.rel (%p1994) target = $region220
        $region219: #{tsvqvae_forward.1} parent=11 // pred_region
          _
        $region220: #{tsvqvae_forward.1} parent=11 // pred_fallthru
          _
        // Predicated region
        $region221: #{tsvqvae_forward.1} parent=11 // pred_check
          %p1997 = pneg %p1283
        $region222: #{tsvqvae_forward.1} parent=11 // pred_check_branch
          %1999 = sbr.rel (%p1997) target = $region224
        $region223: #{tsvqvae_forward.1} parent=11 // pred_region
          _
        $region224: #{tsvqvae_forward.1} parent=11 // pred_fallthru
          _
      $region12: #{tsvqvae_forward.1} parent=5 // pred_fallthru
        _
      %p2000 = scmp.lt.s32.totalorder %s144, 2
      // Predicated region
      $region225: #{tsvqvae_forward.1} parent=5 // pred_check
        %p2001 = pneg %p2000
      $region226: #{tsvqvae_forward.1} parent=5 // pred_check_branch
        %2003 = sbr.rel (%p2001) target = $region228
      $region227: #{tsvqvae_forward.1} parent=5 // pred_region
        // Predicated region
        $region229: #{tsvqvae_forward.1} parent=227 // pred_check
          %p2004 = pneg %p164
        $region230: #{tsvqvae_forward.1} parent=227 // pred_check_branch
          %2006 = sbr.rel (%p2004) target = $region232
        $region231: #{tsvqvae_forward.1} parent=227 // pred_region
          %p2007 = scmp.lt.s32.totalorder %s144, 1
          %s2008 = scalar_select %p2007, %s144, 1
          %s2009 = smul.addr %s2008, 2
          %s2010 = smul.addr %s2009, 8
          %s2011 = scalar_lea.vmem %s1, %s2010
        $region232: #{tsvqvae_forward.1} parent=227 // pred_fallthru
          _
      $region228: #{tsvqvae_forward.1} parent=5 // pred_fallthru
        _
      %p2012 = scmp.le.s32.totalorder 1, %s144
      %p2013 = scmp.lt.s32.totalorder %s144, 3
      %p2014 = pnand %p2012, %p2013
      %p2015 = pneg %p2014
      // Predicated region
      $region233: #{tsvqvae_forward.1} parent=5 // pred_check
        _
      $region234: #{tsvqvae_forward.1} parent=5 // pred_check_branch
        %2017 = sbr.rel (%p2014) target = $region236
      $region235: #{tsvqvae_forward.1} parent=5 // pred_region
        %s2018 = ssub.s32 %s144, 1
        // Predicated region
        $region237: #{tsvqvae_forward.1} parent=235 // pred_check
          %p2019 = pneg %p191
        $region238: #{tsvqvae_forward.1} parent=235 // pred_check_branch
          %2021 = sbr.rel (%p2019) target = $region240
        $region239: #{tsvqvae_forward.1} parent=235 // pred_region
          %2023 = dma.done [#allocation3], 16
        $region240: #{tsvqvae_forward.1} parent=235 // pred_fallthru
          _
        // Predicated region
        $region241: #{tsvqvae_forward.1} parent=235 // pred_check
          %p2024 = pneg %p212
        $region242: #{tsvqvae_forward.1} parent=235 // pred_check_branch
          %2026 = sbr.rel (%p2024) target = $region244
        $region243: #{tsvqvae_forward.1} parent=235 // pred_region
          %2028 = dma.done [#allocation5], 768
        $region244: #{tsvqvae_forward.1} parent=235 // pred_fallthru
          _
        // Predicated region
        $region245: #{tsvqvae_forward.1} parent=235 // pred_check
          %p2029 = pneg %p233
        $region246: #{tsvqvae_forward.1} parent=235 // pred_check_branch
          %2031 = sbr.rel (%p2029) target = $region248
        $region247: #{tsvqvae_forward.1} parent=235 // pred_region
          %2033 = dma.done [#allocation5], 16
        $region248: #{tsvqvae_forward.1} parent=235 // pred_fallthru
          _
        // Predicated region
        $region249: #{tsvqvae_forward.1} parent=235 // pred_check
          %p2034 = pneg %p254
        $region250: #{tsvqvae_forward.1} parent=235 // pred_check_branch
          %2036 = sbr.rel (%p2034) target = $region252
        $region251: #{tsvqvae_forward.1} parent=235 // pred_region
          %2038 = dma.done [#allocation8], 768
        $region252: #{tsvqvae_forward.1} parent=235 // pred_fallthru
          _
        // Predicated region
        $region253: #{tsvqvae_forward.1} parent=235 // pred_check
          %p2039 = pneg %p275
        $region254: #{tsvqvae_forward.1} parent=235 // pred_check_branch
          %2041 = sbr.rel (%p2039) target = $region256
        $region255: #{tsvqvae_forward.1} parent=235 // pred_region
          %2043 = dma.done [#allocation8], 16
        $region256: #{tsvqvae_forward.1} parent=235 // pred_fallthru
          _
        // Predicated region
        $region257: #{tsvqvae_forward.1} parent=235 // pred_check
          %p2044 = pneg %p317
        $region258: #{tsvqvae_forward.1} parent=235 // pred_check_branch
          %2046 = sbr.rel (%p2044) target = $region260
        $region259: #{tsvqvae_forward.1} parent=235 // pred_region
          %2048 = dma.done [#allocation11], 16
        $region260: #{tsvqvae_forward.1} parent=235 // pred_fallthru
          _
        // Predicated region
        $region261: #{tsvqvae_forward.1} parent=235 // pred_check
          %p2049 = pneg %p338
        $region262: #{tsvqvae_forward.1} parent=235 // pred_check_branch
          %2051 = sbr.rel (%p2049) target = $region264
        $region263: #{tsvqvae_forward.1} parent=235 // pred_region
          %2053 = dma.done [#allocation11], 768
        $region264: #{tsvqvae_forward.1} parent=235 // pred_fallthru
          _
        // Predicated region
        $region265: #{tsvqvae_forward.1} parent=235 // pred_check
          %p2054 = pneg %p359
        $region266: #{tsvqvae_forward.1} parent=235 // pred_check_branch
          %2056 = sbr.rel (%p2054) target = $region268
        $region267: #{tsvqvae_forward.1} parent=235 // pred_region
          %2058 = dma.done [#allocation14], 16
        $region268: #{tsvqvae_forward.1} parent=235 // pred_fallthru
          _
        // Predicated region
        $region269: #{tsvqvae_forward.1} parent=235 // pred_check
          %p2059 = pneg %p380
        $region270: #{tsvqvae_forward.1} parent=235 // pred_check_branch
          %2061 = sbr.rel (%p2059) target = $region272
        $region271: #{tsvqvae_forward.1} parent=235 // pred_region
          %2063 = dma.done [#allocation14], 768
        $region272: #{tsvqvae_forward.1} parent=235 // pred_fallthru
          _
        // Predicated region
        $region273: #{tsvqvae_forward.1} parent=235 // pred_check
          %p2064 = pneg %p401
        $region274: #{tsvqvae_forward.1} parent=235 // pred_check_branch
          %2066 = sbr.rel (%p2064) target = $region276
        $region275: #{tsvqvae_forward.1} parent=235 // pred_region
          %2068 = dma.done [#allocation17], 16
        $region276: #{tsvqvae_forward.1} parent=235 // pred_fallthru
          _
        // Predicated region
        $region277: #{tsvqvae_forward.1} parent=235 // pred_check
          %p2069 = pneg %p422
        $region278: #{tsvqvae_forward.1} parent=235 // pred_check_branch
          %2071 = sbr.rel (%p2069) target = $region280
        $region279: #{tsvqvae_forward.1} parent=235 // pred_region
          %2073 = dma.done [#allocation17], 256
        $region280: #{tsvqvae_forward.1} parent=235 // pred_fallthru
          _
        // Predicated region
        $region281: #{tsvqvae_forward.1} parent=235 // pred_check
          %p2074 = pneg %p443
        $region282: #{tsvqvae_forward.1} parent=235 // pred_check_branch
          %2076 = sbr.rel (%p2074) target = $region284
        $region283: #{tsvqvae_forward.1} parent=235 // pred_region
          %2078 = dma.done [#allocation20], 16
        $region284: #{tsvqvae_forward.1} parent=235 // pred_fallthru
          _
        // Predicated region
        $region285: #{tsvqvae_forward.1} parent=235 // pred_check
          %p2079 = pneg %p464
        $region286: #{tsvqvae_forward.1} parent=235 // pred_check_branch
          %2081 = sbr.rel (%p2079) target = $region288
        $region287: #{tsvqvae_forward.1} parent=235 // pred_region
          %2083 = dma.done [#allocation20], 768
        $region288: #{tsvqvae_forward.1} parent=235 // pred_fallthru
          _
        // Predicated region
        $region289: #{tsvqvae_forward.1} parent=235 // pred_check
          %p2084 = pneg %p485
        $region290: #{tsvqvae_forward.1} parent=235 // pred_check_branch
          %2086 = sbr.rel (%p2084) target = $region292
        $region291: #{tsvqvae_forward.1} parent=235 // pred_region
          %2088 = dma.done [#allocation23], 16
        $region292: #{tsvqvae_forward.1} parent=235 // pred_fallthru
          _
        // Predicated region
        $region293: #{tsvqvae_forward.1} parent=235 // pred_check
          %p2089 = pneg %p506
        $region294: #{tsvqvae_forward.1} parent=235 // pred_check_branch
          %2091 = sbr.rel (%p2089) target = $region296
        $region295: #{tsvqvae_forward.1} parent=235 // pred_region
          %2093 = dma.done [#allocation23], 256
        $region296: #{tsvqvae_forward.1} parent=235 // pred_fallthru
          _
        // Predicated region
        $region297: #{tsvqvae_forward.1} parent=235 // pred_check
          %p2094 = pneg %p527
        $region298: #{tsvqvae_forward.1} parent=235 // pred_check_branch
          %2096 = sbr.rel (%p2094) target = $region300
        $region299: #{tsvqvae_forward.1} parent=235 // pred_region
          %2098 = dma.done [#allocation26], 16
        $region300: #{tsvqvae_forward.1} parent=235 // pred_fallthru
          _
        // Predicated region
        $region301: #{tsvqvae_forward.1} parent=235 // pred_check
          %p2099 = pneg %p548
        $region302: #{tsvqvae_forward.1} parent=235 // pred_check_branch
          %2101 = sbr.rel (%p2099) target = $region304
        $region303: #{tsvqvae_forward.1} parent=235 // pred_region
          %2103 = dma.done [#allocation26], 768
        $region304: #{tsvqvae_forward.1} parent=235 // pred_fallthru
          _
        // Predicated region
        $region305: #{tsvqvae_forward.1} parent=235 // pred_check
          %p2104 = pneg %p569
        $region306: #{tsvqvae_forward.1} parent=235 // pred_check_branch
          %2106 = sbr.rel (%p2104) target = $region308
        $region307: #{tsvqvae_forward.1} parent=235 // pred_region
          %2108 = dma.done [#allocation29], 16
        $region308: #{tsvqvae_forward.1} parent=235 // pred_fallthru
          _
        // Predicated region
        $region309: #{tsvqvae_forward.1} parent=235 // pred_check
          %p2109 = pneg %p590
        $region310: #{tsvqvae_forward.1} parent=235 // pred_check_branch
          %2111 = sbr.rel (%p2109) target = $region312
        $region311: #{tsvqvae_forward.1} parent=235 // pred_region
          %2113 = dma.done [#allocation29], 768
        $region312: #{tsvqvae_forward.1} parent=235 // pred_fallthru
          _
        // Predicated region
        $region313: #{tsvqvae_forward.1} parent=235 // pred_check
          %p2114 = pneg %p611
        $region314: #{tsvqvae_forward.1} parent=235 // pred_check_branch
          %2116 = sbr.rel (%p2114) target = $region316
        $region315: #{tsvqvae_forward.1} parent=235 // pred_region
          %2118 = dma.done [#allocation32], 16
        $region316: #{tsvqvae_forward.1} parent=235 // pred_fallthru
          _
        // Predicated region
        $region317: #{tsvqvae_forward.1} parent=235 // pred_check
          %p2119 = pneg %p632
        $region318: #{tsvqvae_forward.1} parent=235 // pred_check_branch
          %2121 = sbr.rel (%p2119) target = $region320
        $region319: #{tsvqvae_forward.1} parent=235 // pred_region
          %2123 = dma.done [#allocation32], 256
        $region320: #{tsvqvae_forward.1} parent=235 // pred_fallthru
          _
        // Predicated region
        $region321: #{tsvqvae_forward.1} parent=235 // pred_check
          %p2124 = pneg %p653
        $region322: #{tsvqvae_forward.1} parent=235 // pred_check_branch
          %2126 = sbr.rel (%p2124) target = $region324
        $region323: #{tsvqvae_forward.1} parent=235 // pred_region
          %2128 = dma.done [#allocation35], 16
        $region324: #{tsvqvae_forward.1} parent=235 // pred_fallthru
          _
        // Predicated region
        $region325: #{tsvqvae_forward.1} parent=235 // pred_check
          %p2129 = pneg %p674
        $region326: #{tsvqvae_forward.1} parent=235 // pred_check_branch
          %2131 = sbr.rel (%p2129) target = $region328
        $region327: #{tsvqvae_forward.1} parent=235 // pred_region
          %2133 = dma.done [#allocation35], 768
        $region328: #{tsvqvae_forward.1} parent=235 // pred_fallthru
          _
        // Predicated region
        $region329: #{tsvqvae_forward.1} parent=235 // pred_check
          %p2134 = pneg %p695
        $region330: #{tsvqvae_forward.1} parent=235 // pred_check_branch
          %2136 = sbr.rel (%p2134) target = $region332
        $region331: #{tsvqvae_forward.1} parent=235 // pred_region
          %2138 = dma.done [#allocation38], 16
        $region332: #{tsvqvae_forward.1} parent=235 // pred_fallthru
          _
        // Predicated region
        $region333: #{tsvqvae_forward.1} parent=235 // pred_check
          %p2139 = pneg %p716
        $region334: #{tsvqvae_forward.1} parent=235 // pred_check_branch
          %2141 = sbr.rel (%p2139) target = $region336
        $region335: #{tsvqvae_forward.1} parent=235 // pred_region
          %2143 = dma.done [#allocation38], 256
        $region336: #{tsvqvae_forward.1} parent=235 // pred_fallthru
          _
        // Predicated region
        $region337: #{tsvqvae_forward.1} parent=235 // pred_check
          %p2144 = pneg %p737
        $region338: #{tsvqvae_forward.1} parent=235 // pred_check_branch
          %2146 = sbr.rel (%p2144) target = $region340
        $region339: #{tsvqvae_forward.1} parent=235 // pred_region
          %2148 = dma.done [#allocation41], 16
        $region340: #{tsvqvae_forward.1} parent=235 // pred_fallthru
          _
        // Predicated region
        $region341: #{tsvqvae_forward.1} parent=235 // pred_check
          %p2149 = pneg %p779
        $region342: #{tsvqvae_forward.1} parent=235 // pred_check_branch
          %2151 = sbr.rel (%p2149) target = $region344
        $region343: #{tsvqvae_forward.1} parent=235 // pred_region
          %2153 = dma.done [#allocation41], 16
        $region344: #{tsvqvae_forward.1} parent=235 // pred_fallthru
          _
        // Predicated region
        $region345: #{tsvqvae_forward.1} parent=235 // pred_check
          %p2154 = pneg %p800
        $region346: #{tsvqvae_forward.1} parent=235 // pred_check_branch
          %2156 = sbr.rel (%p2154) target = $region348
        $region347: #{tsvqvae_forward.1} parent=235 // pred_region
          %2158 = dma.done [#allocation44], 768
        $region348: #{tsvqvae_forward.1} parent=235 // pred_fallthru
          _
        // Predicated region
        $region349: #{tsvqvae_forward.1} parent=235 // pred_check
          %p2159 = pneg %p821
        $region350: #{tsvqvae_forward.1} parent=235 // pred_check_branch
          %2161 = sbr.rel (%p2159) target = $region352
        $region351: #{tsvqvae_forward.1} parent=235 // pred_region
          %2163 = dma.done [#allocation44], 16
        $region352: #{tsvqvae_forward.1} parent=235 // pred_fallthru
          _
        // Predicated region
        $region353: #{tsvqvae_forward.1} parent=235 // pred_check
          %p2164 = pneg %p842
        $region354: #{tsvqvae_forward.1} parent=235 // pred_check_branch
          %2166 = sbr.rel (%p2164) target = $region356
        $region355: #{tsvqvae_forward.1} parent=235 // pred_region
          %2168 = dma.done [#allocation47], 256
        $region356: #{tsvqvae_forward.1} parent=235 // pred_fallthru
          _
        // Predicated region
        $region357: #{tsvqvae_forward.1} parent=235 // pred_check
          %p2169 = pneg %p863
        $region358: #{tsvqvae_forward.1} parent=235 // pred_check_branch
          %2171 = sbr.rel (%p2169) target = $region360
        $region359: #{tsvqvae_forward.1} parent=235 // pred_region
          %2173 = dma.done [#allocation47], 16
        $region360: #{tsvqvae_forward.1} parent=235 // pred_fallthru
          _
        // Predicated region
        $region361: #{tsvqvae_forward.1} parent=235 // pred_check
          %p2174 = pneg %p884
        $region362: #{tsvqvae_forward.1} parent=235 // pred_check_branch
          %2176 = sbr.rel (%p2174) target = $region364
        $region363: #{tsvqvae_forward.1} parent=235 // pred_region
          %2178 = dma.done [#allocation50], 768
        $region364: #{tsvqvae_forward.1} parent=235 // pred_fallthru
          _
        // Predicated region
        $region365: #{tsvqvae_forward.1} parent=235 // pred_check
          %p2179 = pneg %p905
        $region366: #{tsvqvae_forward.1} parent=235 // pred_check_branch
          %2181 = sbr.rel (%p2179) target = $region368
        $region367: #{tsvqvae_forward.1} parent=235 // pred_region
          %2183 = dma.done [#allocation50], 16
        $region368: #{tsvqvae_forward.1} parent=235 // pred_fallthru
          _
        // Predicated region
        $region369: #{tsvqvae_forward.1} parent=235 // pred_check
          %p2184 = pneg %p947
        $region370: #{tsvqvae_forward.1} parent=235 // pred_check_branch
          %2186 = sbr.rel (%p2184) target = $region372
        $region371: #{tsvqvae_forward.1} parent=235 // pred_region
          %2188 = dma.done [#allocation53], 16
        $region372: #{tsvqvae_forward.1} parent=235 // pred_fallthru
          _
        // Predicated region
        $region373: #{tsvqvae_forward.1} parent=235 // pred_check
          %p2189 = pneg %p989
        $region374: #{tsvqvae_forward.1} parent=235 // pred_check_branch
          %2191 = sbr.rel (%p2189) target = $region376
        $region375: #{tsvqvae_forward.1} parent=235 // pred_region
          %2193 = dma.done [#allocation53], 16
        $region376: #{tsvqvae_forward.1} parent=235 // pred_fallthru
          _
        // Predicated region
        $region377: #{tsvqvae_forward.1} parent=235 // pred_check
          %p2194 = pneg %p1010
        $region378: #{tsvqvae_forward.1} parent=235 // pred_check_branch
          %2196 = sbr.rel (%p2194) target = $region380
        $region379: #{tsvqvae_forward.1} parent=235 // pred_region
          %2198 = dma.done [#allocation56], 768
        $region380: #{tsvqvae_forward.1} parent=235 // pred_fallthru
          _
        // Predicated region
        $region381: #{tsvqvae_forward.1} parent=235 // pred_check
          %p2199 = pneg %p1031
        $region382: #{tsvqvae_forward.1} parent=235 // pred_check_branch
          %2201 = sbr.rel (%p2199) target = $region384
        $region383: #{tsvqvae_forward.1} parent=235 // pred_region
          %2203 = dma.done [#allocation56], 16
        $region384: #{tsvqvae_forward.1} parent=235 // pred_fallthru
          _
        // Predicated region
        $region385: #{tsvqvae_forward.1} parent=235 // pred_check
          %p2204 = pneg %p1052
        $region386: #{tsvqvae_forward.1} parent=235 // pred_check_branch
          %2206 = sbr.rel (%p2204) target = $region388
        $region387: #{tsvqvae_forward.1} parent=235 // pred_region
          %2208 = dma.done [#allocation59], 256
        $region388: #{tsvqvae_forward.1} parent=235 // pred_fallthru
          _
        // Predicated region
        $region389: #{tsvqvae_forward.1} parent=235 // pred_check
          %p2209 = pneg %p1073
        $region390: #{tsvqvae_forward.1} parent=235 // pred_check_branch
          %2211 = sbr.rel (%p2209) target = $region392
        $region391: #{tsvqvae_forward.1} parent=235 // pred_region
          %2213 = dma.done [#allocation59], 16
        $region392: #{tsvqvae_forward.1} parent=235 // pred_fallthru
          _
        // Predicated region
        $region393: #{tsvqvae_forward.1} parent=235 // pred_check
          %p2214 = pneg %p1094
        $region394: #{tsvqvae_forward.1} parent=235 // pred_check_branch
          %2216 = sbr.rel (%p2214) target = $region396
        $region395: #{tsvqvae_forward.1} parent=235 // pred_region
          %2218 = dma.done [#allocation62], 768
        $region396: #{tsvqvae_forward.1} parent=235 // pred_fallthru
          _
        // Predicated region
        $region397: #{tsvqvae_forward.1} parent=235 // pred_check
          %p2219 = pneg %p1115
        $region398: #{tsvqvae_forward.1} parent=235 // pred_check_branch
          %2221 = sbr.rel (%p2219) target = $region400
        $region399: #{tsvqvae_forward.1} parent=235 // pred_region
          %2223 = dma.done [#allocation62], 16
        $region400: #{tsvqvae_forward.1} parent=235 // pred_fallthru
          _
        // Predicated region
        $region401: #{tsvqvae_forward.1} parent=235 // pred_check
          %p2224 = pneg %p1136
        $region402: #{tsvqvae_forward.1} parent=235 // pred_check_branch
          %2226 = sbr.rel (%p2224) target = $region404
        $region403: #{tsvqvae_forward.1} parent=235 // pred_region
          %2228 = dma.done [#allocation65], 256
        $region404: #{tsvqvae_forward.1} parent=235 // pred_fallthru
          _
        // Predicated region
        $region405: #{tsvqvae_forward.1} parent=235 // pred_check
          %p2229 = pneg %p1157
        $region406: #{tsvqvae_forward.1} parent=235 // pred_check_branch
          %2231 = sbr.rel (%p2229) target = $region408
        $region407: #{tsvqvae_forward.1} parent=235 // pred_region
          %2233 = dma.done [#allocation65], 16
        $region408: #{tsvqvae_forward.1} parent=235 // pred_fallthru
          _
        // Predicated region
        $region409: #{tsvqvae_forward.1} parent=235 // pred_check
          %p2234 = pneg %p1178
        $region410: #{tsvqvae_forward.1} parent=235 // pred_check_branch
          %2236 = sbr.rel (%p2234) target = $region412
        $region411: #{tsvqvae_forward.1} parent=235 // pred_region
          %2238 = dma.done [#allocation68], 192
        $region412: #{tsvqvae_forward.1} parent=235 // pred_fallthru
          _
        // Predicated region
        $region413: #{tsvqvae_forward.1} parent=235 // pred_check
          %p2239 = pneg %p1199
        $region414: #{tsvqvae_forward.1} parent=235 // pred_check_branch
          %2241 = sbr.rel (%p2239) target = $region416
        $region415: #{tsvqvae_forward.1} parent=235 // pred_region
          %2243 = dma.done [#allocation68], 16
        $region416: #{tsvqvae_forward.1} parent=235 // pred_fallthru
          _
        // Predicated region
        $region417: #{tsvqvae_forward.1} parent=235 // pred_check
          %p2244 = pneg %p1220
        $region418: #{tsvqvae_forward.1} parent=235 // pred_check_branch
          %2246 = sbr.rel (%p2244) target = $region420
        $region419: #{tsvqvae_forward.1} parent=235 // pred_region
          %2248 = dma.done [#allocation71], 768
        $region420: #{tsvqvae_forward.1} parent=235 // pred_fallthru
          _
        // Predicated region
        $region421: #{tsvqvae_forward.1} parent=235 // pred_check
          %p2249 = pneg %p1241
        $region422: #{tsvqvae_forward.1} parent=235 // pred_check_branch
          %2251 = sbr.rel (%p2249) target = $region424
        $region423: #{tsvqvae_forward.1} parent=235 // pred_region
          %2253 = dma.done [#allocation71], 16
        $region424: #{tsvqvae_forward.1} parent=235 // pred_fallthru
          _
        %p2254 = scmp.lt.s32.totalorder %s149, 1
        %s2255 = scalar_select %p2254, %s149, 1
        %s2256 = smul.addr %s2255, 2
        %s2257 = smul.addr %s2256, 8
        %s2258 = scalar_lea.vmem %s1, %s2257
        %p2259 = pneg %p170
        %p2260 = pneg %p167
        %p2261 = pneg %p191
        %p2262 = pneg %p188
        %p2263 = pneg %p212
        %p2264 = pneg %p209
        %p2265 = pneg %p233
        %p2266 = pneg %p230
        %p2267 = pneg %p254
        %p2268 = pneg %p251
        %p2269 = pneg %p275
        %p2270 = pneg %p272
        %p2271 = pneg %p296
        %p2272 = pneg %p293
        %p2273 = pneg %p317
        %p2274 = pneg %p314
        %p2275 = pneg %p338
        %p2276 = pneg %p335
        %p2277 = pneg %p359
        %p2278 = pneg %p356
        %p2279 = pneg %p380
        %p2280 = pneg %p377
        %p2281 = pneg %p401
        %p2282 = pneg %p398
        %p2283 = pneg %p422
        %p2284 = pneg %p419
        %p2285 = pneg %p443
        %p2286 = pneg %p440
        %p2287 = pneg %p464
        %p2288 = pneg %p461
        %p2289 = pneg %p485
        %p2290 = pneg %p482
        %p2291 = pneg %p506
        %p2292 = pneg %p503
        %p2293 = pneg %p527
        %p2294 = pneg %p524
        %p2295 = pneg %p548
        %p2296 = pneg %p545
        %p2297 = pneg %p569
        %p2298 = pneg %p566
        %p2299 = pneg %p590
        %p2300 = pneg %p587
        %p2301 = pneg %p611
        %p2302 = pneg %p608
        %p2303 = pneg %p632
        %p2304 = pneg %p629
        %p2305 = pneg %p653
        %p2306 = pneg %p650
        %p2307 = pneg %p674
        %p2308 = pneg %p671
        %p2309 = pneg %p695
        %p2310 = pneg %p692
        %p2311 = pneg %p716
        %p2312 = pneg %p713
        %p2313 = pneg %p737
        %p2314 = pneg %p734
        %p2315 = pneg %p758
        %p2316 = pneg %p755
        %p2317 = pneg %p779
        %p2318 = pneg %p776
        %p2319 = pneg %p800
        %p2320 = pneg %p797
        %p2321 = pneg %p821
        %p2322 = pneg %p818
        %p2323 = pneg %p842
        %p2324 = pneg %p839
        %p2325 = pneg %p863
        %p2326 = pneg %p860
        %p2327 = pneg %p884
        %p2328 = pneg %p881
        %p2329 = pneg %p905
        %p2330 = pneg %p902
        %p2331 = pneg %p926
        %p2332 = pneg %p923
        %p2333 = pneg %p947
        %p2334 = pneg %p944
        %p2335 = pneg %p968
        %p2336 = pneg %p965
        %p2337 = pneg %p989
        %p2338 = pneg %p986
        %p2339 = pneg %p1010
        %p2340 = pneg %p1007
        %p2341 = pneg %p1031
        %p2342 = pneg %p1028
        %p2343 = pneg %p1052
        %p2344 = pneg %p1049
        %p2345 = pneg %p1073
        %p2346 = pneg %p1070
        %p2347 = pneg %p1094
        %p2348 = pneg %p1091
        %p2349 = pneg %p1115
        %p2350 = pneg %p1112
        %p2351 = pneg %p1136
        %p2352 = pneg %p1133
        %p2353 = pneg %p1157
        %p2354 = pneg %p1154
        %p2355 = pneg %p1178
        %p2356 = pneg %p1175
        %p2357 = pneg %p1199
        %p2358 = pneg %p1196
        %p2359 = pneg %p1220
        %p2360 = pneg %p1217
        %p2361 = pneg %p1241
        %p2362 = pneg %p1238
        %p2363 = pneg %p1262
        %p2364 = pneg %p1259
        %p2365 = pneg %p1283
        %p2366 = pneg %p1280
        %p2367 = pneg %p1309
        %p2368 = pneg %p1306
        %p2369 = scmp.lt.s32.totalorder %s149, 1
        %s2370 = scalar_select %p2369, %s149, 1
        %s2371 = smul.addr %s2370, 2
        %s2372 = smul.addr %s2371, 8
        %s2373 = scalar_lea.vmem %s109, %s2372
        %p2374 = pneg %p1335
        %p2375 = pneg %p1332
        %p2376 = scmp.lt.s32.totalorder %s149, 1
        %s2377 = scalar_select %p2376, %s149, 1
        %s2378 = scalar_lea.vmem %s111, %s2377
        %p2379 = pneg %p1361
        %p2380 = pneg %p1358
        %p2381 = scmp.lt.s32.totalorder %s149, 1
        %s2382 = scalar_select %p2381, %s149, 1
        %s2383 = scalar_lea.vmem %s113, %s2382
        %p2384 = scmp.lt.s32.totalorder %s149, 1
        %s2385 = scalar_select %p2384, %s149, 1
        %s2386 = smul.addr %s2385, 2
        %s2387 = smul.addr %s2386, 8
        %s2388 = scalar_lea.vmem %s1, %s2387
        %p2389 = scmp.lt.s32.totalorder %s149, 1
        %s2390 = scalar_select %p2389, %s149, 1
        %s2391 = smul.addr %s2390, 2
        %s2392 = smul.addr %s2391, 8
        %s2393 = scalar_lea.vmem %s109, %s2392
        %p2394 = scmp.lt.s32.totalorder %s149, 1
        %s2395 = scalar_select %p2394, %s149, 1
        %s2396 = scalar_lea.vmem %s111, %s2395
        %p2397 = scmp.lt.s32.totalorder %s149, 1
        %s2398 = scalar_select %p2397, %s149, 1
        %s2399 = scalar_lea.vmem %s113, %s2398
        %v2401 = vld [vmem:[%s2388] sm:$0xff]
        %v2402 = vld [vmem:[%s2388 + $0x8] sm:$0xff]
        %v2403 = vpack.c.bf16 %v2402, %v2401
        %v2404 = vlaneseq
        %v2405 = vshrl.u32 %v2404, 7
        %v2406 = vadd.s32 %v2405, 8
        %v2407 = vlaneseq
        %v2408 = vand.u32 %v2407, 127
        %v2409 = vadd.s32 %v2405, 4294967295
        %v2410 = vadd.s32 %v2406, 4294967295
        %vm2411 = vcmp.eq.s32.totalorder %v2408, %v2409
        %vm2412 = vcmp.eq.s32.totalorder %v2408, %v2410
        %v2413 = vsel %vm2411, 1, 0
        %v2414 = vsel %vm2412, 1, 0
        %v2415 = vcvt.s32.f32 %v2413
        %v2416 = vcvt.s32.f32 %v2414
        %v2417 = vpack.c.bf16 %v2416, %v2415
        %vm2418 = vcmask 130048
        %v2420 = vsel %vm2418, %v2417, 0
        %2422 = vmatpush.bf16.msra.mxu0 0
        %2423 = vmatpush.bf16.msra.mxu0 0
        %2424 = vmatpush.bf16.msra.mxu0 0
        %2425 = vmatpush.bf16.msra.mxu0 0
        %2426 = vmatpush.bf16.msra.mxu0 0
        %2427 = vmatpush.bf16.msra.mxu0 0
        %2428 = vmatpush.bf16.msra.mxu0 0
        %2429 = vmatpush.bf16.msra.mxu0 %v2403
        %2430 = vmatmul.bf16.gmra.mxu0 %v2420
        %v2431 = vpop.f32.mrf.mxu0
        %v2432 = vadd.f32 0.0, %v2431
        %v2433 = vpop.f32.mrf.mxu0
        %v2434 = vadd.f32 0.0, %v2433
        %2435 = vdwg.mxu0
        %v2436 = vpack.c.bf16 %v2434, %v2432
        %v2437 = vld [vmem:[#allocation67] sm:$0x7]
        %s2438 = scalar_lea.vmem [#allocation67], 4
        %v2439 = vld [vmem:[%s2438] sm:$0x7]
        %vm2440 = vcmask 48128
        %v2442 = vsel %vm2440, %v2403, 0
        %vm2444 = vcmask 1042432
        %v2446 = vsel %vm2444, %v2439, 0
        %2448 = vmatpush.bf16.msra.mxu0 0
        %2449 = vmatpush.bf16.msra.mxu0 0
        %2450 = vmatpush.bf16.msra.mxu0 0
        %2451 = vmatpush.bf16.msra.mxu0 0
        %2452 = vmatpush.bf16.msra.mxu0 0
        %2453 = vmatpush.bf16.msra.mxu0 0
        %2454 = vmatpush.bf16.msra.mxu0 0
        %2455 = vmatpush.bf16.msra.mxu0 %v2446
        %2456 = vmatmul.bf16.gmra.mxu0 %v2442
        %v2457 = vpop.f32.mrf.mxu0
        %v2458 = vadd.f32 0.0, %v2457
        %v2459 = vpop.f32.mrf.mxu0
        %v2460 = vadd.f32 0.0, %v2459
        %2461 = vdwg.mxu0
        %v2463 = vsel %vm2440, %v2436, 0
        %v2466 = vsel %vm2444, %v2437, 0
        %2468 = vmatpush.bf16.msra.mxu0 0
        %2469 = vmatpush.bf16.msra.mxu0 0
        %2470 = vmatpush.bf16.msra.mxu0 0
        %2471 = vmatpush.bf16.msra.mxu0 0
        %2472 = vmatpush.bf16.msra.mxu0 0
        %2473 = vmatpush.bf16.msra.mxu0 0
        %2474 = vmatpush.bf16.msra.mxu0 0
        %2475 = vmatpush.bf16.msra.mxu0 %v2466
        %2476 = vmatmul.bf16.gmra.mxu0 %v2463
        %v2477 = vpop.f32.mrf.mxu0
        %v2478 = vadd.f32 %v2458, %v2477
        %v2479 = vpop.f32.mrf.mxu0
        %v2480 = vadd.f32 %v2460, %v2479
        %2481 = vdwg.mxu0
        %v2482 = vadd.s32 %v2405, 1
        %v2483 = vadd.s32 %v2406, 1
        %vm2484 = vcmp.eq.s32.totalorder %v2408, %v2482
        %vm2485 = vcmp.eq.s32.totalorder %v2408, %v2483
        %v2486 = vsel %vm2484, 1, 0
        %v2487 = vsel %vm2485, 1, 0
        %v2488 = vcvt.s32.f32 %v2486
        %v2489 = vcvt.s32.f32 %v2487
        %v2490 = vpack.c.bf16 %v2489, %v2488
        %v2492 = vsel %vm2418, %v2490, 0
        %2494 = vmatpush.bf16.msra.mxu0 0
        %2495 = vmatpush.bf16.msra.mxu0 0
        %2496 = vmatpush.bf16.msra.mxu0 0
        %2497 = vmatpush.bf16.msra.mxu0 0
        %2498 = vmatpush.bf16.msra.mxu0 0
        %2499 = vmatpush.bf16.msra.mxu0 0
        %2500 = vmatpush.bf16.msra.mxu0 0
        %2501 = vmatpush.bf16.msra.mxu0 %v2403
        %2502 = vmatmul.bf16.gmra.mxu0 %v2492
        %v2503 = vpop.f32.mrf.mxu0
        %v2504 = vadd.f32 0.0, %v2503
        %v2505 = vpop.f32.mrf.mxu0
        %v2506 = vadd.f32 0.0, %v2505
        %2507 = vdwg.mxu0
        %v2508 = vpack.c.bf16 %v2506, %v2504
        %s2509 = scalar_lea.vmem [#allocation67], 8
        %v2510 = vld [vmem:[%s2509] sm:$0x7]
        %v2512 = vsel %vm2440, %v2508, 0
        %v2515 = vsel %vm2444, %v2510, 0
        %2517 = vmatpush.bf16.msra.mxu0 0
        %2518 = vmatpush.bf16.msra.mxu0 0
        %2519 = vmatpush.bf16.msra.mxu0 0
        %2520 = vmatpush.bf16.msra.mxu0 0
        %2521 = vmatpush.bf16.msra.mxu0 0
        %2522 = vmatpush.bf16.msra.mxu0 0
        %2523 = vmatpush.bf16.msra.mxu0 0
        %2524 = vmatpush.bf16.msra.mxu0 %v2515
        %2525 = vmatmul.bf16.gmra.mxu0 %v2512
        %v2526 = vpop.f32.mrf.mxu0
        %v2527 = vadd.f32 0.0, %v2526
        %v2528 = vpop.f32.mrf.mxu0
        %v2529 = vadd.f32 0.0, %v2528
        %2530 = vdwg.mxu0
        %v2531 = vadd.f32 %v2478, %v2527
        %v2532 = vadd.f32 %v2480, %v2529
        %v2533 = vld [vmem:[#allocation66] sm:$0x1]
        %v2535 = vperm.slane %v2533, 0
        %v2537 = vadd.f32 %v2531, %v2535
        %v2538 = vadd.f32 %v2532, %v2535
        %v2539 = vmax.f32 %v2537, 0.0
        %v2540 = vmax.f32 %v2538, 0.0
        %v2541 = vpack.c.bf16 %v2540, %v2539
        %v2542 = vmul.u32 %v2405, 2
        %v2543 = vadd.s32 %v2542, 4294967295
        %vm2544 = vcmp.eq.s32.totalorder %v2408, %v2543
        %v2545 = vsel %vm2544, 1, 0
        %v2546 = vcvt.s32.f32 %v2545
        %v2547 = vpack.c.bf16 %v2546, %v2546
        %v2549 = vsel %vm2418, %v2547, 0
        %2551 = vmatpush.bf16.msra.mxu0 0
        %2552 = vmatpush.bf16.msra.mxu0 0
        %2553 = vmatpush.bf16.msra.mxu0 0
        %2554 = vmatpush.bf16.msra.mxu0 0
        %2555 = vmatpush.bf16.msra.mxu0 0
        %2556 = vmatpush.bf16.msra.mxu0 0
        %2557 = vmatpush.bf16.msra.mxu0 0
        %2558 = vmatpush.bf16.msra.mxu0 %v2541
        %2559 = vmatmul.bf16.gmra.mxu0 %v2549
        %v2560 = vpop.f32.mrf.mxu0
        %v2561 = vadd.f32 0.0, %v2560
        %v2562 = vpop.f32.mrf.mxu0
        %2563 = vdwg.mxu0
        %v2564 = vpack.c.bf16 %v2561, %v2561
        %v2565 = vld [vmem:[%s57] sm:$0xf]
        %v2566 = vld [vmem:[%s57 + $0x4] sm:$0xf]
        %v2567 = vld [vmem:[%s57 + $0x8] sm:$0xf]
        %v2568 = vld [vmem:[%s57 + $0xc] sm:$0xf]
        %vm2569 = vcmp.eq.s32.totalorder %v2408, %v2542
        %v2570 = vsel %vm2569, 1, 0
        %v2571 = vcvt.s32.f32 %v2570
        %v2572 = vpack.c.bf16 %v2571, %v2571
        %v2574 = vsel %vm2418, %v2572, 0
        %2576 = vmatpush.bf16.msra.mxu0 0
        %2577 = vmatpush.bf16.msra.mxu0 0
        %2578 = vmatpush.bf16.msra.mxu0 0
        %2579 = vmatpush.bf16.msra.mxu0 0
        %2580 = vmatpush.bf16.msra.mxu0 0
        %2581 = vmatpush.bf16.msra.mxu0 0
        %2582 = vmatpush.bf16.msra.mxu0 0
        %2583 = vmatpush.bf16.msra.mxu0 %v2541
        %2584 = vmatmul.bf16.gmra.mxu0 %v2574
        %v2585 = vpop.f32.mrf.mxu0
        %v2586 = vadd.f32 0.0, %v2585
        %v2587 = vpop.f32.mrf.mxu0
        %2588 = vdwg.mxu0
        %v2589 = vpack.c.bf16 %v2586, %v2586
        %s2590 = scalar_lea.vmem %s57, 16
        %v2591 = vld [vmem:[%s2590] sm:$0xf]
        %v2592 = vld [vmem:[%s2590 + $0x4] sm:$0xf]
        %v2593 = vld [vmem:[%s2590 + $0x8] sm:$0xf]
        %v2594 = vld [vmem:[%s2590 + $0xc] sm:$0xf]
        %v2599 = vunpack.c.l.b16 %v2591
        %v2600 = vunpack.c.l.b16 %v2592
        %v2601 = vunpack.c.l.b16 %v2593
        %v2602 = vunpack.c.l.b16 %v2594
        %v2603 = vpack.c.b16 %v2600, %v2599
        %v2604 = vpack.c.b16 %v2602, %v2601
        %vm2607 = vcmask 261120
        %v2609 = vsel %vm2607, %v2589, 0
        %2611 = vmatpush.bf16.msra.mxu0 0
        %2612 = vmatpush.bf16.msra.mxu0 0
        %2613 = vmatpush.bf16.msra.mxu0 0
        %2614 = vmatpush.bf16.msra.mxu0 0
        %2615 = vmatpush.bf16.msra.mxu0 0
        %2616 = vmatpush.bf16.msra.mxu0 0
        %2617 = vmatpush.bf16.msra.mxu0 %v2604
        %2618 = vmatpush.bf16.msra.mxu0 %v2603
        %2619 = vmatmul.bf16.gmra.mxu0 %v2609
        %v2620 = vpop.f32.mrf.mxu0
        %v2621 = vadd.f32 0.0, %v2620
        %v2622 = vpop.f32.mrf.mxu0
        %2623 = vdwg.mxu0
        %v2628 = vunpack.c.l.b16 %v2565
        %v2629 = vunpack.c.l.b16 %v2566
        %v2630 = vunpack.c.l.b16 %v2567
        %v2631 = vunpack.c.l.b16 %v2568
        %v2632 = vpack.c.b16 %v2629, %v2628
        %v2633 = vpack.c.b16 %v2631, %v2630
        %v2637 = vsel %vm2607, %v2564, 0
        %2639 = vmatpush.bf16.msra.mxu0 0
        %2640 = vmatpush.bf16.msra.mxu0 0
        %2641 = vmatpush.bf16.msra.mxu0 0
        %2642 = vmatpush.bf16.msra.mxu0 0
        %2643 = vmatpush.bf16.msra.mxu0 0
        %2644 = vmatpush.bf16.msra.mxu0 0
        %2645 = vmatpush.bf16.msra.mxu0 %v2633
        %2646 = vmatpush.bf16.msra.mxu0 %v2632
        %2647 = vmatmul.bf16.gmra.mxu0 %v2637
        %v2648 = vpop.f32.mrf.mxu0
        %v2649 = vadd.f32 %v2621, %v2648
        %v2650 = vpop.f32.mrf.mxu0
        %2651 = vdwg.mxu0
        %v2652 = vadd.s32 %v2542, 1
        %vm2653 = vcmp.eq.s32.totalorder %v2408, %v2652
        %v2654 = vsel %vm2653, 1, 0
        %v2655 = vcvt.s32.f32 %v2654
        %v2656 = vpack.c.bf16 %v2655, %v2655
        %v2658 = vsel %vm2418, %v2656, 0
        %2660 = vmatpush.bf16.msra.mxu0 0
        %2661 = vmatpush.bf16.msra.mxu0 0
        %2662 = vmatpush.bf16.msra.mxu0 0
        %2663 = vmatpush.bf16.msra.mxu0 0
        %2664 = vmatpush.bf16.msra.mxu0 0
        %2665 = vmatpush.bf16.msra.mxu0 0
        %2666 = vmatpush.bf16.msra.mxu0 0
        %2667 = vmatpush.bf16.msra.mxu0 %v2541
        %2668 = vmatmul.bf16.gmra.mxu0 %v2658
        %v2669 = vpop.f32.mrf.mxu0
        %v2670 = vadd.f32 0.0, %v2669
        %v2671 = vpop.f32.mrf.mxu0
        %2672 = vdwg.mxu0
        %v2673 = vpack.c.bf16 %v2670, %v2670
        %s2674 = scalar_lea.vmem %s57, 32
        %v2675 = vld [vmem:[%s2674] sm:$0xf]
        %v2676 = vld [vmem:[%s2674 + $0x4] sm:$0xf]
        %v2677 = vld [vmem:[%s2674 + $0x8] sm:$0xf]
        %v2678 = vld [vmem:[%s2674 + $0xc] sm:$0xf]
        %v2683 = vunpack.c.l.b16 %v2675
        %v2684 = vunpack.c.l.b16 %v2676
        %v2685 = vunpack.c.l.b16 %v2677
        %v2686 = vunpack.c.l.b16 %v2678
        %v2687 = vpack.c.b16 %v2684, %v2683
        %v2688 = vpack.c.b16 %v2686, %v2685
        %v2692 = vsel %vm2607, %v2673, 0
        %2694 = vmatpush.bf16.msra.mxu0 0
        %2695 = vmatpush.bf16.msra.mxu0 0
        %2696 = vmatpush.bf16.msra.mxu0 0
        %2697 = vmatpush.bf16.msra.mxu0 0
        %2698 = vmatpush.bf16.msra.mxu0 0
        %2699 = vmatpush.bf16.msra.mxu0 0
        %2700 = vmatpush.bf16.msra.mxu0 %v2688
        %2701 = vmatpush.bf16.msra.mxu0 %v2687
        %2702 = vmatmul.bf16.gmra.mxu0 %v2692
        %v2703 = vpop.f32.mrf.mxu0
        %v2704 = vadd.f32 0.0, %v2703
        %v2705 = vpop.f32.mrf.mxu0
        %2706 = vdwg.mxu0
        %v2707 = vadd.f32 %v2649, %v2704
        %v2708 = vadd.s32 %v2542, 2
        %vm2709 = vcmp.eq.s32.totalorder %v2408, %v2708
        %v2710 = vsel %vm2709, 1, 0
        %v2711 = vcvt.s32.f32 %v2710
        %v2712 = vpack.c.bf16 %v2711, %v2711
        %v2714 = vsel %vm2418, %v2712, 0
        %2716 = vmatpush.bf16.msra.mxu0 0
        %2717 = vmatpush.bf16.msra.mxu0 0
        %2718 = vmatpush.bf16.msra.mxu0 0
        %2719 = vmatpush.bf16.msra.mxu0 0
        %2720 = vmatpush.bf16.msra.mxu0 0
        %2721 = vmatpush.bf16.msra.mxu0 0
        %2722 = vmatpush.bf16.msra.mxu0 0
        %2723 = vmatpush.bf16.msra.mxu0 %v2541
        %2724 = vmatmul.bf16.gmra.mxu0 %v2714
        %v2725 = vpop.f32.mrf.mxu0
        %v2726 = vadd.f32 0.0, %v2725
        %v2727 = vpop.f32.mrf.mxu0
        %2728 = vdwg.mxu0
        %v2729 = vpack.c.bf16 %v2726, %v2726
        %s2730 = scalar_lea.vmem %s57, 48
        %v2731 = vld [vmem:[%s2730] sm:$0xf]
        %v2732 = vld [vmem:[%s2730 + $0x4] sm:$0xf]
        %v2733 = vld [vmem:[%s2730 + $0x8] sm:$0xf]
        %v2734 = vld [vmem:[%s2730 + $0xc] sm:$0xf]
        %v2739 = vunpack.c.l.b16 %v2731
        %v2740 = vunpack.c.l.b16 %v2732
        %v2741 = vunpack.c.l.b16 %v2733
        %v2742 = vunpack.c.l.b16 %v2734
        %v2743 = vpack.c.b16 %v2740, %v2739
        %v2744 = vpack.c.b16 %v2742, %v2741
        %v2748 = vsel %vm2607, %v2729, 0
        %2750 = vmatpush.bf16.msra.mxu0 0
        %2751 = vmatpush.bf16.msra.mxu0 0
        %2752 = vmatpush.bf16.msra.mxu0 0
        %2753 = vmatpush.bf16.msra.mxu0 0
        %2754 = vmatpush.bf16.msra.mxu0 0
        %2755 = vmatpush.bf16.msra.mxu0 0
        %2756 = vmatpush.bf16.msra.mxu0 %v2744
        %2757 = vmatpush.bf16.msra.mxu0 %v2743
        %2758 = vmatmul.bf16.gmra.mxu0 %v2748
        %v2759 = vpop.f32.mrf.mxu0
        %v2760 = vadd.f32 0.0, %v2759
        %v2761 = vpop.f32.mrf.mxu0
        %2762 = vdwg.mxu0
        %v2763 = vadd.f32 %v2707, %v2760
        %v2764 = vld [vmem:[#allocation40] sm:$0x1]
        %v2766 = vperm.slane %v2764, 0
        %v2768 = vadd.f32 %v2763, %v2766
        %v2769 = vmax.f32 %v2768, 0.0
        %v2770 = vpack.c.bf16 %v2769, %v2769
        %v2771 = vadd.s32 %v2405, 4294967293
        %vm2772 = vcmp.eq.s32.totalorder %v2408, %v2771
        %v2773 = vsel %vm2772, 1, 0
        %v2774 = vcvt.s32.f32 %v2773
        %v2775 = vpack.c.bf16 %v2774, %v2774
        %vm2776 = vcmask 64512
        %v2778 = vsel %vm2776, %v2775, 0
        %vm2780 = vcmask 1043456
        %v2782 = vsel %vm2780, %v2770, 0
        %2784 = vmatpush.bf16.msra.mxu0 0
        %2785 = vmatpush.bf16.msra.mxu0 0
        %2786 = vmatpush.bf16.msra.mxu0 0
        %2787 = vmatpush.bf16.msra.mxu0 0
        %2788 = vmatpush.bf16.msra.mxu0 0
        %2789 = vmatpush.bf16.msra.mxu0 0
        %2790 = vmatpush.bf16.msra.mxu0 0
        %2791 = vmatpush.bf16.msra.mxu0 %v2782
        %2792 = vmatmul.bf16.gmra.mxu0 %v2778
        %v2793 = vpop.f32.mrf.mxu0
        %v2794 = vadd.f32 0.0, %v2793
        %v2795 = vpop.f32.mrf.mxu0
        %2796 = vdwg.mxu0
        %v2797 = vpack.c.bf16 %v2794, %v2794
        %v2798 = vld [vmem:[#allocation43] sm:$0xf]
        %v2799 = vld [vmem:[#allocation43 + $0x4] sm:$0xf]
        %v2800 = vld [vmem:[#allocation43 + $0x8] sm:$0xf]
        %v2801 = vld [vmem:[#allocation43 + $0xc] sm:$0xf]
        %s2802 = scalar_lea.vmem [#allocation43], 16
        %v2803 = vld [vmem:[%s2802] sm:$0xf]
        %v2804 = vld [vmem:[%s2802 + $0x4] sm:$0xf]
        %v2805 = vld [vmem:[%s2802 + $0x8] sm:$0xf]
        %v2806 = vld [vmem:[%s2802 + $0xc] sm:$0xf]
        %v2811 = vunpack.c.l.b16 %v2803
        %v2812 = vunpack.c.l.b16 %v2804
        %v2813 = vunpack.c.l.b16 %v2805
        %v2814 = vunpack.c.l.b16 %v2806
        %v2815 = vpack.c.b16 %v2812, %v2811
        %v2816 = vpack.c.b16 %v2814, %v2813
        %v2819 = vsel %vm2607, %v2770, 0
        %2821 = vmatpush.bf16.msra.mxu0 0
        %2822 = vmatpush.bf16.msra.mxu0 0
        %2823 = vmatpush.bf16.msra.mxu0 0
        %2824 = vmatpush.bf16.msra.mxu0 0
        %2825 = vmatpush.bf16.msra.mxu0 0
        %2826 = vmatpush.bf16.msra.mxu0 0
        %2827 = vmatpush.bf16.msra.mxu0 %v2816
        %2828 = vmatpush.bf16.msra.mxu0 %v2815
        %2829 = vmatmul.bf16.gmra.mxu0 %v2819
        %v2830 = vpop.f32.mrf.mxu0
        %v2831 = vadd.f32 0.0, %v2830
        %v2832 = vpop.f32.mrf.mxu0
        %2833 = vdwg.mxu0
        %v2838 = vunpack.c.l.b16 %v2798
        %v2839 = vunpack.c.l.b16 %v2799
        %v2840 = vunpack.c.l.b16 %v2800
        %v2841 = vunpack.c.l.b16 %v2801
        %v2842 = vpack.c.b16 %v2839, %v2838
        %v2843 = vpack.c.b16 %v2841, %v2840
        %v2847 = vsel %vm2607, %v2797, 0
        %2849 = vmatpush.bf16.msra.mxu0 0
        %2850 = vmatpush.bf16.msra.mxu0 0
        %2851 = vmatpush.bf16.msra.mxu0 0
        %2852 = vmatpush.bf16.msra.mxu0 0
        %2853 = vmatpush.bf16.msra.mxu0 0
        %2854 = vmatpush.bf16.msra.mxu0 0
        %2855 = vmatpush.bf16.msra.mxu0 %v2843
        %2856 = vmatpush.bf16.msra.mxu0 %v2842
        %2857 = vmatmul.bf16.gmra.mxu0 %v2847
        %v2858 = vpop.f32.mrf.mxu0
        %v2859 = vadd.f32 %v2831, %v2858
        %v2860 = vpop.f32.mrf.mxu0
        %2861 = vdwg.mxu0
        %v2862 = vadd.s32 %v2405, 3
        %vm2863 = vcmp.eq.s32.totalorder %v2408, %v2862
        %v2864 = vsel %vm2863, 1, 0
        %v2865 = vcvt.s32.f32 %v2864
        %v2866 = vpack.c.bf16 %v2865, %v2865
        %v2868 = vsel %vm2776, %v2866, 0
        %2870 = vmatpush.bf16.msra.mxu0 0
        %2871 = vmatpush.bf16.msra.mxu0 0
        %2872 = vmatpush.bf16.msra.mxu0 0
        %2873 = vmatpush.bf16.msra.mxu0 0
        %2874 = vmatpush.bf16.msra.mxu0 0
        %2875 = vmatpush.bf16.msra.mxu0 0
        %2876 = vmatpush.bf16.msra.mxu0 0
        %2877 = vmatpush.bf16.msra.mxu0 %v2782
        %2878 = vmatmul.bf16.gmra.mxu0 %v2868
        %v2879 = vpop.f32.mrf.mxu0
        %v2880 = vadd.f32 0.0, %v2879
        %v2881 = vpop.f32.mrf.mxu0
        %2882 = vdwg.mxu0
        %v2883 = vpack.c.bf16 %v2880, %v2880
        %s2884 = scalar_lea.vmem [#allocation43], 32
        %v2885 = vld [vmem:[%s2884] sm:$0xf]
        %v2886 = vld [vmem:[%s2884 + $0x4] sm:$0xf]
        %v2887 = vld [vmem:[%s2884 + $0x8] sm:$0xf]
        %v2888 = vld [vmem:[%s2884 + $0xc] sm:$0xf]
        %v2893 = vunpack.c.l.b16 %v2885
        %v2894 = vunpack.c.l.b16 %v2886
        %v2895 = vunpack.c.l.b16 %v2887
        %v2896 = vunpack.c.l.b16 %v2888
        %v2897 = vpack.c.b16 %v2894, %v2893
        %v2898 = vpack.c.b16 %v2896, %v2895
        %v2902 = vsel %vm2607, %v2883, 0
        %2904 = vmatpush.bf16.msra.mxu0 0
        %2905 = vmatpush.bf16.msra.mxu0 0
        %2906 = vmatpush.bf16.msra.mxu0 0
        %2907 = vmatpush.bf16.msra.mxu0 0
        %2908 = vmatpush.bf16.msra.mxu0 0
        %2909 = vmatpush.bf16.msra.mxu0 0
        %2910 = vmatpush.bf16.msra.mxu0 %v2898
        %2911 = vmatpush.bf16.msra.mxu0 %v2897
        %2912 = vmatmul.bf16.gmra.mxu0 %v2902
        %v2913 = vpop.f32.mrf.mxu0
        %v2914 = vadd.f32 0.0, %v2913
        %v2915 = vpop.f32.mrf.mxu0
        %2916 = vdwg.mxu0
        %v2917 = vadd.f32 %v2859, %v2914
        %v2918 = vld [vmem:[#allocation42] sm:$0x1]
        %v2920 = vperm.slane %v2918, 0
        %v2922 = vadd.f32 %v2917, %v2920
        %v2923 = vmax.f32 %v2922, 0.0
        %v2924 = vpack.c.bf16 %v2923, %v2923
        %v2925 = vld [vmem:[#allocation46] sm:$0xf]
        %v2926 = vld [vmem:[#allocation46 + $0x4] sm:$0xf]
        %v2927 = vld [vmem:[#allocation46 + $0x8] sm:$0xf]
        %v2928 = vld [vmem:[#allocation46 + $0xc] sm:$0xf]
        %v2929 = vld [vmem:[#allocation45] sm:$0x1]
        %v2931 = vperm.slane %v2929, 0
        %v2937 = vunpack.c.l.b16 %v2925
        %v2938 = vunpack.c.l.b16 %v2926
        %v2939 = vunpack.c.l.b16 %v2927
        %v2940 = vunpack.c.l.b16 %v2928
        %v2941 = vpack.c.b16 %v2938, %v2937
        %v2942 = vpack.c.b16 %v2940, %v2939
        %v2946 = vsel %vm2607, %v2924, 0
        %2948 = vmatpush.bf16.msra.mxu0 0
        %2949 = vmatpush.bf16.msra.mxu0 0
        %2950 = vmatpush.bf16.msra.mxu0 0
        %2951 = vmatpush.bf16.msra.mxu0 0
        %2952 = vmatpush.bf16.msra.mxu0 0
        %2953 = vmatpush.bf16.msra.mxu0 0
        %2954 = vmatpush.bf16.msra.mxu0 %v2942
        %2955 = vmatpush.bf16.msra.mxu0 %v2941
        %2956 = vmatmul.bf16.gmra.mxu0 %v2946
        %v2957 = vpop.f32.mrf.mxu0
        %v2958 = vadd.f32 %v2931, %v2957
        %v2959 = vpop.f32.mrf.mxu0
        %2960 = vdwg.mxu0
        %v2961 = vadd.f32 %v2768, %v2958
        %v2962 = vmax.f32 %v2961, 0.0
        %v2963 = vpack.c.bf16 %v2962, %v2962
        %v2964 = vpack.c.bf16 %v2415, %v2415
        %v2966 = vsel %vm2776, %v2964, 0
        %v2969 = vsel %vm2780, %v2963, 0
        %2971 = vmatpush.bf16.msra.mxu0 0
        %2972 = vmatpush.bf16.msra.mxu0 0
        %2973 = vmatpush.bf16.msra.mxu0 0
        %2974 = vmatpush.bf16.msra.mxu0 0
        %2975 = vmatpush.bf16.msra.mxu0 0
        %2976 = vmatpush.bf16.msra.mxu0 0
        %2977 = vmatpush.bf16.msra.mxu0 0
        %2978 = vmatpush.bf16.msra.mxu0 %v2969
        %2979 = vmatmul.bf16.gmra.mxu0 %v2966
        %v2980 = vpop.f32.mrf.mxu0
        %v2981 = vadd.f32 0.0, %v2980
        %v2982 = vpop.f32.mrf.mxu0
        %2983 = vdwg.mxu0
        %v2984 = vpack.c.bf16 %v2981, %v2981
        %v2985 = vld [vmem:[#allocation49] sm:$0xf]
        %v2986 = vld [vmem:[#allocation49 + $0x4] sm:$0xf]
        %v2987 = vld [vmem:[#allocation49 + $0x8] sm:$0xf]
        %v2988 = vld [vmem:[#allocation49 + $0xc] sm:$0xf]
        %s2989 = scalar_lea.vmem [#allocation49], 16
        %v2990 = vld [vmem:[%s2989] sm:$0xf]
        %v2991 = vld [vmem:[%s2989 + $0x4] sm:$0xf]
        %v2992 = vld [vmem:[%s2989 + $0x8] sm:$0xf]
        %v2993 = vld [vmem:[%s2989 + $0xc] sm:$0xf]
        %v2998 = vunpack.c.l.b16 %v2990
        %v2999 = vunpack.c.l.b16 %v2991
        %v3000 = vunpack.c.l.b16 %v2992
        %v3001 = vunpack.c.l.b16 %v2993
        %v3002 = vpack.c.b16 %v2999, %v2998
        %v3003 = vpack.c.b16 %v3001, %v3000
        %v3006 = vsel %vm2607, %v2963, 0
        %3008 = vmatpush.bf16.msra.mxu0 0
        %3009 = vmatpush.bf16.msra.mxu0 0
        %3010 = vmatpush.bf16.msra.mxu0 0
        %3011 = vmatpush.bf16.msra.mxu0 0
        %3012 = vmatpush.bf16.msra.mxu0 0
        %3013 = vmatpush.bf16.msra.mxu0 0
        %3014 = vmatpush.bf16.msra.mxu0 %v3003
        %3015 = vmatpush.bf16.msra.mxu0 %v3002
        %3016 = vmatmul.bf16.gmra.mxu0 %v3006
        %v3017 = vpop.f32.mrf.mxu0
        %v3018 = vadd.f32 0.0, %v3017
        %v3019 = vpop.f32.mrf.mxu0
        %3020 = vdwg.mxu0
        %v3025 = vunpack.c.l.b16 %v2985
        %v3026 = vunpack.c.l.b16 %v2986
        %v3027 = vunpack.c.l.b16 %v2987
        %v3028 = vunpack.c.l.b16 %v2988
        %v3029 = vpack.c.b16 %v3026, %v3025
        %v3030 = vpack.c.b16 %v3028, %v3027
        %v3034 = vsel %vm2607, %v2984, 0
        %3036 = vmatpush.bf16.msra.mxu0 0
        %3037 = vmatpush.bf16.msra.mxu0 0
        %3038 = vmatpush.bf16.msra.mxu0 0
        %3039 = vmatpush.bf16.msra.mxu0 0
        %3040 = vmatpush.bf16.msra.mxu0 0
        %3041 = vmatpush.bf16.msra.mxu0 0
        %3042 = vmatpush.bf16.msra.mxu0 %v3030
        %3043 = vmatpush.bf16.msra.mxu0 %v3029
        %3044 = vmatmul.bf16.gmra.mxu0 %v3034
        %v3045 = vpop.f32.mrf.mxu0
        %v3046 = vadd.f32 %v3018, %v3045
        %v3047 = vpop.f32.mrf.mxu0
        %3048 = vdwg.mxu0
        %v3049 = vpack.c.bf16 %v2488, %v2488
        %v3051 = vsel %vm2776, %v3049, 0
        %3053 = vmatpush.bf16.msra.mxu0 0
        %3054 = vmatpush.bf16.msra.mxu0 0
        %3055 = vmatpush.bf16.msra.mxu0 0
        %3056 = vmatpush.bf16.msra.mxu0 0
        %3057 = vmatpush.bf16.msra.mxu0 0
        %3058 = vmatpush.bf16.msra.mxu0 0
        %3059 = vmatpush.bf16.msra.mxu0 0
        %3060 = vmatpush.bf16.msra.mxu0 %v2969
        %3061 = vmatmul.bf16.gmra.mxu0 %v3051
        %v3062 = vpop.f32.mrf.mxu0
        %v3063 = vadd.f32 0.0, %v3062
        %v3064 = vpop.f32.mrf.mxu0
        %3065 = vdwg.mxu0
        %v3066 = vpack.c.bf16 %v3063, %v3063
        %s3067 = scalar_lea.vmem [#allocation49], 32
        %v3068 = vld [vmem:[%s3067] sm:$0xf]
        %v3069 = vld [vmem:[%s3067 + $0x4] sm:$0xf]
        %v3070 = vld [vmem:[%s3067 + $0x8] sm:$0xf]
        %v3071 = vld [vmem:[%s3067 + $0xc] sm:$0xf]
        %v3076 = vunpack.c.l.b16 %v3068
        %v3077 = vunpack.c.l.b16 %v3069
        %v3078 = vunpack.c.l.b16 %v3070
        %v3079 = vunpack.c.l.b16 %v3071
        %v3080 = vpack.c.b16 %v3077, %v3076
        %v3081 = vpack.c.b16 %v3079, %v3078
        %v3085 = vsel %vm2607, %v3066, 0
        %3087 = vmatpush.bf16.msra.mxu0 0
        %3088 = vmatpush.bf16.msra.mxu0 0
        %3089 = vmatpush.bf16.msra.mxu0 0
        %3090 = vmatpush.bf16.msra.mxu0 0
        %3091 = vmatpush.bf16.msra.mxu0 0
        %3092 = vmatpush.bf16.msra.mxu0 0
        %3093 = vmatpush.bf16.msra.mxu0 %v3081
        %3094 = vmatpush.bf16.msra.mxu0 %v3080
        %3095 = vmatmul.bf16.gmra.mxu0 %v3085
        %v3096 = vpop.f32.mrf.mxu0
        %v3097 = vadd.f32 0.0, %v3096
        %v3098 = vpop.f32.mrf.mxu0
        %3099 = vdwg.mxu0
        %v3100 = vadd.f32 %v3046, %v3097
        %v3101 = vld [vmem:[#allocation48] sm:$0x1]
        %v3103 = vperm.slane %v3101, 0
        %v3105 = vadd.f32 %v3100, %v3103
        %v3106 = vmax.f32 %v3105, 0.0
        %v3107 = vpack.c.bf16 %v3106, %v3106
        %v3108 = vld [vmem:[%s73] sm:$0xf]
        %v3109 = vld [vmem:[%s73 + $0x4] sm:$0xf]
        %v3110 = vld [vmem:[%s73 + $0x8] sm:$0xf]
        %v3111 = vld [vmem:[%s73 + $0xc] sm:$0xf]
        %v3112 = vld [vmem:[#allocation51] sm:$0x1]
        %v3114 = vperm.slane %v3112, 0
        %v3120 = vunpack.c.l.b16 %v3108
        %v3121 = vunpack.c.l.b16 %v3109
        %v3122 = vunpack.c.l.b16 %v3110
        %v3123 = vunpack.c.l.b16 %v3111
        %v3124 = vpack.c.b16 %v3121, %v3120
        %v3125 = vpack.c.b16 %v3123, %v3122
        %v3129 = vsel %vm2607, %v3107, 0
        %3131 = vmatpush.bf16.msra.mxu0 0
        %3132 = vmatpush.bf16.msra.mxu0 0
        %3133 = vmatpush.bf16.msra.mxu0 0
        %3134 = vmatpush.bf16.msra.mxu0 0
        %3135 = vmatpush.bf16.msra.mxu0 0
        %3136 = vmatpush.bf16.msra.mxu0 0
        %3137 = vmatpush.bf16.msra.mxu0 %v3125
        %3138 = vmatpush.bf16.msra.mxu0 %v3124
        %3139 = vmatmul.bf16.gmra.mxu0 %v3129
        %v3140 = vpop.f32.mrf.mxu0
        %v3141 = vadd.f32 %v3114, %v3140
        %v3142 = vpop.f32.mrf.mxu0
        %3143 = vdwg.mxu0
        %v3144 = vadd.f32 %v2961, %v3141
        %v3145 = vpack.c.bf16 %v3144, %v3144
        %v3146 = vsel %vm2776, %v2547, 0
        %v3149 = vsel %vm2780, %v3145, 0
        %3151 = vmatpush.bf16.msra.mxu0 0
        %3152 = vmatpush.bf16.msra.mxu0 0
        %3153 = vmatpush.bf16.msra.mxu0 0
        %3154 = vmatpush.bf16.msra.mxu0 0
        %3155 = vmatpush.bf16.msra.mxu0 0
        %3156 = vmatpush.bf16.msra.mxu0 0
        %3157 = vmatpush.bf16.msra.mxu0 0
        %3158 = vmatpush.bf16.msra.mxu0 %v3149
        %3159 = vmatmul.bf16.gmra.mxu0 %v3146
        %v3160 = vpop.f32.mrf.mxu0
        %v3161 = vadd.f32 0.0, %v3160
        %v3162 = vpop.f32.mrf.mxu0
        %3163 = vdwg.mxu0
        %v3164 = vpack.c.bf16 %v3161, %v3161
        %v3165 = vld [vmem:[%s77] sm:$0xf]
        %v3166 = vld [vmem:[%s77 + $0x4] sm:$0xf]
        %v3167 = vld [vmem:[%s77 + $0x8] sm:$0xf]
        %v3168 = vld [vmem:[%s77 + $0xc] sm:$0xf]
        %v3169 = vsel %vm2776, %v2572, 0
        %3171 = vmatpush.bf16.msra.mxu0 0
        %3172 = vmatpush.bf16.msra.mxu0 0
        %3173 = vmatpush.bf16.msra.mxu0 0
        %3174 = vmatpush.bf16.msra.mxu0 0
        %3175 = vmatpush.bf16.msra.mxu0 0
        %3176 = vmatpush.bf16.msra.mxu0 0
        %3177 = vmatpush.bf16.msra.mxu0 0
        %3178 = vmatpush.bf16.msra.mxu0 %v3149
        %3179 = vmatmul.bf16.gmra.mxu0 %v3169
        %v3180 = vpop.f32.mrf.mxu0
        %v3181 = vadd.f32 0.0, %v3180
        %v3182 = vpop.f32.mrf.mxu0
        %3183 = vdwg.mxu0
        %v3184 = vpack.c.bf16 %v3181, %v3181
        %s3185 = scalar_lea.vmem %s77, 16
        %v3186 = vld [vmem:[%s3185] sm:$0xf]
        %v3187 = vld [vmem:[%s3185 + $0x4] sm:$0xf]
        %v3188 = vld [vmem:[%s3185 + $0x8] sm:$0xf]
        %v3189 = vld [vmem:[%s3185 + $0xc] sm:$0xf]
        %v3194 = vunpack.c.l.b16 %v3186
        %v3195 = vunpack.c.l.b16 %v3187
        %v3196 = vunpack.c.l.b16 %v3188
        %v3197 = vunpack.c.l.b16 %v3189
        %v3198 = vpack.c.b16 %v3195, %v3194
        %v3199 = vpack.c.b16 %v3197, %v3196
        %v3203 = vsel %vm2607, %v3184, 0
        %3205 = vmatpush.bf16.msra.mxu0 0
        %3206 = vmatpush.bf16.msra.mxu0 0
        %3207 = vmatpush.bf16.msra.mxu0 0
        %3208 = vmatpush.bf16.msra.mxu0 0
        %3209 = vmatpush.bf16.msra.mxu0 0
        %3210 = vmatpush.bf16.msra.mxu0 0
        %3211 = vmatpush.bf16.msra.mxu0 %v3199
        %3212 = vmatpush.bf16.msra.mxu0 %v3198
        %3213 = vmatmul.bf16.gmra.mxu0 %v3203
        %v3214 = vpop.f32.mrf.mxu0
        %v3215 = vadd.f32 0.0, %v3214
        %v3216 = vpop.f32.mrf.mxu0
        %3217 = vdwg.mxu0
        %v3222 = vunpack.c.l.b16 %v3165
        %v3223 = vunpack.c.l.b16 %v3166
        %v3224 = vunpack.c.l.b16 %v3167
        %v3225 = vunpack.c.l.b16 %v3168
        %v3226 = vpack.c.b16 %v3223, %v3222
        %v3227 = vpack.c.b16 %v3225, %v3224
        %v3231 = vsel %vm2607, %v3164, 0
        %3233 = vmatpush.bf16.msra.mxu0 0
        %3234 = vmatpush.bf16.msra.mxu0 0
        %3235 = vmatpush.bf16.msra.mxu0 0
        %3236 = vmatpush.bf16.msra.mxu0 0
        %3237 = vmatpush.bf16.msra.mxu0 0
        %3238 = vmatpush.bf16.msra.mxu0 0
        %3239 = vmatpush.bf16.msra.mxu0 %v3227
        %3240 = vmatpush.bf16.msra.mxu0 %v3226
        %3241 = vmatmul.bf16.gmra.mxu0 %v3231
        %v3242 = vpop.f32.mrf.mxu0
        %v3243 = vadd.f32 %v3215, %v3242
        %v3244 = vpop.f32.mrf.mxu0
        %3245 = vdwg.mxu0
        %v3246 = vsel %vm2776, %v2656, 0
        %3248 = vmatpush.bf16.msra.mxu0 0
        %3249 = vmatpush.bf16.msra.mxu0 0
        %3250 = vmatpush.bf16.msra.mxu0 0
        %3251 = vmatpush.bf16.msra.mxu0 0
        %3252 = vmatpush.bf16.msra.mxu0 0
        %3253 = vmatpush.bf16.msra.mxu0 0
        %3254 = vmatpush.bf16.msra.mxu0 0
        %3255 = vmatpush.bf16.msra.mxu0 %v3149
        %3256 = vmatmul.bf16.gmra.mxu0 %v3246
        %v3257 = vpop.f32.mrf.mxu0
        %v3258 = vadd.f32 0.0, %v3257
        %v3259 = vpop.f32.mrf.mxu0
        %3260 = vdwg.mxu0
        %v3261 = vpack.c.bf16 %v3258, %v3258
        %s3262 = scalar_lea.vmem %s77, 32
        %v3263 = vld [vmem:[%s3262] sm:$0xf]
        %v3264 = vld [vmem:[%s3262 + $0x4] sm:$0xf]
        %v3265 = vld [vmem:[%s3262 + $0x8] sm:$0xf]
        %v3266 = vld [vmem:[%s3262 + $0xc] sm:$0xf]
        %v3271 = vunpack.c.l.b16 %v3263
        %v3272 = vunpack.c.l.b16 %v3264
        %v3273 = vunpack.c.l.b16 %v3265
        %v3274 = vunpack.c.l.b16 %v3266
        %v3275 = vpack.c.b16 %v3272, %v3271
        %v3276 = vpack.c.b16 %v3274, %v3273
        %v3280 = vsel %vm2607, %v3261, 0
        %3282 = vmatpush.bf16.msra.mxu0 0
        %3283 = vmatpush.bf16.msra.mxu0 0
        %3284 = vmatpush.bf16.msra.mxu0 0
        %3285 = vmatpush.bf16.msra.mxu0 0
        %3286 = vmatpush.bf16.msra.mxu0 0
        %3287 = vmatpush.bf16.msra.mxu0 0
        %3288 = vmatpush.bf16.msra.mxu0 %v3276
        %3289 = vmatpush.bf16.msra.mxu0 %v3275
        %3290 = vmatmul.bf16.gmra.mxu0 %v3280
        %v3291 = vpop.f32.mrf.mxu0
        %v3292 = vadd.f32 0.0, %v3291
        %v3293 = vpop.f32.mrf.mxu0
        %3294 = vdwg.mxu0
        %v3295 = vadd.f32 %v3243, %v3292
        %v3296 = vsel %vm2776, %v2712, 0
        %3298 = vmatpush.bf16.msra.mxu0 0
        %3299 = vmatpush.bf16.msra.mxu0 0
        %3300 = vmatpush.bf16.msra.mxu0 0
        %3301 = vmatpush.bf16.msra.mxu0 0
        %3302 = vmatpush.bf16.msra.mxu0 0
        %3303 = vmatpush.bf16.msra.mxu0 0
        %3304 = vmatpush.bf16.msra.mxu0 0
        %3305 = vmatpush.bf16.msra.mxu0 %v3149
        %3306 = vmatmul.bf16.gmra.mxu0 %v3296
        %v3307 = vpop.f32.mrf.mxu0
        %v3308 = vadd.f32 0.0, %v3307
        %v3309 = vpop.f32.mrf.mxu0
        %3310 = vdwg.mxu0
        %v3311 = vpack.c.bf16 %v3308, %v3308
        %s3312 = scalar_lea.vmem %s77, 48
        %v3313 = vld [vmem:[%s3312] sm:$0xf]
        %v3314 = vld [vmem:[%s3312 + $0x4] sm:$0xf]
        %v3315 = vld [vmem:[%s3312 + $0x8] sm:$0xf]
        %v3316 = vld [vmem:[%s3312 + $0xc] sm:$0xf]
        %v3321 = vunpack.c.l.b16 %v3313
        %v3322 = vunpack.c.l.b16 %v3314
        %v3323 = vunpack.c.l.b16 %v3315
        %v3324 = vunpack.c.l.b16 %v3316
        %v3325 = vpack.c.b16 %v3322, %v3321
        %v3326 = vpack.c.b16 %v3324, %v3323
        %v3330 = vsel %vm2607, %v3311, 0
        %3332 = vmatpush.bf16.msra.mxu0 0
        %3333 = vmatpush.bf16.msra.mxu0 0
        %3334 = vmatpush.bf16.msra.mxu0 0
        %3335 = vmatpush.bf16.msra.mxu0 0
        %3336 = vmatpush.bf16.msra.mxu0 0
        %3337 = vmatpush.bf16.msra.mxu0 0
        %3338 = vmatpush.bf16.msra.mxu0 %v3326
        %3339 = vmatpush.bf16.msra.mxu0 %v3325
        %3340 = vmatmul.bf16.gmra.mxu0 %v3330
        %v3341 = vpop.f32.mrf.mxu0
        %v3342 = vadd.f32 0.0, %v3341
        %v3343 = vpop.f32.mrf.mxu0
        %3344 = vdwg.mxu0
        %v3345 = vadd.f32 %v3295, %v3342
        %v3346 = vld [vmem:[#allocation52] sm:$0x1]
        %v3348 = vperm.slane %v3346, 0
        %v3350 = vadd.f32 %v3345, %v3348
        %v3351 = vmax.f32 %v3350, 0.0
        %v3352 = vpack.c.bf16 %v3351, %v3351
        %vm3353 = vcmask 31744
        %v3354 = vsel %vm3353, %v2775, 0
        %vm3356 = vcmask 1041408
        %v3358 = vsel %vm3356, %v3352, 0
        %3360 = vmatpush.bf16.msra.mxu0 0
        %3361 = vmatpush.bf16.msra.mxu0 0
        %3362 = vmatpush.bf16.msra.mxu0 0
        %3363 = vmatpush.bf16.msra.mxu0 0
        %3364 = vmatpush.bf16.msra.mxu0 0
        %3365 = vmatpush.bf16.msra.mxu0 0
        %3366 = vmatpush.bf16.msra.mxu0 0
        %3367 = vmatpush.bf16.msra.mxu0 %v3358
        %3368 = vmatmul.bf16.gmra.mxu0 %v3354
        %v3369 = vpop.f32.mrf.mxu0
        %v3370 = vadd.f32 0.0, %v3369
        %v3371 = vpop.f32.mrf.mxu0
        %3372 = vdwg.mxu0
        %v3373 = vpack.c.bf16 %v3370, %v3370
        %v3374 = vld [vmem:[#allocation55] sm:$0xf]
        %v3375 = vld [vmem:[#allocation55 + $0x4] sm:$0xf]
        %v3376 = vld [vmem:[#allocation55 + $0x8] sm:$0xf]
        %v3377 = vld [vmem:[#allocation55 + $0xc] sm:$0xf]
        %s3378 = scalar_lea.vmem [#allocation55], 16
        %v3379 = vld [vmem:[%s3378] sm:$0xf]
        %v3380 = vld [vmem:[%s3378 + $0x4] sm:$0xf]
        %v3381 = vld [vmem:[%s3378 + $0x8] sm:$0xf]
        %v3382 = vld [vmem:[%s3378 + $0xc] sm:$0xf]
        %v3387 = vunpack.c.l.b16 %v3379
        %v3388 = vunpack.c.l.b16 %v3380
        %v3389 = vunpack.c.l.b16 %v3381
        %v3390 = vunpack.c.l.b16 %v3382
        %v3391 = vpack.c.b16 %v3388, %v3387
        %v3392 = vpack.c.b16 %v3390, %v3389
        %v3395 = vsel %vm2607, %v3352, 0
        %3397 = vmatpush.bf16.msra.mxu0 0
        %3398 = vmatpush.bf16.msra.mxu0 0
        %3399 = vmatpush.bf16.msra.mxu0 0
        %3400 = vmatpush.bf16.msra.mxu0 0
        %3401 = vmatpush.bf16.msra.mxu0 0
        %3402 = vmatpush.bf16.msra.mxu0 0
        %3403 = vmatpush.bf16.msra.mxu0 %v3392
        %3404 = vmatpush.bf16.msra.mxu0 %v3391
        %3405 = vmatmul.bf16.gmra.mxu0 %v3395
        %v3406 = vpop.f32.mrf.mxu0
        %v3407 = vadd.f32 0.0, %v3406
        %v3408 = vpop.f32.mrf.mxu0
        %3409 = vdwg.mxu0
        %v3414 = vunpack.c.l.b16 %v3374
        %v3415 = vunpack.c.l.b16 %v3375
        %v3416 = vunpack.c.l.b16 %v3376
        %v3417 = vunpack.c.l.b16 %v3377
        %v3418 = vpack.c.b16 %v3415, %v3414
        %v3419 = vpack.c.b16 %v3417, %v3416
        %v3423 = vsel %vm2607, %v3373, 0
        %3425 = vmatpush.bf16.msra.mxu0 0
        %3426 = vmatpush.bf16.msra.mxu0 0
        %3427 = vmatpush.bf16.msra.mxu0 0
        %3428 = vmatpush.bf16.msra.mxu0 0
        %3429 = vmatpush.bf16.msra.mxu0 0
        %3430 = vmatpush.bf16.msra.mxu0 0
        %3431 = vmatpush.bf16.msra.mxu0 %v3419
        %3432 = vmatpush.bf16.msra.mxu0 %v3418
        %3433 = vmatmul.bf16.gmra.mxu0 %v3423
        %v3434 = vpop.f32.mrf.mxu0
        %v3435 = vadd.f32 %v3407, %v3434
        %v3436 = vpop.f32.mrf.mxu0
        %3437 = vdwg.mxu0
        %v3438 = vsel %vm3353, %v2866, 0
        %3440 = vmatpush.bf16.msra.mxu0 0
        %3441 = vmatpush.bf16.msra.mxu0 0
        %3442 = vmatpush.bf16.msra.mxu0 0
        %3443 = vmatpush.bf16.msra.mxu0 0
        %3444 = vmatpush.bf16.msra.mxu0 0
        %3445 = vmatpush.bf16.msra.mxu0 0
        %3446 = vmatpush.bf16.msra.mxu0 0
        %3447 = vmatpush.bf16.msra.mxu0 %v3358
        %3448 = vmatmul.bf16.gmra.mxu0 %v3438
        %v3449 = vpop.f32.mrf.mxu0
        %v3450 = vadd.f32 0.0, %v3449
        %v3451 = vpop.f32.mrf.mxu0
        %3452 = vdwg.mxu0
        %v3453 = vpack.c.bf16 %v3450, %v3450
        %s3454 = scalar_lea.vmem [#allocation55], 32
        %v3455 = vld [vmem:[%s3454] sm:$0xf]
        %v3456 = vld [vmem:[%s3454 + $0x4] sm:$0xf]
        %v3457 = vld [vmem:[%s3454 + $0x8] sm:$0xf]
        %v3458 = vld [vmem:[%s3454 + $0xc] sm:$0xf]
        %v3463 = vunpack.c.l.b16 %v3455
        %v3464 = vunpack.c.l.b16 %v3456
        %v3465 = vunpack.c.l.b16 %v3457
        %v3466 = vunpack.c.l.b16 %v3458
        %v3467 = vpack.c.b16 %v3464, %v3463
        %v3468 = vpack.c.b16 %v3466, %v3465
        %v3472 = vsel %vm2607, %v3453, 0
        %3474 = vmatpush.bf16.msra.mxu0 0
        %3475 = vmatpush.bf16.msra.mxu0 0
        %3476 = vmatpush.bf16.msra.mxu0 0
        %3477 = vmatpush.bf16.msra.mxu0 0
        %3478 = vmatpush.bf16.msra.mxu0 0
        %3479 = vmatpush.bf16.msra.mxu0 0
        %3480 = vmatpush.bf16.msra.mxu0 %v3468
        %3481 = vmatpush.bf16.msra.mxu0 %v3467
        %3482 = vmatmul.bf16.gmra.mxu0 %v3472
        %v3483 = vpop.f32.mrf.mxu0
        %v3484 = vadd.f32 0.0, %v3483
        %v3485 = vpop.f32.mrf.mxu0
        %3486 = vdwg.mxu0
        %v3487 = vadd.f32 %v3435, %v3484
        %v3488 = vld [vmem:[#allocation54] sm:$0x1]
        %v3490 = vperm.slane %v3488, 0
        %v3492 = vadd.f32 %v3487, %v3490
        %v3493 = vmax.f32 %v3492, 0.0
        %v3494 = vpack.c.bf16 %v3493, %v3493
        %v3495 = vld [vmem:[#allocation58] sm:$0xf]
        %v3496 = vld [vmem:[#allocation58 + $0x4] sm:$0xf]
        %v3497 = vld [vmem:[#allocation58 + $0x8] sm:$0xf]
        %v3498 = vld [vmem:[#allocation58 + $0xc] sm:$0xf]
        %v3499 = vld [vmem:[#allocation57] sm:$0x1]
        %v3501 = vperm.slane %v3499, 0
        %v3507 = vunpack.c.l.b16 %v3495
        %v3508 = vunpack.c.l.b16 %v3496
        %v3509 = vunpack.c.l.b16 %v3497
        %v3510 = vunpack.c.l.b16 %v3498
        %v3511 = vpack.c.b16 %v3508, %v3507
        %v3512 = vpack.c.b16 %v3510, %v3509
        %v3516 = vsel %vm2607, %v3494, 0
        %3518 = vmatpush.bf16.msra.mxu0 0
        %3519 = vmatpush.bf16.msra.mxu0 0
        %3520 = vmatpush.bf16.msra.mxu0 0
        %3521 = vmatpush.bf16.msra.mxu0 0
        %3522 = vmatpush.bf16.msra.mxu0 0
        %3523 = vmatpush.bf16.msra.mxu0 0
        %3524 = vmatpush.bf16.msra.mxu0 %v3512
        %3525 = vmatpush.bf16.msra.mxu0 %v3511
        %3526 = vmatmul.bf16.gmra.mxu0 %v3516
        %v3527 = vpop.f32.mrf.mxu0
        %v3528 = vadd.f32 %v3501, %v3527
        %v3529 = vpop.f32.mrf.mxu0
        %3530 = vdwg.mxu0
        %v3531 = vadd.f32 %v3350, %v3528
        %v3532 = vmax.f32 %v3531, 0.0
        %v3533 = vpack.c.bf16 %v3532, %v3532
        %v3534 = vsel %vm3353, %v2964, 0
        %v3537 = vsel %vm3356, %v3533, 0
        %3539 = vmatpush.bf16.msra.mxu0 0
        %3540 = vmatpush.bf16.msra.mxu0 0
        %3541 = vmatpush.bf16.msra.mxu0 0
        %3542 = vmatpush.bf16.msra.mxu0 0
        %3543 = vmatpush.bf16.msra.mxu0 0
        %3544 = vmatpush.bf16.msra.mxu0 0
        %3545 = vmatpush.bf16.msra.mxu0 0
        %3546 = vmatpush.bf16.msra.mxu0 %v3537
        %3547 = vmatmul.bf16.gmra.mxu0 %v3534
        %v3548 = vpop.f32.mrf.mxu0
        %v3549 = vadd.f32 0.0, %v3548
        %v3550 = vpop.f32.mrf.mxu0
        %3551 = vdwg.mxu0
        %v3552 = vpack.c.bf16 %v3549, %v3549
        %v3553 = vld [vmem:[#allocation61] sm:$0xf]
        %v3554 = vld [vmem:[#allocation61 + $0x4] sm:$0xf]
        %v3555 = vld [vmem:[#allocation61 + $0x8] sm:$0xf]
        %v3556 = vld [vmem:[#allocation61 + $0xc] sm:$0xf]
        %s3557 = scalar_lea.vmem [#allocation61], 16
        %v3558 = vld [vmem:[%s3557] sm:$0xf]
        %v3559 = vld [vmem:[%s3557 + $0x4] sm:$0xf]
        %v3560 = vld [vmem:[%s3557 + $0x8] sm:$0xf]
        %v3561 = vld [vmem:[%s3557 + $0xc] sm:$0xf]
        %v3566 = vunpack.c.l.b16 %v3558
        %v3567 = vunpack.c.l.b16 %v3559
        %v3568 = vunpack.c.l.b16 %v3560
        %v3569 = vunpack.c.l.b16 %v3561
        %v3570 = vpack.c.b16 %v3567, %v3566
        %v3571 = vpack.c.b16 %v3569, %v3568
        %v3574 = vsel %vm2607, %v3533, 0
        %3576 = vmatpush.bf16.msra.mxu0 0
        %3577 = vmatpush.bf16.msra.mxu0 0
        %3578 = vmatpush.bf16.msra.mxu0 0
        %3579 = vmatpush.bf16.msra.mxu0 0
        %3580 = vmatpush.bf16.msra.mxu0 0
        %3581 = vmatpush.bf16.msra.mxu0 0
        %3582 = vmatpush.bf16.msra.mxu0 %v3571
        %3583 = vmatpush.bf16.msra.mxu0 %v3570
        %3584 = vmatmul.bf16.gmra.mxu0 %v3574
        %v3585 = vpop.f32.mrf.mxu0
        %v3586 = vadd.f32 0.0, %v3585
        %v3587 = vpop.f32.mrf.mxu0
        %3588 = vdwg.mxu0
        %v3593 = vunpack.c.l.b16 %v3553
        %v3594 = vunpack.c.l.b16 %v3554
        %v3595 = vunpack.c.l.b16 %v3555
        %v3596 = vunpack.c.l.b16 %v3556
        %v3597 = vpack.c.b16 %v3594, %v3593
        %v3598 = vpack.c.b16 %v3596, %v3595
        %v3602 = vsel %vm2607, %v3552, 0
        %3604 = vmatpush.bf16.msra.mxu0 0
        %3605 = vmatpush.bf16.msra.mxu0 0
        %3606 = vmatpush.bf16.msra.mxu0 0
        %3607 = vmatpush.bf16.msra.mxu0 0
        %3608 = vmatpush.bf16.msra.mxu0 0
        %3609 = vmatpush.bf16.msra.mxu0 0
        %3610 = vmatpush.bf16.msra.mxu0 %v3598
        %3611 = vmatpush.bf16.msra.mxu0 %v3597
        %3612 = vmatmul.bf16.gmra.mxu0 %v3602
        %v3613 = vpop.f32.mrf.mxu0
        %v3614 = vadd.f32 %v3586, %v3613
        %v3615 = vpop.f32.mrf.mxu0
        %3616 = vdwg.mxu0
        %v3617 = vsel %vm3353, %v3049, 0
        %3619 = vmatpush.bf16.msra.mxu0 0
        %3620 = vmatpush.bf16.msra.mxu0 0
        %3621 = vmatpush.bf16.msra.mxu0 0
        %3622 = vmatpush.bf16.msra.mxu0 0
        %3623 = vmatpush.bf16.msra.mxu0 0
        %3624 = vmatpush.bf16.msra.mxu0 0
        %3625 = vmatpush.bf16.msra.mxu0 0
        %3626 = vmatpush.bf16.msra.mxu0 %v3537
        %3627 = vmatmul.bf16.gmra.mxu0 %v3617
        %v3628 = vpop.f32.mrf.mxu0
        %v3629 = vadd.f32 0.0, %v3628
        %v3630 = vpop.f32.mrf.mxu0
        %3631 = vdwg.mxu0
        %v3632 = vpack.c.bf16 %v3629, %v3629
        %s3633 = scalar_lea.vmem [#allocation61], 32
        %v3634 = vld [vmem:[%s3633] sm:$0xf]
        %v3635 = vld [vmem:[%s3633 + $0x4] sm:$0xf]
        %v3636 = vld [vmem:[%s3633 + $0x8] sm:$0xf]
        %v3637 = vld [vmem:[%s3633 + $0xc] sm:$0xf]
        %v3642 = vunpack.c.l.b16 %v3634
        %v3643 = vunpack.c.l.b16 %v3635
        %v3644 = vunpack.c.l.b16 %v3636
        %v3645 = vunpack.c.l.b16 %v3637
        %v3646 = vpack.c.b16 %v3643, %v3642
        %v3647 = vpack.c.b16 %v3645, %v3644
        %v3651 = vsel %vm2607, %v3632, 0
        %3653 = vmatpush.bf16.msra.mxu0 0
        %3654 = vmatpush.bf16.msra.mxu0 0
        %3655 = vmatpush.bf16.msra.mxu0 0
        %3656 = vmatpush.bf16.msra.mxu0 0
        %3657 = vmatpush.bf16.msra.mxu0 0
        %3658 = vmatpush.bf16.msra.mxu0 0
        %3659 = vmatpush.bf16.msra.mxu0 %v3647
        %3660 = vmatpush.bf16.msra.mxu0 %v3646
        %3661 = vmatmul.bf16.gmra.mxu0 %v3651
        %v3662 = vpop.f32.mrf.mxu0
        %v3663 = vadd.f32 0.0, %v3662
        %v3664 = vpop.f32.mrf.mxu0
        %3665 = vdwg.mxu0
        %v3666 = vadd.f32 %v3614, %v3663
        %v3667 = vld [vmem:[#allocation60] sm:$0x1]
        %v3669 = vperm.slane %v3667, 0
        %v3671 = vadd.f32 %v3666, %v3669
        %v3672 = vmax.f32 %v3671, 0.0
        %v3673 = vpack.c.bf16 %v3672, %v3672
        %v3674 = vld [vmem:[#allocation64] sm:$0xf]
        %v3675 = vld [vmem:[#allocation64 + $0x4] sm:$0xf]
        %v3676 = vld [vmem:[#allocation64 + $0x8] sm:$0xf]
        %v3677 = vld [vmem:[#allocation64 + $0xc] sm:$0xf]
        %v3678 = vld [vmem:[#allocation63] sm:$0x1]
        %v3680 = vperm.slane %v3678, 0
        %v3686 = vunpack.c.l.b16 %v3674
        %v3687 = vunpack.c.l.b16 %v3675
        %v3688 = vunpack.c.l.b16 %v3676
        %v3689 = vunpack.c.l.b16 %v3677
        %v3690 = vpack.c.b16 %v3687, %v3686
        %v3691 = vpack.c.b16 %v3689, %v3688
        %v3695 = vsel %vm2607, %v3673, 0
        %3697 = vmatpush.bf16.msra.mxu0 0
        %3698 = vmatpush.bf16.msra.mxu0 0
        %3699 = vmatpush.bf16.msra.mxu0 0
        %3700 = vmatpush.bf16.msra.mxu0 0
        %3701 = vmatpush.bf16.msra.mxu0 0
        %3702 = vmatpush.bf16.msra.mxu0 0
        %3703 = vmatpush.bf16.msra.mxu0 %v3691
        %3704 = vmatpush.bf16.msra.mxu0 %v3690
        %3705 = vmatmul.bf16.gmra.mxu0 %v3695
        %v3706 = vpop.f32.mrf.mxu0
        %v3707 = vadd.f32 %v3680, %v3706
        %v3708 = vpop.f32.mrf.mxu0
        %3709 = vdwg.mxu0
        %v3710 = vadd.f32 %v3531, %v3707
        %v3711 = vpack.c.bf16 %v3710, %v3710
        %v3713 = vsel %vm3356, %v3711, 0
        %3715 = vmatpush.bf16.msra.mxu0 0
        %3716 = vmatpush.bf16.msra.mxu0 0
        %3717 = vmatpush.bf16.msra.mxu0 0
        %3718 = vmatpush.bf16.msra.mxu0 0
        %3719 = vmatpush.bf16.msra.mxu0 0
        %3720 = vmatpush.bf16.msra.mxu0 0
        %3721 = vmatpush.bf16.msra.mxu0 0
        %3722 = vmatpush.bf16.msra.mxu0 %v3713
        %3723 = vmatmul.bf16.gmra.mxu0 %v3534
        %v3724 = vpop.f32.mrf.mxu0
        %v3725 = vadd.f32 0.0, %v3724
        %v3726 = vpop.f32.mrf.mxu0
        %3727 = vdwg.mxu0
        %v3728 = vpack.c.bf16 %v3725, %v3725
        %v3729 = vld [vmem:[#allocation70] sm:$0xf]
        %v3730 = vld [vmem:[#allocation70 + $0x4] sm:$0xf]
        %v3731 = vld [vmem:[#allocation70 + $0x8] sm:$0xf]
        %v3732 = vld [vmem:[#allocation70 + $0xc] sm:$0xf]
        %s3733 = scalar_lea.vmem [#allocation70], 16
        %v3734 = vld [vmem:[%s3733] sm:$0xf]
        %v3735 = vld [vmem:[%s3733 + $0x4] sm:$0xf]
        %v3736 = vld [vmem:[%s3733 + $0x8] sm:$0xf]
        %v3737 = vld [vmem:[%s3733 + $0xc] sm:$0xf]
        %v3742 = vunpack.c.l.b16 %v3734
        %v3743 = vunpack.c.l.b16 %v3735
        %v3744 = vunpack.c.l.b16 %v3736
        %v3745 = vunpack.c.l.b16 %v3737
        %v3746 = vpack.c.b16 %v3743, %v3742
        %v3747 = vpack.c.b16 %v3745, %v3744
        %v3750 = vsel %vm2607, %v3711, 0
        %3752 = vmatpush.bf16.msra.mxu0 0
        %3753 = vmatpush.bf16.msra.mxu0 0
        %3754 = vmatpush.bf16.msra.mxu0 0
        %3755 = vmatpush.bf16.msra.mxu0 0
        %3756 = vmatpush.bf16.msra.mxu0 0
        %3757 = vmatpush.bf16.msra.mxu0 0
        %3758 = vmatpush.bf16.msra.mxu0 %v3747
        %3759 = vmatpush.bf16.msra.mxu0 %v3746
        %3760 = vmatmul.bf16.gmra.mxu0 %v3750
        %v3761 = vpop.f32.mrf.mxu0
        %v3762 = vadd.f32 0.0, %v3761
        %v3763 = vpop.f32.mrf.mxu0
        %3764 = vdwg.mxu0
        %v3769 = vunpack.c.l.b16 %v3729
        %v3770 = vunpack.c.l.b16 %v3730
        %v3771 = vunpack.c.l.b16 %v3731
        %v3772 = vunpack.c.l.b16 %v3732
        %v3773 = vpack.c.b16 %v3770, %v3769
        %v3774 = vpack.c.b16 %v3772, %v3771
        %v3778 = vsel %vm2607, %v3728, 0
        %3780 = vmatpush.bf16.msra.mxu0 0
        %3781 = vmatpush.bf16.msra.mxu0 0
        %3782 = vmatpush.bf16.msra.mxu0 0
        %3783 = vmatpush.bf16.msra.mxu0 0
        %3784 = vmatpush.bf16.msra.mxu0 0
        %3785 = vmatpush.bf16.msra.mxu0 0
        %3786 = vmatpush.bf16.msra.mxu0 %v3774
        %3787 = vmatpush.bf16.msra.mxu0 %v3773
        %3788 = vmatmul.bf16.gmra.mxu0 %v3778
        %v3789 = vpop.f32.mrf.mxu0
        %v3790 = vadd.f32 %v3762, %v3789
        %v3791 = vpop.f32.mrf.mxu0
        %3792 = vdwg.mxu0
        %3793 = vmatpush.bf16.msra.mxu0 0
        %3794 = vmatpush.bf16.msra.mxu0 0
        %3795 = vmatpush.bf16.msra.mxu0 0
        %3796 = vmatpush.bf16.msra.mxu0 0
        %3797 = vmatpush.bf16.msra.mxu0 0
        %3798 = vmatpush.bf16.msra.mxu0 0
        %3799 = vmatpush.bf16.msra.mxu0 0
        %3800 = vmatpush.bf16.msra.mxu0 %v3713
        %3801 = vmatmul.bf16.gmra.mxu0 %v3617
        %v3802 = vpop.f32.mrf.mxu0
        %v3803 = vadd.f32 0.0, %v3802
        %v3804 = vpop.f32.mrf.mxu0
        %3805 = vdwg.mxu0
        %v3806 = vpack.c.bf16 %v3803, %v3803
        %s3807 = scalar_lea.vmem [#allocation70], 32
        %v3808 = vld [vmem:[%s3807] sm:$0xf]
        %v3809 = vld [vmem:[%s3807 + $0x4] sm:$0xf]
        %v3810 = vld [vmem:[%s3807 + $0x8] sm:$0xf]
        %v3811 = vld [vmem:[%s3807 + $0xc] sm:$0xf]
        %v3816 = vunpack.c.l.b16 %v3808
        %v3817 = vunpack.c.l.b16 %v3809
        %v3818 = vunpack.c.l.b16 %v3810
        %v3819 = vunpack.c.l.b16 %v3811
        %v3820 = vpack.c.b16 %v3817, %v3816
        %v3821 = vpack.c.b16 %v3819, %v3818
        %v3825 = vsel %vm2607, %v3806, 0
        %3827 = vmatpush.bf16.msra.mxu0 0
        %3828 = vmatpush.bf16.msra.mxu0 0
        %3829 = vmatpush.bf16.msra.mxu0 0
        %3830 = vmatpush.bf16.msra.mxu0 0
        %3831 = vmatpush.bf16.msra.mxu0 0
        %3832 = vmatpush.bf16.msra.mxu0 0
        %3833 = vmatpush.bf16.msra.mxu0 %v3821
        %3834 = vmatpush.bf16.msra.mxu0 %v3820
        %3835 = vmatmul.bf16.gmra.mxu0 %v3825
        %v3836 = vpop.f32.mrf.mxu0
        %v3837 = vadd.f32 0.0, %v3836
        %v3838 = vpop.f32.mrf.mxu0
        %3839 = vdwg.mxu0
        %v3840 = vadd.f32 %v3790, %v3837
        %v3841 = vld [vmem:[#allocation69] sm:$0x1]
        %v3843 = vperm.slane %v3841, 0
        %v3845 = vadd.f32 %v3840, %v3843
        %v3846 = vpack.c.bf16 %v3845, %v3845
        %v3847 = vld [vmem:[#allocation72] sm:$0x1]
        %v3848 = vld [vmem:[%s107] sm:$0xf]
        %v3849 = vld [vmem:[%s107 + $0x4] sm:$0xf]
        %v3850 = vld [vmem:[%s107 + $0x8] sm:$0xf]
        %v3851 = vld [vmem:[%s107 + $0xc] sm:$0xf]
        %v3856 = vunpack.c.l.b16 %v3848
        %v3857 = vunpack.c.l.b16 %v3849
        %v3858 = vunpack.c.l.b16 %v3850
        %v3859 = vunpack.c.l.b16 %v3851
        %v3860 = vpack.c.b16 %v3857, %v3856
        %v3861 = vpack.c.b16 %v3859, %v3858
        %v3865 = vsel %vm2607, %v3846, 0
        %3867 = vmatpush.bf16.msra.mxu0 0
        %3868 = vmatpush.bf16.msra.mxu0 0
        %3869 = vmatpush.bf16.msra.mxu0 0
        %3870 = vmatpush.bf16.msra.mxu0 0
        %3871 = vmatpush.bf16.msra.mxu0 0
        %3872 = vmatpush.bf16.msra.mxu0 0
        %3873 = vmatpush.bf16.msra.mxu0 %v3861
        %3874 = vmatpush.bf16.msra.mxu0 %v3860
        %3875 = vmatmul.bf16.gmra.mxu0 %v3865
        %v3876 = vpop.f32.mrf.mxu0
        %v3877 = vadd.f32 0.0, %v3876
        %v3878 = vpop.f32.mrf.mxu0
        %3879 = vdwg.mxu0
        %v3880 = vmul.f32 %v3877, 2.0
        %v3882 = vperm.slane %v3847, 0
        %v3884 = vsub.f32 %v3882, %v3880
        %v3885 = vcvt.s32.f32 %v2408
        %vm3886 = vcmask 519168
        %v3887 = vsel %vm3886, %v3884, inf
        %3888 = vmin.xlane.f32.xlu0 %v3887
        %v3889 = vpop.xlane.xlu0 %3888
        %vm3890 = vcmp.le.f32.partialorder %v3884, %v3889
        %v3891 = vsel %vm3890, %v3885, 64.0
        %v3892 = vsel %vm3886, %v3891, inf
        %3893 = vmin.xlane.f32.xlu0 %v3892
        %v3894 = vpop.xlane.xlu0 %3893
        %vm3895 = vcmp.eq.f32.partialorder %v3885, %v3894
        %v3896 = vsel %vm3895, 1, 0
        %v3897 = vcvt.s32.f32 %v3896
        %v3898 = vpack.c.bf16 %v3897, %v3897
        %v3899 = vld [vmem:[%s105] sm:$0xf]
        %v3900 = vld [vmem:[%s105 + $0x4] sm:$0xf]
        %v3901 = vld [vmem:[%s105 + $0x8] sm:$0xf]
        %v3902 = vld [vmem:[%s105 + $0xc] sm:$0xf]
        %v3903 = vld [vmem:[%s105 + $0x10] sm:$0xf]
        %v3904 = vld [vmem:[%s105 + $0x14] sm:$0xf]
        %v3905 = vld [vmem:[%s105 + $0x18] sm:$0xf]
        %v3906 = vld [vmem:[%s105 + $0x1c] sm:$0xf]
        %v3915 = vunpack.c.l.b16 %v3899
        %v3916 = vunpack.c.l.b16 %v3900
        %v3917 = vunpack.c.l.b16 %v3901
        %v3918 = vunpack.c.l.b16 %v3902
        %v3919 = vunpack.c.l.b16 %v3903
        %v3920 = vunpack.c.l.b16 %v3904
        %v3921 = vunpack.c.l.b16 %v3905
        %v3922 = vunpack.c.l.b16 %v3906
        %v3923 = vpack.c.b16 %v3916, %v3915
        %v3924 = vpack.c.b16 %v3918, %v3917
        %v3925 = vpack.c.b16 %v3920, %v3919
        %v3926 = vpack.c.b16 %v3922, %v3921
        %vm3931 = vcmask 523264
        %v3933 = vsel %vm3931, %v3898, 0
        %3935 = vmatpush.bf16.msra.mxu0 0
        %3936 = vmatpush.bf16.msra.mxu0 0
        %3937 = vmatpush.bf16.msra.mxu0 0
        %3938 = vmatpush.bf16.msra.mxu0 0
        %3939 = vmatpush.bf16.msra.mxu0 %v3926
        %3940 = vmatpush.bf16.msra.mxu0 %v3925
        %3941 = vmatpush.bf16.msra.mxu0 %v3924
        %3942 = vmatpush.bf16.msra.mxu0 %v3923
        %3943 = vmatmul.bf16.gmra.mxu0 %v3933
        %v3944 = vpop.f32.mrf.mxu0
        %v3945 = vadd.f32 0.0, %v3944
        %v3946 = vpop.f32.mrf.mxu0
        %3947 = vdwg.mxu0
        %v3948 = vsel %vm3886, %v3897, 0.0
        %v3949 = vrot.slane %v3948, 4
        %v3950 = vadd.f32 %v3948, %v3949
        %v3951 = vrot.slane %v3950, 2
        %v3952 = vadd.f32 %v3950, %v3951
        %v3953 = vrot.slane %v3952, 1
        %v3954 = vadd.f32 %v3952, %v3953
        %v3955 = vsub.f32 %v3845, %v3945
        %v3956 = vmul.f32 %v3955, %v3955
        %vm3957 = vcmask 257024
        %v3958 = vsel %vm3957, %v3956, 0.0
        %3959 = vadd.xlane.f32.xlu0 %v3958
        %v3960 = vpop.xlane.xlu0 %3959
        %v3961 = vrot.slane %v3960, 4
        %v3962 = vadd.f32 %v3960, %v3961
        %v3963 = vrot.slane %v3962, 2
        %v3964 = vadd.f32 %v3962, %v3963
        %v3965 = vrot.slane %v3964, 1
        %v3966 = vadd.f32 %v3964, %v3965
        %s3967 = vtos %v3966
        %v3968 = vpack.c.bf16 %v3945, %v3945
        %v3970 = vsel %vm3356, %v3968, 0
        %3972 = vmatpush.bf16.msra.mxu0 0
        %3973 = vmatpush.bf16.msra.mxu0 0
        %3974 = vmatpush.bf16.msra.mxu0 0
        %3975 = vmatpush.bf16.msra.mxu0 0
        %3976 = vmatpush.bf16.msra.mxu0 0
        %3977 = vmatpush.bf16.msra.mxu0 0
        %3978 = vmatpush.bf16.msra.mxu0 0
        %3979 = vmatpush.bf16.msra.mxu0 %v3970
        %3980 = vmatmul.bf16.gmra.mxu0 %v3534
        %v3981 = vpop.f32.mrf.mxu0
        %v3982 = vadd.f32 0.0, %v3981
        %v3983 = vpop.f32.mrf.mxu0
        %3984 = vdwg.mxu0
        %v3985 = vpack.c.bf16 %v3982, %v3982
        %v3986 = vld [vmem:[#allocation4] sm:$0xf]
        %v3987 = vld [vmem:[#allocation4 + $0x4] sm:$0xf]
        %v3988 = vld [vmem:[#allocation4 + $0x8] sm:$0xf]
        %v3989 = vld [vmem:[#allocation4 + $0xc] sm:$0xf]
        %s3990 = scalar_lea.vmem [#allocation4], 16
        %v3991 = vld [vmem:[%s3990] sm:$0xf]
        %v3992 = vld [vmem:[%s3990 + $0x4] sm:$0xf]
        %v3993 = vld [vmem:[%s3990 + $0x8] sm:$0xf]
        %v3994 = vld [vmem:[%s3990 + $0xc] sm:$0xf]
        %v3999 = vunpack.c.l.b16 %v3991
        %v4000 = vunpack.c.l.b16 %v3992
        %v4001 = vunpack.c.l.b16 %v3993
        %v4002 = vunpack.c.l.b16 %v3994
        %v4003 = vpack.c.b16 %v4000, %v3999
        %v4004 = vpack.c.b16 %v4002, %v4001
        %v4007 = vsel %vm2607, %v3968, 0
        %4009 = vmatpush.bf16.msra.mxu0 0
        %4010 = vmatpush.bf16.msra.mxu0 0
        %4011 = vmatpush.bf16.msra.mxu0 0
        %4012 = vmatpush.bf16.msra.mxu0 0
        %4013 = vmatpush.bf16.msra.mxu0 0
        %4014 = vmatpush.bf16.msra.mxu0 0
        %4015 = vmatpush.bf16.msra.mxu0 %v4004
        %4016 = vmatpush.bf16.msra.mxu0 %v4003
        %4017 = vmatmul.bf16.gmra.mxu0 %v4007
        %v4018 = vpop.f32.mrf.mxu0
        %v4019 = vadd.f32 0.0, %v4018
        %v4020 = vpop.f32.mrf.mxu0
        %4021 = vdwg.mxu0
        %v4026 = vunpack.c.l.b16 %v3986
        %v4027 = vunpack.c.l.b16 %v3987
        %v4028 = vunpack.c.l.b16 %v3988
        %v4029 = vunpack.c.l.b16 %v3989
        %v4030 = vpack.c.b16 %v4027, %v4026
        %v4031 = vpack.c.b16 %v4029, %v4028
        %v4035 = vsel %vm2607, %v3985, 0
        %4037 = vmatpush.bf16.msra.mxu0 0
        %4038 = vmatpush.bf16.msra.mxu0 0
        %4039 = vmatpush.bf16.msra.mxu0 0
        %4040 = vmatpush.bf16.msra.mxu0 0
        %4041 = vmatpush.bf16.msra.mxu0 0
        %4042 = vmatpush.bf16.msra.mxu0 0
        %4043 = vmatpush.bf16.msra.mxu0 %v4031
        %4044 = vmatpush.bf16.msra.mxu0 %v4030
        %4045 = vmatmul.bf16.gmra.mxu0 %v4035
        %v4046 = vpop.f32.mrf.mxu0
        %v4047 = vadd.f32 %v4019, %v4046
        %v4048 = vpop.f32.mrf.mxu0
        %4049 = vdwg.mxu0
        %4050 = vmatpush.bf16.msra.mxu0 0
        %4051 = vmatpush.bf16.msra.mxu0 0
        %4052 = vmatpush.bf16.msra.mxu0 0
        %4053 = vmatpush.bf16.msra.mxu0 0
        %4054 = vmatpush.bf16.msra.mxu0 0
        %4055 = vmatpush.bf16.msra.mxu0 0
        %4056 = vmatpush.bf16.msra.mxu0 0
        %4057 = vmatpush.bf16.msra.mxu0 %v3970
        %4058 = vmatmul.bf16.gmra.mxu0 %v3617
        %v4059 = vpop.f32.mrf.mxu0
        %v4060 = vadd.f32 0.0, %v4059
        %v4061 = vpop.f32.mrf.mxu0
        %4062 = vdwg.mxu0
        %v4063 = vpack.c.bf16 %v4060, %v4060
        %s4064 = scalar_lea.vmem [#allocation4], 32
        %v4065 = vld [vmem:[%s4064] sm:$0xf]
        %v4066 = vld [vmem:[%s4064 + $0x4] sm:$0xf]
        %v4067 = vld [vmem:[%s4064 + $0x8] sm:$0xf]
        %v4068 = vld [vmem:[%s4064 + $0xc] sm:$0xf]
        %v4073 = vunpack.c.l.b16 %v4065
        %v4074 = vunpack.c.l.b16 %v4066
        %v4075 = vunpack.c.l.b16 %v4067
        %v4076 = vunpack.c.l.b16 %v4068
        %v4077 = vpack.c.b16 %v4074, %v4073
        %v4078 = vpack.c.b16 %v4076, %v4075
        %v4082 = vsel %vm2607, %v4063, 0
        %4084 = vmatpush.bf16.msra.mxu0 0
        %4085 = vmatpush.bf16.msra.mxu0 0
        %4086 = vmatpush.bf16.msra.mxu0 0
        %4087 = vmatpush.bf16.msra.mxu0 0
        %4088 = vmatpush.bf16.msra.mxu0 0
        %4089 = vmatpush.bf16.msra.mxu0 0
        %4090 = vmatpush.bf16.msra.mxu0 %v4078
        %4091 = vmatpush.bf16.msra.mxu0 %v4077
        %4092 = vmatmul.bf16.gmra.mxu0 %v4082
        %v4093 = vpop.f32.mrf.mxu0
        %v4094 = vadd.f32 0.0, %v4093
        %v4095 = vpop.f32.mrf.mxu0
        %4096 = vdwg.mxu0
        %v4097 = vadd.f32 %v4047, %v4094
        %v4098 = vld [vmem:[#allocation2] sm:$0x1]
        %v4100 = vperm.slane %v4098, 0
        %v4102 = vadd.f32 %v4097, %v4100
        %v4103 = vmax.f32 %v4102, 0.0
        %v4104 = vmax.f32 %v4103, 0.0
        %v4105 = vpack.c.bf16 %v4104, %v4104
        %v4107 = vsel %vm3356, %v4105, 0
        %4109 = vmatpush.bf16.msra.mxu0 0
        %4110 = vmatpush.bf16.msra.mxu0 0
        %4111 = vmatpush.bf16.msra.mxu0 0
        %4112 = vmatpush.bf16.msra.mxu0 0
        %4113 = vmatpush.bf16.msra.mxu0 0
        %4114 = vmatpush.bf16.msra.mxu0 0
        %4115 = vmatpush.bf16.msra.mxu0 0
        %4116 = vmatpush.bf16.msra.mxu0 %v4107
        %4117 = vmatmul.bf16.gmra.mxu0 %v3354
        %v4118 = vpop.f32.mrf.mxu0
        %v4119 = vadd.f32 0.0, %v4118
        %v4120 = vpop.f32.mrf.mxu0
        %4121 = vdwg.mxu0
        %v4122 = vpack.c.bf16 %v4119, %v4119
        %v4123 = vld [vmem:[#allocation15] sm:$0xf]
        %v4124 = vld [vmem:[#allocation15 + $0x4] sm:$0xf]
        %v4125 = vld [vmem:[#allocation15 + $0x8] sm:$0xf]
        %v4126 = vld [vmem:[#allocation15 + $0xc] sm:$0xf]
        %s4127 = scalar_lea.vmem [#allocation15], 16
        %v4128 = vld [vmem:[%s4127] sm:$0xf]
        %v4129 = vld [vmem:[%s4127 + $0x4] sm:$0xf]
        %v4130 = vld [vmem:[%s4127 + $0x8] sm:$0xf]
        %v4131 = vld [vmem:[%s4127 + $0xc] sm:$0xf]
        %v4136 = vunpack.c.l.b16 %v4128
        %v4137 = vunpack.c.l.b16 %v4129
        %v4138 = vunpack.c.l.b16 %v4130
        %v4139 = vunpack.c.l.b16 %v4131
        %v4140 = vpack.c.b16 %v4137, %v4136
        %v4141 = vpack.c.b16 %v4139, %v4138
        %v4144 = vsel %vm2607, %v4105, 0
        %4146 = vmatpush.bf16.msra.mxu0 0
        %4147 = vmatpush.bf16.msra.mxu0 0
        %4148 = vmatpush.bf16.msra.mxu0 0
        %4149 = vmatpush.bf16.msra.mxu0 0
        %4150 = vmatpush.bf16.msra.mxu0 0
        %4151 = vmatpush.bf16.msra.mxu0 0
        %4152 = vmatpush.bf16.msra.mxu0 %v4141
        %4153 = vmatpush.bf16.msra.mxu0 %v4140
        %4154 = vmatmul.bf16.gmra.mxu0 %v4144
        %v4155 = vpop.f32.mrf.mxu0
        %v4156 = vadd.f32 0.0, %v4155
        %v4157 = vpop.f32.mrf.mxu0
        %4158 = vdwg.mxu0
        %v4163 = vunpack.c.l.b16 %v4123
        %v4164 = vunpack.c.l.b16 %v4124
        %v4165 = vunpack.c.l.b16 %v4125
        %v4166 = vunpack.c.l.b16 %v4126
        %v4167 = vpack.c.b16 %v4164, %v4163
        %v4168 = vpack.c.b16 %v4166, %v4165
        %v4172 = vsel %vm2607, %v4122, 0
        %4174 = vmatpush.bf16.msra.mxu0 0
        %4175 = vmatpush.bf16.msra.mxu0 0
        %4176 = vmatpush.bf16.msra.mxu0 0
        %4177 = vmatpush.bf16.msra.mxu0 0
        %4178 = vmatpush.bf16.msra.mxu0 0
        %4179 = vmatpush.bf16.msra.mxu0 0
        %4180 = vmatpush.bf16.msra.mxu0 %v4168
        %4181 = vmatpush.bf16.msra.mxu0 %v4167
        %4182 = vmatmul.bf16.gmra.mxu0 %v4172
        %v4183 = vpop.f32.mrf.mxu0
        %v4184 = vadd.f32 %v4156, %v4183
        %v4185 = vpop.f32.mrf.mxu0
        %4186 = vdwg.mxu0
        %4187 = vmatpush.bf16.msra.mxu0 0
        %4188 = vmatpush.bf16.msra.mxu0 0
        %4189 = vmatpush.bf16.msra.mxu0 0
        %4190 = vmatpush.bf16.msra.mxu0 0
        %4191 = vmatpush.bf16.msra.mxu0 0
        %4192 = vmatpush.bf16.msra.mxu0 0
        %4193 = vmatpush.bf16.msra.mxu0 0
        %4194 = vmatpush.bf16.msra.mxu0 %v4107
        %4195 = vmatmul.bf16.gmra.mxu0 %v3438
        %v4196 = vpop.f32.mrf.mxu0
        %v4197 = vadd.f32 0.0, %v4196
        %v4198 = vpop.f32.mrf.mxu0
        %4199 = vdwg.mxu0
        %v4200 = vpack.c.bf16 %v4197, %v4197
        %s4201 = scalar_lea.vmem [#allocation15], 32
        %v4202 = vld [vmem:[%s4201] sm:$0xf]
        %v4203 = vld [vmem:[%s4201 + $0x4] sm:$0xf]
        %v4204 = vld [vmem:[%s4201 + $0x8] sm:$0xf]
        %v4205 = vld [vmem:[%s4201 + $0xc] sm:$0xf]
        %v4210 = vunpack.c.l.b16 %v4202
        %v4211 = vunpack.c.l.b16 %v4203
        %v4212 = vunpack.c.l.b16 %v4204
        %v4213 = vunpack.c.l.b16 %v4205
        %v4214 = vpack.c.b16 %v4211, %v4210
        %v4215 = vpack.c.b16 %v4213, %v4212
        %v4219 = vsel %vm2607, %v4200, 0
        %4221 = vmatpush.bf16.msra.mxu0 0
        %4222 = vmatpush.bf16.msra.mxu0 0
        %4223 = vmatpush.bf16.msra.mxu0 0
        %4224 = vmatpush.bf16.msra.mxu0 0
        %4225 = vmatpush.bf16.msra.mxu0 0
        %4226 = vmatpush.bf16.msra.mxu0 0
        %4227 = vmatpush.bf16.msra.mxu0 %v4215
        %4228 = vmatpush.bf16.msra.mxu0 %v4214
        %4229 = vmatmul.bf16.gmra.mxu0 %v4219
        %v4230 = vpop.f32.mrf.mxu0
        %v4231 = vadd.f32 0.0, %v4230
        %v4232 = vpop.f32.mrf.mxu0
        %4233 = vdwg.mxu0
        %v4234 = vadd.f32 %v4184, %v4231
        %v4235 = vld [vmem:[#allocation13] sm:$0x1]
        %v4237 = vperm.slane %v4235, 0
        %v4239 = vadd.f32 %v4234, %v4237
        %v4240 = vmax.f32 %v4239, 0.0
        %v4241 = vpack.c.bf16 %v4240, %v4240
        %v4242 = vld [vmem:[#allocation18] sm:$0xf]
        %v4243 = vld [vmem:[#allocation18 + $0x4] sm:$0xf]
        %v4244 = vld [vmem:[#allocation18 + $0x8] sm:$0xf]
        %v4245 = vld [vmem:[#allocation18 + $0xc] sm:$0xf]
        %v4246 = vld [vmem:[#allocation16] sm:$0x1]
        %v4248 = vperm.slane %v4246, 0
        %v4254 = vunpack.c.l.b16 %v4242
        %v4255 = vunpack.c.l.b16 %v4243
        %v4256 = vunpack.c.l.b16 %v4244
        %v4257 = vunpack.c.l.b16 %v4245
        %v4258 = vpack.c.b16 %v4255, %v4254
        %v4259 = vpack.c.b16 %v4257, %v4256
        %v4263 = vsel %vm2607, %v4241, 0
        %4265 = vmatpush.bf16.msra.mxu0 0
        %4266 = vmatpush.bf16.msra.mxu0 0
        %4267 = vmatpush.bf16.msra.mxu0 0
        %4268 = vmatpush.bf16.msra.mxu0 0
        %4269 = vmatpush.bf16.msra.mxu0 0
        %4270 = vmatpush.bf16.msra.mxu0 0
        %4271 = vmatpush.bf16.msra.mxu0 %v4259
        %4272 = vmatpush.bf16.msra.mxu0 %v4258
        %4273 = vmatmul.bf16.gmra.mxu0 %v4263
        %v4274 = vpop.f32.mrf.mxu0
        %v4275 = vadd.f32 %v4248, %v4274
        %v4276 = vpop.f32.mrf.mxu0
        %4277 = vdwg.mxu0
        %v4278 = vadd.f32 %v4103, %v4275
        %v4279 = vmax.f32 %v4278, 0.0
        %v4280 = vpack.c.bf16 %v4279, %v4279
        %v4282 = vsel %vm3356, %v4280, 0
        %4284 = vmatpush.bf16.msra.mxu0 0
        %4285 = vmatpush.bf16.msra.mxu0 0
        %4286 = vmatpush.bf16.msra.mxu0 0
        %4287 = vmatpush.bf16.msra.mxu0 0
        %4288 = vmatpush.bf16.msra.mxu0 0
        %4289 = vmatpush.bf16.msra.mxu0 0
        %4290 = vmatpush.bf16.msra.mxu0 0
        %4291 = vmatpush.bf16.msra.mxu0 %v4282
        %4292 = vmatmul.bf16.gmra.mxu0 %v3534
        %v4293 = vpop.f32.mrf.mxu0
        %v4294 = vadd.f32 0.0, %v4293
        %v4295 = vpop.f32.mrf.mxu0
        %4296 = vdwg.mxu0
        %v4297 = vpack.c.bf16 %v4294, %v4294
        %v4298 = vld [vmem:[#allocation21] sm:$0xf]
        %v4299 = vld [vmem:[#allocation21 + $0x4] sm:$0xf]
        %v4300 = vld [vmem:[#allocation21 + $0x8] sm:$0xf]
        %v4301 = vld [vmem:[#allocation21 + $0xc] sm:$0xf]
        %s4302 = scalar_lea.vmem [#allocation21], 16
        %v4303 = vld [vmem:[%s4302] sm:$0xf]
        %v4304 = vld [vmem:[%s4302 + $0x4] sm:$0xf]
        %v4305 = vld [vmem:[%s4302 + $0x8] sm:$0xf]
        %v4306 = vld [vmem:[%s4302 + $0xc] sm:$0xf]
        %v4311 = vunpack.c.l.b16 %v4303
        %v4312 = vunpack.c.l.b16 %v4304
        %v4313 = vunpack.c.l.b16 %v4305
        %v4314 = vunpack.c.l.b16 %v4306
        %v4315 = vpack.c.b16 %v4312, %v4311
        %v4316 = vpack.c.b16 %v4314, %v4313
        %v4319 = vsel %vm2607, %v4280, 0
        %4321 = vmatpush.bf16.msra.mxu0 0
        %4322 = vmatpush.bf16.msra.mxu0 0
        %4323 = vmatpush.bf16.msra.mxu0 0
        %4324 = vmatpush.bf16.msra.mxu0 0
        %4325 = vmatpush.bf16.msra.mxu0 0
        %4326 = vmatpush.bf16.msra.mxu0 0
        %4327 = vmatpush.bf16.msra.mxu0 %v4316
        %4328 = vmatpush.bf16.msra.mxu0 %v4315
        %4329 = vmatmul.bf16.gmra.mxu0 %v4319
        %v4330 = vpop.f32.mrf.mxu0
        %v4331 = vadd.f32 0.0, %v4330
        %v4332 = vpop.f32.mrf.mxu0
        %4333 = vdwg.mxu0
        %v4338 = vunpack.c.l.b16 %v4298
        %v4339 = vunpack.c.l.b16 %v4299
        %v4340 = vunpack.c.l.b16 %v4300
        %v4341 = vunpack.c.l.b16 %v4301
        %v4342 = vpack.c.b16 %v4339, %v4338
        %v4343 = vpack.c.b16 %v4341, %v4340
        %v4347 = vsel %vm2607, %v4297, 0
        %4349 = vmatpush.bf16.msra.mxu0 0
        %4350 = vmatpush.bf16.msra.mxu0 0
        %4351 = vmatpush.bf16.msra.mxu0 0
        %4352 = vmatpush.bf16.msra.mxu0 0
        %4353 = vmatpush.bf16.msra.mxu0 0
        %4354 = vmatpush.bf16.msra.mxu0 0
        %4355 = vmatpush.bf16.msra.mxu0 %v4343
        %4356 = vmatpush.bf16.msra.mxu0 %v4342
        %4357 = vmatmul.bf16.gmra.mxu0 %v4347
        %v4358 = vpop.f32.mrf.mxu0
        %v4359 = vadd.f32 %v4331, %v4358
        %v4360 = vpop.f32.mrf.mxu0
        %4361 = vdwg.mxu0
        %4362 = vmatpush.bf16.msra.mxu0 0
        %4363 = vmatpush.bf16.msra.mxu0 0
        %4364 = vmatpush.bf16.msra.mxu0 0
        %4365 = vmatpush.bf16.msra.mxu0 0
        %4366 = vmatpush.bf16.msra.mxu0 0
        %4367 = vmatpush.bf16.msra.mxu0 0
        %4368 = vmatpush.bf16.msra.mxu0 0
        %4369 = vmatpush.bf16.msra.mxu0 %v4282
        %4370 = vmatmul.bf16.gmra.mxu0 %v3617
        %v4371 = vpop.f32.mrf.mxu0
        %v4372 = vadd.f32 0.0, %v4371
        %v4373 = vpop.f32.mrf.mxu0
        %4374 = vdwg.mxu0
        %v4375 = vpack.c.bf16 %v4372, %v4372
        %s4376 = scalar_lea.vmem [#allocation21], 32
        %v4377 = vld [vmem:[%s4376] sm:$0xf]
        %v4378 = vld [vmem:[%s4376 + $0x4] sm:$0xf]
        %v4379 = vld [vmem:[%s4376 + $0x8] sm:$0xf]
        %v4380 = vld [vmem:[%s4376 + $0xc] sm:$0xf]
        %v4385 = vunpack.c.l.b16 %v4377
        %v4386 = vunpack.c.l.b16 %v4378
        %v4387 = vunpack.c.l.b16 %v4379
        %v4388 = vunpack.c.l.b16 %v4380
        %v4389 = vpack.c.b16 %v4386, %v4385
        %v4390 = vpack.c.b16 %v4388, %v4387
        %v4394 = vsel %vm2607, %v4375, 0
        %4396 = vmatpush.bf16.msra.mxu0 0
        %4397 = vmatpush.bf16.msra.mxu0 0
        %4398 = vmatpush.bf16.msra.mxu0 0
        %4399 = vmatpush.bf16.msra.mxu0 0
        %4400 = vmatpush.bf16.msra.mxu0 0
        %4401 = vmatpush.bf16.msra.mxu0 0
        %4402 = vmatpush.bf16.msra.mxu0 %v4390
        %4403 = vmatpush.bf16.msra.mxu0 %v4389
        %4404 = vmatmul.bf16.gmra.mxu0 %v4394
        %v4405 = vpop.f32.mrf.mxu0
        %v4406 = vadd.f32 0.0, %v4405
        %v4407 = vpop.f32.mrf.mxu0
        %4408 = vdwg.mxu0
        %v4409 = vadd.f32 %v4359, %v4406
        %v4410 = vld [vmem:[#allocation19] sm:$0x1]
        %v4412 = vperm.slane %v4410, 0
        %v4414 = vadd.f32 %v4409, %v4412
        %v4415 = vmax.f32 %v4414, 0.0
        %v4416 = vpack.c.bf16 %v4415, %v4415
        %v4417 = vld [vmem:[#allocation24] sm:$0xf]
        %v4418 = vld [vmem:[#allocation24 + $0x4] sm:$0xf]
        %v4419 = vld [vmem:[#allocation24 + $0x8] sm:$0xf]
        %v4420 = vld [vmem:[#allocation24 + $0xc] sm:$0xf]
        %v4421 = vld [vmem:[#allocation22] sm:$0x1]
        %v4423 = vperm.slane %v4421, 0
        %v4429 = vunpack.c.l.b16 %v4417
        %v4430 = vunpack.c.l.b16 %v4418
        %v4431 = vunpack.c.l.b16 %v4419
        %v4432 = vunpack.c.l.b16 %v4420
        %v4433 = vpack.c.b16 %v4430, %v4429
        %v4434 = vpack.c.b16 %v4432, %v4431
        %v4438 = vsel %vm2607, %v4416, 0
        %4440 = vmatpush.bf16.msra.mxu0 0
        %4441 = vmatpush.bf16.msra.mxu0 0
        %4442 = vmatpush.bf16.msra.mxu0 0
        %4443 = vmatpush.bf16.msra.mxu0 0
        %4444 = vmatpush.bf16.msra.mxu0 0
        %4445 = vmatpush.bf16.msra.mxu0 0
        %4446 = vmatpush.bf16.msra.mxu0 %v4434
        %4447 = vmatpush.bf16.msra.mxu0 %v4433
        %4448 = vmatmul.bf16.gmra.mxu0 %v4438
        %v4449 = vpop.f32.mrf.mxu0
        %v4450 = vadd.f32 %v4423, %v4449
        %v4451 = vpop.f32.mrf.mxu0
        %4452 = vdwg.mxu0
        %v4453 = vadd.f32 %v4278, %v4450
        %v4454 = vmul.u32 %v2408, 2
        %v4455 = vsub.s32 %v2405, %v4454
        %vm4456 = vcmp.eq.s32.totalorder %v4455, 0
        %vm4457 = vcmp.eq.s32.totalorder %v4455, 1
        %vm4458 = vmor %vm4456, %vm4457
        %v4459 = vsel %vm4458, 1, 0
        %v4460 = vcvt.s32.f32 %v4459
        %v4461 = vpack.c.bf16 %v4460, %v4460
        %v4462 = vpack.c.bf16 %v4453, %v4453
        %v4464 = vsel %vm3353, %v4461, 0
        %v4467 = vsel %vm3356, %v4462, 0
        %4469 = vmatpush.bf16.msra.mxu0 0
        %4470 = vmatpush.bf16.msra.mxu0 0
        %4471 = vmatpush.bf16.msra.mxu0 0
        %4472 = vmatpush.bf16.msra.mxu0 0
        %4473 = vmatpush.bf16.msra.mxu0 0
        %4474 = vmatpush.bf16.msra.mxu0 0
        %4475 = vmatpush.bf16.msra.mxu0 0
        %4476 = vmatpush.bf16.msra.mxu0 %v4467
        %4477 = vmatmul.bf16.gmra.mxu0 %v4464
        %v4478 = vpop.f32.mrf.mxu0
        %v4479 = vadd.f32 0.0, %v4478
        %v4480 = vpop.f32.mrf.mxu0
        %4481 = vdwg.mxu0
        %v4482 = vpack.c.bf16 %v4479, %v4479
        %v4484 = vsel %vm2780, %v4482, 0
        %4486 = vmatpush.bf16.msra.mxu0 0
        %4487 = vmatpush.bf16.msra.mxu0 0
        %4488 = vmatpush.bf16.msra.mxu0 0
        %4489 = vmatpush.bf16.msra.mxu0 0
        %4490 = vmatpush.bf16.msra.mxu0 0
        %4491 = vmatpush.bf16.msra.mxu0 0
        %4492 = vmatpush.bf16.msra.mxu0 0
        %4493 = vmatpush.bf16.msra.mxu0 %v4484
        %4494 = vmatmul.bf16.gmra.mxu0 %v2966
        %v4495 = vpop.f32.mrf.mxu0
        %v4496 = vadd.f32 0.0, %v4495
        %v4497 = vpop.f32.mrf.mxu0
        %4498 = vdwg.mxu0
        %v4499 = vpack.c.bf16 %v4496, %v4496
        %v4500 = vld [vmem:[#allocation12] sm:$0xf]
        %v4501 = vld [vmem:[#allocation12 + $0x4] sm:$0xf]
        %v4502 = vld [vmem:[#allocation12 + $0x8] sm:$0xf]
        %v4503 = vld [vmem:[#allocation12 + $0xc] sm:$0xf]
        %s4504 = scalar_lea.vmem [#allocation12], 16
        %v4505 = vld [vmem:[%s4504] sm:$0xf]
        %v4506 = vld [vmem:[%s4504 + $0x4] sm:$0xf]
        %v4507 = vld [vmem:[%s4504 + $0x8] sm:$0xf]
        %v4508 = vld [vmem:[%s4504 + $0xc] sm:$0xf]
        %v4513 = vunpack.c.l.b16 %v4505
        %v4514 = vunpack.c.l.b16 %v4506
        %v4515 = vunpack.c.l.b16 %v4507
        %v4516 = vunpack.c.l.b16 %v4508
        %v4517 = vpack.c.b16 %v4514, %v4513
        %v4518 = vpack.c.b16 %v4516, %v4515
        %v4521 = vsel %vm2607, %v4482, 0
        %4523 = vmatpush.bf16.msra.mxu0 0
        %4524 = vmatpush.bf16.msra.mxu0 0
        %4525 = vmatpush.bf16.msra.mxu0 0
        %4526 = vmatpush.bf16.msra.mxu0 0
        %4527 = vmatpush.bf16.msra.mxu0 0
        %4528 = vmatpush.bf16.msra.mxu0 0
        %4529 = vmatpush.bf16.msra.mxu0 %v4518
        %4530 = vmatpush.bf16.msra.mxu0 %v4517
        %4531 = vmatmul.bf16.gmra.mxu0 %v4521
        %v4532 = vpop.f32.mrf.mxu0
        %v4533 = vadd.f32 0.0, %v4532
        %v4534 = vpop.f32.mrf.mxu0
        %4535 = vdwg.mxu0
        %v4540 = vunpack.c.l.b16 %v4500
        %v4541 = vunpack.c.l.b16 %v4501
        %v4542 = vunpack.c.l.b16 %v4502
        %v4543 = vunpack.c.l.b16 %v4503
        %v4544 = vpack.c.b16 %v4541, %v4540
        %v4545 = vpack.c.b16 %v4543, %v4542
        %v4549 = vsel %vm2607, %v4499, 0
        %4551 = vmatpush.bf16.msra.mxu0 0
        %4552 = vmatpush.bf16.msra.mxu0 0
        %4553 = vmatpush.bf16.msra.mxu0 0
        %4554 = vmatpush.bf16.msra.mxu0 0
        %4555 = vmatpush.bf16.msra.mxu0 0
        %4556 = vmatpush.bf16.msra.mxu0 0
        %4557 = vmatpush.bf16.msra.mxu0 %v4545
        %4558 = vmatpush.bf16.msra.mxu0 %v4544
        %4559 = vmatmul.bf16.gmra.mxu0 %v4549
        %v4560 = vpop.f32.mrf.mxu0
        %v4561 = vadd.f32 %v4533, %v4560
        %v4562 = vpop.f32.mrf.mxu0
        %4563 = vdwg.mxu0
        %4564 = vmatpush.bf16.msra.mxu0 0
        %4565 = vmatpush.bf16.msra.mxu0 0
        %4566 = vmatpush.bf16.msra.mxu0 0
        %4567 = vmatpush.bf16.msra.mxu0 0
        %4568 = vmatpush.bf16.msra.mxu0 0
        %4569 = vmatpush.bf16.msra.mxu0 0
        %4570 = vmatpush.bf16.msra.mxu0 0
        %4571 = vmatpush.bf16.msra.mxu0 %v4484
        %4572 = vmatmul.bf16.gmra.mxu0 %v3051
        %v4573 = vpop.f32.mrf.mxu0
        %v4574 = vadd.f32 0.0, %v4573
        %v4575 = vpop.f32.mrf.mxu0
        %4576 = vdwg.mxu0
        %v4577 = vpack.c.bf16 %v4574, %v4574
        %s4578 = scalar_lea.vmem [#allocation12], 32
        %v4579 = vld [vmem:[%s4578] sm:$0xf]
        %v4580 = vld [vmem:[%s4578 + $0x4] sm:$0xf]
        %v4581 = vld [vmem:[%s4578 + $0x8] sm:$0xf]
        %v4582 = vld [vmem:[%s4578 + $0xc] sm:$0xf]
        %v4587 = vunpack.c.l.b16 %v4579
        %v4588 = vunpack.c.l.b16 %v4580
        %v4589 = vunpack.c.l.b16 %v4581
        %v4590 = vunpack.c.l.b16 %v4582
        %v4591 = vpack.c.b16 %v4588, %v4587
        %v4592 = vpack.c.b16 %v4590, %v4589
        %v4596 = vsel %vm2607, %v4577, 0
        %4598 = vmatpush.bf16.msra.mxu0 0
        %4599 = vmatpush.bf16.msra.mxu0 0
        %4600 = vmatpush.bf16.msra.mxu0 0
        %4601 = vmatpush.bf16.msra.mxu0 0
        %4602 = vmatpush.bf16.msra.mxu0 0
        %4603 = vmatpush.bf16.msra.mxu0 0
        %4604 = vmatpush.bf16.msra.mxu0 %v4592
        %4605 = vmatpush.bf16.msra.mxu0 %v4591
        %4606 = vmatmul.bf16.gmra.mxu0 %v4596
        %v4607 = vpop.f32.mrf.mxu0
        %v4608 = vadd.f32 0.0, %v4607
        %v4609 = vpop.f32.mrf.mxu0
        %4610 = vdwg.mxu0
        %v4611 = vadd.f32 %v4561, %v4608
        %v4612 = vld [vmem:[#allocation10] sm:$0x1]
        %v4614 = vperm.slane %v4612, 0
        %v4616 = vadd.f32 %v4611, %v4614
        %v4617 = vmax.f32 %v4616, 0.0
        %v4618 = vpack.c.bf16 %v4617, %v4617
        %v4620 = vsel %vm2780, %v4618, 0
        %4622 = vmatpush.bf16.msra.mxu0 0
        %4623 = vmatpush.bf16.msra.mxu0 0
        %4624 = vmatpush.bf16.msra.mxu0 0
        %4625 = vmatpush.bf16.msra.mxu0 0
        %4626 = vmatpush.bf16.msra.mxu0 0
        %4627 = vmatpush.bf16.msra.mxu0 0
        %4628 = vmatpush.bf16.msra.mxu0 0
        %4629 = vmatpush.bf16.msra.mxu0 %v4620
        %4630 = vmatmul.bf16.gmra.mxu0 %v2778
        %v4631 = vpop.f32.mrf.mxu0
        %v4632 = vadd.f32 0.0, %v4631
        %v4633 = vpop.f32.mrf.mxu0
        %4634 = vdwg.mxu0
        %v4635 = vpack.c.bf16 %v4632, %v4632
        %v4636 = vld [vmem:[#allocation30] sm:$0xf]
        %v4637 = vld [vmem:[#allocation30 + $0x4] sm:$0xf]
        %v4638 = vld [vmem:[#allocation30 + $0x8] sm:$0xf]
        %v4639 = vld [vmem:[#allocation30 + $0xc] sm:$0xf]
        %s4640 = scalar_lea.vmem [#allocation30], 16
        %v4641 = vld [vmem:[%s4640] sm:$0xf]
        %v4642 = vld [vmem:[%s4640 + $0x4] sm:$0xf]
        %v4643 = vld [vmem:[%s4640 + $0x8] sm:$0xf]
        %v4644 = vld [vmem:[%s4640 + $0xc] sm:$0xf]
        %v4649 = vunpack.c.l.b16 %v4641
        %v4650 = vunpack.c.l.b16 %v4642
        %v4651 = vunpack.c.l.b16 %v4643
        %v4652 = vunpack.c.l.b16 %v4644
        %v4653 = vpack.c.b16 %v4650, %v4649
        %v4654 = vpack.c.b16 %v4652, %v4651
        %v4657 = vsel %vm2607, %v4618, 0
        %4659 = vmatpush.bf16.msra.mxu0 0
        %4660 = vmatpush.bf16.msra.mxu0 0
        %4661 = vmatpush.bf16.msra.mxu0 0
        %4662 = vmatpush.bf16.msra.mxu0 0
        %4663 = vmatpush.bf16.msra.mxu0 0
        %4664 = vmatpush.bf16.msra.mxu0 0
        %4665 = vmatpush.bf16.msra.mxu0 %v4654
        %4666 = vmatpush.bf16.msra.mxu0 %v4653
        %4667 = vmatmul.bf16.gmra.mxu0 %v4657
        %v4668 = vpop.f32.mrf.mxu0
        %v4669 = vadd.f32 0.0, %v4668
        %v4670 = vpop.f32.mrf.mxu0
        %4671 = vdwg.mxu0
        %v4676 = vunpack.c.l.b16 %v4636
        %v4677 = vunpack.c.l.b16 %v4637
        %v4678 = vunpack.c.l.b16 %v4638
        %v4679 = vunpack.c.l.b16 %v4639
        %v4680 = vpack.c.b16 %v4677, %v4676
        %v4681 = vpack.c.b16 %v4679, %v4678
        %v4685 = vsel %vm2607, %v4635, 0
        %4687 = vmatpush.bf16.msra.mxu0 0
        %4688 = vmatpush.bf16.msra.mxu0 0
        %4689 = vmatpush.bf16.msra.mxu0 0
        %4690 = vmatpush.bf16.msra.mxu0 0
        %4691 = vmatpush.bf16.msra.mxu0 0
        %4692 = vmatpush.bf16.msra.mxu0 0
        %4693 = vmatpush.bf16.msra.mxu0 %v4681
        %4694 = vmatpush.bf16.msra.mxu0 %v4680
        %4695 = vmatmul.bf16.gmra.mxu0 %v4685
        %v4696 = vpop.f32.mrf.mxu0
        %v4697 = vadd.f32 %v4669, %v4696
        %v4698 = vpop.f32.mrf.mxu0
        %4699 = vdwg.mxu0
        %4700 = vmatpush.bf16.msra.mxu0 0
        %4701 = vmatpush.bf16.msra.mxu0 0
        %4702 = vmatpush.bf16.msra.mxu0 0
        %4703 = vmatpush.bf16.msra.mxu0 0
        %4704 = vmatpush.bf16.msra.mxu0 0
        %4705 = vmatpush.bf16.msra.mxu0 0
        %4706 = vmatpush.bf16.msra.mxu0 0
        %4707 = vmatpush.bf16.msra.mxu0 %v4620
        %4708 = vmatmul.bf16.gmra.mxu0 %v2868
        %v4709 = vpop.f32.mrf.mxu0
        %v4710 = vadd.f32 0.0, %v4709
        %v4711 = vpop.f32.mrf.mxu0
        %4712 = vdwg.mxu0
        %v4713 = vpack.c.bf16 %v4710, %v4710
        %s4714 = scalar_lea.vmem [#allocation30], 32
        %v4715 = vld [vmem:[%s4714] sm:$0xf]
        %v4716 = vld [vmem:[%s4714 + $0x4] sm:$0xf]
        %v4717 = vld [vmem:[%s4714 + $0x8] sm:$0xf]
        %v4718 = vld [vmem:[%s4714 + $0xc] sm:$0xf]
        %v4723 = vunpack.c.l.b16 %v4715
        %v4724 = vunpack.c.l.b16 %v4716
        %v4725 = vunpack.c.l.b16 %v4717
        %v4726 = vunpack.c.l.b16 %v4718
        %v4727 = vpack.c.b16 %v4724, %v4723
        %v4728 = vpack.c.b16 %v4726, %v4725
        %v4732 = vsel %vm2607, %v4713, 0
        %4734 = vmatpush.bf16.msra.mxu0 0
        %4735 = vmatpush.bf16.msra.mxu0 0
        %4736 = vmatpush.bf16.msra.mxu0 0
        %4737 = vmatpush.bf16.msra.mxu0 0
        %4738 = vmatpush.bf16.msra.mxu0 0
        %4739 = vmatpush.bf16.msra.mxu0 0
        %4740 = vmatpush.bf16.msra.mxu0 %v4728
        %4741 = vmatpush.bf16.msra.mxu0 %v4727
        %4742 = vmatmul.bf16.gmra.mxu0 %v4732
        %v4743 = vpop.f32.mrf.mxu0
        %v4744 = vadd.f32 0.0, %v4743
        %v4745 = vpop.f32.mrf.mxu0
        %4746 = vdwg.mxu0
        %v4747 = vadd.f32 %v4697, %v4744
        %v4748 = vld [vmem:[#allocation28] sm:$0x1]
        %v4750 = vperm.slane %v4748, 0
        %v4752 = vadd.f32 %v4747, %v4750
        %v4753 = vmax.f32 %v4752, 0.0
        %v4754 = vpack.c.bf16 %v4753, %v4753
        %v4755 = vld [vmem:[#allocation33] sm:$0xf]
        %v4756 = vld [vmem:[#allocation33 + $0x4] sm:$0xf]
        %v4757 = vld [vmem:[#allocation33 + $0x8] sm:$0xf]
        %v4758 = vld [vmem:[#allocation33 + $0xc] sm:$0xf]
        %v4759 = vld [vmem:[#allocation31] sm:$0x1]
        %v4761 = vperm.slane %v4759, 0
        %v4767 = vunpack.c.l.b16 %v4755
        %v4768 = vunpack.c.l.b16 %v4756
        %v4769 = vunpack.c.l.b16 %v4757
        %v4770 = vunpack.c.l.b16 %v4758
        %v4771 = vpack.c.b16 %v4768, %v4767
        %v4772 = vpack.c.b16 %v4770, %v4769
        %v4776 = vsel %vm2607, %v4754, 0
        %4778 = vmatpush.bf16.msra.mxu0 0
        %4779 = vmatpush.bf16.msra.mxu0 0
        %4780 = vmatpush.bf16.msra.mxu0 0
        %4781 = vmatpush.bf16.msra.mxu0 0
        %4782 = vmatpush.bf16.msra.mxu0 0
        %4783 = vmatpush.bf16.msra.mxu0 0
        %4784 = vmatpush.bf16.msra.mxu0 %v4772
        %4785 = vmatpush.bf16.msra.mxu0 %v4771
        %4786 = vmatmul.bf16.gmra.mxu0 %v4776
        %v4787 = vpop.f32.mrf.mxu0
        %v4788 = vadd.f32 %v4761, %v4787
        %v4789 = vpop.f32.mrf.mxu0
        %4790 = vdwg.mxu0
        %v4791 = vadd.f32 %v4616, %v4788
        %v4792 = vmax.f32 %v4791, 0.0
        %v4793 = vpack.c.bf16 %v4792, %v4792
        %v4795 = vsel %vm2780, %v4793, 0
        %4797 = vmatpush.bf16.msra.mxu0 0
        %4798 = vmatpush.bf16.msra.mxu0 0
        %4799 = vmatpush.bf16.msra.mxu0 0
        %4800 = vmatpush.bf16.msra.mxu0 0
        %4801 = vmatpush.bf16.msra.mxu0 0
        %4802 = vmatpush.bf16.msra.mxu0 0
        %4803 = vmatpush.bf16.msra.mxu0 0
        %4804 = vmatpush.bf16.msra.mxu0 %v4795
        %4805 = vmatmul.bf16.gmra.mxu0 %v2966
        %v4806 = vpop.f32.mrf.mxu0
        %v4807 = vadd.f32 0.0, %v4806
        %v4808 = vpop.f32.mrf.mxu0
        %4809 = vdwg.mxu0
        %v4810 = vpack.c.bf16 %v4807, %v4807
        %v4811 = vld [vmem:[#allocation36] sm:$0xf]
        %v4812 = vld [vmem:[#allocation36 + $0x4] sm:$0xf]
        %v4813 = vld [vmem:[#allocation36 + $0x8] sm:$0xf]
        %v4814 = vld [vmem:[#allocation36 + $0xc] sm:$0xf]
        %s4815 = scalar_lea.vmem [#allocation36], 16
        %v4816 = vld [vmem:[%s4815] sm:$0xf]
        %v4817 = vld [vmem:[%s4815 + $0x4] sm:$0xf]
        %v4818 = vld [vmem:[%s4815 + $0x8] sm:$0xf]
        %v4819 = vld [vmem:[%s4815 + $0xc] sm:$0xf]
        %v4824 = vunpack.c.l.b16 %v4816
        %v4825 = vunpack.c.l.b16 %v4817
        %v4826 = vunpack.c.l.b16 %v4818
        %v4827 = vunpack.c.l.b16 %v4819
        %v4828 = vpack.c.b16 %v4825, %v4824
        %v4829 = vpack.c.b16 %v4827, %v4826
        %v4832 = vsel %vm2607, %v4793, 0
        %4834 = vmatpush.bf16.msra.mxu0 0
        %4835 = vmatpush.bf16.msra.mxu0 0
        %4836 = vmatpush.bf16.msra.mxu0 0
        %4837 = vmatpush.bf16.msra.mxu0 0
        %4838 = vmatpush.bf16.msra.mxu0 0
        %4839 = vmatpush.bf16.msra.mxu0 0
        %4840 = vmatpush.bf16.msra.mxu0 %v4829
        %4841 = vmatpush.bf16.msra.mxu0 %v4828
        %4842 = vmatmul.bf16.gmra.mxu0 %v4832
        %v4843 = vpop.f32.mrf.mxu0
        %v4844 = vadd.f32 0.0, %v4843
        %v4845 = vpop.f32.mrf.mxu0
        %4846 = vdwg.mxu0
        %v4851 = vunpack.c.l.b16 %v4811
        %v4852 = vunpack.c.l.b16 %v4812
        %v4853 = vunpack.c.l.b16 %v4813
        %v4854 = vunpack.c.l.b16 %v4814
        %v4855 = vpack.c.b16 %v4852, %v4851
        %v4856 = vpack.c.b16 %v4854, %v4853
        %v4860 = vsel %vm2607, %v4810, 0
        %4862 = vmatpush.bf16.msra.mxu0 0
        %4863 = vmatpush.bf16.msra.mxu0 0
        %4864 = vmatpush.bf16.msra.mxu0 0
        %4865 = vmatpush.bf16.msra.mxu0 0
        %4866 = vmatpush.bf16.msra.mxu0 0
        %4867 = vmatpush.bf16.msra.mxu0 0
        %4868 = vmatpush.bf16.msra.mxu0 %v4856
        %4869 = vmatpush.bf16.msra.mxu0 %v4855
        %4870 = vmatmul.bf16.gmra.mxu0 %v4860
        %v4871 = vpop.f32.mrf.mxu0
        %v4872 = vadd.f32 %v4844, %v4871
        %v4873 = vpop.f32.mrf.mxu0
        %4874 = vdwg.mxu0
        %4875 = vmatpush.bf16.msra.mxu0 0
        %4876 = vmatpush.bf16.msra.mxu0 0
        %4877 = vmatpush.bf16.msra.mxu0 0
        %4878 = vmatpush.bf16.msra.mxu0 0
        %4879 = vmatpush.bf16.msra.mxu0 0
        %4880 = vmatpush.bf16.msra.mxu0 0
        %4881 = vmatpush.bf16.msra.mxu0 0
        %4882 = vmatpush.bf16.msra.mxu0 %v4795
        %4883 = vmatmul.bf16.gmra.mxu0 %v3051
        %v4884 = vpop.f32.mrf.mxu0
        %v4885 = vadd.f32 0.0, %v4884
        %v4886 = vpop.f32.mrf.mxu0
        %4887 = vdwg.mxu0
        %v4888 = vpack.c.bf16 %v4885, %v4885
        %s4889 = scalar_lea.vmem [#allocation36], 32
        %v4890 = vld [vmem:[%s4889] sm:$0xf]
        %v4891 = vld [vmem:[%s4889 + $0x4] sm:$0xf]
        %v4892 = vld [vmem:[%s4889 + $0x8] sm:$0xf]
        %v4893 = vld [vmem:[%s4889 + $0xc] sm:$0xf]
        %v4898 = vunpack.c.l.b16 %v4890
        %v4899 = vunpack.c.l.b16 %v4891
        %v4900 = vunpack.c.l.b16 %v4892
        %v4901 = vunpack.c.l.b16 %v4893
        %v4902 = vpack.c.b16 %v4899, %v4898
        %v4903 = vpack.c.b16 %v4901, %v4900
        %v4907 = vsel %vm2607, %v4888, 0
        %4909 = vmatpush.bf16.msra.mxu0 0
        %4910 = vmatpush.bf16.msra.mxu0 0
        %4911 = vmatpush.bf16.msra.mxu0 0
        %4912 = vmatpush.bf16.msra.mxu0 0
        %4913 = vmatpush.bf16.msra.mxu0 0
        %4914 = vmatpush.bf16.msra.mxu0 0
        %4915 = vmatpush.bf16.msra.mxu0 %v4903
        %4916 = vmatpush.bf16.msra.mxu0 %v4902
        %4917 = vmatmul.bf16.gmra.mxu0 %v4907
        %v4918 = vpop.f32.mrf.mxu0
        %v4919 = vadd.f32 0.0, %v4918
        %v4920 = vpop.f32.mrf.mxu0
        %4921 = vdwg.mxu0
        %v4922 = vadd.f32 %v4872, %v4919
        %v4923 = vld [vmem:[#allocation34] sm:$0x1]
        %v4925 = vperm.slane %v4923, 0
        %v4927 = vadd.f32 %v4922, %v4925
        %v4928 = vmax.f32 %v4927, 0.0
        %v4929 = vpack.c.bf16 %v4928, %v4928
        %v4930 = vld [vmem:[#allocation39] sm:$0xf]
        %v4931 = vld [vmem:[#allocation39 + $0x4] sm:$0xf]
        %v4932 = vld [vmem:[#allocation39 + $0x8] sm:$0xf]
        %v4933 = vld [vmem:[#allocation39 + $0xc] sm:$0xf]
        %v4934 = vld [vmem:[#allocation37] sm:$0x1]
        %v4936 = vperm.slane %v4934, 0
        %v4942 = vunpack.c.l.b16 %v4930
        %v4943 = vunpack.c.l.b16 %v4931
        %v4944 = vunpack.c.l.b16 %v4932
        %v4945 = vunpack.c.l.b16 %v4933
        %v4946 = vpack.c.b16 %v4943, %v4942
        %v4947 = vpack.c.b16 %v4945, %v4944
        %v4951 = vsel %vm2607, %v4929, 0
        %4953 = vmatpush.bf16.msra.mxu0 0
        %4954 = vmatpush.bf16.msra.mxu0 0
        %4955 = vmatpush.bf16.msra.mxu0 0
        %4956 = vmatpush.bf16.msra.mxu0 0
        %4957 = vmatpush.bf16.msra.mxu0 0
        %4958 = vmatpush.bf16.msra.mxu0 0
        %4959 = vmatpush.bf16.msra.mxu0 %v4947
        %4960 = vmatpush.bf16.msra.mxu0 %v4946
        %4961 = vmatmul.bf16.gmra.mxu0 %v4951
        %v4962 = vpop.f32.mrf.mxu0
        %v4963 = vadd.f32 %v4936, %v4962
        %v4964 = vpop.f32.mrf.mxu0
        %4965 = vdwg.mxu0
        %v4966 = vadd.f32 %v4791, %v4963
        %v4967 = vsub.s32 %v2406, %v4454
        %vm4968 = vcmp.eq.s32.totalorder %v4967, 0
        %vm4969 = vcmp.eq.s32.totalorder %v4967, 1
        %vm4970 = vmor %vm4968, %vm4969
        %v4971 = vsel %vm4970, 1, 0
        %v4972 = vcvt.s32.f32 %v4971
        %v4973 = vpack.c.bf16 %v4972, %v4460
        %v4974 = vpack.c.bf16 %v4966, %v4966
        %v4976 = vsel %vm2776, %v4973, 0
        %v4979 = vsel %vm2780, %v4974, 0
        %4981 = vmatpush.bf16.msra.mxu0 0
        %4982 = vmatpush.bf16.msra.mxu0 0
        %4983 = vmatpush.bf16.msra.mxu0 0
        %4984 = vmatpush.bf16.msra.mxu0 0
        %4985 = vmatpush.bf16.msra.mxu0 0
        %4986 = vmatpush.bf16.msra.mxu0 0
        %4987 = vmatpush.bf16.msra.mxu0 0
        %4988 = vmatpush.bf16.msra.mxu0 %v4979
        %4989 = vmatmul.bf16.gmra.mxu0 %v4976
        %v4990 = vpop.f32.mrf.mxu0
        %v4991 = vadd.f32 0.0, %v4990
        %v4992 = vpop.f32.mrf.mxu0
        %v4993 = vadd.f32 0.0, %v4992
        %4994 = vdwg.mxu0
        %v4995 = vpack.c.bf16 %v4993, %v4991
        %4996 = vmatpush.bf16.msra.mxu0 0
        %4997 = vmatpush.bf16.msra.mxu0 0
        %4998 = vmatpush.bf16.msra.mxu0 0
        %4999 = vmatpush.bf16.msra.mxu0 0
        %5000 = vmatpush.bf16.msra.mxu0 0
        %5001 = vmatpush.bf16.msra.mxu0 0
        %5002 = vmatpush.bf16.msra.mxu0 0
        %5003 = vmatpush.bf16.msra.mxu0 %v4995
        %5004 = vmatmul.bf16.gmra.mxu0 %v2420
        %v5005 = vpop.f32.mrf.mxu0
        %v5006 = vadd.f32 0.0, %v5005
        %v5007 = vpop.f32.mrf.mxu0
        %v5008 = vadd.f32 0.0, %v5007
        %5009 = vdwg.mxu0
        %v5010 = vpack.c.bf16 %v5008, %v5006
        %v5011 = vld [vmem:[#allocation27] sm:$0xf]
        %v5012 = vld [vmem:[#allocation27 + $0x4] sm:$0xf]
        %v5013 = vld [vmem:[#allocation27 + $0x8] sm:$0xf]
        %v5014 = vld [vmem:[#allocation27 + $0xc] sm:$0xf]
        %s5015 = scalar_lea.vmem [#allocation27], 16
        %v5016 = vld [vmem:[%s5015] sm:$0xf]
        %v5017 = vld [vmem:[%s5015 + $0x4] sm:$0xf]
        %v5018 = vld [vmem:[%s5015 + $0x8] sm:$0xf]
        %v5019 = vld [vmem:[%s5015 + $0xc] sm:$0xf]
        %v5024 = vunpack.c.l.b16 %v5016
        %v5025 = vunpack.c.l.b16 %v5017
        %v5026 = vunpack.c.l.b16 %v5018
        %v5027 = vunpack.c.l.b16 %v5019
        %v5028 = vpack.c.b16 %v5025, %v5024
        %v5029 = vpack.c.b16 %v5027, %v5026
        %v5033 = vsel %vm2607, %v4995, 0
        %5035 = vmatpush.bf16.msra.mxu0 0
        %5036 = vmatpush.bf16.msra.mxu0 0
        %5037 = vmatpush.bf16.msra.mxu0 0
        %5038 = vmatpush.bf16.msra.mxu0 0
        %5039 = vmatpush.bf16.msra.mxu0 0
        %5040 = vmatpush.bf16.msra.mxu0 0
        %5041 = vmatpush.bf16.msra.mxu0 %v5029
        %5042 = vmatpush.bf16.msra.mxu0 %v5028
        %5043 = vmatmul.bf16.gmra.mxu0 %v5033
        %v5044 = vpop.f32.mrf.mxu0
        %v5045 = vadd.f32 0.0, %v5044
        %v5046 = vpop.f32.mrf.mxu0
        %v5047 = vadd.f32 0.0, %v5046
        %5048 = vdwg.mxu0
        %v5053 = vunpack.c.l.b16 %v5011
        %v5054 = vunpack.c.l.b16 %v5012
        %v5055 = vunpack.c.l.b16 %v5013
        %v5056 = vunpack.c.l.b16 %v5014
        %v5057 = vpack.c.b16 %v5054, %v5053
        %v5058 = vpack.c.b16 %v5056, %v5055
        %v5062 = vsel %vm2607, %v5010, 0
        %5064 = vmatpush.bf16.msra.mxu0 0
        %5065 = vmatpush.bf16.msra.mxu0 0
        %5066 = vmatpush.bf16.msra.mxu0 0
        %5067 = vmatpush.bf16.msra.mxu0 0
        %5068 = vmatpush.bf16.msra.mxu0 0
        %5069 = vmatpush.bf16.msra.mxu0 0
        %5070 = vmatpush.bf16.msra.mxu0 %v5058
        %5071 = vmatpush.bf16.msra.mxu0 %v5057
        %5072 = vmatmul.bf16.gmra.mxu0 %v5062
        %v5073 = vpop.f32.mrf.mxu0
        %v5074 = vadd.f32 %v5045, %v5073
        %v5075 = vpop.f32.mrf.mxu0
        %v5076 = vadd.f32 %v5047, %v5075
        %5077 = vdwg.mxu0
        %5078 = vmatpush.bf16.msra.mxu0 0
        %5079 = vmatpush.bf16.msra.mxu0 0
        %5080 = vmatpush.bf16.msra.mxu0 0
        %5081 = vmatpush.bf16.msra.mxu0 0
        %5082 = vmatpush.bf16.msra.mxu0 0
        %5083 = vmatpush.bf16.msra.mxu0 0
        %5084 = vmatpush.bf16.msra.mxu0 0
        %5085 = vmatpush.bf16.msra.mxu0 %v4995
        %5086 = vmatmul.bf16.gmra.mxu0 %v2492
        %v5087 = vpop.f32.mrf.mxu0
        %v5088 = vadd.f32 0.0, %v5087
        %v5089 = vpop.f32.mrf.mxu0
        %v5090 = vadd.f32 0.0, %v5089
        %5091 = vdwg.mxu0
        %v5092 = vpack.c.bf16 %v5090, %v5088
        %s5093 = scalar_lea.vmem [#allocation27], 32
        %v5094 = vld [vmem:[%s5093] sm:$0xf]
        %v5095 = vld [vmem:[%s5093 + $0x4] sm:$0xf]
        %v5096 = vld [vmem:[%s5093 + $0x8] sm:$0xf]
        %v5097 = vld [vmem:[%s5093 + $0xc] sm:$0xf]
        %v5102 = vunpack.c.l.b16 %v5094
        %v5103 = vunpack.c.l.b16 %v5095
        %v5104 = vunpack.c.l.b16 %v5096
        %v5105 = vunpack.c.l.b16 %v5097
        %v5106 = vpack.c.b16 %v5103, %v5102
        %v5107 = vpack.c.b16 %v5105, %v5104
        %v5111 = vsel %vm2607, %v5092, 0
        %5113 = vmatpush.bf16.msra.mxu0 0
        %5114 = vmatpush.bf16.msra.mxu0 0
        %5115 = vmatpush.bf16.msra.mxu0 0
        %5116 = vmatpush.bf16.msra.mxu0 0
        %5117 = vmatpush.bf16.msra.mxu0 0
        %5118 = vmatpush.bf16.msra.mxu0 0
        %5119 = vmatpush.bf16.msra.mxu0 %v5107
        %5120 = vmatpush.bf16.msra.mxu0 %v5106
        %5121 = vmatmul.bf16.gmra.mxu0 %v5111
        %v5122 = vpop.f32.mrf.mxu0
        %v5123 = vadd.f32 0.0, %v5122
        %v5124 = vpop.f32.mrf.mxu0
        %v5125 = vadd.f32 0.0, %v5124
        %5126 = vdwg.mxu0
        %v5127 = vadd.f32 %v5074, %v5123
        %v5128 = vadd.f32 %v5076, %v5125
        %v5129 = vld [vmem:[#allocation25] sm:$0x1]
        %v5131 = vperm.slane %v5129, 0
        %v5133 = vadd.f32 %v5127, %v5131
        %v5134 = vadd.f32 %v5128, %v5131
        %v5135 = vpack.c.bf16 %v5134, %v5133
        %5136 = vmatpush.bf16.msra.mxu0 0
        %5137 = vmatpush.bf16.msra.mxu0 0
        %5138 = vmatpush.bf16.msra.mxu0 0
        %5139 = vmatpush.bf16.msra.mxu0 0
        %5140 = vmatpush.bf16.msra.mxu0 0
        %5141 = vmatpush.bf16.msra.mxu0 0
        %5142 = vmatpush.bf16.msra.mxu0 0
        %5143 = vmatpush.bf16.msra.mxu0 %v5135
        %5144 = vmatmul.bf16.gmra.mxu0 %v2420
        %v5145 = vpop.f32.mrf.mxu0
        %v5146 = vadd.f32 0.0, %v5145
        %v5147 = vpop.f32.mrf.mxu0
        %v5148 = vadd.f32 0.0, %v5147
        %5149 = vdwg.mxu0
        %v5150 = vpack.c.bf16 %v5148, %v5146
        %v5151 = vld [vmem:[#allocation7] sm:$0xf]
        %v5152 = vld [vmem:[#allocation7 + $0x4] sm:$0xf]
        %v5153 = vld [vmem:[#allocation7 + $0x8] sm:$0xf]
        %v5154 = vld [vmem:[#allocation7 + $0xc] sm:$0xf]
        %s5155 = scalar_lea.vmem [#allocation7], 16
        %v5156 = vld [vmem:[%s5155] sm:$0xf]
        %v5157 = vld [vmem:[%s5155 + $0x4] sm:$0xf]
        %v5158 = vld [vmem:[%s5155 + $0x8] sm:$0xf]
        %v5159 = vld [vmem:[%s5155 + $0xc] sm:$0xf]
        %v5164 = vunpack.c.l.b16 %v5156
        %v5165 = vunpack.c.l.b16 %v5157
        %v5166 = vunpack.c.l.b16 %v5158
        %v5167 = vunpack.c.l.b16 %v5159
        %v5168 = vpack.c.b16 %v5165, %v5164
        %v5169 = vpack.c.b16 %v5167, %v5166
        %v5173 = vsel %vm2607, %v5135, 0
        %5175 = vmatpush.bf16.msra.mxu0 0
        %5176 = vmatpush.bf16.msra.mxu0 0
        %5177 = vmatpush.bf16.msra.mxu0 0
        %5178 = vmatpush.bf16.msra.mxu0 0
        %5179 = vmatpush.bf16.msra.mxu0 0
        %5180 = vmatpush.bf16.msra.mxu0 0
        %5181 = vmatpush.bf16.msra.mxu0 %v5169
        %5182 = vmatpush.bf16.msra.mxu0 %v5168
        %5183 = vmatmul.bf16.gmra.mxu0 %v5173
        %v5184 = vpop.f32.mrf.mxu0
        %v5185 = vadd.f32 0.0, %v5184
        %v5186 = vpop.f32.mrf.mxu0
        %v5187 = vadd.f32 0.0, %v5186
        %5188 = vdwg.mxu0
        %v5193 = vunpack.c.l.b16 %v5151
        %v5194 = vunpack.c.l.b16 %v5152
        %v5195 = vunpack.c.l.b16 %v5153
        %v5196 = vunpack.c.l.b16 %v5154
        %v5197 = vpack.c.b16 %v5194, %v5193
        %v5198 = vpack.c.b16 %v5196, %v5195
        %v5202 = vsel %vm2607, %v5150, 0
        %5204 = vmatpush.bf16.msra.mxu0 0
        %5205 = vmatpush.bf16.msra.mxu0 0
        %5206 = vmatpush.bf16.msra.mxu0 0
        %5207 = vmatpush.bf16.msra.mxu0 0
        %5208 = vmatpush.bf16.msra.mxu0 0
        %5209 = vmatpush.bf16.msra.mxu0 0
        %5210 = vmatpush.bf16.msra.mxu0 %v5198
        %5211 = vmatpush.bf16.msra.mxu0 %v5197
        %5212 = vmatmul.bf16.gmra.mxu0 %v5202
        %v5213 = vpop.f32.mrf.mxu0
        %v5214 = vadd.f32 %v5185, %v5213
        %v5215 = vpop.f32.mrf.mxu0
        %v5216 = vadd.f32 %v5187, %v5215
        %5217 = vdwg.mxu0
        %5218 = vmatpush.bf16.msra.mxu0 0
        %5219 = vmatpush.bf16.msra.mxu0 0
        %5220 = vmatpush.bf16.msra.mxu0 0
        %5221 = vmatpush.bf16.msra.mxu0 0
        %5222 = vmatpush.bf16.msra.mxu0 0
        %5223 = vmatpush.bf16.msra.mxu0 0
        %5224 = vmatpush.bf16.msra.mxu0 0
        %5225 = vmatpush.bf16.msra.mxu0 %v5135
        %5226 = vmatmul.bf16.gmra.mxu0 %v2492
        %v5227 = vpop.f32.mrf.mxu0
        %v5228 = vadd.f32 0.0, %v5227
        %v5229 = vpop.f32.mrf.mxu0
        %v5230 = vadd.f32 0.0, %v5229
        %5231 = vdwg.mxu0
        %v5232 = vpack.c.bf16 %v5230, %v5228
        %s5233 = scalar_lea.vmem [#allocation7], 32
        %v5234 = vld [vmem:[%s5233] sm:$0xf]
        %v5235 = vld [vmem:[%s5233 + $0x4] sm:$0xf]
        %v5236 = vld [vmem:[%s5233 + $0x8] sm:$0xf]
        %v5237 = vld [vmem:[%s5233 + $0xc] sm:$0xf]
        %v5242 = vunpack.c.l.b16 %v5234
        %v5243 = vunpack.c.l.b16 %v5235
        %v5244 = vunpack.c.l.b16 %v5236
        %v5245 = vunpack.c.l.b16 %v5237
        %v5246 = vpack.c.b16 %v5243, %v5242
        %v5247 = vpack.c.b16 %v5245, %v5244
        %v5251 = vsel %vm2607, %v5232, 0
        %5253 = vmatpush.bf16.msra.mxu0 0
        %5254 = vmatpush.bf16.msra.mxu0 0
        %5255 = vmatpush.bf16.msra.mxu0 0
        %5256 = vmatpush.bf16.msra.mxu0 0
        %5257 = vmatpush.bf16.msra.mxu0 0
        %5258 = vmatpush.bf16.msra.mxu0 0
        %5259 = vmatpush.bf16.msra.mxu0 %v5247
        %5260 = vmatpush.bf16.msra.mxu0 %v5246
        %5261 = vmatmul.bf16.gmra.mxu0 %v5251
        %v5262 = vpop.f32.mrf.mxu0
        %v5263 = vadd.f32 0.0, %v5262
        %v5264 = vpop.f32.mrf.mxu0
        %v5265 = vadd.f32 0.0, %v5264
        %5266 = vdwg.mxu0
        %v5267 = vadd.f32 %v5214, %v5263
        %v5268 = vadd.f32 %v5216, %v5265
        %v5269 = vld [vmem:[#allocation6] sm:$0x1]
        %v5271 = vperm.slane %v5269, 0
        %v5273 = vadd.f32 %v5267, %v5271
        %v5274 = vadd.f32 %v5268, %v5271
        %v5275 = vmax.f32 %v5273, 0.0
        %v5276 = vmax.f32 %v5274, 0.0
        %v5277 = vpack.c.bf16 %v5276, %v5275
        %5278 = vmatpush.bf16.msra.mxu0 0
        %5279 = vmatpush.bf16.msra.mxu0 0
        %5280 = vmatpush.bf16.msra.mxu0 0
        %5281 = vmatpush.bf16.msra.mxu0 0
        %5282 = vmatpush.bf16.msra.mxu0 0
        %5283 = vmatpush.bf16.msra.mxu0 0
        %5284 = vmatpush.bf16.msra.mxu0 0
        %5285 = vmatpush.bf16.msra.mxu0 %v5277
        %5286 = vmatmul.bf16.gmra.mxu0 %v2420
        %v5287 = vpop.f32.mrf.mxu0
        %v5288 = vadd.f32 0.0, %v5287
        %v5289 = vpop.f32.mrf.mxu0
        %v5290 = vadd.f32 0.0, %v5289
        %5291 = vdwg.mxu0
        %v5292 = vpack.c.bf16 %v5290, %v5288
        %v5293 = vld [vmem:[%s13] sm:$0xf]
        %v5294 = vld [vmem:[%s13 + $0x4] sm:$0xf]
        %v5295 = vld [vmem:[%s13 + $0x8] sm:$0xf]
        %v5296 = vld [vmem:[%s13 + $0xc] sm:$0xf]
        %s5297 = scalar_lea.vmem %s13, 16
        %v5298 = vld [vmem:[%s5297] sm:$0xf]
        %v5299 = vld [vmem:[%s5297 + $0x4] sm:$0xf]
        %v5300 = vld [vmem:[%s5297 + $0x8] sm:$0xf]
        %v5301 = vld [vmem:[%s5297 + $0xc] sm:$0xf]
        %v5306 = vunpack.c.l.b16 %v5298
        %v5307 = vunpack.c.l.b16 %v5299
        %v5308 = vunpack.c.l.b16 %v5300
        %v5309 = vunpack.c.l.b16 %v5301
        %v5310 = vpack.c.b16 %v5307, %v5306
        %v5311 = vpack.c.b16 %v5309, %v5308
        %v5315 = vsel %vm2607, %v5277, 0
        %5317 = vmatpush.bf16.msra.mxu0 0
        %5318 = vmatpush.bf16.msra.mxu0 0
        %5319 = vmatpush.bf16.msra.mxu0 0
        %5320 = vmatpush.bf16.msra.mxu0 0
        %5321 = vmatpush.bf16.msra.mxu0 0
        %5322 = vmatpush.bf16.msra.mxu0 0
        %5323 = vmatpush.bf16.msra.mxu0 %v5311
        %5324 = vmatpush.bf16.msra.mxu0 %v5310
        %5325 = vmatmul.bf16.gmra.mxu0 %v5315
        %v5326 = vpop.f32.mrf.mxu0
        %v5327 = vadd.f32 0.0, %v5326
        %v5328 = vpop.f32.mrf.mxu0
        %v5329 = vadd.f32 0.0, %v5328
        %5330 = vdwg.mxu0
        %v5335 = vunpack.c.l.b16 %v5293
        %v5336 = vunpack.c.l.b16 %v5294
        %v5337 = vunpack.c.l.b16 %v5295
        %v5338 = vunpack.c.l.b16 %v5296
        %v5339 = vpack.c.b16 %v5336, %v5335
        %v5340 = vpack.c.b16 %v5338, %v5337
        %v5344 = vsel %vm2607, %v5292, 0
        %5346 = vmatpush.bf16.msra.mxu0 0
        %5347 = vmatpush.bf16.msra.mxu0 0
        %5348 = vmatpush.bf16.msra.mxu0 0
        %5349 = vmatpush.bf16.msra.mxu0 0
        %5350 = vmatpush.bf16.msra.mxu0 0
        %5351 = vmatpush.bf16.msra.mxu0 0
        %5352 = vmatpush.bf16.msra.mxu0 %v5340
        %5353 = vmatpush.bf16.msra.mxu0 %v5339
        %5354 = vmatmul.bf16.gmra.mxu0 %v5344
        %v5355 = vpop.f32.mrf.mxu0
        %v5356 = vadd.f32 %v5327, %v5355
        %v5357 = vpop.f32.mrf.mxu0
        %v5358 = vadd.f32 %v5329, %v5357
        %5359 = vdwg.mxu0
        %5360 = vmatpush.bf16.msra.mxu0 0
        %5361 = vmatpush.bf16.msra.mxu0 0
        %5362 = vmatpush.bf16.msra.mxu0 0
        %5363 = vmatpush.bf16.msra.mxu0 0
        %5364 = vmatpush.bf16.msra.mxu0 0
        %5365 = vmatpush.bf16.msra.mxu0 0
        %5366 = vmatpush.bf16.msra.mxu0 0
        %5367 = vmatpush.bf16.msra.mxu0 %v5277
        %5368 = vmatmul.bf16.gmra.mxu0 %v2492
        %v5369 = vpop.f32.mrf.mxu0
        %v5370 = vadd.f32 0.0, %v5369
        %v5371 = vpop.f32.mrf.mxu0
        %v5372 = vadd.f32 0.0, %v5371
        %5373 = vdwg.mxu0
        %v5374 = vpack.c.bf16 %v5372, %v5370
        %s5375 = scalar_lea.vmem %s13, 32
        %v5376 = vld [vmem:[%s5375] sm:$0xf]
        %v5377 = vld [vmem:[%s5375 + $0x4] sm:$0xf]
        %v5378 = vld [vmem:[%s5375 + $0x8] sm:$0xf]
        %v5379 = vld [vmem:[%s5375 + $0xc] sm:$0xf]
        %v5384 = vunpack.c.l.b16 %v5376
        %v5385 = vunpack.c.l.b16 %v5377
        %v5386 = vunpack.c.l.b16 %v5378
        %v5387 = vunpack.c.l.b16 %v5379
        %v5388 = vpack.c.b16 %v5385, %v5384
        %v5389 = vpack.c.b16 %v5387, %v5386
        %v5393 = vsel %vm2607, %v5374, 0
        %5395 = vmatpush.bf16.msra.mxu0 0
        %5396 = vmatpush.bf16.msra.mxu0 0
        %5397 = vmatpush.bf16.msra.mxu0 0
        %5398 = vmatpush.bf16.msra.mxu0 0
        %5399 = vmatpush.bf16.msra.mxu0 0
        %5400 = vmatpush.bf16.msra.mxu0 0
        %5401 = vmatpush.bf16.msra.mxu0 %v5389
        %5402 = vmatpush.bf16.msra.mxu0 %v5388
        %5403 = vmatmul.bf16.gmra.mxu0 %v5393
        %v5404 = vpop.f32.mrf.mxu0
        %v5405 = vadd.f32 0.0, %v5404
        %v5406 = vpop.f32.mrf.mxu0
        %v5407 = vadd.f32 0.0, %v5406
        %5408 = vdwg.mxu0
        %v5409 = vadd.f32 %v5356, %v5405
        %v5410 = vadd.f32 %v5358, %v5407
        %v5411 = vld [vmem:[#allocation9] sm:$0x1]
        %v5413 = vperm.slane %v5411, 0
        %v5415 = vadd.f32 %v5409, %v5413
        %v5416 = vadd.f32 %v5410, %v5413
        %5417 = vst.msk [vmem:[%s2393] sm:$0xff] %vm2440, %v5415
        %5418 = vst.msk [vmem:[%s2393 + $0x8] sm:$0xff] %vm2440, %v5416
        %vm5419 = vcmask 516096
        %5420 = vst.msk [vmem:[%s2396] sm:$0x1] %vm5419, %v3954
        %v5421 = vstv %s3967
        %vm5422 = vcmask 0
        %5423 = vst.msk [vmem:[%s2399] sm:$0x1] %vm5422, %v5421
        %p5424 = scmp.lt.s32.totalorder %s149, 1
        %s5425 = scalar_select %p5424, %s149, 1
        %s5426 = smul.addr %s5425, 2
        %s5427 = smul.addr %s5426, 8
        %s5428 = scalar_lea.vmem %s109, %s5427
        %p5429 = scmp.lt.s32.totalorder %s149, 1
        %s5430 = scalar_select %p5429, %s149, 1
        %s5431 = scalar_lea.vmem %s111, %s5430
        %p5432 = scmp.lt.s32.totalorder %s149, 1
        %s5433 = scalar_select %p5432, %s149, 1
        %s5434 = scalar_lea.vmem %s113, %s5433
        // Predicated region
        $region425: #{tsvqvae_forward.1} parent=235 // pred_check
          %p5435 = pneg %p1306
        $region426: #{tsvqvae_forward.1} parent=235 // pred_check_branch
          %5437 = sbr.rel (%p5435) target = $region428
        $region427: #{tsvqvae_forward.1} parent=235 // pred_region
          _
        $region428: #{tsvqvae_forward.1} parent=235 // pred_fallthru
          _
        // Predicated region
        $region429: #{tsvqvae_forward.1} parent=235 // pred_check
          %p5438 = pneg %p1332
        $region430: #{tsvqvae_forward.1} parent=235 // pred_check_branch
          %5440 = sbr.rel (%p5438) target = $region432
        $region431: #{tsvqvae_forward.1} parent=235 // pred_region
          _
        $region432: #{tsvqvae_forward.1} parent=235 // pred_fallthru
          _
        // Predicated region
        $region433: #{tsvqvae_forward.1} parent=235 // pred_check
          %p5441 = pneg %p1358
        $region434: #{tsvqvae_forward.1} parent=235 // pred_check_branch
          %5443 = sbr.rel (%p5441) target = $region436
        $region435: #{tsvqvae_forward.1} parent=235 // pred_region
          _
        $region436: #{tsvqvae_forward.1} parent=235 // pred_fallthru
          _
      $region236: #{tsvqvae_forward.1} parent=5 // pred_fallthru
        _
      %p5444 = scmp.le.s32.totalorder 2, %s144
      // Predicated region
      $region437: #{tsvqvae_forward.1} parent=5 // pred_check
        %p5445 = pneg %p5444
      $region438: #{tsvqvae_forward.1} parent=5 // pred_check_branch
        %5447 = sbr.rel (%p5445) target = $region440
      $region439: #{tsvqvae_forward.1} parent=5 // pred_region
        %s5448 = ssub.s32 %s144, 2
        // Predicated region
        $region441: #{tsvqvae_forward.1} parent=439 // pred_check
          %p5449 = pneg %p1312
        $region442: #{tsvqvae_forward.1} parent=439 // pred_check_branch
          %5451 = sbr.rel (%p5449) target = $region444
        $region443: #{tsvqvae_forward.1} parent=439 // pred_region
          %p5452 = scmp.lt.s32.totalorder %s150, 1
          %s5453 = scalar_select %p5452, %s150, 1
          %s5454 = smul.addr %s5453, 2
          %s5455 = smul.addr %s5454, 8
          %s5456 = scalar_lea.vmem %s109, %s5455
        $region444: #{tsvqvae_forward.1} parent=439 // pred_fallthru
          _
        // Predicated region
        $region445: #{tsvqvae_forward.1} parent=439 // pred_check
          %p5457 = pneg %p1338
        $region446: #{tsvqvae_forward.1} parent=439 // pred_check_branch
          %5459 = sbr.rel (%p5457) target = $region448
        $region447: #{tsvqvae_forward.1} parent=439 // pred_region
          %p5460 = scmp.lt.s32.totalorder %s150, 1
          %s5461 = scalar_select %p5460, %s150, 1
          %s5462 = scalar_lea.vmem %s111, %s5461
        $region448: #{tsvqvae_forward.1} parent=439 // pred_fallthru
          _
        // Predicated region
        $region449: #{tsvqvae_forward.1} parent=439 // pred_check
          %p5463 = pneg %p1364
        $region450: #{tsvqvae_forward.1} parent=439 // pred_check_branch
          %5465 = sbr.rel (%p5463) target = $region452
        $region451: #{tsvqvae_forward.1} parent=439 // pred_region
          %p5466 = scmp.lt.s32.totalorder %s150, 1
          %s5467 = scalar_select %p5466, %s150, 1
          %s5468 = scalar_lea.vmem %s113, %s5467
        $region452: #{tsvqvae_forward.1} parent=439 // pred_fallthru
          _
      $region440: #{tsvqvae_forward.1} parent=5 // pred_fallthru
        _
    $region6: #{tsvqvae_forward.1} parent=1 // loop_footer
      %s148 = sadd.s32 1, %s144
    $region7: #{tsvqvae_forward.1} parent=1 // loop_footer_branch
      %143 = sbr.rel target = $region3
    $region8: #{tsvqvae_forward.1} parent=1 // loop_exit
      _
    %5469 = vsyncpa [#allocation3], 1
    %s5470 = scalar_lea.sflag [#allocation3], 1
    %5471 = vsyncpa %s5470, 1
    %5472 = vsyncpa [#allocation5], 1
    %5473 = vsyncpa [#allocation8], 1
    %5474 = vsyncpa [#allocation11], 1
    %5475 = vsyncpa [#allocation14], 1
    %5476 = vsyncpa [#allocation17], 1
    %5477 = vsyncpa [#allocation20], 1
    %5478 = vsyncpa [#allocation23], 1
    %5479 = vsyncpa [#allocation26], 1
    %5480 = vsyncpa [#allocation29], 1
    %5481 = vsyncpa [#allocation32], 1
    %5482 = vsyncpa [#allocation35], 1
    %5483 = vsyncpa [#allocation38], 1
    %5484 = vsyncpa [#allocation41], 1
    %5485 = vsyncpa [#allocation44], 1
    %5486 = vsyncpa [#allocation47], 1
    %5487 = vsyncpa [#allocation50], 1
    %5488 = vsyncpa [#allocation53], 1
    %5489 = vsyncpa [#allocation56], 1
    %5490 = vsyncpa [#allocation59], 1
    %5491 = vsyncpa [#allocation62], 1
    %5492 = vsyncpa [#allocation65], 1
    %5493 = vsyncpa [#allocation68], 1
    %5494 = vsyncpa [#allocation71], 1

</llo_original>
